<compile_context>
chip_gen: v7x
topology: tpu7x:2x2x1
jax: 0.10.0
libtpu: 0.0.40
codegen_flags: <defaults>
</compile_context>

<pallas_src>
import functools
import math

import jax
import jax.numpy as jnp
from jax.experimental import pallas as pl
from jax.experimental.pallas import tpu as pltpu


# timm's vit_base_patch16_224 builds LayerNorm with eps=1e-6.
LN_EPS = 1e-6

CFG = dict(
    img_size=16, patch=4, in_chans=3,
    embed_dim=128,          # lane-dense feature dim
    depth=2, num_heads=4, mlp_hidden=256,
    num_classes=2,
    t_pad=32,               # tokens (16 patches + cls = 17) padded to 32
    classes_pad=128,        # classifier output padded to 128 lanes
)


def _layernorm(x, g, b):
    mu = jnp.mean(x, axis=-1, keepdims=True)
    var = jnp.mean((x - mu) ** 2, axis=-1, keepdims=True)
    return (x - mu) * jax.lax.rsqrt(var + LN_EPS) * g + b


# ----------------------------------------------------------------------------
# Fused ViT kernel: one grid step == one batch element (all frames)
# ----------------------------------------------------------------------------

def _vit_kernel(patch_ref, mask_ref,
                pw_ref, pb_ref, cls_ref, pos_ref,
                ln1g_ref, ln1b_ref, qkvw_ref, qkvb_ref,
                projw_ref, projb_ref, ln2g_ref, ln2b_ref,
                fc1w_ref, fc1b_ref, fc2w_ref, fc2b_ref,
                ng_ref, nb_ref, hw_ref, hb_ref,
                o_ref, xs_ref,
                *, depth, heads, frames, t_pad, n_patches):
    D = pos_ref.shape[1]
    hd = D // heads
    scale = 1.0 / math.sqrt(hd)
    pad_rows = t_pad - 1 - n_patches

    # ---- patch embedding + cls token + positional embedding --------------
    xp = patch_ref[0].astype(jnp.bfloat16)                     # [F*n_patches, cpp]
    tok = jnp.dot(xp, pw_ref[...],
                  preferred_element_type=jnp.float32) + pb_ref[...]
    pos = pos_ref[...]                                         # [t_pad, D]
    cls_row = cls_ref[...] + pos[0:1, :]                       # [1, D]
    pos_patch = pos[1:1 + n_patches, :]                        # [n_patches, D]
    zeros_pad = jnp.zeros((pad_rows, D), jnp.float32)

    # Assemble the residual-stream slab with direct stores (no concatenate).
    for f in range(frames):
        base = f * t_pad
        xs_ref[pl.ds(base, 1), :] = cls_row
        xs_ref[pl.ds(base + 1, n_patches), :] = (
            tok[f * n_patches:(f + 1) * n_patches, :] + pos_patch)
        xs_ref[pl.ds(base + 1 + n_patches, pad_rows), :] = zeros_pad

    x = xs_ref[...]                                            # [F*t_pad, D] f32
    mask = mask_ref[...]                                       # [1, t_pad] (0 / -1e30)

    # ---- transformer encoder blocks (static layer loop, weights in VMEM) --
    for l in range(depth):
        # attention
        xn = _layernorm(x, ln1g_ref[l], ln1b_ref[l])
        qkv = jnp.dot(xn.astype(jnp.bfloat16), qkvw_ref[l],
                      preferred_element_type=jnp.float32) + qkvb_ref[l]
        qkv3 = qkv.reshape(frames, t_pad, 3 * D)
        projw_l = projw_ref[l]                                 # [D, D] bf16

        attn = None
        for h in range(heads):                                 # static unroll
            qh = qkv3[:, :, h * hd:(h + 1) * hd].astype(jnp.bfloat16)
            kh = qkv3[:, :, D + h * hd:D + (h + 1) * hd].astype(jnp.bfloat16)
            vh = qkv3[:, :, 2 * D + h * hd:2 * D + (h + 1) * hd].astype(jnp.bfloat16)
            # frames batched in one dot_general per head
            s = jnp.einsum('bqd,bkd->bqk', qh, kh,
                           preferred_element_type=jnp.float32) * scale + mask
            m = jnp.max(s, axis=-1, keepdims=True)
            pexp = jnp.exp(s - m)
            pr = pexp / jnp.sum(pexp, axis=-1, keepdims=True)  # exact divide
            oh = jnp.einsum('bqk,bkd->bqd', pr.astype(jnp.bfloat16), vh,
                            preferred_element_type=jnp.float32)
            # accumulate head output straight through its proj-weight slice
            contrib = jnp.dot(
                oh.reshape(frames * t_pad, hd).astype(jnp.bfloat16),
                projw_l[h * hd:(h + 1) * hd, :],
                preferred_element_type=jnp.float32)
            attn = contrib if attn is None else attn + contrib
        x = x + attn + projb_ref[l]

        # MLP
        xn = _layernorm(x, ln2g_ref[l], ln2b_ref[l])
        # TODO(synk): PyTorch/timm GELU is exact erf; tanh approximation used
        # here for a guaranteed Mosaic elementwise lowering (~1e-3 difference).
        h1 = jax.nn.gelu(
            jnp.dot(xn.astype(jnp.bfloat16), fc1w_ref[l],
                    preferred_element_type=jnp.float32) + fc1b_ref[l],
            approximate=True)
        x = x + jnp.dot(h1.astype(jnp.bfloat16), fc2w_ref[l],
                        preferred_element_type=jnp.float32) + fc2b_ref[l]

    # ---- final ViT LayerNorm on cls tokens + frame mean + classifier ------
    cls_rows = jnp.concatenate(
        [x[f * t_pad:f * t_pad + 1, :] for f in range(frames)], axis=0)  # [F, D]
    cls_n = _layernorm(cls_rows, ng_ref[...], nb_ref[...])
    feat = jnp.mean(cls_n, axis=0, keepdims=True)               # seq_mask=None -> mean
    # Dropout(p=0.5) is identity at inference.
    logits = jnp.dot(feat.astype(jnp.bfloat16), hw_ref[...],
                     preferred_element_type=jnp.float32) + hb_ref[...]
    o_ref[0] = logits.astype(o_ref.dtype)


# ----------------------------------------------------------------------------
# Wrapper: layout glue in XLA, all math in one pallas_call
# ----------------------------------------------------------------------------

def vit_forward(params, x, cfg):
    """x: [B, F, C, H, W] -> logits [B, num_classes]."""
    B, F, C, H, W = x.shape
    p, D = cfg['patch'], cfg['embed_dim']
    hp, wp = H // p, W // p
    n_patches = hp * wp
    T = n_patches + 1
    t_pad, c_pad = cfg['t_pad'], cfg['classes_pad']
    depth, heads, Hm = cfg['depth'], cfg['num_heads'], cfg['mlp_hidden']
    cpp = C * p * p

    # Patch extraction (non-overlapping conv == matmul on rearranged pixels).
    # No lane padding of the 48-wide pixel axis (full-extent block instead).
    xf = x.reshape(B * F, C, hp, p, wp, p)
    patches = jnp.transpose(xf, (0, 2, 4, 1, 3, 5)).reshape(B, F * n_patches, cpp)

    # Hoisted key-padding mask bias (scores stay f32, so -1e30 is safe).
    mask_bias = jnp.where(jnp.arange(t_pad) < T, 0.0, -1e30).astype(
        jnp.float32).reshape(1, t_pad)

    kern = functools.partial(_vit_kernel, depth=depth, heads=heads, frames=F,
                             t_pad=t_pad, n_patches=n_patches)

    def cs(shape):
        # constant block index -> loaded once, VMEM-resident across steps
        if len(shape) == 2:
            return pl.BlockSpec(shape, lambda i: (0, 0))
        return pl.BlockSpec(shape, lambda i: (0, 0, 0))

    out = pl.pallas_call(
        kern,
        grid=(B,),
        in_specs=[
            pl.BlockSpec((1, F * n_patches, cpp), lambda i: (i, 0, 0)),
            cs((1, t_pad)),
            cs((cpp, D)), cs((1, D)), cs((1, D)), cs((t_pad, D)),
            cs((depth, 1, D)), cs((depth, 1, D)),
            cs((depth, D, 3 * D)), cs((depth, 1, 3 * D)),
            cs((depth, D, D)), cs((depth, 1, D)),
            cs((depth, 1, D)), cs((depth, 1, D)),
            cs((depth, D, Hm)), cs((depth, 1, Hm)),
            cs((depth, Hm, D)), cs((depth, 1, D)),
            cs((1, D)), cs((1, D)),
            cs((D, c_pad)), cs((1, c_pad)),
        ],
        out_specs=pl.BlockSpec((1, 1, c_pad), lambda i: (i, 0, 0)),
        out_shape=jax.ShapeDtypeStruct((B, 1, c_pad), jnp.float32),
        scratch_shapes=[pltpu.VMEM((F * t_pad, D), jnp.float32)],
        compiler_params=pltpu.CompilerParams(
            dimension_semantics=("parallel",)),
    )(patches, mask_bias,
      params['patch_w'], params['patch_b'], params['cls'], params['pos'],
      params['ln1_g'], params['ln1_b'], params['qkv_w'], params['qkv_b'],
      params['proj_w'], params['proj_b'], params['ln2_g'], params['ln2_b'],
      params['fc1_w'], params['fc1_b'], params['fc2_w'], params['fc2_b'],
      params['norm_g'], params['norm_b'], params['head_w'], params['head_b'])
    return out[:, 0, :cfg['num_classes']]


# ----------------------------------------------------------------------------
# Synthetic ViT config + deterministic parameter init (bf16 MXU weights)
# ----------------------------------------------------------------------------

def init_params(key, cfg):
    p, C, D = cfg['patch'], cfg['in_chans'], cfg['embed_dim']
    n_patches = (cfg['img_size'] // p) ** 2
    T = n_patches + 1
    t_pad, c_pad = cfg['t_pad'], cfg['classes_pad']
    Hm, depth = cfg['mlp_hidden'], cfg['depth']
    cpp = C * p * p

    def nrm(k, shape, std=0.02):
        return (std * jax.random.normal(k, shape)).astype(jnp.float32)

    keys = iter(jax.random.split(key, 32))

    pos = jnp.zeros((t_pad, D), jnp.float32).at[:T].set(nrm(next(keys), (T, D)))
    head_w = jnp.zeros((D, c_pad), jnp.float32).at[:, :cfg['num_classes']].set(
        nrm(next(keys), (D, cfg['num_classes'])))

    return {
        'patch_w': nrm(next(keys), (cpp, D)).astype(jnp.bfloat16),
        'patch_b': jnp.zeros((1, D), jnp.float32),
        'cls': nrm(next(keys), (1, D)),
        'pos': pos,
        'ln1_g': jnp.ones((depth, 1, D), jnp.float32),
        'ln1_b': jnp.zeros((depth, 1, D), jnp.float32),
        'qkv_w': nrm(next(keys), (depth, D, 3 * D)).astype(jnp.bfloat16),
        'qkv_b': jnp.zeros((depth, 1, 3 * D), jnp.float32),
        'proj_w': nrm(next(keys), (depth, D, D)).astype(jnp.bfloat16),
        'proj_b': jnp.zeros((depth, 1, D), jnp.float32),
        'ln2_g': jnp.ones((depth, 1, D), jnp.float32),
        'ln2_b': jnp.zeros((depth, 1, D), jnp.float32),
        'fc1_w': nrm(next(keys), (depth, D, Hm)).astype(jnp.bfloat16),
        'fc1_b': jnp.zeros((depth, 1, Hm), jnp.float32),
        'fc2_w': nrm(next(keys), (depth, Hm, D)).astype(jnp.bfloat16),
        'fc2_b': jnp.zeros((depth, 1, D), jnp.float32),
        'norm_g': jnp.ones((1, D), jnp.float32),
        'norm_b': jnp.zeros((1, D), jnp.float32),
        'head_w': head_w.astype(jnp.bfloat16),
        'head_b': jnp.zeros((1, c_pad), jnp.float32),
    }


# ----------------------------------------------------------------------------

if __name__ == "__main__":
    key = jax.random.PRNGKey(0)
    kp, kx = jax.random.split(key)
    params = init_params(kp, CFG)

    B, F = 2, 3
    # TODO(synk): LSTM temporal branch (use_temporal_modeling=True) and
    # pretrained timm weight loading are not implemented (inference path with
    # use_temporal_modeling=False, seq_mask=None, synthetic weights).
    x = jax.random.normal(
        kx, (B, F, CFG['in_chans'], CFG['img_size'], CFG['img_size']),
        dtype=jnp.float32)

    fwd = jax.jit(lambda xx: vit_forward(params, xx, CFG))
    out = fwd(x)
    jax.block_until_ready(out)
    assert out.shape == (B, CFG['num_classes'])
    assert bool(jnp.all(jnp.isfinite(out)))
    print("KERNEL_OK")
</pallas_src>

<mosaic_0001>
module attributes {stable_mosaic.version = 11 : i64} {
  func.func @_vit_kernel(%arg0: i32, %arg1: memref<1x48x48xf32, #tpu.memory_space<vmem>>, %arg2: memref<1x32xf32, #tpu.memory_space<vmem>>, %arg3: memref<48x128xbf16, #tpu.memory_space<vmem>>, %arg4: memref<1x128xf32, #tpu.memory_space<vmem>>, %arg5: memref<1x128xf32, #tpu.memory_space<vmem>>, %arg6: memref<32x128xf32, #tpu.memory_space<vmem>>, %arg7: memref<2x1x128xf32, #tpu.memory_space<vmem>>, %arg8: memref<2x1x128xf32, #tpu.memory_space<vmem>>, %arg9: memref<2x128x384xbf16, #tpu.memory_space<vmem>>, %arg10: memref<2x1x384xf32, #tpu.memory_space<vmem>>, %arg11: memref<2x128x128xbf16, #tpu.memory_space<vmem>>, %arg12: memref<2x1x128xf32, #tpu.memory_space<vmem>>, %arg13: memref<2x1x128xf32, #tpu.memory_space<vmem>>, %arg14: memref<2x1x128xf32, #tpu.memory_space<vmem>>, %arg15: memref<2x128x256xbf16, #tpu.memory_space<vmem>>, %arg16: memref<2x1x256xf32, #tpu.memory_space<vmem>>, %arg17: memref<2x256x128xbf16, #tpu.memory_space<vmem>>, %arg18: memref<2x1x128xf32, #tpu.memory_space<vmem>>, %arg19: memref<1x128xf32, #tpu.memory_space<vmem>>, %arg20: memref<1x128xf32, #tpu.memory_space<vmem>>, %arg21: memref<128x128xbf16, #tpu.memory_space<vmem>>, %arg22: memref<1x128xf32, #tpu.memory_space<vmem>>, %arg23: memref<1x1x128xf32, #tpu.memory_space<vmem>>, %arg24: memref<96x128xf32, #tpu.memory_space<vmem>>) attributes {dimension_semantics = [#tpu.dimension_semantics<parallel>], iteration_bounds = array<i64: 2>, scalar_prefetch = 0 : i64, scratch_operands = 1 : i64, tpu.core_type = #tpu.core_type<tc>, window_params = [{transform_indices = @transform_0, window_bounds = array<i64: 1, 48, 48>}, {pipeline_mode = #tpu.pipeline_mode<synchronous>, transform_indices = @transform_1, window_bounds = array<i64: 1, 32>}, {pipeline_mode = #tpu.pipeline_mode<synchronous>, transform_indices = @transform_2, window_bounds = array<i64: 48, 128>}, {pipeline_mode = #tpu.pipeline_mode<synchronous>, transform_indices = @transform_3, window_bounds = array<i64: 1, 128>}, {pipeline_mode = #tpu.pipeline_mode<synchronous>, transform_indices = @transform_4, window_bounds = array<i64: 1, 128>}, {pipeline_mode = #tpu.pipeline_mode<synchronous>, transform_indices = @transform_5, window_bounds = array<i64: 32, 128>}, {pipeline_mode = #tpu.pipeline_mode<synchronous>, transform_indices = @transform_6, window_bounds = array<i64: 2, 1, 128>}, {pipeline_mode = #tpu.pipeline_mode<synchronous>, transform_indices = @transform_7, window_bounds = array<i64: 2, 1, 128>}, {pipeline_mode = #tpu.pipeline_mode<synchronous>, transform_indices = @transform_8, window_bounds = array<i64: 2, 128, 384>}, {pipeline_mode = #tpu.pipeline_mode<synchronous>, transform_indices = @transform_9, window_bounds = array<i64: 2, 1, 384>}, {pipeline_mode = #tpu.pipeline_mode<synchronous>, transform_indices = @transform_10, window_bounds = array<i64: 2, 128, 128>}, {pipeline_mode = #tpu.pipeline_mode<synchronous>, transform_indices = @transform_11, window_bounds = array<i64: 2, 1, 128>}, {pipeline_mode = #tpu.pipeline_mode<synchronous>, transform_indices = @transform_12, window_bounds = array<i64: 2, 1, 128>}, {pipeline_mode = #tpu.pipeline_mode<synchronous>, transform_indices = @transform_13, window_bounds = array<i64: 2, 1, 128>}, {pipeline_mode = #tpu.pipeline_mode<synchronous>, transform_indices = @transform_14, window_bounds = array<i64: 2, 128, 256>}, {pipeline_mode = #tpu.pipeline_mode<synchronous>, transform_indices = @transform_15, window_bounds = array<i64: 2, 1, 256>}, {pipeline_mode = #tpu.pipeline_mode<synchronous>, transform_indices = @transform_16, window_bounds = array<i64: 2, 256, 128>}, {pipeline_mode = #tpu.pipeline_mode<synchronous>, transform_indices = @transform_17, window_bounds = array<i64: 2, 1, 128>}, {pipeline_mode = #tpu.pipeline_mode<synchronous>, transform_indices = @transform_18, window_bounds = array<i64: 1, 128>}, {pipeline_mode = #tpu.pipeline_mode<synchronous>, transform_indices = @transform_19, window_bounds = array<i64: 1, 128>}, {pipeline_mode = #tpu.pipeline_mode<synchronous>, transform_indices = @transform_20, window_bounds = array<i64: 128, 128>}, {pipeline_mode = #tpu.pipeline_mode<synchronous>, transform_indices = @transform_21, window_bounds = array<i64: 1, 128>}, {transform_indices = @transform_22, window_bounds = array<i64: 1, 1, 128>}]} {
    %c0 = arith.constant 0 : index
    %c0_0 = arith.constant 0 : index
    %c0_1 = arith.constant 0 : index
    %0 = vector.load %arg1[%c0, %c0_0, %c0_1] : memref<1x48x48xf32, #tpu.memory_space<vmem>>, vector<1x48x48xf32>
    %1 = vector.shape_cast %0 : vector<1x48x48xf32> to vector<48x48xf32>
    %2 = arith.truncf %1 : vector<48x48xf32> to vector<48x48xbf16>
    %c0_2 = arith.constant 0 : index
    %c0_3 = arith.constant 0 : index
    %3 = vector.load %arg3[%c0_2, %c0_3] : memref<48x128xbf16, #tpu.memory_space<vmem>>, vector<48x128xbf16>
    %cst = arith.constant dense<0.000000e+00> : vector<48x128xf32>
    %4 = tpu.matmul %2, %3, %cst {dimension_numbers = #tpu.dot_dimension_numbers<[1], [0], [0], [1], [0, 0, 1, 1], [], []>} : vector<48x48xbf16>, vector<48x128xbf16>, vector<48x128xf32> -> vector<48x128xf32>
    %c0_4 = arith.constant 0 : index
    %c0_5 = arith.constant 0 : index
    %5 = vector.load %arg4[%c0_4, %c0_5] : memref<1x128xf32, #tpu.memory_space<vmem>>, vector<1x128xf32>
    %6 = vector.broadcast %5 : vector<1x128xf32> to vector<48x128xf32>
    %7 = arith.addf %4, %6 : vector<48x128xf32>
    %c0_6 = arith.constant 0 : index
    %c0_7 = arith.constant 0 : index
    %8 = vector.load %arg6[%c0_6, %c0_7] : memref<32x128xf32, #tpu.memory_space<vmem>>, vector<32x128xf32>
    %c0_8 = arith.constant 0 : index
    %c0_9 = arith.constant 0 : index
    %9 = vector.load %arg5[%c0_8, %c0_9] : memref<1x128xf32, #tpu.memory_space<vmem>>, vector<1x128xf32>
    %10 = vector.extract_strided_slice %8 {offsets = [0, 0], sizes = [1, 128], strides = [1, 1]} : vector<32x128xf32> to vector<1x128xf32>
    %11 = arith.addf %9, %10 : vector<1x128xf32>
    %12 = vector.extract_strided_slice %8 {offsets = [1, 0], sizes = [16, 128], strides = [1, 1]} : vector<32x128xf32> to vector<16x128xf32>
    %cst_10 = arith.constant 0.000000e+00 : f32
    %13 = vector.broadcast %cst_10 : f32 to vector<15x128xf32>
    %c0_11 = arith.constant 0 : index
    %c0_12 = arith.constant 0 : index
    %14 = vector.load %arg24[%c0_11, %c0_12] : memref<96x128xf32, #tpu.memory_space<vmem>>, vector<1x128xf32>
    tpu.vector_store %arg24[%c0_11, %c0_12], %11 {strides = array<i32>} : memref<96x128xf32, #tpu.memory_space<vmem>>, vector<1x128xf32>,
    %15 = vector.extract_strided_slice %7 {offsets = [0, 0], sizes = [16, 128], strides = [1, 1]} : vector<48x128xf32> to vector<16x128xf32>
    %16 = arith.addf %15, %12 : vector<16x128xf32>
    %c1 = arith.constant 1 : index
    %c0_13 = arith.constant 0 : index
    %17 = vector.load %arg24[%c1, %c0_13] : memref<96x128xf32, #tpu.memory_space<vmem>>, vector<16x128xf32>
    tpu.vector_store %arg24[%c1, %c0_13], %16 {strides = array<i32>} : memref<96x128xf32, #tpu.memory_space<vmem>>, vector<16x128xf32>,
    %c17 = arith.constant 17 : index
    %c0_14 = arith.constant 0 : index
    %18 = vector.load %arg24[%c17, %c0_14] : memref<96x128xf32, #tpu.memory_space<vmem>>, vector<15x128xf32>
    tpu.vector_store %arg24[%c17, %c0_14], %13 {strides = array<i32>} : memref<96x128xf32, #tpu.memory_space<vmem>>, vector<15x128xf32>,
    %c32 = arith.constant 32 : index
    %c0_15 = arith.constant 0 : index
    %19 = vector.load %arg24[%c32, %c0_15] : memref<96x128xf32, #tpu.memory_space<vmem>>, vector<1x128xf32>
    tpu.vector_store %arg24[%c32, %c0_15], %11 {strides = array<i32>} : memref<96x128xf32, #tpu.memory_space<vmem>>, vector<1x128xf32>,
    %20 = vector.extract_strided_slice %7 {offsets = [16, 0], sizes = [16, 128], strides = [1, 1]} : vector<48x128xf32> to vector<16x128xf32>
    %21 = arith.addf %20, %12 : vector<16x128xf32>
    %c33 = arith.constant 33 : index
    %c0_16 = arith.constant 0 : index
    %22 = vector.load %arg24[%c33, %c0_16] : memref<96x128xf32, #tpu.memory_space<vmem>>, vector<16x128xf32>
    tpu.vector_store %arg24[%c33, %c0_16], %21 {strides = array<i32>} : memref<96x128xf32, #tpu.memory_space<vmem>>, vector<16x128xf32>,
    %c49 = arith.constant 49 : index
    %c0_17 = arith.constant 0 : index
    %23 = vector.load %arg24[%c49, %c0_17] : memref<96x128xf32, #tpu.memory_space<vmem>>, vector<15x128xf32>
    tpu.vector_store %arg24[%c49, %c0_17], %13 {strides = array<i32>} : memref<96x128xf32, #tpu.memory_space<vmem>>, vector<15x128xf32>,
    %c64 = arith.constant 64 : index
    %c0_18 = arith.constant 0 : index
    %24 = vector.load %arg24[%c64, %c0_18] : memref<96x128xf32, #tpu.memory_space<vmem>>, vector<1x128xf32>
    tpu.vector_store %arg24[%c64, %c0_18], %11 {strides = array<i32>} : memref<96x128xf32, #tpu.memory_space<vmem>>, vector<1x128xf32>,
    %25 = vector.extract_strided_slice %7 {offsets = [32, 0], sizes = [16, 128], strides = [1, 1]} : vector<48x128xf32> to vector<16x128xf32>
    %26 = arith.addf %25, %12 : vector<16x128xf32>
    %c65 = arith.constant 65 : index
    %c0_19 = arith.constant 0 : index
    %27 = vector.load %arg24[%c65, %c0_19] : memref<96x128xf32, #tpu.memory_space<vmem>>, vector<16x128xf32>
    tpu.vector_store %arg24[%c65, %c0_19], %26 {strides = array<i32>} : memref<96x128xf32, #tpu.memory_space<vmem>>, vector<16x128xf32>,
    %c81 = arith.constant 81 : index
    %c0_20 = arith.constant 0 : index
    %28 = vector.load %arg24[%c81, %c0_20] : memref<96x128xf32, #tpu.memory_space<vmem>>, vector<15x128xf32>
    tpu.vector_store %arg24[%c81, %c0_20], %13 {strides = array<i32>} : memref<96x128xf32, #tpu.memory_space<vmem>>, vector<15x128xf32>,
    %c0_21 = arith.constant 0 : index
    %c0_22 = arith.constant 0 : index
    %29 = vector.load %arg24[%c0_21, %c0_22] : memref<96x128xf32, #tpu.memory_space<vmem>>, vector<96x128xf32>
    %c0_23 = arith.constant 0 : index
    %c0_24 = arith.constant 0 : index
    %30 = vector.load %arg2[%c0_23, %c0_24] : memref<1x32xf32, #tpu.memory_space<vmem>>, vector<1x32xf32>
    %c0_25 = arith.constant 0 : index
    %c0_26 = arith.constant 0 : index
    %c0_27 = arith.constant 0 : index
    %31 = vector.load %arg7[%c0_25, %c0_26, %c0_27] : memref<2x1x128xf32, #tpu.memory_space<vmem>>, vector<1x1x128xf32>
    %32 = vector.shape_cast %31 : vector<1x1x128xf32> to vector<1x128xf32>
    %c0_28 = arith.constant 0 : index
    %c0_29 = arith.constant 0 : index
    %c0_30 = arith.constant 0 : index
    %33 = vector.load %arg8[%c0_28, %c0_29, %c0_30] : memref<2x1x128xf32, #tpu.memory_space<vmem>>, vector<1x1x128xf32>
    %34 = vector.shape_cast %33 : vector<1x1x128xf32> to vector<1x128xf32>
    %cst_31 = arith.constant dense<0.000000e+00> : vector<96xf32>
    %35 = vector.multi_reduction <add>, %29, %cst_31 [1] : vector<96x128xf32> to vector<96xf32>
    %36 = vector.shape_cast %35 : vector<96xf32> to vector<96x1xf32>
    %cst_32 = arith.constant 1.280000e+02 : f32
    %37 = vector.broadcast %cst_32 : f32 to vector<96x1xf32>
    %38 = arith.divf %36, %37 : vector<96x1xf32>
    %39 = vector.broadcast %38 : vector<96x1xf32> to vector<96x128xf32>
    %40 = arith.subf %29, %39 : vector<96x128xf32>
    %41 = arith.mulf %40, %40 : vector<96x128xf32>
    %cst_33 = arith.constant dense<0.000000e+00> : vector<96xf32>
    %42 = vector.multi_reduction <add>, %41, %cst_33 [1] : vector<96x128xf32> to vector<96xf32>
    %43 = vector.shape_cast %42 : vector<96xf32> to vector<96x1xf32>
    %cst_34 = arith.constant 1.280000e+02 : f32
    %44 = vector.broadcast %cst_34 : f32 to vector<96x1xf32>
    %45 = arith.divf %43, %44 : vector<96x1xf32>
    %46 = vector.broadcast %38 : vector<96x1xf32> to vector<96x128xf32>
    %47 = arith.subf %29, %46 : vector<96x128xf32>
    %cst_35 = arith.constant 9.99999997E-7 : f32
    %48 = vector.broadcast %cst_35 : f32 to vector<96x1xf32>
    %49 = arith.addf %45, %48 : vector<96x1xf32>
    %50 = math.rsqrt %49 : vector<96x1xf32>
    %51 = vector.broadcast %50 : vector<96x1xf32> to vector<96x128xf32>
    %52 = arith.mulf %47, %51 : vector<96x128xf32>
    %53 = vector.broadcast %32 : vector<1x128xf32> to vector<96x128xf32>
    %54 = arith.mulf %52, %53 : vector<96x128xf32>
    %55 = vector.broadcast %34 : vector<1x128xf32> to vector<96x128xf32>
    %56 = arith.addf %54, %55 : vector<96x128xf32>
    %57 = arith.truncf %56 : vector<96x128xf32> to vector<96x128xbf16>
    %c0_36 = arith.constant 0 : index
    %c0_37 = arith.constant 0 : index
    %c0_38 = arith.constant 0 : index
    %58 = vector.load %arg9[%c0_36, %c0_37, %c0_38] : memref<2x128x384xbf16, #tpu.memory_space<vmem>>, vector<1x128x384xbf16>
    %59 = vector.shape_cast %58 : vector<1x128x384xbf16> to vector<128x384xbf16>
    %cst_39 = arith.constant dense<0.000000e+00> : vector<96x384xf32>
    %60 = tpu.matmul %57, %59, %cst_39 {dimension_numbers = #tpu.dot_dimension_numbers<[1], [0], [0], [1], [0, 0, 1, 1], [], []>} : vector<96x128xbf16>, vector<128x384xbf16>, vector<96x384xf32> -> vector<96x384xf32>
    %c0_40 = arith.constant 0 : index
    %c0_41 = arith.constant 0 : index
    %c0_42 = arith.constant 0 : index
    %61 = vector.load %arg10[%c0_40, %c0_41, %c0_42] : memref<2x1x384xf32, #tpu.memory_space<vmem>>, vector<1x1x384xf32>
    %62 = vector.shape_cast %61 : vector<1x1x384xf32> to vector<1x384xf32>
    %63 = vector.broadcast %62 : vector<1x384xf32> to vector<96x384xf32>
    %64 = arith.addf %60, %63 : vector<96x384xf32>
    %65 = vector.shape_cast %64 : vector<96x384xf32> to vector<3x32x384xf32>
    %c0_43 = arith.constant 0 : index
    %c0_44 = arith.constant 0 : index
    %c0_45 = arith.constant 0 : index
    %66 = vector.load %arg11[%c0_43, %c0_44, %c0_45] : memref<2x128x128xbf16, #tpu.memory_space<vmem>>, vector<1x128x128xbf16>
    %67 = vector.shape_cast %66 : vector<1x128x128xbf16> to vector<128x128xbf16>
    %68 = vector.extract_strided_slice %65 {offsets = [0, 0, 0], sizes = [3, 32, 32], strides = [1, 1, 1]} : vector<3x32x384xf32> to vector<3x32x32xf32>
    %69 = arith.truncf %68 : vector<3x32x32xf32> to vector<3x32x32xbf16>
    %70 = vector.extract_strided_slice %65 {offsets = [0, 0, 128], sizes = [3, 32, 32], strides = [1, 1, 1]} : vector<3x32x384xf32> to vector<3x32x32xf32>
    %71 = arith.truncf %70 : vector<3x32x32xf32> to vector<3x32x32xbf16>
    %72 = vector.extract_strided_slice %65 {offsets = [0, 0, 256], sizes = [3, 32, 32], strides = [1, 1, 1]} : vector<3x32x384xf32> to vector<3x32x32xf32>
    %73 = arith.truncf %72 : vector<3x32x32xf32> to vector<3x32x32xbf16>
    "tpu.trace_start"() <{level = 10 : i32, message = "bqd,bkd->bqk"}> : () -> ()
    %cst_46 = arith.constant dense<0.000000e+00> : vector<3x32x32xf32>
    %74 = tpu.matmul %69, %71, %cst_46 {dimension_numbers = #tpu.dot_dimension_numbers<[2], [2], [1], [1], [0, 0, 0, 1, 1, 1], [0], [0]>} : vector<3x32x32xbf16>, vector<3x32x32xbf16>, vector<3x32x32xf32> -> vector<3x32x32xf32>
    "tpu.trace_stop"() : () -> ()
    %cst_47 = arith.constant 0.176776692 : f32
    %75 = vector.broadcast %cst_47 : f32 to vector<3x32x32xf32>
    %76 = arith.mulf %74, %75 : vector<3x32x32xf32>
    %77 = vector.shape_cast %30 : vector<1x32xf32> to vector<1x1x32xf32>
    %78 = vector.broadcast %77 : vector<1x1x32xf32> to vector<3x32x32xf32>
    %79 = arith.addf %76, %78 : vector<3x32x32xf32>
    %cst_48 = arith.constant dense<0xFF800000> : vector<3x32xf32>
    %80 = vector.multi_reduction <maximumf>, %79, %cst_48 [2] : vector<3x32x32xf32> to vector<3x32xf32>
    %81 = vector.shape_cast %80 : vector<3x32xf32> to vector<3x32x1xf32>
    %82 = vector.broadcast %81 : vector<3x32x1xf32> to vector<3x32x32xf32>
    %83 = arith.subf %79, %82 : vector<3x32x32xf32>
    %84 = math.exp %83 : vector<3x32x32xf32>
    %cst_49 = arith.constant dense<0.000000e+00> : vector<3x32xf32>
    %85 = vector.multi_reduction <add>, %84, %cst_49 [2] : vector<3x32x32xf32> to vector<3x32xf32>
    %86 = vector.shape_cast %85 : vector<3x32xf32> to vector<3x32x1xf32>
    %87 = vector.broadcast %86 : vector<3x32x1xf32> to vector<3x32x32xf32>
    %88 = arith.divf %84, %87 : vector<3x32x32xf32>
    %89 = arith.truncf %88 : vector<3x32x32xf32> to vector<3x32x32xbf16>
    "tpu.trace_start"() <{level = 10 : i32, message = "bqk,bkd->bqd"}> : () -> ()
    %cst_50 = arith.constant dense<0.000000e+00> : vector<3x32x32xf32>
    %90 = tpu.matmul %89, %73, %cst_50 {dimension_numbers = #tpu.dot_dimension_numbers<[2], [1], [1], [2], [0, 0, 0, 1, 1, 2], [0], [0]>} : vector<3x32x32xbf16>, vector<3x32x32xbf16>, vector<3x32x32xf32> -> vector<3x32x32xf32>
    "tpu.trace_stop"() : () -> ()
    %91 = vector.shape_cast %90 : vector<3x32x32xf32> to vector<96x32xf32>
    %92 = arith.truncf %91 : vector<96x32xf32> to vector<96x32xbf16>
    %93 = vector.extract_strided_slice %67 {offsets = [0, 0], sizes = [32, 128], strides = [1, 1]} : vector<128x128xbf16> to vector<32x128xbf16>
    %cst_51 = arith.constant dense<0.000000e+00> : vector<96x128xf32>
    %94 = tpu.matmul %92, %93, %cst_51 {dimension_numbers = #tpu.dot_dimension_numbers<[1], [0], [0], [1], [0, 0, 1, 1], [], []>} : vector<96x32xbf16>, vector<32x128xbf16>, vector<96x128xf32> -> vector<96x128xf32>
    %95 = vector.extract_strided_slice %65 {offsets = [0, 0, 32], sizes = [3, 32, 32], strides = [1, 1, 1]} : vector<3x32x384xf32> to vector<3x32x32xf32>
    %96 = arith.truncf %95 : vector<3x32x32xf32> to vector<3x32x32xbf16>
    %97 = vector.extract_strided_slice %65 {offsets = [0, 0, 160], sizes = [3, 32, 32], strides = [1, 1, 1]} : vector<3x32x384xf32> to vector<3x32x32xf32>
    %98 = arith.truncf %97 : vector<3x32x32xf32> to vector<3x32x32xbf16>
    %99 = vector.extract_strided_slice %65 {offsets = [0, 0, 288], sizes = [3, 32, 32], strides = [1, 1, 1]} : vector<3x32x384xf32> to vector<3x32x32xf32>
    %100 = arith.truncf %99 : vector<3x32x32xf32> to vector<3x32x32xbf16>
    "tpu.trace_start"() <{level = 10 : i32, message = "bqd,bkd->bqk"}> : () -> ()
    %cst_52 = arith.constant dense<0.000000e+00> : vector<3x32x32xf32>
    %101 = tpu.matmul %96, %98, %cst_52 {dimension_numbers = #tpu.dot_dimension_numbers<[2], [2], [1], [1], [0, 0, 0, 1, 1, 1], [0], [0]>} : vector<3x32x32xbf16>, vector<3x32x32xbf16>, vector<3x32x32xf32> -> vector<3x32x32xf32>
    "tpu.trace_stop"() : () -> ()
    %cst_53 = arith.constant 0.176776692 : f32
    %102 = vector.broadcast %cst_53 : f32 to vector<3x32x32xf32>
    %103 = arith.mulf %101, %102 : vector<3x32x32xf32>
    %104 = vector.shape_cast %30 : vector<1x32xf32> to vector<1x1x32xf32>
    %105 = vector.broadcast %104 : vector<1x1x32xf32> to vector<3x32x32xf32>
    %106 = arith.addf %103, %105 : vector<3x32x32xf32>
    %cst_54 = arith.constant dense<0xFF800000> : vector<3x32xf32>
    %107 = vector.multi_reduction <maximumf>, %106, %cst_54 [2] : vector<3x32x32xf32> to vector<3x32xf32>
    %108 = vector.shape_cast %107 : vector<3x32xf32> to vector<3x32x1xf32>
    %109 = vector.broadcast %108 : vector<3x32x1xf32> to vector<3x32x32xf32>
    %110 = arith.subf %106, %109 : vector<3x32x32xf32>
    %111 = math.exp %110 : vector<3x32x32xf32>
    %cst_55 = arith.constant dense<0.000000e+00> : vector<3x32xf32>
    %112 = vector.multi_reduction <add>, %111, %cst_55 [2] : vector<3x32x32xf32> to vector<3x32xf32>
    %113 = vector.shape_cast %112 : vector<3x32xf32> to vector<3x32x1xf32>
    %114 = vector.broadcast %113 : vector<3x32x1xf32> to vector<3x32x32xf32>
    %115 = arith.divf %111, %114 : vector<3x32x32xf32>
    %116 = arith.truncf %115 : vector<3x32x32xf32> to vector<3x32x32xbf16>
    "tpu.trace_start"() <{level = 10 : i32, message = "bqk,bkd->bqd"}> : () -> ()
    %cst_56 = arith.constant dense<0.000000e+00> : vector<3x32x32xf32>
    %117 = tpu.matmul %116, %100, %cst_56 {dimension_numbers = #tpu.dot_dimension_numbers<[2], [1], [1], [2], [0, 0, 0, 1, 1, 2], [0], [0]>} : vector<3x32x32xbf16>, vector<3x32x32xbf16>, vector<3x32x32xf32> -> vector<3x32x32xf32>
    "tpu.trace_stop"() : () -> ()
    %118 = vector.shape_cast %117 : vector<3x32x32xf32> to vector<96x32xf32>
    %119 = arith.truncf %118 : vector<96x32xf32> to vector<96x32xbf16>
    %120 = vector.extract_strided_slice %67 {offsets = [32, 0], sizes = [32, 128], strides = [1, 1]} : vector<128x128xbf16> to vector<32x128xbf16>
    %cst_57 = arith.constant dense<0.000000e+00> : vector<96x128xf32>
    %121 = tpu.matmul %119, %120, %cst_57 {dimension_numbers = #tpu.dot_dimension_numbers<[1], [0], [0], [1], [0, 0, 1, 1], [], []>} : vector<96x32xbf16>, vector<32x128xbf16>, vector<96x128xf32> -> vector<96x128xf32>
    %122 = arith.addf %94, %121 : vector<96x128xf32>
    %123 = vector.extract_strided_slice %65 {offsets = [0, 0, 64], sizes = [3, 32, 32], strides = [1, 1, 1]} : vector<3x32x384xf32> to vector<3x32x32xf32>
    %124 = arith.truncf %123 : vector<3x32x32xf32> to vector<3x32x32xbf16>
    %125 = vector.extract_strided_slice %65 {offsets = [0, 0, 192], sizes = [3, 32, 32], strides = [1, 1, 1]} : vector<3x32x384xf32> to vector<3x32x32xf32>
    %126 = arith.truncf %125 : vector<3x32x32xf32> to vector<3x32x32xbf16>
    %127 = vector.extract_strided_slice %65 {offsets = [0, 0, 320], sizes = [3, 32, 32], strides = [1, 1, 1]} : vector<3x32x384xf32> to vector<3x32x32xf32>
    %128 = arith.truncf %127 : vector<3x32x32xf32> to vector<3x32x32xbf16>
    "tpu.trace_start"() <{level = 10 : i32, message = "bqd,bkd->bqk"}> : () -> ()
    %cst_58 = arith.constant dense<0.000000e+00> : vector<3x32x32xf32>
    %129 = tpu.matmul %124, %126, %cst_58 {dimension_numbers = #tpu.dot_dimension_numbers<[2], [2], [1], [1], [0, 0, 0, 1, 1, 1], [0], [0]>} : vector<3x32x32xbf16>, vector<3x32x32xbf16>, vector<3x32x32xf32> -> vector<3x32x32xf32>
    "tpu.trace_stop"() : () -> ()
    %cst_59 = arith.constant 0.176776692 : f32
    %130 = vector.broadcast %cst_59 : f32 to vector<3x32x32xf32>
    %131 = arith.mulf %129, %130 : vector<3x32x32xf32>
    %132 = vector.shape_cast %30 : vector<1x32xf32> to vector<1x1x32xf32>
    %133 = vector.broadcast %132 : vector<1x1x32xf32> to vector<3x32x32xf32>
    %134 = arith.addf %131, %133 : vector<3x32x32xf32>
    %cst_60 = arith.constant dense<0xFF800000> : vector<3x32xf32>
    %135 = vector.multi_reduction <maximumf>, %134, %cst_60 [2] : vector<3x32x32xf32> to vector<3x32xf32>
    %136 = vector.shape_cast %135 : vector<3x32xf32> to vector<3x32x1xf32>
    %137 = vector.broadcast %136 : vector<3x32x1xf32> to vector<3x32x32xf32>
    %138 = arith.subf %134, %137 : vector<3x32x32xf32>
    %139 = math.exp %138 : vector<3x32x32xf32>
    %cst_61 = arith.constant dense<0.000000e+00> : vector<3x32xf32>
    %140 = vector.multi_reduction <add>, %139, %cst_61 [2] : vector<3x32x32xf32> to vector<3x32xf32>
    %141 = vector.shape_cast %140 : vector<3x32xf32> to vector<3x32x1xf32>
    %142 = vector.broadcast %141 : vector<3x32x1xf32> to vector<3x32x32xf32>
    %143 = arith.divf %139, %142 : vector<3x32x32xf32>
    %144 = arith.truncf %143 : vector<3x32x32xf32> to vector<3x32x32xbf16>
    "tpu.trace_start"() <{level = 10 : i32, message = "bqk,bkd->bqd"}> : () -> ()
    %cst_62 = arith.constant dense<0.000000e+00> : vector<3x32x32xf32>
    %145 = tpu.matmul %144, %128, %cst_62 {dimension_numbers = #tpu.dot_dimension_numbers<[2], [1], [1], [2], [0, 0, 0, 1, 1, 2], [0], [0]>} : vector<3x32x32xbf16>, vector<3x32x32xbf16>, vector<3x32x32xf32> -> vector<3x32x32xf32>
    "tpu.trace_stop"() : () -> ()
    %146 = vector.shape_cast %145 : vector<3x32x32xf32> to vector<96x32xf32>
    %147 = arith.truncf %146 : vector<96x32xf32> to vector<96x32xbf16>
    %148 = vector.extract_strided_slice %67 {offsets = [64, 0], sizes = [32, 128], strides = [1, 1]} : vector<128x128xbf16> to vector<32x128xbf16>
    %cst_63 = arith.constant dense<0.000000e+00> : vector<96x128xf32>
    %149 = tpu.matmul %147, %148, %cst_63 {dimension_numbers = #tpu.dot_dimension_numbers<[1], [0], [0], [1], [0, 0, 1, 1], [], []>} : vector<96x32xbf16>, vector<32x128xbf16>, vector<96x128xf32> -> vector<96x128xf32>
    %150 = arith.addf %122, %149 : vector<96x128xf32>
    %151 = vector.extract_strided_slice %65 {offsets = [0, 0, 96], sizes = [3, 32, 32], strides = [1, 1, 1]} : vector<3x32x384xf32> to vector<3x32x32xf32>
    %152 = arith.truncf %151 : vector<3x32x32xf32> to vector<3x32x32xbf16>
    %153 = vector.extract_strided_slice %65 {offsets = [0, 0, 224], sizes = [3, 32, 32], strides = [1, 1, 1]} : vector<3x32x384xf32> to vector<3x32x32xf32>
    %154 = arith.truncf %153 : vector<3x32x32xf32> to vector<3x32x32xbf16>
    %155 = vector.extract_strided_slice %65 {offsets = [0, 0, 352], sizes = [3, 32, 32], strides = [1, 1, 1]} : vector<3x32x384xf32> to vector<3x32x32xf32>
    %156 = arith.truncf %155 : vector<3x32x32xf32> to vector<3x32x32xbf16>
    "tpu.trace_start"() <{level = 10 : i32, message = "bqd,bkd->bqk"}> : () -> ()
    %cst_64 = arith.constant dense<0.000000e+00> : vector<3x32x32xf32>
    %157 = tpu.matmul %152, %154, %cst_64 {dimension_numbers = #tpu.dot_dimension_numbers<[2], [2], [1], [1], [0, 0, 0, 1, 1, 1], [0], [0]>} : vector<3x32x32xbf16>, vector<3x32x32xbf16>, vector<3x32x32xf32> -> vector<3x32x32xf32>
    "tpu.trace_stop"() : () -> ()
    %cst_65 = arith.constant 0.176776692 : f32
    %158 = vector.broadcast %cst_65 : f32 to vector<3x32x32xf32>
    %159 = arith.mulf %157, %158 : vector<3x32x32xf32>
    %160 = vector.shape_cast %30 : vector<1x32xf32> to vector<1x1x32xf32>
    %161 = vector.broadcast %160 : vector<1x1x32xf32> to vector<3x32x32xf32>
    %162 = arith.addf %159, %161 : vector<3x32x32xf32>
    %cst_66 = arith.constant dense<0xFF800000> : vector<3x32xf32>
    %163 = vector.multi_reduction <maximumf>, %162, %cst_66 [2] : vector<3x32x32xf32> to vector<3x32xf32>
    %164 = vector.shape_cast %163 : vector<3x32xf32> to vector<3x32x1xf32>
    %165 = vector.broadcast %164 : vector<3x32x1xf32> to vector<3x32x32xf32>
    %166 = arith.subf %162, %165 : vector<3x32x32xf32>
    %167 = math.exp %166 : vector<3x32x32xf32>
    %cst_67 = arith.constant dense<0.000000e+00> : vector<3x32xf32>
    %168 = vector.multi_reduction <add>, %167, %cst_67 [2] : vector<3x32x32xf32> to vector<3x32xf32>
    %169 = vector.shape_cast %168 : vector<3x32xf32> to vector<3x32x1xf32>
    %170 = vector.broadcast %169 : vector<3x32x1xf32> to vector<3x32x32xf32>
    %171 = arith.divf %167, %170 : vector<3x32x32xf32>
    %172 = arith.truncf %171 : vector<3x32x32xf32> to vector<3x32x32xbf16>
    "tpu.trace_start"() <{level = 10 : i32, message = "bqk,bkd->bqd"}> : () -> ()
    %cst_68 = arith.constant dense<0.000000e+00> : vector<3x32x32xf32>
    %173 = tpu.matmul %172, %156, %cst_68 {dimension_numbers = #tpu.dot_dimension_numbers<[2], [1], [1], [2], [0, 0, 0, 1, 1, 2], [0], [0]>} : vector<3x32x32xbf16>, vector<3x32x32xbf16>, vector<3x32x32xf32> -> vector<3x32x32xf32>
    "tpu.trace_stop"() : () -> ()
    %174 = vector.shape_cast %173 : vector<3x32x32xf32> to vector<96x32xf32>
    %175 = arith.truncf %174 : vector<96x32xf32> to vector<96x32xbf16>
    %176 = vector.extract_strided_slice %67 {offsets = [96, 0], sizes = [32, 128], strides = [1, 1]} : vector<128x128xbf16> to vector<32x128xbf16>
    %cst_69 = arith.constant dense<0.000000e+00> : vector<96x128xf32>
    %177 = tpu.matmul %175, %176, %cst_69 {dimension_numbers = #tpu.dot_dimension_numbers<[1], [0], [0], [1], [0, 0, 1, 1], [], []>} : vector<96x32xbf16>, vector<32x128xbf16>, vector<96x128xf32> -> vector<96x128xf32>
    %178 = arith.addf %150, %177 : vector<96x128xf32>
    %179 = arith.addf %29, %178 : vector<96x128xf32>
    %c0_70 = arith.constant 0 : index
    %c0_71 = arith.constant 0 : index
    %c0_72 = arith.constant 0 : index
    %180 = vector.load %arg12[%c0_70, %c0_71, %c0_72] : memref<2x1x128xf32, #tpu.memory_space<vmem>>, vector<1x1x128xf32>
    %181 = vector.shape_cast %180 : vector<1x1x128xf32> to vector<1x128xf32>
    %182 = vector.broadcast %181 : vector<1x128xf32> to vector<96x128xf32>
    %183 = arith.addf %179, %182 : vector<96x128xf32>
    %c0_73 = arith.constant 0 : index
    %c0_74 = arith.constant 0 : index
    %c0_75 = arith.constant 0 : index
    %184 = vector.load %arg13[%c0_73, %c0_74, %c0_75] : memref<2x1x128xf32, #tpu.memory_space<vmem>>, vector<1x1x128xf32>
    %185 = vector.shape_cast %184 : vector<1x1x128xf32> to vector<1x128xf32>
    %c0_76 = arith.constant 0 : index
    %c0_77 = arith.constant 0 : index
    %c0_78 = arith.constant 0 : index
    %186 = vector.load %arg14[%c0_76, %c0_77, %c0_78] : memref<2x1x128xf32, #tpu.memory_space<vmem>>, vector<1x1x128xf32>
    %187 = vector.shape_cast %186 : vector<1x1x128xf32> to vector<1x128xf32>
    %cst_79 = arith.constant dense<0.000000e+00> : vector<96xf32>
    %188 = vector.multi_reduction <add>, %183, %cst_79 [1] : vector<96x128xf32> to vector<96xf32>
    %189 = vector.shape_cast %188 : vector<96xf32> to vector<96x1xf32>
    %cst_80 = arith.constant 1.280000e+02 : f32
    %190 = vector.broadcast %cst_80 : f32 to vector<96x1xf32>
    %191 = arith.divf %189, %190 : vector<96x1xf32>
    %192 = vector.broadcast %191 : vector<96x1xf32> to vector<96x128xf32>
    %193 = arith.subf %183, %192 : vector<96x128xf32>
    %194 = arith.mulf %193, %193 : vector<96x128xf32>
    %cst_81 = arith.constant dense<0.000000e+00> : vector<96xf32>
    %195 = vector.multi_reduction <add>, %194, %cst_81 [1] : vector<96x128xf32> to vector<96xf32>
    %196 = vector.shape_cast %195 : vector<96xf32> to vector<96x1xf32>
    %cst_82 = arith.constant 1.280000e+02 : f32
    %197 = vector.broadcast %cst_82 : f32 to vector<96x1xf32>
    %198 = arith.divf %196, %197 : vector<96x1xf32>
    %199 = vector.broadcast %191 : vector<96x1xf32> to vector<96x128xf32>
    %200 = arith.subf %183, %199 : vector<96x128xf32>
    %cst_83 = arith.constant 9.99999997E-7 : f32
    %201 = vector.broadcast %cst_83 : f32 to vector<96x1xf32>
    %202 = arith.addf %198, %201 : vector<96x1xf32>
    %203 = math.rsqrt %202 : vector<96x1xf32>
    %204 = vector.broadcast %203 : vector<96x1xf32> to vector<96x128xf32>
    %205 = arith.mulf %200, %204 : vector<96x128xf32>
    %206 = vector.broadcast %185 : vector<1x128xf32> to vector<96x128xf32>
    %207 = arith.mulf %205, %206 : vector<96x128xf32>
    %208 = vector.broadcast %187 : vector<1x128xf32> to vector<96x128xf32>
    %209 = arith.addf %207, %208 : vector<96x128xf32>
    %210 = arith.truncf %209 : vector<96x128xf32> to vector<96x128xbf16>
    %c0_84 = arith.constant 0 : index
    %c0_85 = arith.constant 0 : index
    %c0_86 = arith.constant 0 : index
    %211 = vector.load %arg15[%c0_84, %c0_85, %c0_86] : memref<2x128x256xbf16, #tpu.memory_space<vmem>>, vector<1x128x256xbf16>
    %212 = vector.shape_cast %211 : vector<1x128x256xbf16> to vector<128x256xbf16>
    %cst_87 = arith.constant dense<0.000000e+00> : vector<96x256xf32>
    %213 = tpu.matmul %210, %212, %cst_87 {dimension_numbers = #tpu.dot_dimension_numbers<[1], [0], [0], [1], [0, 0, 1, 1], [], []>} : vector<96x128xbf16>, vector<128x256xbf16>, vector<96x256xf32> -> vector<96x256xf32>
    %c0_88 = arith.constant 0 : index
    %c0_89 = arith.constant 0 : index
    %c0_90 = arith.constant 0 : index
    %214 = vector.load %arg16[%c0_88, %c0_89, %c0_90] : memref<2x1x256xf32, #tpu.memory_space<vmem>>, vector<1x1x256xf32>
    %215 = vector.shape_cast %214 : vector<1x1x256xf32> to vector<1x256xf32>
    %216 = vector.broadcast %215 : vector<1x256xf32> to vector<96x256xf32>
    %217 = arith.addf %213, %216 : vector<96x256xf32>
    %218 = arith.mulf %217, %217 : vector<96x256xf32>
    %219 = arith.mulf %217, %218 : vector<96x256xf32>
    %cst_91 = arith.constant 4.471500e-02 : f32
    %220 = vector.broadcast %cst_91 : f32 to vector<96x256xf32>
    %221 = arith.mulf %220, %219 : vector<96x256xf32>
    %222 = arith.addf %217, %221 : vector<96x256xf32>
    %cst_92 = arith.constant 0.797884583 : f32
    %223 = vector.broadcast %cst_92 : f32 to vector<96x256xf32>
    %224 = arith.mulf %223, %222 : vector<96x256xf32>
    %225 = math.tanh %224 : vector<96x256xf32>
    %cst_93 = arith.constant 1.000000e+00 : f32
    %226 = vector.broadcast %cst_93 : f32 to vector<96x256xf32>
    %227 = arith.addf %226, %225 : vector<96x256xf32>
    %cst_94 = arith.constant 5.000000e-01 : f32
    %228 = vector.broadcast %cst_94 : f32 to vector<96x256xf32>
    %229 = arith.mulf %228, %227 : vector<96x256xf32>
    %230 = arith.mulf %217, %229 : vector<96x256xf32>
    %231 = arith.truncf %230 : vector<96x256xf32> to vector<96x256xbf16>
    %c0_95 = arith.constant 0 : index
    %c0_96 = arith.constant 0 : index
    %c0_97 = arith.constant 0 : index
    %232 = vector.load %arg17[%c0_95, %c0_96, %c0_97] : memref<2x256x128xbf16, #tpu.memory_space<vmem>>, vector<1x256x128xbf16>
    %233 = vector.shape_cast %232 : vector<1x256x128xbf16> to vector<256x128xbf16>
    %cst_98 = arith.constant dense<0.000000e+00> : vector<96x128xf32>
    %234 = tpu.matmul %231, %233, %cst_98 {dimension_numbers = #tpu.dot_dimension_numbers<[1], [0], [0], [1], [0, 0, 1, 1], [], []>} : vector<96x256xbf16>, vector<256x128xbf16>, vector<96x128xf32> -> vector<96x128xf32>
    %235 = arith.addf %183, %234 : vector<96x128xf32>
    %c0_99 = arith.constant 0 : index
    %c0_100 = arith.constant 0 : index
    %c0_101 = arith.constant 0 : index
    %236 = vector.load %arg18[%c0_99, %c0_100, %c0_101] : memref<2x1x128xf32, #tpu.memory_space<vmem>>, vector<1x1x128xf32>
    %237 = vector.shape_cast %236 : vector<1x1x128xf32> to vector<1x128xf32>
    %238 = vector.broadcast %237 : vector<1x128xf32> to vector<96x128xf32>
    %239 = arith.addf %235, %238 : vector<96x128xf32>
    %c1_102 = arith.constant 1 : index
    %c0_103 = arith.constant 0 : index
    %c0_104 = arith.constant 0 : index
    %240 = vector.load %arg7[%c1_102, %c0_103, %c0_104] : memref<2x1x128xf32, #tpu.memory_space<vmem>>, vector<1x1x128xf32>
    %241 = vector.shape_cast %240 : vector<1x1x128xf32> to vector<1x128xf32>
    %c1_105 = arith.constant 1 : index
    %c0_106 = arith.constant 0 : index
    %c0_107 = arith.constant 0 : index
    %242 = vector.load %arg8[%c1_105, %c0_106, %c0_107] : memref<2x1x128xf32, #tpu.memory_space<vmem>>, vector<1x1x128xf32>
    %243 = vector.shape_cast %242 : vector<1x1x128xf32> to vector<1x128xf32>
    %cst_108 = arith.constant dense<0.000000e+00> : vector<96xf32>
    %244 = vector.multi_reduction <add>, %239, %cst_108 [1] : vector<96x128xf32> to vector<96xf32>
    %245 = vector.shape_cast %244 : vector<96xf32> to vector<96x1xf32>
    %cst_109 = arith.constant 1.280000e+02 : f32
    %246 = vector.broadcast %cst_109 : f32 to vector<96x1xf32>
    %247 = arith.divf %245, %246 : vector<96x1xf32>
    %248 = vector.broadcast %247 : vector<96x1xf32> to vector<96x128xf32>
    %249 = arith.subf %239, %248 : vector<96x128xf32>
    %250 = arith.mulf %249, %249 : vector<96x128xf32>
    %cst_110 = arith.constant dense<0.000000e+00> : vector<96xf32>
    %251 = vector.multi_reduction <add>, %250, %cst_110 [1] : vector<96x128xf32> to vector<96xf32>
    %252 = vector.shape_cast %251 : vector<96xf32> to vector<96x1xf32>
    %cst_111 = arith.constant 1.280000e+02 : f32
    %253 = vector.broadcast %cst_111 : f32 to vector<96x1xf32>
    %254 = arith.divf %252, %253 : vector<96x1xf32>
    %255 = vector.broadcast %247 : vector<96x1xf32> to vector<96x128xf32>
    %256 = arith.subf %239, %255 : vector<96x128xf32>
    %cst_112 = arith.constant 9.99999997E-7 : f32
    %257 = vector.broadcast %cst_112 : f32 to vector<96x1xf32>
    %258 = arith.addf %254, %257 : vector<96x1xf32>
    %259 = math.rsqrt %258 : vector<96x1xf32>
    %260 = vector.broadcast %259 : vector<96x1xf32> to vector<96x128xf32>
    %261 = arith.mulf %256, %260 : vector<96x128xf32>
    %262 = vector.broadcast %241 : vector<1x128xf32> to vector<96x128xf32>
    %263 = arith.mulf %261, %262 : vector<96x128xf32>
    %264 = vector.broadcast %243 : vector<1x128xf32> to vector<96x128xf32>
    %265 = arith.addf %263, %264 : vector<96x128xf32>
    %266 = arith.truncf %265 : vector<96x128xf32> to vector<96x128xbf16>
    %c1_113 = arith.constant 1 : index
    %c0_114 = arith.constant 0 : index
    %c0_115 = arith.constant 0 : index
    %267 = vector.load %arg9[%c1_113, %c0_114, %c0_115] : memref<2x128x384xbf16, #tpu.memory_space<vmem>>, vector<1x128x384xbf16>
    %268 = vector.shape_cast %267 : vector<1x128x384xbf16> to vector<128x384xbf16>
    %cst_116 = arith.constant dense<0.000000e+00> : vector<96x384xf32>
    %269 = tpu.matmul %266, %268, %cst_116 {dimension_numbers = #tpu.dot_dimension_numbers<[1], [0], [0], [1], [0, 0, 1, 1], [], []>} : vector<96x128xbf16>, vector<128x384xbf16>, vector<96x384xf32> -> vector<96x384xf32>
    %c1_117 = arith.constant 1 : index
    %c0_118 = arith.constant 0 : index
    %c0_119 = arith.constant 0 : index
    %270 = vector.load %arg10[%c1_117, %c0_118, %c0_119] : memref<2x1x384xf32, #tpu.memory_space<vmem>>, vector<1x1x384xf32>
    %271 = vector.shape_cast %270 : vector<1x1x384xf32> to vector<1x384xf32>
    %272 = vector.broadcast %271 : vector<1x384xf32> to vector<96x384xf32>
    %273 = arith.addf %269, %272 : vector<96x384xf32>
    %274 = vector.shape_cast %273 : vector<96x384xf32> to vector<3x32x384xf32>
    %c1_120 = arith.constant 1 : index
    %c0_121 = arith.constant 0 : index
    %c0_122 = arith.constant 0 : index
    %275 = vector.load %arg11[%c1_120, %c0_121, %c0_122] : memref<2x128x128xbf16, #tpu.memory_space<vmem>>, vector<1x128x128xbf16>
    %276 = vector.shape_cast %275 : vector<1x128x128xbf16> to vector<128x128xbf16>
    %277 = vector.extract_strided_slice %274 {offsets = [0, 0, 0], sizes = [3, 32, 32], strides = [1, 1, 1]} : vector<3x32x384xf32> to vector<3x32x32xf32>
    %278 = arith.truncf %277 : vector<3x32x32xf32> to vector<3x32x32xbf16>
    %279 = vector.extract_strided_slice %274 {offsets = [0, 0, 128], sizes = [3, 32, 32], strides = [1, 1, 1]} : vector<3x32x384xf32> to vector<3x32x32xf32>
    %280 = arith.truncf %279 : vector<3x32x32xf32> to vector<3x32x32xbf16>
    %281 = vector.extract_strided_slice %274 {offsets = [0, 0, 256], sizes = [3, 32, 32], strides = [1, 1, 1]} : vector<3x32x384xf32> to vector<3x32x32xf32>
    %282 = arith.truncf %281 : vector<3x32x32xf32> to vector<3x32x32xbf16>
    "tpu.trace_start"() <{level = 10 : i32, message = "bqd,bkd->bqk"}> : () -> ()
    %cst_123 = arith.constant dense<0.000000e+00> : vector<3x32x32xf32>
    %283 = tpu.matmul %278, %280, %cst_123 {dimension_numbers = #tpu.dot_dimension_numbers<[2], [2], [1], [1], [0, 0, 0, 1, 1, 1], [0], [0]>} : vector<3x32x32xbf16>, vector<3x32x32xbf16>, vector<3x32x32xf32> -> vector<3x32x32xf32>
    "tpu.trace_stop"() : () -> ()
    %cst_124 = arith.constant 0.176776692 : f32
    %284 = vector.broadcast %cst_124 : f32 to vector<3x32x32xf32>
    %285 = arith.mulf %283, %284 : vector<3x32x32xf32>
    %286 = vector.shape_cast %30 : vector<1x32xf32> to vector<1x1x32xf32>
    %287 = vector.broadcast %286 : vector<1x1x32xf32> to vector<3x32x32xf32>
    %288 = arith.addf %285, %287 : vector<3x32x32xf32>
    %cst_125 = arith.constant dense<0xFF800000> : vector<3x32xf32>
    %289 = vector.multi_reduction <maximumf>, %288, %cst_125 [2] : vector<3x32x32xf32> to vector<3x32xf32>
    %290 = vector.shape_cast %289 : vector<3x32xf32> to vector<3x32x1xf32>
    %291 = vector.broadcast %290 : vector<3x32x1xf32> to vector<3x32x32xf32>
    %292 = arith.subf %288, %291 : vector<3x32x32xf32>
    %293 = math.exp %292 : vector<3x32x32xf32>
    %cst_126 = arith.constant dense<0.000000e+00> : vector<3x32xf32>
    %294 = vector.multi_reduction <add>, %293, %cst_126 [2] : vector<3x32x32xf32> to vector<3x32xf32>
    %295 = vector.shape_cast %294 : vector<3x32xf32> to vector<3x32x1xf32>
    %296 = vector.broadcast %295 : vector<3x32x1xf32> to vector<3x32x32xf32>
    %297 = arith.divf %293, %296 : vector<3x32x32xf32>
    %298 = arith.truncf %297 : vector<3x32x32xf32> to vector<3x32x32xbf16>
    "tpu.trace_start"() <{level = 10 : i32, message = "bqk,bkd->bqd"}> : () -> ()
    %cst_127 = arith.constant dense<0.000000e+00> : vector<3x32x32xf32>
    %299 = tpu.matmul %298, %282, %cst_127 {dimension_numbers = #tpu.dot_dimension_numbers<[2], [1], [1], [2], [0, 0, 0, 1, 1, 2], [0], [0]>} : vector<3x32x32xbf16>, vector<3x32x32xbf16>, vector<3x32x32xf32> -> vector<3x32x32xf32>
    "tpu.trace_stop"() : () -> ()
    %300 = vector.shape_cast %299 : vector<3x32x32xf32> to vector<96x32xf32>
    %301 = arith.truncf %300 : vector<96x32xf32> to vector<96x32xbf16>
    %302 = vector.extract_strided_slice %276 {offsets = [0, 0], sizes = [32, 128], strides = [1, 1]} : vector<128x128xbf16> to vector<32x128xbf16>
    %cst_128 = arith.constant dense<0.000000e+00> : vector<96x128xf32>
    %303 = tpu.matmul %301, %302, %cst_128 {dimension_numbers = #tpu.dot_dimension_numbers<[1], [0], [0], [1], [0, 0, 1, 1], [], []>} : vector<96x32xbf16>, vector<32x128xbf16>, vector<96x128xf32> -> vector<96x128xf32>
    %304 = vector.extract_strided_slice %274 {offsets = [0, 0, 32], sizes = [3, 32, 32], strides = [1, 1, 1]} : vector<3x32x384xf32> to vector<3x32x32xf32>
    %305 = arith.truncf %304 : vector<3x32x32xf32> to vector<3x32x32xbf16>
    %306 = vector.extract_strided_slice %274 {offsets = [0, 0, 160], sizes = [3, 32, 32], strides = [1, 1, 1]} : vector<3x32x384xf32> to vector<3x32x32xf32>
    %307 = arith.truncf %306 : vector<3x32x32xf32> to vector<3x32x32xbf16>
    %308 = vector.extract_strided_slice %274 {offsets = [0, 0, 288], sizes = [3, 32, 32], strides = [1, 1, 1]} : vector<3x32x384xf32> to vector<3x32x32xf32>
    %309 = arith.truncf %308 : vector<3x32x32xf32> to vector<3x32x32xbf16>
    "tpu.trace_start"() <{level = 10 : i32, message = "bqd,bkd->bqk"}> : () -> ()
    %cst_129 = arith.constant dense<0.000000e+00> : vector<3x32x32xf32>
    %310 = tpu.matmul %305, %307, %cst_129 {dimension_numbers = #tpu.dot_dimension_numbers<[2], [2], [1], [1], [0, 0, 0, 1, 1, 1], [0], [0]>} : vector<3x32x32xbf16>, vector<3x32x32xbf16>, vector<3x32x32xf32> -> vector<3x32x32xf32>
    "tpu.trace_stop"() : () -> ()
    %cst_130 = arith.constant 0.176776692 : f32
    %311 = vector.broadcast %cst_130 : f32 to vector<3x32x32xf32>
    %312 = arith.mulf %310, %311 : vector<3x32x32xf32>
    %313 = vector.shape_cast %30 : vector<1x32xf32> to vector<1x1x32xf32>
    %314 = vector.broadcast %313 : vector<1x1x32xf32> to vector<3x32x32xf32>
    %315 = arith.addf %312, %314 : vector<3x32x32xf32>
    %cst_131 = arith.constant dense<0xFF800000> : vector<3x32xf32>
    %316 = vector.multi_reduction <maximumf>, %315, %cst_131 [2] : vector<3x32x32xf32> to vector<3x32xf32>
    %317 = vector.shape_cast %316 : vector<3x32xf32> to vector<3x32x1xf32>
    %318 = vector.broadcast %317 : vector<3x32x1xf32> to vector<3x32x32xf32>
    %319 = arith.subf %315, %318 : vector<3x32x32xf32>
    %320 = math.exp %319 : vector<3x32x32xf32>
    %cst_132 = arith.constant dense<0.000000e+00> : vector<3x32xf32>
    %321 = vector.multi_reduction <add>, %320, %cst_132 [2] : vector<3x32x32xf32> to vector<3x32xf32>
    %322 = vector.shape_cast %321 : vector<3x32xf32> to vector<3x32x1xf32>
    %323 = vector.broadcast %322 : vector<3x32x1xf32> to vector<3x32x32xf32>
    %324 = arith.divf %320, %323 : vector<3x32x32xf32>
    %325 = arith.truncf %324 : vector<3x32x32xf32> to vector<3x32x32xbf16>
    "tpu.trace_start"() <{level = 10 : i32, message = "bqk,bkd->bqd"}> : () -> ()
    %cst_133 = arith.constant dense<0.000000e+00> : vector<3x32x32xf32>
    %326 = tpu.matmul %325, %309, %cst_133 {dimension_numbers = #tpu.dot_dimension_numbers<[2], [1], [1], [2], [0, 0, 0, 1, 1, 2], [0], [0]>} : vector<3x32x32xbf16>, vector<3x32x32xbf16>, vector<3x32x32xf32> -> vector<3x32x32xf32>
    "tpu.trace_stop"() : () -> ()
    %327 = vector.shape_cast %326 : vector<3x32x32xf32> to vector<96x32xf32>
    %328 = arith.truncf %327 : vector<96x32xf32> to vector<96x32xbf16>
    %329 = vector.extract_strided_slice %276 {offsets = [32, 0], sizes = [32, 128], strides = [1, 1]} : vector<128x128xbf16> to vector<32x128xbf16>
    %cst_134 = arith.constant dense<0.000000e+00> : vector<96x128xf32>
    %330 = tpu.matmul %328, %329, %cst_134 {dimension_numbers = #tpu.dot_dimension_numbers<[1], [0], [0], [1], [0, 0, 1, 1], [], []>} : vector<96x32xbf16>, vector<32x128xbf16>, vector<96x128xf32> -> vector<96x128xf32>
    %331 = arith.addf %303, %330 : vector<96x128xf32>
    %332 = vector.extract_strided_slice %274 {offsets = [0, 0, 64], sizes = [3, 32, 32], strides = [1, 1, 1]} : vector<3x32x384xf32> to vector<3x32x32xf32>
    %333 = arith.truncf %332 : vector<3x32x32xf32> to vector<3x32x32xbf16>
    %334 = vector.extract_strided_slice %274 {offsets = [0, 0, 192], sizes = [3, 32, 32], strides = [1, 1, 1]} : vector<3x32x384xf32> to vector<3x32x32xf32>
    %335 = arith.truncf %334 : vector<3x32x32xf32> to vector<3x32x32xbf16>
    %336 = vector.extract_strided_slice %274 {offsets = [0, 0, 320], sizes = [3, 32, 32], strides = [1, 1, 1]} : vector<3x32x384xf32> to vector<3x32x32xf32>
    %337 = arith.truncf %336 : vector<3x32x32xf32> to vector<3x32x32xbf16>
    "tpu.trace_start"() <{level = 10 : i32, message = "bqd,bkd->bqk"}> : () -> ()
    %cst_135 = arith.constant dense<0.000000e+00> : vector<3x32x32xf32>
    %338 = tpu.matmul %333, %335, %cst_135 {dimension_numbers = #tpu.dot_dimension_numbers<[2], [2], [1], [1], [0, 0, 0, 1, 1, 1], [0], [0]>} : vector<3x32x32xbf16>, vector<3x32x32xbf16>, vector<3x32x32xf32> -> vector<3x32x32xf32>
    "tpu.trace_stop"() : () -> ()
    %cst_136 = arith.constant 0.176776692 : f32
    %339 = vector.broadcast %cst_136 : f32 to vector<3x32x32xf32>
    %340 = arith.mulf %338, %339 : vector<3x32x32xf32>
    %341 = vector.shape_cast %30 : vector<1x32xf32> to vector<1x1x32xf32>
    %342 = vector.broadcast %341 : vector<1x1x32xf32> to vector<3x32x32xf32>
    %343 = arith.addf %340, %342 : vector<3x32x32xf32>
    %cst_137 = arith.constant dense<0xFF800000> : vector<3x32xf32>
    %344 = vector.multi_reduction <maximumf>, %343, %cst_137 [2] : vector<3x32x32xf32> to vector<3x32xf32>
    %345 = vector.shape_cast %344 : vector<3x32xf32> to vector<3x32x1xf32>
    %346 = vector.broadcast %345 : vector<3x32x1xf32> to vector<3x32x32xf32>
    %347 = arith.subf %343, %346 : vector<3x32x32xf32>
    %348 = math.exp %347 : vector<3x32x32xf32>
    %cst_138 = arith.constant dense<0.000000e+00> : vector<3x32xf32>
    %349 = vector.multi_reduction <add>, %348, %cst_138 [2] : vector<3x32x32xf32> to vector<3x32xf32>
    %350 = vector.shape_cast %349 : vector<3x32xf32> to vector<3x32x1xf32>
    %351 = vector.broadcast %350 : vector<3x32x1xf32> to vector<3x32x32xf32>
    %352 = arith.divf %348, %351 : vector<3x32x32xf32>
    %353 = arith.truncf %352 : vector<3x32x32xf32> to vector<3x32x32xbf16>
    "tpu.trace_start"() <{level = 10 : i32, message = "bqk,bkd->bqd"}> : () -> ()
    %cst_139 = arith.constant dense<0.000000e+00> : vector<3x32x32xf32>
    %354 = tpu.matmul %353, %337, %cst_139 {dimension_numbers = #tpu.dot_dimension_numbers<[2], [1], [1], [2], [0, 0, 0, 1, 1, 2], [0], [0]>} : vector<3x32x32xbf16>, vector<3x32x32xbf16>, vector<3x32x32xf32> -> vector<3x32x32xf32>
    "tpu.trace_stop"() : () -> ()
    %355 = vector.shape_cast %354 : vector<3x32x32xf32> to vector<96x32xf32>
    %356 = arith.truncf %355 : vector<96x32xf32> to vector<96x32xbf16>
    %357 = vector.extract_strided_slice %276 {offsets = [64, 0], sizes = [32, 128], strides = [1, 1]} : vector<128x128xbf16> to vector<32x128xbf16>
    %cst_140 = arith.constant dense<0.000000e+00> : vector<96x128xf32>
    %358 = tpu.matmul %356, %357, %cst_140 {dimension_numbers = #tpu.dot_dimension_numbers<[1], [0], [0], [1], [0, 0, 1, 1], [], []>} : vector<96x32xbf16>, vector<32x128xbf16>, vector<96x128xf32> -> vector<96x128xf32>
    %359 = arith.addf %331, %358 : vector<96x128xf32>
    %360 = vector.extract_strided_slice %274 {offsets = [0, 0, 96], sizes = [3, 32, 32], strides = [1, 1, 1]} : vector<3x32x384xf32> to vector<3x32x32xf32>
    %361 = arith.truncf %360 : vector<3x32x32xf32> to vector<3x32x32xbf16>
    %362 = vector.extract_strided_slice %274 {offsets = [0, 0, 224], sizes = [3, 32, 32], strides = [1, 1, 1]} : vector<3x32x384xf32> to vector<3x32x32xf32>
    %363 = arith.truncf %362 : vector<3x32x32xf32> to vector<3x32x32xbf16>
    %364 = vector.extract_strided_slice %274 {offsets = [0, 0, 352], sizes = [3, 32, 32], strides = [1, 1, 1]} : vector<3x32x384xf32> to vector<3x32x32xf32>
    %365 = arith.truncf %364 : vector<3x32x32xf32> to vector<3x32x32xbf16>
    "tpu.trace_start"() <{level = 10 : i32, message = "bqd,bkd->bqk"}> : () -> ()
    %cst_141 = arith.constant dense<0.000000e+00> : vector<3x32x32xf32>
    %366 = tpu.matmul %361, %363, %cst_141 {dimension_numbers = #tpu.dot_dimension_numbers<[2], [2], [1], [1], [0, 0, 0, 1, 1, 1], [0], [0]>} : vector<3x32x32xbf16>, vector<3x32x32xbf16>, vector<3x32x32xf32> -> vector<3x32x32xf32>
    "tpu.trace_stop"() : () -> ()
    %cst_142 = arith.constant 0.176776692 : f32
    %367 = vector.broadcast %cst_142 : f32 to vector<3x32x32xf32>
    %368 = arith.mulf %366, %367 : vector<3x32x32xf32>
    %369 = vector.shape_cast %30 : vector<1x32xf32> to vector<1x1x32xf32>
    %370 = vector.broadcast %369 : vector<1x1x32xf32> to vector<3x32x32xf32>
    %371 = arith.addf %368, %370 : vector<3x32x32xf32>
    %cst_143 = arith.constant dense<0xFF800000> : vector<3x32xf32>
    %372 = vector.multi_reduction <maximumf>, %371, %cst_143 [2] : vector<3x32x32xf32> to vector<3x32xf32>
    %373 = vector.shape_cast %372 : vector<3x32xf32> to vector<3x32x1xf32>
    %374 = vector.broadcast %373 : vector<3x32x1xf32> to vector<3x32x32xf32>
    %375 = arith.subf %371, %374 : vector<3x32x32xf32>
    %376 = math.exp %375 : vector<3x32x32xf32>
    %cst_144 = arith.constant dense<0.000000e+00> : vector<3x32xf32>
    %377 = vector.multi_reduction <add>, %376, %cst_144 [2] : vector<3x32x32xf32> to vector<3x32xf32>
    %378 = vector.shape_cast %377 : vector<3x32xf32> to vector<3x32x1xf32>
    %379 = vector.broadcast %378 : vector<3x32x1xf32> to vector<3x32x32xf32>
    %380 = arith.divf %376, %379 : vector<3x32x32xf32>
    %381 = arith.truncf %380 : vector<3x32x32xf32> to vector<3x32x32xbf16>
    "tpu.trace_start"() <{level = 10 : i32, message = "bqk,bkd->bqd"}> : () -> ()
    %cst_145 = arith.constant dense<0.000000e+00> : vector<3x32x32xf32>
    %382 = tpu.matmul %381, %365, %cst_145 {dimension_numbers = #tpu.dot_dimension_numbers<[2], [1], [1], [2], [0, 0, 0, 1, 1, 2], [0], [0]>} : vector<3x32x32xbf16>, vector<3x32x32xbf16>, vector<3x32x32xf32> -> vector<3x32x32xf32>
    "tpu.trace_stop"() : () -> ()
    %383 = vector.shape_cast %382 : vector<3x32x32xf32> to vector<96x32xf32>
    %384 = arith.truncf %383 : vector<96x32xf32> to vector<96x32xbf16>
    %385 = vector.extract_strided_slice %276 {offsets = [96, 0], sizes = [32, 128], strides = [1, 1]} : vector<128x128xbf16> to vector<32x128xbf16>
    %cst_146 = arith.constant dense<0.000000e+00> : vector<96x128xf32>
    %386 = tpu.matmul %384, %385, %cst_146 {dimension_numbers = #tpu.dot_dimension_numbers<[1], [0], [0], [1], [0, 0, 1, 1], [], []>} : vector<96x32xbf16>, vector<32x128xbf16>, vector<96x128xf32> -> vector<96x128xf32>
    %387 = arith.addf %359, %386 : vector<96x128xf32>
    %388 = arith.addf %239, %387 : vector<96x128xf32>
    %c1_147 = arith.constant 1 : index
    %c0_148 = arith.constant 0 : index
    %c0_149 = arith.constant 0 : index
    %389 = vector.load %arg12[%c1_147, %c0_148, %c0_149] : memref<2x1x128xf32, #tpu.memory_space<vmem>>, vector<1x1x128xf32>
    %390 = vector.shape_cast %389 : vector<1x1x128xf32> to vector<1x128xf32>
    %391 = vector.broadcast %390 : vector<1x128xf32> to vector<96x128xf32>
    %392 = arith.addf %388, %391 : vector<96x128xf32>
    %c1_150 = arith.constant 1 : index
    %c0_151 = arith.constant 0 : index
    %c0_152 = arith.constant 0 : index
    %393 = vector.load %arg13[%c1_150, %c0_151, %c0_152] : memref<2x1x128xf32, #tpu.memory_space<vmem>>, vector<1x1x128xf32>
    %394 = vector.shape_cast %393 : vector<1x1x128xf32> to vector<1x128xf32>
    %c1_153 = arith.constant 1 : index
    %c0_154 = arith.constant 0 : index
    %c0_155 = arith.constant 0 : index
    %395 = vector.load %arg14[%c1_153, %c0_154, %c0_155] : memref<2x1x128xf32, #tpu.memory_space<vmem>>, vector<1x1x128xf32>
    %396 = vector.shape_cast %395 : vector<1x1x128xf32> to vector<1x128xf32>
    %cst_156 = arith.constant dense<0.000000e+00> : vector<96xf32>
    %397 = vector.multi_reduction <add>, %392, %cst_156 [1] : vector<96x128xf32> to vector<96xf32>
    %398 = vector.shape_cast %397 : vector<96xf32> to vector<96x1xf32>
    %cst_157 = arith.constant 1.280000e+02 : f32
    %399 = vector.broadcast %cst_157 : f32 to vector<96x1xf32>
    %400 = arith.divf %398, %399 : vector<96x1xf32>
    %401 = vector.broadcast %400 : vector<96x1xf32> to vector<96x128xf32>
    %402 = arith.subf %392, %401 : vector<96x128xf32>
    %403 = arith.mulf %402, %402 : vector<96x128xf32>
    %cst_158 = arith.constant dense<0.000000e+00> : vector<96xf32>
    %404 = vector.multi_reduction <add>, %403, %cst_158 [1] : vector<96x128xf32> to vector<96xf32>
    %405 = vector.shape_cast %404 : vector<96xf32> to vector<96x1xf32>
    %cst_159 = arith.constant 1.280000e+02 : f32
    %406 = vector.broadcast %cst_159 : f32 to vector<96x1xf32>
    %407 = arith.divf %405, %406 : vector<96x1xf32>
    %408 = vector.broadcast %400 : vector<96x1xf32> to vector<96x128xf32>
    %409 = arith.subf %392, %408 : vector<96x128xf32>
    %cst_160 = arith.constant 9.99999997E-7 : f32
    %410 = vector.broadcast %cst_160 : f32 to vector<96x1xf32>
    %411 = arith.addf %407, %410 : vector<96x1xf32>
    %412 = math.rsqrt %411 : vector<96x1xf32>
    %413 = vector.broadcast %412 : vector<96x1xf32> to vector<96x128xf32>
    %414 = arith.mulf %409, %413 : vector<96x128xf32>
    %415 = vector.broadcast %394 : vector<1x128xf32> to vector<96x128xf32>
    %416 = arith.mulf %414, %415 : vector<96x128xf32>
    %417 = vector.broadcast %396 : vector<1x128xf32> to vector<96x128xf32>
    %418 = arith.addf %416, %417 : vector<96x128xf32>
    %419 = arith.truncf %418 : vector<96x128xf32> to vector<96x128xbf16>
    %c1_161 = arith.constant 1 : index
    %c0_162 = arith.constant 0 : index
    %c0_163 = arith.constant 0 : index
    %420 = vector.load %arg15[%c1_161, %c0_162, %c0_163] : memref<2x128x256xbf16, #tpu.memory_space<vmem>>, vector<1x128x256xbf16>
    %421 = vector.shape_cast %420 : vector<1x128x256xbf16> to vector<128x256xbf16>
    %cst_164 = arith.constant dense<0.000000e+00> : vector<96x256xf32>
    %422 = tpu.matmul %419, %421, %cst_164 {dimension_numbers = #tpu.dot_dimension_numbers<[1], [0], [0], [1], [0, 0, 1, 1], [], []>} : vector<96x128xbf16>, vector<128x256xbf16>, vector<96x256xf32> -> vector<96x256xf32>
    %c1_165 = arith.constant 1 : index
    %c0_166 = arith.constant 0 : index
    %c0_167 = arith.constant 0 : index
    %423 = vector.load %arg16[%c1_165, %c0_166, %c0_167] : memref<2x1x256xf32, #tpu.memory_space<vmem>>, vector<1x1x256xf32>
    %424 = vector.shape_cast %423 : vector<1x1x256xf32> to vector<1x256xf32>
    %425 = vector.broadcast %424 : vector<1x256xf32> to vector<96x256xf32>
    %426 = arith.addf %422, %425 : vector<96x256xf32>
    %427 = arith.mulf %426, %426 : vector<96x256xf32>
    %428 = arith.mulf %426, %427 : vector<96x256xf32>
    %cst_168 = arith.constant 4.471500e-02 : f32
    %429 = vector.broadcast %cst_168 : f32 to vector<96x256xf32>
    %430 = arith.mulf %429, %428 : vector<96x256xf32>
    %431 = arith.addf %426, %430 : vector<96x256xf32>
    %cst_169 = arith.constant 0.797884583 : f32
    %432 = vector.broadcast %cst_169 : f32 to vector<96x256xf32>
    %433 = arith.mulf %432, %431 : vector<96x256xf32>
    %434 = math.tanh %433 : vector<96x256xf32>
    %cst_170 = arith.constant 1.000000e+00 : f32
    %435 = vector.broadcast %cst_170 : f32 to vector<96x256xf32>
    %436 = arith.addf %435, %434 : vector<96x256xf32>
    %cst_171 = arith.constant 5.000000e-01 : f32
    %437 = vector.broadcast %cst_171 : f32 to vector<96x256xf32>
    %438 = arith.mulf %437, %436 : vector<96x256xf32>
    %439 = arith.mulf %426, %438 : vector<96x256xf32>
    %440 = arith.truncf %439 : vector<96x256xf32> to vector<96x256xbf16>
    %c1_172 = arith.constant 1 : index
    %c0_173 = arith.constant 0 : index
    %c0_174 = arith.constant 0 : index
    %441 = vector.load %arg17[%c1_172, %c0_173, %c0_174] : memref<2x256x128xbf16, #tpu.memory_space<vmem>>, vector<1x256x128xbf16>
    %442 = vector.shape_cast %441 : vector<1x256x128xbf16> to vector<256x128xbf16>
    %cst_175 = arith.constant dense<0.000000e+00> : vector<96x128xf32>
    %443 = tpu.matmul %440, %442, %cst_175 {dimension_numbers = #tpu.dot_dimension_numbers<[1], [0], [0], [1], [0, 0, 1, 1], [], []>} : vector<96x256xbf16>, vector<256x128xbf16>, vector<96x128xf32> -> vector<96x128xf32>
    %444 = arith.addf %392, %443 : vector<96x128xf32>
    %c1_176 = arith.constant 1 : index
    %c0_177 = arith.constant 0 : index
    %c0_178 = arith.constant 0 : index
    %445 = vector.load %arg18[%c1_176, %c0_177, %c0_178] : memref<2x1x128xf32, #tpu.memory_space<vmem>>, vector<1x1x128xf32>
    %446 = vector.shape_cast %445 : vector<1x1x128xf32> to vector<1x128xf32>
    %447 = vector.broadcast %446 : vector<1x128xf32> to vector<96x128xf32>
    %448 = arith.addf %444, %447 : vector<96x128xf32>
    %449 = vector.extract_strided_slice %448 {offsets = [0, 0], sizes = [1, 128], strides = [1, 1]} : vector<96x128xf32> to vector<1x128xf32>
    %450 = vector.extract_strided_slice %448 {offsets = [32, 0], sizes = [1, 128], strides = [1, 1]} : vector<96x128xf32> to vector<1x128xf32>
    %451 = vector.extract_strided_slice %448 {offsets = [64, 0], sizes = [1, 128], strides = [1, 1]} : vector<96x128xf32> to vector<1x128xf32>
    %452 = tpu.concatenate %449, %450, %451 in 0 : vector<1x128xf32>, vector<1x128xf32>, vector<1x128xf32> -> vector<3x128xf32>
    %c0_179 = arith.constant 0 : index
    %c0_180 = arith.constant 0 : index
    %453 = vector.load %arg19[%c0_179, %c0_180] : memref<1x128xf32, #tpu.memory_space<vmem>>, vector<1x128xf32>
    %c0_181 = arith.constant 0 : index
    %c0_182 = arith.constant 0 : index
    %454 = vector.load %arg20[%c0_181, %c0_182] : memref<1x128xf32, #tpu.memory_space<vmem>>, vector<1x128xf32>
    %cst_183 = arith.constant dense<0.000000e+00> : vector<3xf32>
    %455 = vector.multi_reduction <add>, %452, %cst_183 [1] : vector<3x128xf32> to vector<3xf32>
    %456 = vector.shape_cast %455 : vector<3xf32> to vector<3x1xf32>
    %cst_184 = arith.constant 1.280000e+02 : f32
    %457 = vector.broadcast %cst_184 : f32 to vector<3x1xf32>
    %458 = arith.divf %456, %457 : vector<3x1xf32>
    %459 = vector.broadcast %458 : vector<3x1xf32> to vector<3x128xf32>
    %460 = arith.subf %452, %459 : vector<3x128xf32>
    %461 = arith.mulf %460, %460 : vector<3x128xf32>
    %cst_185 = arith.constant dense<0.000000e+00> : vector<3xf32>
    %462 = vector.multi_reduction <add>, %461, %cst_185 [1] : vector<3x128xf32> to vector<3xf32>
    %463 = vector.shape_cast %462 : vector<3xf32> to vector<3x1xf32>
    %cst_186 = arith.constant 1.280000e+02 : f32
    %464 = vector.broadcast %cst_186 : f32 to vector<3x1xf32>
    %465 = arith.divf %463, %464 : vector<3x1xf32>
    %466 = vector.broadcast %458 : vector<3x1xf32> to vector<3x128xf32>
    %467 = arith.subf %452, %466 : vector<3x128xf32>
    %cst_187 = arith.constant 9.99999997E-7 : f32
    %468 = vector.broadcast %cst_187 : f32 to vector<3x1xf32>
    %469 = arith.addf %465, %468 : vector<3x1xf32>
    %470 = math.rsqrt %469 : vector<3x1xf32>
    %471 = vector.broadcast %470 : vector<3x1xf32> to vector<3x128xf32>
    %472 = arith.mulf %467, %471 : vector<3x128xf32>
    %473 = vector.broadcast %453 : vector<1x128xf32> to vector<3x128xf32>
    %474 = arith.mulf %472, %473 : vector<3x128xf32>
    %475 = vector.broadcast %454 : vector<1x128xf32> to vector<3x128xf32>
    %476 = arith.addf %474, %475 : vector<3x128xf32>
    %cst_188 = arith.constant dense<0.000000e+00> : vector<128xf32>
    %477 = vector.multi_reduction <add>, %476, %cst_188 [0] : vector<3x128xf32> to vector<128xf32>
    %478 = vector.shape_cast %477 : vector<128xf32> to vector<1x128xf32>
    %cst_189 = arith.constant 3.000000e+00 : f32
    %479 = vector.broadcast %cst_189 : f32 to vector<1x128xf32>
    %480 = arith.divf %478, %479 : vector<1x128xf32>
    %481 = arith.truncf %480 : vector<1x128xf32> to vector<1x128xbf16>
    %c0_190 = arith.constant 0 : index
    %c0_191 = arith.constant 0 : index
    %482 = vector.load %arg21[%c0_190, %c0_191] : memref<128x128xbf16, #tpu.memory_space<vmem>>, vector<128x128xbf16>
    %cst_192 = arith.constant dense<0.000000e+00> : vector<1x128xf32>
    %483 = tpu.matmul %481, %482, %cst_192 {dimension_numbers = #tpu.dot_dimension_numbers<[1], [0], [0], [1], [0, 0, 1, 1], [], []>} : vector<1x128xbf16>, vector<128x128xbf16>, vector<1x128xf32> -> vector<1x128xf32>
    %c0_193 = arith.constant 0 : index
    %c0_194 = arith.constant 0 : index
    %484 = vector.load %arg22[%c0_193, %c0_194] : memref<1x128xf32, #tpu.memory_space<vmem>>, vector<1x128xf32>
    %485 = arith.addf %483, %484 : vector<1x128xf32>
    %c0_195 = arith.constant 0 : index
    %c0_196 = arith.constant 0 : index
    %c0_197 = arith.constant 0 : index
    %486 = vector.load %arg23[%c0_195, %c0_196, %c0_197] : memref<1x1x128xf32, #tpu.memory_space<vmem>>, vector<1x1x128xf32>
    %487 = vector.shape_cast %486 : vector<1x1x128xf32> to vector<1x128xf32>
    %488 = vector.shape_cast %485 : vector<1x128xf32> to vector<1x1x128xf32>
    tpu.vector_store %arg23[%c0_195, %c0_196, %c0_197], %488 {strides = array<i32>} : memref<1x1x128xf32, #tpu.memory_space<vmem>>, vector<1x1x128xf32>,
    return
  }
  func.func @transform_0(%arg0: i32) -> (i32, i32, i32) {
    %c0_i32 = arith.constant 0 : i32
    %c0_i32_0 = arith.constant 0 : i32
    %c0_i32_1 = arith.constant 0 : i32
    return %arg0, %c0_i32, %c0_i32_0 : i32, i32, i32
  }
  func.func @transform_1(%arg0: i32) -> (i32, i32) {
    %c0_i32 = arith.constant 0 : i32
    %c0_i32_0 = arith.constant 0 : i32
    %c0_i32_1 = arith.constant 0 : i32
    return %c0_i32, %c0_i32_0 : i32, i32
  }
  func.func @transform_2(%arg0: i32) -> (i32, i32) {
    %c0_i32 = arith.constant 0 : i32
    %c0_i32_0 = arith.constant 0 : i32
    %c0_i32_1 = arith.constant 0 : i32
    return %c0_i32, %c0_i32_0 : i32, i32
  }
  func.func @transform_3(%arg0: i32) -> (i32, i32) {
    %c0_i32 = arith.constant 0 : i32
    %c0_i32_0 = arith.constant 0 : i32
    %c0_i32_1 = arith.constant 0 : i32
    return %c0_i32, %c0_i32_0 : i32, i32
  }
  func.func @transform_4(%arg0: i32) -> (i32, i32) {
    %c0_i32 = arith.constant 0 : i32
    %c0_i32_0 = arith.constant 0 : i32
    %c0_i32_1 = arith.constant 0 : i32
    return %c0_i32, %c0_i32_0 : i32, i32
  }
  func.func @transform_5(%arg0: i32) -> (i32, i32) {
    %c0_i32 = arith.constant 0 : i32
    %c0_i32_0 = arith.constant 0 : i32
    %c0_i32_1 = arith.constant 0 : i32
    return %c0_i32, %c0_i32_0 : i32, i32
  }
  func.func @transform_6(%arg0: i32) -> (i32, i32, i32) {
    %c0_i32 = arith.constant 0 : i32
    %c0_i32_0 = arith.constant 0 : i32
    %c0_i32_1 = arith.constant 0 : i32
    %c0_i32_2 = arith.constant 0 : i32
    return %c0_i32, %c0_i32_0, %c0_i32_1 : i32, i32, i32
  }
  func.func @transform_7(%arg0: i32) -> (i32, i32, i32) {
    %c0_i32 = arith.constant 0 : i32
    %c0_i32_0 = arith.constant 0 : i32
    %c0_i32_1 = arith.constant 0 : i32
    %c0_i32_2 = arith.constant 0 : i32
    return %c0_i32, %c0_i32_0, %c0_i32_1 : i32, i32, i32
  }
  func.func @transform_8(%arg0: i32) -> (i32, i32, i32) {
    %c0_i32 = arith.constant 0 : i32
    %c0_i32_0 = arith.constant 0 : i32
    %c0_i32_1 = arith.constant 0 : i32
    %c0_i32_2 = arith.constant 0 : i32
    return %c0_i32, %c0_i32_0, %c0_i32_1 : i32, i32, i32
  }
  func.func @transform_9(%arg0: i32) -> (i32, i32, i32) {
    %c0_i32 = arith.constant 0 : i32
    %c0_i32_0 = arith.constant 0 : i32
    %c0_i32_1 = arith.constant 0 : i32
    %c0_i32_2 = arith.constant 0 : i32
    return %c0_i32, %c0_i32_0, %c0_i32_1 : i32, i32, i32
  }
  func.func @transform_10(%arg0: i32) -> (i32, i32, i32) {
    %c0_i32 = arith.constant 0 : i32
    %c0_i32_0 = arith.constant 0 : i32
    %c0_i32_1 = arith.constant 0 : i32
    %c0_i32_2 = arith.constant 0 : i32
    return %c0_i32, %c0_i32_0, %c0_i32_1 : i32, i32, i32
  }
  func.func @transform_11(%arg0: i32) -> (i32, i32, i32) {
    %c0_i32 = arith.constant 0 : i32
    %c0_i32_0 = arith.constant 0 : i32
    %c0_i32_1 = arith.constant 0 : i32
    %c0_i32_2 = arith.constant 0 : i32
    return %c0_i32, %c0_i32_0, %c0_i32_1 : i32, i32, i32
  }
  func.func @transform_12(%arg0: i32) -> (i32, i32, i32) {
    %c0_i32 = arith.constant 0 : i32
    %c0_i32_0 = arith.constant 0 : i32
    %c0_i32_1 = arith.constant 0 : i32
    %c0_i32_2 = arith.constant 0 : i32
    return %c0_i32, %c0_i32_0, %c0_i32_1 : i32, i32, i32
  }
  func.func @transform_13(%arg0: i32) -> (i32, i32, i32) {
    %c0_i32 = arith.constant 0 : i32
    %c0_i32_0 = arith.constant 0 : i32
    %c0_i32_1 = arith.constant 0 : i32
    %c0_i32_2 = arith.constant 0 : i32
    return %c0_i32, %c0_i32_0, %c0_i32_1 : i32, i32, i32
  }
  func.func @transform_14(%arg0: i32) -> (i32, i32, i32) {
    %c0_i32 = arith.constant 0 : i32
    %c0_i32_0 = arith.constant 0 : i32
    %c0_i32_1 = arith.constant 0 : i32
    %c0_i32_2 = arith.constant 0 : i32
    return %c0_i32, %c0_i32_0, %c0_i32_1 : i32, i32, i32
  }
  func.func @transform_15(%arg0: i32) -> (i32, i32, i32) {
    %c0_i32 = arith.constant 0 : i32
    %c0_i32_0 = arith.constant 0 : i32
    %c0_i32_1 = arith.constant 0 : i32
    %c0_i32_2 = arith.constant 0 : i32
    return %c0_i32, %c0_i32_0, %c0_i32_1 : i32, i32, i32
  }
  func.func @transform_16(%arg0: i32) -> (i32, i32, i32) {
    %c0_i32 = arith.constant 0 : i32
    %c0_i32_0 = arith.constant 0 : i32
    %c0_i32_1 = arith.constant 0 : i32
    %c0_i32_2 = arith.constant 0 : i32
    return %c0_i32, %c0_i32_0, %c0_i32_1 : i32, i32, i32
  }
  func.func @transform_17(%arg0: i32) -> (i32, i32, i32) {
    %c0_i32 = arith.constant 0 : i32
    %c0_i32_0 = arith.constant 0 : i32
    %c0_i32_1 = arith.constant 0 : i32
    %c0_i32_2 = arith.constant 0 : i32
    return %c0_i32, %c0_i32_0, %c0_i32_1 : i32, i32, i32
  }
  func.func @transform_18(%arg0: i32) -> (i32, i32) {
    %c0_i32 = arith.constant 0 : i32
    %c0_i32_0 = arith.constant 0 : i32
    %c0_i32_1 = arith.constant 0 : i32
    return %c0_i32, %c0_i32_0 : i32, i32
  }
  func.func @transform_19(%arg0: i32) -> (i32, i32) {
    %c0_i32 = arith.constant 0 : i32
    %c0_i32_0 = arith.constant 0 : i32
    %c0_i32_1 = arith.constant 0 : i32
    return %c0_i32, %c0_i32_0 : i32, i32
  }
  func.func @transform_20(%arg0: i32) -> (i32, i32) {
    %c0_i32 = arith.constant 0 : i32
    %c0_i32_0 = arith.constant 0 : i32
    %c0_i32_1 = arith.constant 0 : i32
    return %c0_i32, %c0_i32_0 : i32, i32
  }
  func.func @transform_21(%arg0: i32) -> (i32, i32) {
    %c0_i32 = arith.constant 0 : i32
    %c0_i32_0 = arith.constant 0 : i32
    %c0_i32_1 = arith.constant 0 : i32
    return %c0_i32, %c0_i32_0 : i32, i32
  }
  func.func @transform_22(%arg0: i32) -> (i32, i32, i32) {
    %c0_i32 = arith.constant 0 : i32
    %c0_i32_0 = arith.constant 0 : i32
    %c0_i32_1 = arith.constant 0 : i32
    return %arg0, %c0_i32, %c0_i32_0 : i32, i32, i32
  }
}

</mosaic_0001>

<llo_original>
// kernel: _lambda_.1
$region0: #{_lambda_.1}
  #allocation0 [shape = 'u32[]', space=smem, size = 0x4, offset = 0x4, fixed_abs, tag = 'smem constant byte address 0x4 - core index']
  #allocation1 [shape = 'u32[144,128]{1,0:T(1,128)}', space=vmem, size = 0x12000, scoped, tag = 'internal scratch']
  #allocation2 [shape = 'f32[96,128]{1,0:T(8,128)}', space=vmem, size = 0xc000, scoped, tag = 'scratch operand']
  %s0 = inlined_call_operand.vmem [shape: f32[2,48,48], index: 0, kind: input, shape index: {}]
  %s1 = inlined_call_operand.vmem [shape: f32[1,32], index: 1, kind: input, shape index: {}]
  %s2 = inlined_call_operand.vmem [shape: bf16[48,128], index: 2, kind: input, shape index: {}]
  %s3 = inlined_call_operand.vmem [shape: f32[1,128], index: 3, kind: input, shape index: {}, may-alias: {3,19,21}]
  %s4 = inlined_call_operand.vmem [shape: f32[1,128], index: 4, kind: input, shape index: {}]
  %s5 = inlined_call_operand.vmem [shape: f32[32,128], index: 5, kind: input, shape index: {}]
  %s6 = inlined_call_operand.vmem [shape: f32[2,1,128], index: 6, kind: input, shape index: {}, may-alias: {6,12}]
  %s7 = inlined_call_operand.vmem [shape: f32[2,1,128], index: 7, kind: input, shape index: {}, may-alias: {7,11,13,17}]
  %s8 = inlined_call_operand.vmem [shape: bf16[2,128,384], index: 8, kind: input, shape index: {}]
  %s9 = inlined_call_operand.vmem [shape: f32[2,1,384], index: 9, kind: input, shape index: {}]
  %s10 = inlined_call_operand.vmem [shape: bf16[2,128,128], index: 10, kind: input, shape index: {}]
  %s11 = inlined_call_operand.vmem [shape: f32[2,1,128], index: 11, kind: input, shape index: {}, may-alias: {7,11,13,17}]
  %s12 = inlined_call_operand.vmem [shape: f32[2,1,128], index: 12, kind: input, shape index: {}, may-alias: {6,12}]
  %s13 = inlined_call_operand.vmem [shape: f32[2,1,128], index: 13, kind: input, shape index: {}, may-alias: {7,11,13,17}]
  %s14 = inlined_call_operand.vmem [shape: bf16[2,128,256], index: 14, kind: input, shape index: {}]
  %s15 = inlined_call_operand.vmem [shape: f32[2,1,256], index: 15, kind: input, shape index: {}]
  %s16 = inlined_call_operand.vmem [shape: bf16[2,256,128], index: 16, kind: input, shape index: {}]
  %s17 = inlined_call_operand.vmem [shape: f32[2,1,128], index: 17, kind: input, shape index: {}, may-alias: {7,11,13,17}]
  %s18 = inlined_call_operand.vmem [shape: f32[1,128], index: 18, kind: input, shape index: {}]
  %s19 = inlined_call_operand.vmem [shape: f32[1,128], index: 19, kind: input, shape index: {}, may-alias: {3,19,21}]
  %s20 = inlined_call_operand.vmem [shape: bf16[128,128], index: 20, kind: input, shape index: {}]
  %s21 = inlined_call_operand.vmem [shape: f32[1,128], index: 21, kind: input, shape index: {}, may-alias: {3,19,21}]
  %s22 = inlined_call_operand.hbm [shape: f32[2,1,128], index: 22, kind: output, shape index: {}]
  %s23 = sld [smem:[#allocation0]]
  $region121: #{_lambda_.1} parent=0
    _
  %s25 = ssub.s32 1, %s23
  %s26 = scalar_select 0, %s25, %s23
  $region1: #{_lambda_.1} parent=0
    #allocation3 [shape = 'u8[1024]{0}', space=vmem, size = 0x400, scoped, tag = 'output window, operand 0']
    #allocation4 [shape = 's32[2]{0}', space=sflag, size = 0x8, scoped, tag = 'scoped memory for _lambda_.1']
    %27 = vsyncpa [#allocation4], 0
    %s28 = scalar_lea.sflag [#allocation4], 1
    %29 = vsyncpa %s28, 0
    loop: start=0, step=1, limit=4
    $region2: #{_lambda_.1} parent=1 // loop_pre_header
      _
    $region3: #{_lambda_.1} parent=1 // loop_header
      %s31 = sphi 0, %s35
      %p32 = scmp.ge.s32.totalorder %s31, 4
      %s41 = sphi 0, %s43
      %s44 = sphi 0, %s41
      %s45 = sphi 0, %s44
      %s61 = sphi 0, %s45
      %s65 = sphi 0, %s65
      %s67 = sphi 0, %s65
      %s68 = sphi 0, %s67
      %s82 = sphi 0, %s68
      %s86 = sphi 0, %s86
      %s88 = sphi 0, %s86
      %s89 = sphi 0, %s88
      %s103 = sphi 0, %s89
      %s107 = sphi 0, %s107
      %s109 = sphi 0, %s107
      %s110 = sphi 0, %s109
      %s124 = sphi 0, %s110
      %s128 = sphi 0, %s128
      %s130 = sphi 0, %s128
      %s131 = sphi 0, %s130
      %s145 = sphi 0, %s131
      %s149 = sphi 0, %s149
      %s151 = sphi 0, %s149
      %s152 = sphi 0, %s151
      %s166 = sphi 0, %s152
      %s170 = sphi 0, %s170
      %s172 = sphi 0, %s170
      %s173 = sphi 0, %s172
      %s187 = sphi 0, %s173
      %s191 = sphi 0, %s191
      %s193 = sphi 0, %s191
      %s194 = sphi 0, %s193
      %s208 = sphi 0, %s194
      %s212 = sphi 0, %s212
      %s214 = sphi 0, %s212
      %s215 = sphi 0, %s214
      %s229 = sphi 0, %s215
      %s233 = sphi 0, %s233
      %s235 = sphi 0, %s233
      %s236 = sphi 0, %s235
      %s250 = sphi 0, %s236
      %s254 = sphi 0, %s254
      %s256 = sphi 0, %s254
      %s257 = sphi 0, %s256
      %s271 = sphi 0, %s257
      %s275 = sphi 0, %s275
      %s277 = sphi 0, %s275
      %s278 = sphi 0, %s277
      %s292 = sphi 0, %s278
      %s296 = sphi 0, %s296
      %s298 = sphi 0, %s296
      %s299 = sphi 0, %s298
      %s313 = sphi 0, %s299
      %s317 = sphi 0, %s317
      %s319 = sphi 0, %s317
      %s320 = sphi 0, %s319
      %s334 = sphi 0, %s320
      %s338 = sphi 0, %s338
      %s340 = sphi 0, %s338
      %s341 = sphi 0, %s340
      %s355 = sphi 0, %s341
      %s359 = sphi 0, %s359
      %s361 = sphi 0, %s359
      %s362 = sphi 0, %s361
      %s376 = sphi 0, %s362
      %s380 = sphi 0, %s380
      %s382 = sphi 0, %s380
      %s383 = sphi 0, %s382
      %s397 = sphi 0, %s383
      %s401 = sphi 0, %s401
      %s403 = sphi 0, %s401
      %s404 = sphi 0, %s403
      %s418 = sphi 0, %s404
      %s422 = sphi 0, %s422
      %s424 = sphi 0, %s422
      %s425 = sphi 0, %s424
      %s439 = sphi 0, %s425
      %s443 = sphi 0, %s443
      %s445 = sphi 0, %s443
      %s446 = sphi 0, %s445
      %s460 = sphi 0, %s446
      %s464 = sphi 0, %s464
      %s466 = sphi 0, %s464
      %s467 = sphi 0, %s466
      %s481 = sphi 0, %s467
      %s485 = sphi 0, %s485
      %s487 = sphi 0, %s485
      %s488 = sphi 0, %s487
      %s502 = sphi 0, %s488
      %s508 = sphi 0, %s510
      %s511 = sphi 0, %s508
      %s512 = sphi 0, %s511
      %s528 = sphi 0, %s512
    $region4: #{_lambda_.1} parent=1 // loop_header_branch
      %34 = sbr.rel (%p32) target = $region8
    $region5: #{_lambda_.1} parent=1 // loop_body
      %s36 = ssub.s32 %s31, 1
      %s37 = ssub.s32 %s31, 2
      %s38 = sadd.s32 %s31, 1
      %s39 = ssub.s32 %s31, %s38
      %p40 = scmp.eq.s32.totalorder %s39, 0
      %s42 = sadd.s32 %s41, 1
      %s43 = scalar_select %p40, %s41, %s42
      %p46 = pneg %p40
      %p47 = scmp.eq.s32.totalorder %s31, 1
      %p48 = por %p46, %p47
      %p49 = scmp.ne.s32.totalorder %s41, %s44
      %p50 = scmp.eq.s32.totalorder %s31, 0
      %p51 = por %p49, %p50
      %p52 = scmp.ne.s32.totalorder %s41, %s44
      %p53 = scmp.eq.s32.totalorder %s36, 1
      %p54 = por %p52, %p53
      %p55 = scmp.ne.s32.totalorder %s44, %s45
      %p56 = scmp.eq.s32.totalorder %s36, 0
      %p57 = por %p55, %p56
      %p58 = scmp.ne.s32.totalorder %s44, %s45
      %p59 = scmp.eq.s32.totalorder %s37, 1
      %p60 = por %p58, %p59
      %p62 = scmp.ne.s32.totalorder %s45, %s61
      %p63 = scmp.eq.s32.totalorder %s37, 0
      %p64 = por %p62, %p63
      %s66 = sadd.s32 %s65, 1
      %p69 = scmp.eq.s32.totalorder %s31, 1
      %p70 = scmp.ne.s32.totalorder %s65, %s67
      %p71 = scmp.eq.s32.totalorder %s31, 0
      %p72 = por %p70, %p71
      %p73 = scmp.ne.s32.totalorder %s65, %s67
      %p74 = scmp.eq.s32.totalorder %s36, 1
      %p75 = por %p73, %p74
      %p76 = scmp.ne.s32.totalorder %s67, %s68
      %p77 = scmp.eq.s32.totalorder %s36, 0
      %p78 = por %p76, %p77
      %p79 = scmp.ne.s32.totalorder %s67, %s68
      %p80 = scmp.eq.s32.totalorder %s37, 1
      %p81 = por %p79, %p80
      %p83 = scmp.ne.s32.totalorder %s68, %s82
      %p84 = scmp.eq.s32.totalorder %s37, 0
      %p85 = por %p83, %p84
      %s87 = sadd.s32 %s86, 1
      %p90 = scmp.eq.s32.totalorder %s31, 1
      %p91 = scmp.ne.s32.totalorder %s86, %s88
      %p92 = scmp.eq.s32.totalorder %s31, 0
      %p93 = por %p91, %p92
      %p94 = scmp.ne.s32.totalorder %s86, %s88
      %p95 = scmp.eq.s32.totalorder %s36, 1
      %p96 = por %p94, %p95
      %p97 = scmp.ne.s32.totalorder %s88, %s89
      %p98 = scmp.eq.s32.totalorder %s36, 0
      %p99 = por %p97, %p98
      %p100 = scmp.ne.s32.totalorder %s88, %s89
      %p101 = scmp.eq.s32.totalorder %s37, 1
      %p102 = por %p100, %p101
      %p104 = scmp.ne.s32.totalorder %s89, %s103
      %p105 = scmp.eq.s32.totalorder %s37, 0
      %p106 = por %p104, %p105
      %s108 = sadd.s32 %s107, 1
      %p111 = scmp.eq.s32.totalorder %s31, 1
      %p112 = scmp.ne.s32.totalorder %s107, %s109
      %p113 = scmp.eq.s32.totalorder %s31, 0
      %p114 = por %p112, %p113
      %p115 = scmp.ne.s32.totalorder %s107, %s109
      %p116 = scmp.eq.s32.totalorder %s36, 1
      %p117 = por %p115, %p116
      %p118 = scmp.ne.s32.totalorder %s109, %s110
      %p119 = scmp.eq.s32.totalorder %s36, 0
      %p120 = por %p118, %p119
      %p121 = scmp.ne.s32.totalorder %s109, %s110
      %p122 = scmp.eq.s32.totalorder %s37, 1
      %p123 = por %p121, %p122
      %p125 = scmp.ne.s32.totalorder %s110, %s124
      %p126 = scmp.eq.s32.totalorder %s37, 0
      %p127 = por %p125, %p126
      %s129 = sadd.s32 %s128, 1
      %p132 = scmp.eq.s32.totalorder %s31, 1
      %p133 = scmp.ne.s32.totalorder %s128, %s130
      %p134 = scmp.eq.s32.totalorder %s31, 0
      %p135 = por %p133, %p134
      %p136 = scmp.ne.s32.totalorder %s128, %s130
      %p137 = scmp.eq.s32.totalorder %s36, 1
      %p138 = por %p136, %p137
      %p139 = scmp.ne.s32.totalorder %s130, %s131
      %p140 = scmp.eq.s32.totalorder %s36, 0
      %p141 = por %p139, %p140
      %p142 = scmp.ne.s32.totalorder %s130, %s131
      %p143 = scmp.eq.s32.totalorder %s37, 1
      %p144 = por %p142, %p143
      %p146 = scmp.ne.s32.totalorder %s131, %s145
      %p147 = scmp.eq.s32.totalorder %s37, 0
      %p148 = por %p146, %p147
      %s150 = sadd.s32 %s149, 1
      %p153 = scmp.eq.s32.totalorder %s31, 1
      %p154 = scmp.ne.s32.totalorder %s149, %s151
      %p155 = scmp.eq.s32.totalorder %s31, 0
      %p156 = por %p154, %p155
      %p157 = scmp.ne.s32.totalorder %s149, %s151
      %p158 = scmp.eq.s32.totalorder %s36, 1
      %p159 = por %p157, %p158
      %p160 = scmp.ne.s32.totalorder %s151, %s152
      %p161 = scmp.eq.s32.totalorder %s36, 0
      %p162 = por %p160, %p161
      %p163 = scmp.ne.s32.totalorder %s151, %s152
      %p164 = scmp.eq.s32.totalorder %s37, 1
      %p165 = por %p163, %p164
      %p167 = scmp.ne.s32.totalorder %s152, %s166
      %p168 = scmp.eq.s32.totalorder %s37, 0
      %p169 = por %p167, %p168
      %s171 = sadd.s32 %s170, 1
      %p174 = scmp.eq.s32.totalorder %s31, 1
      %p175 = scmp.ne.s32.totalorder %s170, %s172
      %p176 = scmp.eq.s32.totalorder %s31, 0
      %p177 = por %p175, %p176
      %p178 = scmp.ne.s32.totalorder %s170, %s172
      %p179 = scmp.eq.s32.totalorder %s36, 1
      %p180 = por %p178, %p179
      %p181 = scmp.ne.s32.totalorder %s172, %s173
      %p182 = scmp.eq.s32.totalorder %s36, 0
      %p183 = por %p181, %p182
      %p184 = scmp.ne.s32.totalorder %s172, %s173
      %p185 = scmp.eq.s32.totalorder %s37, 1
      %p186 = por %p184, %p185
      %p188 = scmp.ne.s32.totalorder %s173, %s187
      %p189 = scmp.eq.s32.totalorder %s37, 0
      %p190 = por %p188, %p189
      %s192 = sadd.s32 %s191, 1
      %p195 = scmp.eq.s32.totalorder %s31, 1
      %p196 = scmp.ne.s32.totalorder %s191, %s193
      %p197 = scmp.eq.s32.totalorder %s31, 0
      %p198 = por %p196, %p197
      %p199 = scmp.ne.s32.totalorder %s191, %s193
      %p200 = scmp.eq.s32.totalorder %s36, 1
      %p201 = por %p199, %p200
      %p202 = scmp.ne.s32.totalorder %s193, %s194
      %p203 = scmp.eq.s32.totalorder %s36, 0
      %p204 = por %p202, %p203
      %p205 = scmp.ne.s32.totalorder %s193, %s194
      %p206 = scmp.eq.s32.totalorder %s37, 1
      %p207 = por %p205, %p206
      %p209 = scmp.ne.s32.totalorder %s194, %s208
      %p210 = scmp.eq.s32.totalorder %s37, 0
      %p211 = por %p209, %p210
      %s213 = sadd.s32 %s212, 1
      %p216 = scmp.eq.s32.totalorder %s31, 1
      %p217 = scmp.ne.s32.totalorder %s212, %s214
      %p218 = scmp.eq.s32.totalorder %s31, 0
      %p219 = por %p217, %p218
      %p220 = scmp.ne.s32.totalorder %s212, %s214
      %p221 = scmp.eq.s32.totalorder %s36, 1
      %p222 = por %p220, %p221
      %p223 = scmp.ne.s32.totalorder %s214, %s215
      %p224 = scmp.eq.s32.totalorder %s36, 0
      %p225 = por %p223, %p224
      %p226 = scmp.ne.s32.totalorder %s214, %s215
      %p227 = scmp.eq.s32.totalorder %s37, 1
      %p228 = por %p226, %p227
      %p230 = scmp.ne.s32.totalorder %s215, %s229
      %p231 = scmp.eq.s32.totalorder %s37, 0
      %p232 = por %p230, %p231
      %s234 = sadd.s32 %s233, 1
      %p237 = scmp.eq.s32.totalorder %s31, 1
      %p238 = scmp.ne.s32.totalorder %s233, %s235
      %p239 = scmp.eq.s32.totalorder %s31, 0
      %p240 = por %p238, %p239
      %p241 = scmp.ne.s32.totalorder %s233, %s235
      %p242 = scmp.eq.s32.totalorder %s36, 1
      %p243 = por %p241, %p242
      %p244 = scmp.ne.s32.totalorder %s235, %s236
      %p245 = scmp.eq.s32.totalorder %s36, 0
      %p246 = por %p244, %p245
      %p247 = scmp.ne.s32.totalorder %s235, %s236
      %p248 = scmp.eq.s32.totalorder %s37, 1
      %p249 = por %p247, %p248
      %p251 = scmp.ne.s32.totalorder %s236, %s250
      %p252 = scmp.eq.s32.totalorder %s37, 0
      %p253 = por %p251, %p252
      %s255 = sadd.s32 %s254, 1
      %p258 = scmp.eq.s32.totalorder %s31, 1
      %p259 = scmp.ne.s32.totalorder %s254, %s256
      %p260 = scmp.eq.s32.totalorder %s31, 0
      %p261 = por %p259, %p260
      %p262 = scmp.ne.s32.totalorder %s254, %s256
      %p263 = scmp.eq.s32.totalorder %s36, 1
      %p264 = por %p262, %p263
      %p265 = scmp.ne.s32.totalorder %s256, %s257
      %p266 = scmp.eq.s32.totalorder %s36, 0
      %p267 = por %p265, %p266
      %p268 = scmp.ne.s32.totalorder %s256, %s257
      %p269 = scmp.eq.s32.totalorder %s37, 1
      %p270 = por %p268, %p269
      %p272 = scmp.ne.s32.totalorder %s257, %s271
      %p273 = scmp.eq.s32.totalorder %s37, 0
      %p274 = por %p272, %p273
      %s276 = sadd.s32 %s275, 1
      %p279 = scmp.eq.s32.totalorder %s31, 1
      %p280 = scmp.ne.s32.totalorder %s275, %s277
      %p281 = scmp.eq.s32.totalorder %s31, 0
      %p282 = por %p280, %p281
      %p283 = scmp.ne.s32.totalorder %s275, %s277
      %p284 = scmp.eq.s32.totalorder %s36, 1
      %p285 = por %p283, %p284
      %p286 = scmp.ne.s32.totalorder %s277, %s278
      %p287 = scmp.eq.s32.totalorder %s36, 0
      %p288 = por %p286, %p287
      %p289 = scmp.ne.s32.totalorder %s277, %s278
      %p290 = scmp.eq.s32.totalorder %s37, 1
      %p291 = por %p289, %p290
      %p293 = scmp.ne.s32.totalorder %s278, %s292
      %p294 = scmp.eq.s32.totalorder %s37, 0
      %p295 = por %p293, %p294
      %s297 = sadd.s32 %s296, 1
      %p300 = scmp.eq.s32.totalorder %s31, 1
      %p301 = scmp.ne.s32.totalorder %s296, %s298
      %p302 = scmp.eq.s32.totalorder %s31, 0
      %p303 = por %p301, %p302
      %p304 = scmp.ne.s32.totalorder %s296, %s298
      %p305 = scmp.eq.s32.totalorder %s36, 1
      %p306 = por %p304, %p305
      %p307 = scmp.ne.s32.totalorder %s298, %s299
      %p308 = scmp.eq.s32.totalorder %s36, 0
      %p309 = por %p307, %p308
      %p310 = scmp.ne.s32.totalorder %s298, %s299
      %p311 = scmp.eq.s32.totalorder %s37, 1
      %p312 = por %p310, %p311
      %p314 = scmp.ne.s32.totalorder %s299, %s313
      %p315 = scmp.eq.s32.totalorder %s37, 0
      %p316 = por %p314, %p315
      %s318 = sadd.s32 %s317, 1
      %p321 = scmp.eq.s32.totalorder %s31, 1
      %p322 = scmp.ne.s32.totalorder %s317, %s319
      %p323 = scmp.eq.s32.totalorder %s31, 0
      %p324 = por %p322, %p323
      %p325 = scmp.ne.s32.totalorder %s317, %s319
      %p326 = scmp.eq.s32.totalorder %s36, 1
      %p327 = por %p325, %p326
      %p328 = scmp.ne.s32.totalorder %s319, %s320
      %p329 = scmp.eq.s32.totalorder %s36, 0
      %p330 = por %p328, %p329
      %p331 = scmp.ne.s32.totalorder %s319, %s320
      %p332 = scmp.eq.s32.totalorder %s37, 1
      %p333 = por %p331, %p332
      %p335 = scmp.ne.s32.totalorder %s320, %s334
      %p336 = scmp.eq.s32.totalorder %s37, 0
      %p337 = por %p335, %p336
      %s339 = sadd.s32 %s338, 1
      %p342 = scmp.eq.s32.totalorder %s31, 1
      %p343 = scmp.ne.s32.totalorder %s338, %s340
      %p344 = scmp.eq.s32.totalorder %s31, 0
      %p345 = por %p343, %p344
      %p346 = scmp.ne.s32.totalorder %s338, %s340
      %p347 = scmp.eq.s32.totalorder %s36, 1
      %p348 = por %p346, %p347
      %p349 = scmp.ne.s32.totalorder %s340, %s341
      %p350 = scmp.eq.s32.totalorder %s36, 0
      %p351 = por %p349, %p350
      %p352 = scmp.ne.s32.totalorder %s340, %s341
      %p353 = scmp.eq.s32.totalorder %s37, 1
      %p354 = por %p352, %p353
      %p356 = scmp.ne.s32.totalorder %s341, %s355
      %p357 = scmp.eq.s32.totalorder %s37, 0
      %p358 = por %p356, %p357
      %s360 = sadd.s32 %s359, 1
      %p363 = scmp.eq.s32.totalorder %s31, 1
      %p364 = scmp.ne.s32.totalorder %s359, %s361
      %p365 = scmp.eq.s32.totalorder %s31, 0
      %p366 = por %p364, %p365
      %p367 = scmp.ne.s32.totalorder %s359, %s361
      %p368 = scmp.eq.s32.totalorder %s36, 1
      %p369 = por %p367, %p368
      %p370 = scmp.ne.s32.totalorder %s361, %s362
      %p371 = scmp.eq.s32.totalorder %s36, 0
      %p372 = por %p370, %p371
      %p373 = scmp.ne.s32.totalorder %s361, %s362
      %p374 = scmp.eq.s32.totalorder %s37, 1
      %p375 = por %p373, %p374
      %p377 = scmp.ne.s32.totalorder %s362, %s376
      %p378 = scmp.eq.s32.totalorder %s37, 0
      %p379 = por %p377, %p378
      %s381 = sadd.s32 %s380, 1
      %p384 = scmp.eq.s32.totalorder %s31, 1
      %p385 = scmp.ne.s32.totalorder %s380, %s382
      %p386 = scmp.eq.s32.totalorder %s31, 0
      %p387 = por %p385, %p386
      %p388 = scmp.ne.s32.totalorder %s380, %s382
      %p389 = scmp.eq.s32.totalorder %s36, 1
      %p390 = por %p388, %p389
      %p391 = scmp.ne.s32.totalorder %s382, %s383
      %p392 = scmp.eq.s32.totalorder %s36, 0
      %p393 = por %p391, %p392
      %p394 = scmp.ne.s32.totalorder %s382, %s383
      %p395 = scmp.eq.s32.totalorder %s37, 1
      %p396 = por %p394, %p395
      %p398 = scmp.ne.s32.totalorder %s383, %s397
      %p399 = scmp.eq.s32.totalorder %s37, 0
      %p400 = por %p398, %p399
      %s402 = sadd.s32 %s401, 1
      %p405 = scmp.eq.s32.totalorder %s31, 1
      %p406 = scmp.ne.s32.totalorder %s401, %s403
      %p407 = scmp.eq.s32.totalorder %s31, 0
      %p408 = por %p406, %p407
      %p409 = scmp.ne.s32.totalorder %s401, %s403
      %p410 = scmp.eq.s32.totalorder %s36, 1
      %p411 = por %p409, %p410
      %p412 = scmp.ne.s32.totalorder %s403, %s404
      %p413 = scmp.eq.s32.totalorder %s36, 0
      %p414 = por %p412, %p413
      %p415 = scmp.ne.s32.totalorder %s403, %s404
      %p416 = scmp.eq.s32.totalorder %s37, 1
      %p417 = por %p415, %p416
      %p419 = scmp.ne.s32.totalorder %s404, %s418
      %p420 = scmp.eq.s32.totalorder %s37, 0
      %p421 = por %p419, %p420
      %s423 = sadd.s32 %s422, 1
      %p426 = scmp.eq.s32.totalorder %s31, 1
      %p427 = scmp.ne.s32.totalorder %s422, %s424
      %p428 = scmp.eq.s32.totalorder %s31, 0
      %p429 = por %p427, %p428
      %p430 = scmp.ne.s32.totalorder %s422, %s424
      %p431 = scmp.eq.s32.totalorder %s36, 1
      %p432 = por %p430, %p431
      %p433 = scmp.ne.s32.totalorder %s424, %s425
      %p434 = scmp.eq.s32.totalorder %s36, 0
      %p435 = por %p433, %p434
      %p436 = scmp.ne.s32.totalorder %s424, %s425
      %p437 = scmp.eq.s32.totalorder %s37, 1
      %p438 = por %p436, %p437
      %p440 = scmp.ne.s32.totalorder %s425, %s439
      %p441 = scmp.eq.s32.totalorder %s37, 0
      %p442 = por %p440, %p441
      %s444 = sadd.s32 %s443, 1
      %p447 = scmp.eq.s32.totalorder %s31, 1
      %p448 = scmp.ne.s32.totalorder %s443, %s445
      %p449 = scmp.eq.s32.totalorder %s31, 0
      %p450 = por %p448, %p449
      %p451 = scmp.ne.s32.totalorder %s443, %s445
      %p452 = scmp.eq.s32.totalorder %s36, 1
      %p453 = por %p451, %p452
      %p454 = scmp.ne.s32.totalorder %s445, %s446
      %p455 = scmp.eq.s32.totalorder %s36, 0
      %p456 = por %p454, %p455
      %p457 = scmp.ne.s32.totalorder %s445, %s446
      %p458 = scmp.eq.s32.totalorder %s37, 1
      %p459 = por %p457, %p458
      %p461 = scmp.ne.s32.totalorder %s446, %s460
      %p462 = scmp.eq.s32.totalorder %s37, 0
      %p463 = por %p461, %p462
      %s465 = sadd.s32 %s464, 1
      %p468 = scmp.eq.s32.totalorder %s31, 1
      %p469 = scmp.ne.s32.totalorder %s464, %s466
      %p470 = scmp.eq.s32.totalorder %s31, 0
      %p471 = por %p469, %p470
      %p472 = scmp.ne.s32.totalorder %s464, %s466
      %p473 = scmp.eq.s32.totalorder %s36, 1
      %p474 = por %p472, %p473
      %p475 = scmp.ne.s32.totalorder %s466, %s467
      %p476 = scmp.eq.s32.totalorder %s36, 0
      %p477 = por %p475, %p476
      %p478 = scmp.ne.s32.totalorder %s466, %s467
      %p479 = scmp.eq.s32.totalorder %s37, 1
      %p480 = por %p478, %p479
      %p482 = scmp.ne.s32.totalorder %s467, %s481
      %p483 = scmp.eq.s32.totalorder %s37, 0
      %p484 = por %p482, %p483
      %s486 = sadd.s32 %s485, 1
      %p489 = scmp.eq.s32.totalorder %s31, 1
      %p490 = scmp.ne.s32.totalorder %s485, %s487
      %p491 = scmp.eq.s32.totalorder %s31, 0
      %p492 = por %p490, %p491
      %p493 = scmp.ne.s32.totalorder %s485, %s487
      %p494 = scmp.eq.s32.totalorder %s36, 1
      %p495 = por %p493, %p494
      %p496 = scmp.ne.s32.totalorder %s487, %s488
      %p497 = scmp.eq.s32.totalorder %s36, 0
      %p498 = por %p496, %p497
      %p499 = scmp.ne.s32.totalorder %s487, %s488
      %p500 = scmp.eq.s32.totalorder %s37, 1
      %p501 = por %p499, %p500
      %p503 = scmp.ne.s32.totalorder %s488, %s502
      %p504 = scmp.eq.s32.totalorder %s37, 0
      %p505 = por %p503, %p504
      %s506 = ssub.s32 %s31, %s38
      %p507 = scmp.eq.s32.totalorder %s506, 0
      %s509 = sadd.s32 %s508, 1
      %s510 = scalar_select %p507, %s508, %s509
      %p513 = pneg %p507
      %p514 = scmp.eq.s32.totalorder %s31, 1
      %p515 = por %p513, %p514
      %p516 = scmp.ne.s32.totalorder %s508, %s511
      %p517 = scmp.eq.s32.totalorder %s31, 0
      %p518 = por %p516, %p517
      %p519 = scmp.ne.s32.totalorder %s508, %s511
      %p520 = scmp.eq.s32.totalorder %s36, 1
      %p521 = por %p519, %p520
      %p522 = scmp.ne.s32.totalorder %s511, %s512
      %p523 = scmp.eq.s32.totalorder %s36, 0
      %p524 = por %p522, %p523
      %p525 = scmp.ne.s32.totalorder %s511, %s512
      %p526 = scmp.eq.s32.totalorder %s37, 1
      %p527 = por %p525, %p526
      %p529 = scmp.ne.s32.totalorder %s512, %s528
      %p530 = scmp.eq.s32.totalorder %s37, 0
      %p531 = por %p529, %p530
      %p532 = scmp.le.s32.totalorder 1, %s31
      %p533 = scmp.lt.s32.totalorder %s31, 3
      %p534 = pnand %p532, %p533
      %p535 = pneg %p534
      // Predicated region
      $region9: #{_lambda_.1} parent=5 // pred_check
        _
      $region10: #{_lambda_.1} parent=5 // pred_check_branch
        %537 = sbr.rel (%p534) target = $region12
      $region11: #{_lambda_.1} parent=5 // pred_region
        %s538 = ssub.s32 %s31, 1
        // Predicated region
        $region13: #{_lambda_.1} parent=11 // pred_check
          %p539 = pneg %p78
        $region14: #{_lambda_.1} parent=11 // pred_check_branch
          %541 = sbr.rel (%p539) target = $region16
        $region15: #{_lambda_.1} parent=11 // pred_region
          _
        $region16: #{_lambda_.1} parent=11 // pred_fallthru
          _
        // Predicated region
        $region17: #{_lambda_.1} parent=11 // pred_check
          %p542 = pneg %p99
        $region18: #{_lambda_.1} parent=11 // pred_check_branch
          %544 = sbr.rel (%p542) target = $region20
        $region19: #{_lambda_.1} parent=11 // pred_region
          _
        $region20: #{_lambda_.1} parent=11 // pred_fallthru
          _
        // Predicated region
        $region21: #{_lambda_.1} parent=11 // pred_check
          %p545 = pneg %p120
        $region22: #{_lambda_.1} parent=11 // pred_check_branch
          %547 = sbr.rel (%p545) target = $region24
        $region23: #{_lambda_.1} parent=11 // pred_region
          _
        $region24: #{_lambda_.1} parent=11 // pred_fallthru
          _
        // Predicated region
        $region25: #{_lambda_.1} parent=11 // pred_check
          %p548 = pneg %p141
        $region26: #{_lambda_.1} parent=11 // pred_check_branch
          %550 = sbr.rel (%p548) target = $region28
        $region27: #{_lambda_.1} parent=11 // pred_region
          _
        $region28: #{_lambda_.1} parent=11 // pred_fallthru
          _
        // Predicated region
        $region29: #{_lambda_.1} parent=11 // pred_check
          %p551 = pneg %p162
        $region30: #{_lambda_.1} parent=11 // pred_check_branch
          %553 = sbr.rel (%p551) target = $region32
        $region31: #{_lambda_.1} parent=11 // pred_region
          _
        $region32: #{_lambda_.1} parent=11 // pred_fallthru
          _
        // Predicated region
        $region33: #{_lambda_.1} parent=11 // pred_check
          %p554 = pneg %p183
        $region34: #{_lambda_.1} parent=11 // pred_check_branch
          %556 = sbr.rel (%p554) target = $region36
        $region35: #{_lambda_.1} parent=11 // pred_region
          _
        $region36: #{_lambda_.1} parent=11 // pred_fallthru
          _
        // Predicated region
        $region37: #{_lambda_.1} parent=11 // pred_check
          %p557 = pneg %p204
        $region38: #{_lambda_.1} parent=11 // pred_check_branch
          %559 = sbr.rel (%p557) target = $region40
        $region39: #{_lambda_.1} parent=11 // pred_region
          _
        $region40: #{_lambda_.1} parent=11 // pred_fallthru
          _
        // Predicated region
        $region41: #{_lambda_.1} parent=11 // pred_check
          %p560 = pneg %p225
        $region42: #{_lambda_.1} parent=11 // pred_check_branch
          %562 = sbr.rel (%p560) target = $region44
        $region43: #{_lambda_.1} parent=11 // pred_region
          _
        $region44: #{_lambda_.1} parent=11 // pred_fallthru
          _
        // Predicated region
        $region45: #{_lambda_.1} parent=11 // pred_check
          %p563 = pneg %p246
        $region46: #{_lambda_.1} parent=11 // pred_check_branch
          %565 = sbr.rel (%p563) target = $region48
        $region47: #{_lambda_.1} parent=11 // pred_region
          _
        $region48: #{_lambda_.1} parent=11 // pred_fallthru
          _
        // Predicated region
        $region49: #{_lambda_.1} parent=11 // pred_check
          %p566 = pneg %p267
        $region50: #{_lambda_.1} parent=11 // pred_check_branch
          %568 = sbr.rel (%p566) target = $region52
        $region51: #{_lambda_.1} parent=11 // pred_region
          _
        $region52: #{_lambda_.1} parent=11 // pred_fallthru
          _
        // Predicated region
        $region53: #{_lambda_.1} parent=11 // pred_check
          %p569 = pneg %p288
        $region54: #{_lambda_.1} parent=11 // pred_check_branch
          %571 = sbr.rel (%p569) target = $region56
        $region55: #{_lambda_.1} parent=11 // pred_region
          _
        $region56: #{_lambda_.1} parent=11 // pred_fallthru
          _
        // Predicated region
        $region57: #{_lambda_.1} parent=11 // pred_check
          %p572 = pneg %p309
        $region58: #{_lambda_.1} parent=11 // pred_check_branch
          %574 = sbr.rel (%p572) target = $region60
        $region59: #{_lambda_.1} parent=11 // pred_region
          _
        $region60: #{_lambda_.1} parent=11 // pred_fallthru
          _
        // Predicated region
        $region61: #{_lambda_.1} parent=11 // pred_check
          %p575 = pneg %p330
        $region62: #{_lambda_.1} parent=11 // pred_check_branch
          %577 = sbr.rel (%p575) target = $region64
        $region63: #{_lambda_.1} parent=11 // pred_region
          _
        $region64: #{_lambda_.1} parent=11 // pred_fallthru
          _
        // Predicated region
        $region65: #{_lambda_.1} parent=11 // pred_check
          %p578 = pneg %p351
        $region66: #{_lambda_.1} parent=11 // pred_check_branch
          %580 = sbr.rel (%p578) target = $region68
        $region67: #{_lambda_.1} parent=11 // pred_region
          _
        $region68: #{_lambda_.1} parent=11 // pred_fallthru
          _
        // Predicated region
        $region69: #{_lambda_.1} parent=11 // pred_check
          %p581 = pneg %p372
        $region70: #{_lambda_.1} parent=11 // pred_check_branch
          %583 = sbr.rel (%p581) target = $region72
        $region71: #{_lambda_.1} parent=11 // pred_region
          _
        $region72: #{_lambda_.1} parent=11 // pred_fallthru
          _
        // Predicated region
        $region73: #{_lambda_.1} parent=11 // pred_check
          %p584 = pneg %p393
        $region74: #{_lambda_.1} parent=11 // pred_check_branch
          %586 = sbr.rel (%p584) target = $region76
        $region75: #{_lambda_.1} parent=11 // pred_region
          _
        $region76: #{_lambda_.1} parent=11 // pred_fallthru
          _
        // Predicated region
        $region77: #{_lambda_.1} parent=11 // pred_check
          %p587 = pneg %p414
        $region78: #{_lambda_.1} parent=11 // pred_check_branch
          %589 = sbr.rel (%p587) target = $region80
        $region79: #{_lambda_.1} parent=11 // pred_region
          _
        $region80: #{_lambda_.1} parent=11 // pred_fallthru
          _
        // Predicated region
        $region81: #{_lambda_.1} parent=11 // pred_check
          %p590 = pneg %p435
        $region82: #{_lambda_.1} parent=11 // pred_check_branch
          %592 = sbr.rel (%p590) target = $region84
        $region83: #{_lambda_.1} parent=11 // pred_region
          _
        $region84: #{_lambda_.1} parent=11 // pred_fallthru
          _
        // Predicated region
        $region85: #{_lambda_.1} parent=11 // pred_check
          %p593 = pneg %p456
        $region86: #{_lambda_.1} parent=11 // pred_check_branch
          %595 = sbr.rel (%p593) target = $region88
        $region87: #{_lambda_.1} parent=11 // pred_region
          _
        $region88: #{_lambda_.1} parent=11 // pred_fallthru
          _
        // Predicated region
        $region89: #{_lambda_.1} parent=11 // pred_check
          %p596 = pneg %p477
        $region90: #{_lambda_.1} parent=11 // pred_check_branch
          %598 = sbr.rel (%p596) target = $region92
        $region91: #{_lambda_.1} parent=11 // pred_region
          _
        $region92: #{_lambda_.1} parent=11 // pred_fallthru
          _
        // Predicated region
        $region93: #{_lambda_.1} parent=11 // pred_check
          %p599 = pneg %p498
        $region94: #{_lambda_.1} parent=11 // pred_check_branch
          %601 = sbr.rel (%p599) target = $region96
        $region95: #{_lambda_.1} parent=11 // pred_region
          _
        $region96: #{_lambda_.1} parent=11 // pred_fallthru
          _
      $region12: #{_lambda_.1} parent=5 // pred_fallthru
        _
      %p602 = scmp.lt.s32.totalorder %s31, 2
      // Predicated region
      $region97: #{_lambda_.1} parent=5 // pred_check
        %p603 = pneg %p602
      $region98: #{_lambda_.1} parent=5 // pred_check_branch
        %605 = sbr.rel (%p603) target = $region100
      $region99: #{_lambda_.1} parent=5 // pred_region
        // Predicated region
        $region101: #{_lambda_.1} parent=99 // pred_check
          %p606 = pneg %p51
        $region102: #{_lambda_.1} parent=99 // pred_check_branch
          %608 = sbr.rel (%p606) target = $region104
        $region103: #{_lambda_.1} parent=99 // pred_region
          %p609 = scmp.lt.s32.totalorder %s31, 1
          %s610 = scalar_select %p609, %s31, 1
          %s611 = smul.addr %s610, 6
          %s612 = smul.addr %s611, 8
          %s613 = scalar_lea.vmem %s0, %s612
        $region104: #{_lambda_.1} parent=99 // pred_fallthru
          _
      $region100: #{_lambda_.1} parent=5 // pred_fallthru
        _
      %p614 = scmp.le.s32.totalorder 1, %s31
      %p615 = scmp.lt.s32.totalorder %s31, 3
      %p616 = pnand %p614, %p615
      %p617 = pneg %p616
      // Predicated region
      $region105: #{_lambda_.1} parent=5 // pred_check
        _
      $region106: #{_lambda_.1} parent=5 // pred_check_branch
        %619 = sbr.rel (%p616) target = $region108
      $region107: #{_lambda_.1} parent=5 // pred_region
        %s620 = ssub.s32 %s31, 1
        %p621 = scmp.lt.s32.totalorder %s36, 1
        %s622 = scalar_select %p621, %s36, 1
        %s623 = smul.addr %s622, 6
        %s624 = smul.addr %s623, 8
        %s625 = scalar_lea.vmem %s0, %s624
        %p626 = pneg %p57
        %p627 = pneg %p54
        %p628 = pneg %p78
        %p629 = pneg %p75
        %p630 = pneg %p99
        %p631 = pneg %p96
        %p632 = pneg %p120
        %p633 = pneg %p117
        %p634 = pneg %p141
        %p635 = pneg %p138
        %p636 = pneg %p162
        %p637 = pneg %p159
        %p638 = pneg %p183
        %p639 = pneg %p180
        %p640 = pneg %p204
        %p641 = pneg %p201
        %p642 = pneg %p225
        %p643 = pneg %p222
        %p644 = pneg %p246
        %p645 = pneg %p243
        %p646 = pneg %p267
        %p647 = pneg %p264
        %p648 = pneg %p288
        %p649 = pneg %p285
        %p650 = pneg %p309
        %p651 = pneg %p306
        %p652 = pneg %p330
        %p653 = pneg %p327
        %p654 = pneg %p351
        %p655 = pneg %p348
        %p656 = pneg %p372
        %p657 = pneg %p369
        %p658 = pneg %p393
        %p659 = pneg %p390
        %p660 = pneg %p414
        %p661 = pneg %p411
        %p662 = pneg %p435
        %p663 = pneg %p432
        %p664 = pneg %p456
        %p665 = pneg %p453
        %p666 = pneg %p477
        %p667 = pneg %p474
        %p668 = pneg %p498
        %p669 = pneg %p495
        %p670 = pneg %p524
        %p671 = pneg %p521
        %s672 = sand.u32 %s511, 1
        %s673 = scalar_lea.sflag [#allocation4], %s672
        %s674 = sand.u32 %s511, 1
        %s675 = scalar_lea.vmem [#allocation3], %s674
        %p676 = scmp.lt.s32.totalorder %s36, 1
        %s677 = scalar_select %p676, %s36, 1
        %s678 = smul.addr %s677, 6
        %s679 = smul.addr %s678, 8
        %s680 = scalar_lea.vmem %s0, %s679
        %v682 = vld [vmem:[%s680] sm:$0xff]
        %v683 = vld [vmem:[%s680 + $0x8] sm:$0xff]
        %v684 = vld [vmem:[%s680 + $0x10] sm:$0xff]
        %v685 = vld [vmem:[%s680 + $0x18] sm:$0xff]
        %v686 = vld [vmem:[%s680 + $0x20] sm:$0xff]
        %v687 = vld [vmem:[%s680 + $0x28] sm:$0xff]
        %v688 = vpack.c.bf16 %v683, %v682
        %v689 = vpack.c.bf16 %v685, %v684
        %v690 = vpack.c.bf16 %v687, %v686
        %v691 = vld [vmem:[%s2] sm:$0xf]
        %v692 = vld [vmem:[%s2 + $0x4] sm:$0xf]
        %v693 = vld [vmem:[%s2 + $0x8] sm:$0xf]
        %v694 = vld [vmem:[%s2 + $0xc] sm:$0xf]
        %v695 = vld [vmem:[%s2 + $0x10] sm:$0xf]
        %v696 = vld [vmem:[%s2 + $0x14] sm:$0xf]
        %v697 = vld [vmem:[%s3] sm:$0x1]
        %v699 = vlaneseq
        %v700 = vshrl.u32 %v699, 7
        %v701 = vsub.s32 0, %v700
        %v702 = vrot.slane %v697, %v701
        %v710 = vunpack.c.l.b16 %v691
        %v711 = vunpack.c.l.b16 %v692
        %v712 = vunpack.c.l.b16 %v693
        %v713 = vunpack.c.l.b16 %v694
        %v714 = vunpack.c.l.b16 %v695
        %v715 = vunpack.c.l.b16 %v696
        %v716 = vpack.c.b16 %v711, %v710
        %v717 = vpack.c.b16 %v713, %v712
        %v718 = vpack.c.b16 %v715, %v714
        %vm722 = vcmask 392192
        %v724 = vsel %vm722, %v688, 0
        %v727 = vsel %vm722, %v689, 0
        %v730 = vsel %vm722, %v690, 0
        %732 = vmatprep.subr.bf16.mxu0 0
        %733 = vmatpush1.bf16.msra.mxu0 %v716
        %734 = vmatprep.subr.bf16.mxu0 0
        %735 = vmatpush1.bf16.msra.mxu0 %v717
        %736 = vmatprep.subr.bf16.mxu0 0
        %737 = vmatpush1.bf16.msra.mxu0 %v718
        %738 = vmatprep.subr.bf16.mxu0 0
        %739 = vmatpush1.bf16.msra.mxu0 0
        %740 = vmatprep.subr.bf16.mxu0 0
        %741 = vmatpush1.bf16.msra.mxu0 0
        %742 = vmatprep.subr.bf16.mxu0 0
        %743 = vmatpush1.bf16.msra.mxu0 0
        %744 = vmatprep.subr.bf16.mxu0 0
        %745 = vmatpush1.bf16.msra.mxu0 0
        %746 = vmatprep.subr.bf16.mxu0 0
        %747 = vmatpush1.bf16.msra.mxu0 0
        %748 = vmatprep.subr.bf16.mxu0 0
        %749 = vmatpush1.bf16.msra.mxu0 0
        %750 = vmatprep.subr.bf16.mxu0 0
        %751 = vmatpush1.bf16.msra.mxu0 0
        %752 = vmatprep.subr.bf16.mxu0 0
        %753 = vmatpush1.bf16.msra.mxu0 0
        %754 = vmatprep.subr.bf16.mxu0 0
        %755 = vmatpush1.bf16.msra.mxu0 0
        %756 = vmatprep.subr.bf16.mxu0 0
        %757 = vmatpush1.bf16.msra.mxu0 0
        %758 = vmatprep.subr.bf16.mxu0 0
        %759 = vmatpush1.bf16.msra.mxu0 0
        %760 = vmatprep.subr.bf16.mxu0 0
        %761 = vmatpush1.bf16.msra.mxu0 0
        %762 = vmatprep.subr.bf16.mxu0 0
        %763 = vmatpush1.bf16.msra.mxu0 0
        %764 = vmatprep.mubr.bf16.mxu0 0
        %765 = vmatmul.mubr.bf16.gmra.mrb[0].mxu0 %v724
        %v766 = vpop.f32.mrb[0].mxu0
        %v767 = vadd.f32 %v702, %v766
        %v768 = vpop.f32.mrb[0].mxu0
        %v769 = vpop.f32.mrb[0].mxu0
        %v770 = vadd.f32 %v702, %v769
        %v771 = vpop.f32.mrb[0].mxu0
        %772 = vmatprep.mubr.bf16.mxu0 0
        %773 = vmatmul.mubr.bf16.gmra.mrb[0].mxu0 %v727
        %v774 = vpop.f32.mrb[0].mxu0
        %v775 = vadd.f32 %v702, %v774
        %v776 = vpop.f32.mrb[0].mxu0
        %v777 = vpop.f32.mrb[0].mxu0
        %v778 = vadd.f32 %v702, %v777
        %v779 = vpop.f32.mrb[0].mxu0
        %780 = vmatprep.mubr.bf16.mxu0 0
        %781 = vmatmul.mubr.bf16.gmra.mrb[0].mxu0 %v730
        %v782 = vpop.f32.mrb[0].mxu0
        %v783 = vadd.f32 %v702, %v782
        %v784 = vpop.f32.mrb[0].mxu0
        %v785 = vpop.f32.mrb[0].mxu0
        %v786 = vadd.f32 %v702, %v785
        %v787 = vpop.f32.mrb[0].mxu0
        %788 = vdwg.mxu0
        %v789 = vld [vmem:[%s5] sm:$0xff]
        %v790 = vld [vmem:[%s5 + $0x8] sm:$0xff]
        %v791 = vld [vmem:[%s5 + $0x10] sm:$0xff]
        %v792 = vld [vmem:[%s4] sm:$0x1]
        %v793 = vadd.f32 %v792, %v789
        %794 = vst [vmem:[#allocation2] sm:$0x1] %v793
        %vm798 = vcmask 1046528
        %v799 = vrot.slane %v789, 1
        %v800 = vrot.slane %v790, 1
        %v801 = vsel %vm798, %v799, %v800
        %v802 = vrot.slane %v791, 1
        %v803 = vsel %vm798, %v800, %v802
        %v806 = vadd.f32 %v767, %v801
        %v807 = vadd.f32 %v770, %v803
        %808 = vst [vmem:[#allocation2 + $0x1] sm:$0xff] %v806
        %809 = vst [vmem:[#allocation2 + $0x9] sm:$0xff] %v807
        %810 = vst [vmem:[#allocation2 + $0x11] sm:$0xff] 0.0
        %811 = vst [vmem:[#allocation2 + $0x19] sm:$0x7f] 0.0
        %812 = vst [vmem:[#allocation2 + $0x20] sm:$0x1] %v793
        %v813 = vadd.f32 %v775, %v801
        %v814 = vadd.f32 %v778, %v803
        %815 = vst [vmem:[#allocation2 + $0x21] sm:$0xff] %v813
        %816 = vst [vmem:[#allocation2 + $0x29] sm:$0xff] %v814
        %817 = vst [vmem:[#allocation2 + $0x31] sm:$0xff] 0.0
        %818 = vst [vmem:[#allocation2 + $0x39] sm:$0x7f] 0.0
        %819 = vst [vmem:[#allocation2 + $0x40] sm:$0x1] %v793
        %v820 = vadd.f32 %v783, %v801
        %v821 = vadd.f32 %v786, %v803
        %822 = vst [vmem:[#allocation2 + $0x41] sm:$0xff] %v820
        %823 = vst [vmem:[#allocation2 + $0x49] sm:$0xff] %v821
        %824 = vst [vmem:[#allocation2 + $0x51] sm:$0xff] 0.0
        %825 = vst [vmem:[#allocation2 + $0x59] sm:$0x7f] 0.0
        %v826 = vld [vmem:[#allocation2] sm:$0xff]
        %v827 = vld [vmem:[#allocation2 + $0x8] sm:$0xff]
        %v828 = vld [vmem:[#allocation2 + $0x10] sm:$0xff]
        %v829 = vld [vmem:[#allocation2 + $0x18] sm:$0xff]
        %v830 = vld [vmem:[#allocation2 + $0x20] sm:$0xff]
        %v831 = vld [vmem:[#allocation2 + $0x28] sm:$0xff]
        %v832 = vld [vmem:[#allocation2 + $0x30] sm:$0xff]
        %v833 = vld [vmem:[#allocation2 + $0x38] sm:$0xff]
        %v834 = vld [vmem:[#allocation2 + $0x40] sm:$0xff]
        %v835 = vld [vmem:[#allocation2 + $0x48] sm:$0xff]
        %v836 = vld [vmem:[#allocation2 + $0x50] sm:$0xff]
        %v837 = vld [vmem:[#allocation2 + $0x58] sm:$0xff]
        %v838 = vld [vmem:[%s1] sm:$0x1]
        %v839 = vld [vmem:[%s6] sm:$0x1]
        %v840 = vld [vmem:[%s7] sm:$0x1]
        %841 = vadd.xlane.f32.xlu0 %v826
        %v842 = vpop.xlane.xlu0 %841
        %843 = vadd.xlane.f32.xlu0 %v827
        %v844 = vpop.xlane.xlu0 %843
        %845 = vadd.xlane.f32.xlu0 %v828
        %v846 = vpop.xlane.xlu0 %845
        %847 = vadd.xlane.f32.xlu0 %v829
        %v848 = vpop.xlane.xlu0 %847
        %849 = vadd.xlane.f32.xlu0 %v830
        %v850 = vpop.xlane.xlu0 %849
        %851 = vadd.xlane.f32.xlu0 %v831
        %v852 = vpop.xlane.xlu0 %851
        %853 = vadd.xlane.f32.xlu0 %v832
        %v854 = vpop.xlane.xlu0 %853
        %855 = vadd.xlane.f32.xlu0 %v833
        %v856 = vpop.xlane.xlu0 %855
        %857 = vadd.xlane.f32.xlu0 %v834
        %v858 = vpop.xlane.xlu0 %857
        %859 = vadd.xlane.f32.xlu0 %v835
        %v860 = vpop.xlane.xlu0 %859
        %861 = vadd.xlane.f32.xlu0 %v836
        %v862 = vpop.xlane.xlu0 %861
        %863 = vadd.xlane.f32.xlu0 %v837
        %v864 = vpop.xlane.xlu0 %863
        %v865 = vrcp.pop 128.0
        %v866 = vmul.f32 %v842, %v865
        %v867 = vmul.f32 %v844, %v865
        %v868 = vmul.f32 %v846, %v865
        %v869 = vmul.f32 %v848, %v865
        %v870 = vmul.f32 %v850, %v865
        %v871 = vmul.f32 %v852, %v865
        %v872 = vmul.f32 %v854, %v865
        %v873 = vmul.f32 %v856, %v865
        %v874 = vmul.f32 %v858, %v865
        %v875 = vmul.f32 %v860, %v865
        %v876 = vmul.f32 %v862, %v865
        %v877 = vmul.f32 %v864, %v865
        %v878 = vsub.f32 %v826, %v866
        %v879 = vsub.f32 %v827, %v867
        %v880 = vsub.f32 %v828, %v868
        %v881 = vsub.f32 %v829, %v869
        %v882 = vsub.f32 %v830, %v870
        %v883 = vsub.f32 %v831, %v871
        %v884 = vsub.f32 %v832, %v872
        %v885 = vsub.f32 %v833, %v873
        %v886 = vsub.f32 %v834, %v874
        %v887 = vsub.f32 %v835, %v875
        %v888 = vsub.f32 %v836, %v876
        %v889 = vsub.f32 %v837, %v877
        %v890 = vmul.f32 %v878, %v878
        %v891 = vmul.f32 %v879, %v879
        %v892 = vmul.f32 %v880, %v880
        %v893 = vmul.f32 %v881, %v881
        %v894 = vmul.f32 %v882, %v882
        %v895 = vmul.f32 %v883, %v883
        %v896 = vmul.f32 %v884, %v884
        %v897 = vmul.f32 %v885, %v885
        %v898 = vmul.f32 %v886, %v886
        %v899 = vmul.f32 %v887, %v887
        %v900 = vmul.f32 %v888, %v888
        %v901 = vmul.f32 %v889, %v889
        %902 = vadd.xlane.f32.xlu0 %v890
        %v903 = vpop.xlane.xlu0 %902
        %904 = vadd.xlane.f32.xlu0 %v891
        %v905 = vpop.xlane.xlu0 %904
        %906 = vadd.xlane.f32.xlu0 %v892
        %v907 = vpop.xlane.xlu0 %906
        %908 = vadd.xlane.f32.xlu0 %v893
        %v909 = vpop.xlane.xlu0 %908
        %910 = vadd.xlane.f32.xlu0 %v894
        %v911 = vpop.xlane.xlu0 %910
        %912 = vadd.xlane.f32.xlu0 %v895
        %v913 = vpop.xlane.xlu0 %912
        %914 = vadd.xlane.f32.xlu0 %v896
        %v915 = vpop.xlane.xlu0 %914
        %916 = vadd.xlane.f32.xlu0 %v897
        %v917 = vpop.xlane.xlu0 %916
        %918 = vadd.xlane.f32.xlu0 %v898
        %v919 = vpop.xlane.xlu0 %918
        %920 = vadd.xlane.f32.xlu0 %v899
        %v921 = vpop.xlane.xlu0 %920
        %922 = vadd.xlane.f32.xlu0 %v900
        %v923 = vpop.xlane.xlu0 %922
        %924 = vadd.xlane.f32.xlu0 %v901
        %v925 = vpop.xlane.xlu0 %924
        %v926 = vmul.f32 %v903, %v865
        %v927 = vmul.f32 %v905, %v865
        %v928 = vmul.f32 %v907, %v865
        %v929 = vmul.f32 %v909, %v865
        %v930 = vmul.f32 %v911, %v865
        %v931 = vmul.f32 %v913, %v865
        %v932 = vmul.f32 %v915, %v865
        %v933 = vmul.f32 %v917, %v865
        %v934 = vmul.f32 %v919, %v865
        %v935 = vmul.f32 %v921, %v865
        %v936 = vmul.f32 %v923, %v865
        %v937 = vmul.f32 %v925, %v865
        %v938 = vadd.f32 %v926, 1e-06
        %v939 = vadd.f32 %v927, 1e-06
        %v940 = vadd.f32 %v928, 1e-06
        %v941 = vadd.f32 %v929, 1e-06
        %v942 = vadd.f32 %v930, 1e-06
        %v943 = vadd.f32 %v931, 1e-06
        %v944 = vadd.f32 %v932, 1e-06
        %v945 = vadd.f32 %v933, 1e-06
        %v946 = vadd.f32 %v934, 1e-06
        %v947 = vadd.f32 %v935, 1e-06
        %v948 = vadd.f32 %v936, 1e-06
        %v949 = vadd.f32 %v937, 1e-06
        %v950 = vrsqrt.pop %v938
        %v951 = vrsqrt.pop %v939
        %v952 = vrsqrt.pop %v940
        %v953 = vrsqrt.pop %v941
        %v954 = vrsqrt.pop %v942
        %v955 = vrsqrt.pop %v943
        %v956 = vrsqrt.pop %v944
        %v957 = vrsqrt.pop %v945
        %v958 = vrsqrt.pop %v946
        %v959 = vrsqrt.pop %v947
        %v960 = vrsqrt.pop %v948
        %v961 = vrsqrt.pop %v949
        %v962 = vmul.f32 %v878, %v950
        %v963 = vmul.f32 %v879, %v951
        %v964 = vmul.f32 %v880, %v952
        %v965 = vmul.f32 %v881, %v953
        %v966 = vmul.f32 %v882, %v954
        %v967 = vmul.f32 %v883, %v955
        %v968 = vmul.f32 %v884, %v956
        %v969 = vmul.f32 %v885, %v957
        %v970 = vmul.f32 %v886, %v958
        %v971 = vmul.f32 %v887, %v959
        %v972 = vmul.f32 %v888, %v960
        %v973 = vmul.f32 %v889, %v961
        %v975 = vlaneseq
        %v976 = vshrl.u32 %v975, 7
        %v977 = vsub.s32 0, %v976
        %v978 = vrot.slane %v839, %v977
        %v980 = vmul.f32 %v962, %v978
        %v981 = vmul.f32 %v963, %v978
        %v982 = vmul.f32 %v964, %v978
        %v983 = vmul.f32 %v965, %v978
        %v984 = vmul.f32 %v966, %v978
        %v985 = vmul.f32 %v967, %v978
        %v986 = vmul.f32 %v968, %v978
        %v987 = vmul.f32 %v969, %v978
        %v988 = vmul.f32 %v970, %v978
        %v989 = vmul.f32 %v971, %v978
        %v990 = vmul.f32 %v972, %v978
        %v991 = vmul.f32 %v973, %v978
        %v993 = vlaneseq
        %v994 = vshrl.u32 %v993, 7
        %v995 = vsub.s32 0, %v994
        %v996 = vrot.slane %v840, %v995
        %v998 = vadd.f32 %v980, %v996
        %v999 = vadd.f32 %v981, %v996
        %v1000 = vadd.f32 %v982, %v996
        %v1001 = vadd.f32 %v983, %v996
        %v1002 = vadd.f32 %v984, %v996
        %v1003 = vadd.f32 %v985, %v996
        %v1004 = vadd.f32 %v986, %v996
        %v1005 = vadd.f32 %v987, %v996
        %v1006 = vadd.f32 %v988, %v996
        %v1007 = vadd.f32 %v989, %v996
        %v1008 = vadd.f32 %v990, %v996
        %v1009 = vadd.f32 %v991, %v996
        %v1010 = vpack.c.bf16 %v999, %v998
        %v1011 = vpack.c.bf16 %v1001, %v1000
        %v1012 = vpack.c.bf16 %v1003, %v1002
        %v1013 = vpack.c.bf16 %v1005, %v1004
        %v1014 = vpack.c.bf16 %v1007, %v1006
        %v1015 = vpack.c.bf16 %v1009, %v1008
        %v1016 = vld [vmem:[%s8] sm:$0xff]
        %v1017 = vld [vmem:[%s8 + $0x8] sm:$0xf]
        %v1018 = vld [vmem:[%s8 + $0xc] sm:$0xff]
        %v1019 = vld [vmem:[%s8 + $0x14] sm:$0xf]
        %v1020 = vld [vmem:[%s8 + $0x18] sm:$0xff]
        %v1021 = vld [vmem:[%s8 + $0x20] sm:$0xf]
        %v1022 = vld [vmem:[%s8 + $0x24] sm:$0xff]
        %v1023 = vld [vmem:[%s8 + $0x2c] sm:$0xf]
        %v1024 = vld [vmem:[%s8 + $0x30] sm:$0xff]
        %v1025 = vld [vmem:[%s8 + $0x38] sm:$0xf]
        %v1026 = vld [vmem:[%s8 + $0x3c] sm:$0xff]
        %v1027 = vld [vmem:[%s8 + $0x44] sm:$0xf]
        %v1028 = vld [vmem:[%s8 + $0x48] sm:$0xff]
        %v1029 = vld [vmem:[%s8 + $0x50] sm:$0xf]
        %v1030 = vld [vmem:[%s8 + $0x54] sm:$0xff]
        %v1031 = vld [vmem:[%s8 + $0x5c] sm:$0xf]
        %v1032 = vld [vmem:[%s8 + $0x60] sm:$0xff]
        %v1033 = vld [vmem:[%s8 + $0x68] sm:$0xf]
        %v1034 = vld [vmem:[%s8 + $0x6c] sm:$0xff]
        %v1035 = vld [vmem:[%s8 + $0x74] sm:$0xf]
        %v1036 = vld [vmem:[%s8 + $0x78] sm:$0xff]
        %v1037 = vld [vmem:[%s8 + $0x80] sm:$0xf]
        %v1038 = vld [vmem:[%s8 + $0x84] sm:$0xff]
        %v1039 = vld [vmem:[%s8 + $0x8c] sm:$0xf]
        %v1040 = vld [vmem:[%s8 + $0x90] sm:$0xff]
        %v1041 = vld [vmem:[%s8 + $0x98] sm:$0xf]
        %v1042 = vld [vmem:[%s8 + $0x9c] sm:$0xff]
        %v1043 = vld [vmem:[%s8 + $0xa4] sm:$0xf]
        %v1044 = vld [vmem:[%s8 + $0xa8] sm:$0xff]
        %v1045 = vld [vmem:[%s8 + $0xb0] sm:$0xf]
        %v1046 = vld [vmem:[%s8 + $0xb4] sm:$0xff]
        %v1047 = vld [vmem:[%s8 + $0xbc] sm:$0xf]
        %v1048 = vld [vmem:[%s9] sm:$0x7]
        %v1050 = vlaneseq
        %v1051 = vshrl.u32 %v1050, 7
        %v1052 = vsub.s32 0, %v1051
        %v1053 = vrot.slane %v1048, %v1052
        %v1054 = vlaneseq
        %v1055 = vshrl.u32 %v1054, 7
        %v1056 = vsub.s32 1, %v1055
        %v1057 = vrot.slane %v1048, %v1056
        %v1058 = vlaneseq
        %v1059 = vshrl.u32 %v1058, 7
        %v1060 = vsub.s32 2, %v1059
        %v1061 = vrot.slane %v1048, %v1060
        %v1097 = vunpack.c.l.b16 %v1016
        %v1098 = vunpack.c.h.b16 %v1016
        %v1099 = vunpack.c.l.b16 %v1017
        %v1100 = vunpack.c.l.b16 %v1018
        %v1101 = vunpack.c.h.b16 %v1018
        %v1102 = vunpack.c.l.b16 %v1019
        %v1103 = vunpack.c.l.b16 %v1020
        %v1104 = vunpack.c.h.b16 %v1020
        %v1105 = vunpack.c.l.b16 %v1021
        %v1106 = vunpack.c.l.b16 %v1022
        %v1107 = vunpack.c.h.b16 %v1022
        %v1108 = vunpack.c.l.b16 %v1023
        %v1109 = vunpack.c.l.b16 %v1024
        %v1110 = vunpack.c.h.b16 %v1024
        %v1111 = vunpack.c.l.b16 %v1025
        %v1112 = vunpack.c.l.b16 %v1026
        %v1113 = vunpack.c.h.b16 %v1026
        %v1114 = vunpack.c.l.b16 %v1027
        %v1115 = vunpack.c.l.b16 %v1028
        %v1116 = vunpack.c.h.b16 %v1028
        %v1117 = vunpack.c.l.b16 %v1029
        %v1118 = vunpack.c.l.b16 %v1030
        %v1119 = vunpack.c.h.b16 %v1030
        %v1120 = vunpack.c.l.b16 %v1031
        %v1121 = vunpack.c.l.b16 %v1032
        %v1122 = vunpack.c.h.b16 %v1032
        %v1123 = vunpack.c.l.b16 %v1033
        %v1124 = vunpack.c.l.b16 %v1034
        %v1125 = vunpack.c.h.b16 %v1034
        %v1126 = vunpack.c.l.b16 %v1035
        %v1127 = vunpack.c.l.b16 %v1036
        %v1128 = vunpack.c.h.b16 %v1036
        %v1129 = vunpack.c.l.b16 %v1037
        %v1130 = vunpack.c.l.b16 %v1038
        %v1131 = vunpack.c.h.b16 %v1038
        %v1132 = vunpack.c.l.b16 %v1039
        %v1133 = vunpack.c.l.b16 %v1040
        %v1134 = vunpack.c.h.b16 %v1040
        %v1135 = vunpack.c.l.b16 %v1041
        %v1136 = vunpack.c.l.b16 %v1042
        %v1137 = vunpack.c.h.b16 %v1042
        %v1138 = vunpack.c.l.b16 %v1043
        %v1139 = vunpack.c.l.b16 %v1044
        %v1140 = vunpack.c.h.b16 %v1044
        %v1141 = vunpack.c.l.b16 %v1045
        %v1142 = vunpack.c.l.b16 %v1046
        %v1143 = vunpack.c.h.b16 %v1046
        %v1144 = vunpack.c.l.b16 %v1047
        %v1145 = vpack.c.b16 %v1100, %v1097
        %v1146 = vpack.c.b16 %v1101, %v1098
        %v1147 = vpack.c.b16 %v1102, %v1099
        %v1148 = vpack.c.b16 %v1106, %v1103
        %v1149 = vpack.c.b16 %v1107, %v1104
        %v1150 = vpack.c.b16 %v1108, %v1105
        %v1151 = vpack.c.b16 %v1112, %v1109
        %v1152 = vpack.c.b16 %v1113, %v1110
        %v1153 = vpack.c.b16 %v1114, %v1111
        %v1154 = vpack.c.b16 %v1118, %v1115
        %v1155 = vpack.c.b16 %v1119, %v1116
        %v1156 = vpack.c.b16 %v1120, %v1117
        %v1157 = vpack.c.b16 %v1124, %v1121
        %v1158 = vpack.c.b16 %v1125, %v1122
        %v1159 = vpack.c.b16 %v1126, %v1123
        %v1160 = vpack.c.b16 %v1130, %v1127
        %v1161 = vpack.c.b16 %v1131, %v1128
        %v1162 = vpack.c.b16 %v1132, %v1129
        %v1163 = vpack.c.b16 %v1136, %v1133
        %v1164 = vpack.c.b16 %v1137, %v1134
        %v1165 = vpack.c.b16 %v1138, %v1135
        %v1166 = vpack.c.b16 %v1142, %v1139
        %v1167 = vpack.c.b16 %v1143, %v1140
        %v1168 = vpack.c.b16 %v1144, %v1141
        %1193 = vmatprep.subr.bf16.mxu0 %v1146
        %1194 = vmatpush1.bf16.msra.mxu0 %v1145
        %1195 = vmatprep.subr.bf16.mxu0 %v1149
        %1196 = vmatpush1.bf16.msra.mxu0 %v1148
        %1197 = vmatprep.subr.bf16.mxu0 %v1152
        %1198 = vmatpush1.bf16.msra.mxu0 %v1151
        %1199 = vmatprep.subr.bf16.mxu0 %v1155
        %1200 = vmatpush1.bf16.msra.mxu0 %v1154
        %1201 = vmatprep.subr.bf16.mxu0 %v1158
        %1202 = vmatpush1.bf16.msra.mxu0 %v1157
        %1203 = vmatprep.subr.bf16.mxu0 %v1161
        %1204 = vmatpush1.bf16.msra.mxu0 %v1160
        %1205 = vmatprep.subr.bf16.mxu0 %v1164
        %1206 = vmatpush1.bf16.msra.mxu0 %v1163
        %1207 = vmatprep.subr.bf16.mxu0 %v1167
        %1208 = vmatpush1.bf16.msra.mxu0 %v1166
        %1209 = vmatprep.subr.bf16.mxu0 0
        %1210 = vmatpush1.bf16.msra.mxu0 0
        %1211 = vmatprep.subr.bf16.mxu0 0
        %1212 = vmatpush1.bf16.msra.mxu0 0
        %1213 = vmatprep.subr.bf16.mxu0 0
        %1214 = vmatpush1.bf16.msra.mxu0 0
        %1215 = vmatprep.subr.bf16.mxu0 0
        %1216 = vmatpush1.bf16.msra.mxu0 0
        %1217 = vmatprep.subr.bf16.mxu0 0
        %1218 = vmatpush1.bf16.msra.mxu0 0
        %1219 = vmatprep.subr.bf16.mxu0 0
        %1220 = vmatpush1.bf16.msra.mxu0 0
        %1221 = vmatprep.subr.bf16.mxu0 0
        %1222 = vmatpush1.bf16.msra.mxu0 0
        %1223 = vmatprep.subr.bf16.mxu0 0
        %1224 = vmatpush1.bf16.msra.mxu0 0
        %1225 = vmatprep.mubr.bf16.mxu0 0
        %1226 = vmatmul.mubr.bf16.gmra.mrb[0].mxu0 %v1010
        %v1227 = vpop.f32.mrb[0].mxu0
        %v1228 = vadd.f32 %v1053, %v1227
        %v1229 = vpop.f32.mrb[0].mxu0
        %v1230 = vadd.f32 %v1057, %v1229
        %v1231 = vpop.f32.mrb[0].mxu0
        %v1232 = vadd.f32 %v1053, %v1231
        %v1233 = vpop.f32.mrb[0].mxu0
        %v1234 = vadd.f32 %v1057, %v1233
        %1235 = vmatprep.mubr.bf16.mxu0 0
        %1236 = vmatmul.mubr.bf16.gmra.mrb[0].mxu0 %v1011
        %v1237 = vpop.f32.mrb[0].mxu0
        %v1238 = vadd.f32 %v1053, %v1237
        %v1239 = vpop.f32.mrb[0].mxu0
        %v1240 = vadd.f32 %v1057, %v1239
        %v1241 = vpop.f32.mrb[0].mxu0
        %v1242 = vadd.f32 %v1053, %v1241
        %v1243 = vpop.f32.mrb[0].mxu0
        %v1244 = vadd.f32 %v1057, %v1243
        %1245 = vmatprep.mubr.bf16.mxu0 0
        %1246 = vmatmul.mubr.bf16.gmra.mrb[0].mxu0 %v1012
        %v1247 = vpop.f32.mrb[0].mxu0
        %v1248 = vadd.f32 %v1053, %v1247
        %v1249 = vpop.f32.mrb[0].mxu0
        %v1250 = vadd.f32 %v1057, %v1249
        %v1251 = vpop.f32.mrb[0].mxu0
        %v1252 = vadd.f32 %v1053, %v1251
        %v1253 = vpop.f32.mrb[0].mxu0
        %v1254 = vadd.f32 %v1057, %v1253
        %1255 = vmatprep.mubr.bf16.mxu0 0
        %1256 = vmatmul.mubr.bf16.gmra.mrb[0].mxu0 %v1013
        %v1257 = vpop.f32.mrb[0].mxu0
        %v1258 = vadd.f32 %v1053, %v1257
        %v1259 = vpop.f32.mrb[0].mxu0
        %v1260 = vadd.f32 %v1057, %v1259
        %v1261 = vpop.f32.mrb[0].mxu0
        %v1262 = vadd.f32 %v1053, %v1261
        %v1263 = vpop.f32.mrb[0].mxu0
        %v1264 = vadd.f32 %v1057, %v1263
        %1265 = vmatprep.mubr.bf16.mxu0 0
        %1266 = vmatmul.mubr.bf16.gmra.mrb[0].mxu0 %v1014
        %v1267 = vpop.f32.mrb[0].mxu0
        %v1268 = vadd.f32 %v1053, %v1267
        %v1269 = vpop.f32.mrb[0].mxu0
        %v1270 = vadd.f32 %v1057, %v1269
        %v1271 = vpop.f32.mrb[0].mxu0
        %v1272 = vadd.f32 %v1053, %v1271
        %v1273 = vpop.f32.mrb[0].mxu0
        %v1274 = vadd.f32 %v1057, %v1273
        %1275 = vmatprep.mubr.bf16.mxu0 0
        %1276 = vmatmul.mubr.bf16.gmra.mrb[0].mxu0 %v1015
        %v1277 = vpop.f32.mrb[0].mxu0
        %v1278 = vadd.f32 %v1053, %v1277
        %v1279 = vpop.f32.mrb[0].mxu0
        %v1280 = vadd.f32 %v1057, %v1279
        %v1281 = vpop.f32.mrb[0].mxu0
        %v1282 = vadd.f32 %v1053, %v1281
        %v1283 = vpop.f32.mrb[0].mxu0
        %v1284 = vadd.f32 %v1057, %v1283
        %1285 = vdwg.mxu0
        %1286 = vmatprep.subr.bf16.mxu0 0
        %1287 = vmatpush1.bf16.msra.mxu0 %v1147
        %1288 = vmatprep.subr.bf16.mxu0 0
        %1289 = vmatpush1.bf16.msra.mxu0 %v1150
        %1290 = vmatprep.subr.bf16.mxu0 0
        %1291 = vmatpush1.bf16.msra.mxu0 %v1153
        %1292 = vmatprep.subr.bf16.mxu0 0
        %1293 = vmatpush1.bf16.msra.mxu0 %v1156
        %1294 = vmatprep.subr.bf16.mxu0 0
        %1295 = vmatpush1.bf16.msra.mxu0 %v1159
        %1296 = vmatprep.subr.bf16.mxu0 0
        %1297 = vmatpush1.bf16.msra.mxu0 %v1162
        %1298 = vmatprep.subr.bf16.mxu0 0
        %1299 = vmatpush1.bf16.msra.mxu0 %v1165
        %1300 = vmatprep.subr.bf16.mxu0 0
        %1301 = vmatpush1.bf16.msra.mxu0 %v1168
        %1302 = vmatprep.subr.bf16.mxu0 0
        %1303 = vmatpush1.bf16.msra.mxu0 0
        %1304 = vmatprep.subr.bf16.mxu0 0
        %1305 = vmatpush1.bf16.msra.mxu0 0
        %1306 = vmatprep.subr.bf16.mxu0 0
        %1307 = vmatpush1.bf16.msra.mxu0 0
        %1308 = vmatprep.subr.bf16.mxu0 0
        %1309 = vmatpush1.bf16.msra.mxu0 0
        %1310 = vmatprep.subr.bf16.mxu0 0
        %1311 = vmatpush1.bf16.msra.mxu0 0
        %1312 = vmatprep.subr.bf16.mxu0 0
        %1313 = vmatpush1.bf16.msra.mxu0 0
        %1314 = vmatprep.subr.bf16.mxu0 0
        %1315 = vmatpush1.bf16.msra.mxu0 0
        %1316 = vmatprep.subr.bf16.mxu0 0
        %1317 = vmatpush1.bf16.msra.mxu0 0
        %1318 = vmatprep.mubr.bf16.mxu0 0
        %1319 = vmatmul.mubr.bf16.gmra.mrb[0].mxu0 %v1010
        %v1320 = vpop.f32.mrb[0].mxu0
        %v1321 = vadd.f32 %v1061, %v1320
        %v1322 = vpop.f32.mrb[0].mxu0
        %v1323 = vpop.f32.mrb[0].mxu0
        %v1324 = vadd.f32 %v1061, %v1323
        %v1325 = vpop.f32.mrb[0].mxu0
        %1326 = vmatprep.mubr.bf16.mxu0 0
        %1327 = vmatmul.mubr.bf16.gmra.mrb[0].mxu0 %v1011
        %v1328 = vpop.f32.mrb[0].mxu0
        %v1329 = vadd.f32 %v1061, %v1328
        %v1330 = vpop.f32.mrb[0].mxu0
        %v1331 = vpop.f32.mrb[0].mxu0
        %v1332 = vadd.f32 %v1061, %v1331
        %v1333 = vpop.f32.mrb[0].mxu0
        %1334 = vmatprep.mubr.bf16.mxu0 0
        %1335 = vmatmul.mubr.bf16.gmra.mrb[0].mxu0 %v1012
        %v1336 = vpop.f32.mrb[0].mxu0
        %v1337 = vadd.f32 %v1061, %v1336
        %v1338 = vpop.f32.mrb[0].mxu0
        %v1339 = vpop.f32.mrb[0].mxu0
        %v1340 = vadd.f32 %v1061, %v1339
        %v1341 = vpop.f32.mrb[0].mxu0
        %1342 = vmatprep.mubr.bf16.mxu0 0
        %1343 = vmatmul.mubr.bf16.gmra.mrb[0].mxu0 %v1013
        %v1344 = vpop.f32.mrb[0].mxu0
        %v1345 = vadd.f32 %v1061, %v1344
        %v1346 = vpop.f32.mrb[0].mxu0
        %v1347 = vpop.f32.mrb[0].mxu0
        %v1348 = vadd.f32 %v1061, %v1347
        %v1349 = vpop.f32.mrb[0].mxu0
        %1350 = vmatprep.mubr.bf16.mxu0 0
        %1351 = vmatmul.mubr.bf16.gmra.mrb[0].mxu0 %v1014
        %v1352 = vpop.f32.mrb[0].mxu0
        %v1353 = vadd.f32 %v1061, %v1352
        %v1354 = vpop.f32.mrb[0].mxu0
        %v1355 = vpop.f32.mrb[0].mxu0
        %v1356 = vadd.f32 %v1061, %v1355
        %v1357 = vpop.f32.mrb[0].mxu0
        %1358 = vmatprep.mubr.bf16.mxu0 0
        %1359 = vmatmul.mubr.bf16.gmra.mrb[0].mxu0 %v1015
        %v1360 = vpop.f32.mrb[0].mxu0
        %v1361 = vadd.f32 %v1061, %v1360
        %v1362 = vpop.f32.mrb[0].mxu0
        %v1363 = vpop.f32.mrb[0].mxu0
        %v1364 = vadd.f32 %v1061, %v1363
        %v1365 = vpop.f32.mrb[0].mxu0
        %1366 = vdwg.mxu0
        %v1367 = vld [vmem:[%s10] sm:$0xf]
        %v1368 = vld [vmem:[%s10 + $0x4] sm:$0xf]
        %v1369 = vld [vmem:[%s10 + $0x8] sm:$0xf]
        %v1370 = vld [vmem:[%s10 + $0xc] sm:$0xf]
        %v1371 = vld [vmem:[%s10 + $0x10] sm:$0xf]
        %v1372 = vld [vmem:[%s10 + $0x14] sm:$0xf]
        %v1373 = vld [vmem:[%s10 + $0x18] sm:$0xf]
        %v1374 = vld [vmem:[%s10 + $0x1c] sm:$0xf]
        %v1375 = vld [vmem:[%s10 + $0x20] sm:$0xf]
        %v1376 = vld [vmem:[%s10 + $0x24] sm:$0xf]
        %v1377 = vld [vmem:[%s10 + $0x28] sm:$0xf]
        %v1378 = vld [vmem:[%s10 + $0x2c] sm:$0xf]
        %v1379 = vld [vmem:[%s10 + $0x30] sm:$0xf]
        %v1380 = vld [vmem:[%s10 + $0x34] sm:$0xf]
        %v1381 = vld [vmem:[%s10 + $0x38] sm:$0xf]
        %v1382 = vld [vmem:[%s10 + $0x3c] sm:$0xf]
        %v1383 = vpack.c.bf16 %v1232, %v1228
        %v1384 = vpack.c.bf16 %v1242, %v1238
        %v1385 = vpack.c.bf16 %v1252, %v1248
        %v1386 = vpack.c.bf16 %v1262, %v1258
        %v1387 = vpack.c.bf16 %v1272, %v1268
        %v1388 = vpack.c.bf16 %v1282, %v1278
        %v1389 = vpack.c.bf16 %v1234, %v1230
        %v1390 = vpack.c.bf16 %v1244, %v1240
        %v1391 = vpack.c.bf16 %v1254, %v1250
        %v1392 = vpack.c.bf16 %v1264, %v1260
        %v1393 = vpack.c.bf16 %v1274, %v1270
        %v1394 = vpack.c.bf16 %v1284, %v1280
        %v1395 = vpack.c.bf16 %v1324, %v1321
        %v1396 = vpack.c.bf16 %v1332, %v1329
        %v1397 = vpack.c.bf16 %v1340, %v1337
        %v1398 = vpack.c.bf16 %v1348, %v1345
        %v1399 = vpack.c.bf16 %v1356, %v1353
        %v1400 = vpack.c.bf16 %v1364, %v1361
        %vm1401 = vcmask 261120
        %v1403 = vsel %vm1401, %v1383, 0
        %v1406 = vsel %vm1401, %v1384, 0
        %v1409 = vsel %vm1401, %v1389, 0
        %v1412 = vsel %vm1401, %v1390, 0
        %1414 = vmatprep.subr.bf16.mxu0 0
        %1415 = vmatpush1.bf16.xpose.msra.mxu0 %v1409
        %1416 = vmatprep.subr.bf16.mxu0 0
        %1417 = vmatpush1.bf16.xpose.msra.mxu0 %v1412
        %1418 = vmatprep.subr.bf16.mxu0 0
        %1419 = vmatpush1.bf16.xpose.msra.mxu0 0
        %1420 = vmatprep.subr.bf16.mxu0 0
        %1421 = vmatpush1.bf16.xpose.msra.mxu0 0
        %1422 = vmatprep.subr.bf16.mxu0 0
        %1423 = vmatpush1.bf16.xpose.msra.mxu0 0
        %1424 = vmatprep.subr.bf16.mxu0 0
        %1425 = vmatpush1.bf16.xpose.msra.mxu0 0
        %1426 = vmatprep.subr.bf16.mxu0 0
        %1427 = vmatpush1.bf16.xpose.msra.mxu0 0
        %1428 = vmatprep.subr.bf16.mxu0 0
        %1429 = vmatpush1.bf16.xpose.msra.mxu0 0
        %1430 = vmatprep.subr.bf16.mxu0 0
        %1431 = vmatpush1.bf16.xpose.msra.mxu0 0
        %1432 = vmatprep.subr.bf16.mxu0 0
        %1433 = vmatpush1.bf16.xpose.msra.mxu0 0
        %1434 = vmatprep.subr.bf16.mxu0 0
        %1435 = vmatpush1.bf16.xpose.msra.mxu0 0
        %1436 = vmatprep.subr.bf16.mxu0 0
        %1437 = vmatpush1.bf16.xpose.msra.mxu0 0
        %1438 = vmatprep.subr.bf16.mxu0 0
        %1439 = vmatpush1.bf16.xpose.msra.mxu0 0
        %1440 = vmatprep.subr.bf16.mxu0 0
        %1441 = vmatpush1.bf16.xpose.msra.mxu0 0
        %1442 = vmatprep.subr.bf16.mxu0 0
        %1443 = vmatpush1.bf16.xpose.msra.mxu0 0
        %1444 = vmatprep.subr.bf16.mxu0 0
        %1445 = vmatpush1.bf16.xpose.msra.mxu0 0
        %1446 = vmatprep.mubr.bf16.mxu0 0
        %1447 = vmatmul.mubr.bf16.gmra.mrb[0].mxu0 %v1403
        %v1448 = vpop.f32.mrb[0].mxu0
        %v1449 = vadd.f32 0.0, %v1448
        %v1450 = vpop.f32.mrb[0].mxu0
        %v1451 = vpop.f32.mrb[0].mxu0
        %v1452 = vadd.f32 0.0, %v1451
        %v1453 = vpop.f32.mrb[0].mxu0
        %1454 = vmatprep.mubr.bf16.mxu0 0
        %1455 = vmatmul.mubr.bf16.gmra.mrb[0].mxu0 %v1406
        %v1456 = vpop.f32.mrb[0].mxu0
        %v1457 = vadd.f32 0.0, %v1456
        %v1458 = vpop.f32.mrb[0].mxu0
        %v1459 = vpop.f32.mrb[0].mxu0
        %v1460 = vadd.f32 0.0, %v1459
        %v1461 = vpop.f32.mrb[0].mxu0
        %1462 = vdwg.mxu0
        %v1464 = vsel %vm1401, %v1385, 0
        %v1467 = vsel %vm1401, %v1386, 0
        %v1470 = vsel %vm1401, %v1391, 0
        %v1473 = vsel %vm1401, %v1392, 0
        %1475 = vmatprep.subr.bf16.mxu0 0
        %1476 = vmatpush1.bf16.xpose.msra.mxu0 %v1470
        %1477 = vmatprep.subr.bf16.mxu0 0
        %1478 = vmatpush1.bf16.xpose.msra.mxu0 %v1473
        %1479 = vmatprep.subr.bf16.mxu0 0
        %1480 = vmatpush1.bf16.xpose.msra.mxu0 0
        %1481 = vmatprep.subr.bf16.mxu0 0
        %1482 = vmatpush1.bf16.xpose.msra.mxu0 0
        %1483 = vmatprep.subr.bf16.mxu0 0
        %1484 = vmatpush1.bf16.xpose.msra.mxu0 0
        %1485 = vmatprep.subr.bf16.mxu0 0
        %1486 = vmatpush1.bf16.xpose.msra.mxu0 0
        %1487 = vmatprep.subr.bf16.mxu0 0
        %1488 = vmatpush1.bf16.xpose.msra.mxu0 0
        %1489 = vmatprep.subr.bf16.mxu0 0
        %1490 = vmatpush1.bf16.xpose.msra.mxu0 0
        %1491 = vmatprep.subr.bf16.mxu0 0
        %1492 = vmatpush1.bf16.xpose.msra.mxu0 0
        %1493 = vmatprep.subr.bf16.mxu0 0
        %1494 = vmatpush1.bf16.xpose.msra.mxu0 0
        %1495 = vmatprep.subr.bf16.mxu0 0
        %1496 = vmatpush1.bf16.xpose.msra.mxu0 0
        %1497 = vmatprep.subr.bf16.mxu0 0
        %1498 = vmatpush1.bf16.xpose.msra.mxu0 0
        %1499 = vmatprep.subr.bf16.mxu0 0
        %1500 = vmatpush1.bf16.xpose.msra.mxu0 0
        %1501 = vmatprep.subr.bf16.mxu0 0
        %1502 = vmatpush1.bf16.xpose.msra.mxu0 0
        %1503 = vmatprep.subr.bf16.mxu0 0
        %1504 = vmatpush1.bf16.xpose.msra.mxu0 0
        %1505 = vmatprep.subr.bf16.mxu0 0
        %1506 = vmatpush1.bf16.xpose.msra.mxu0 0
        %1507 = vmatprep.mubr.bf16.mxu0 0
        %1508 = vmatmul.mubr.bf16.gmra.mrb[0].mxu0 %v1464
        %v1509 = vpop.f32.mrb[0].mxu0
        %v1510 = vadd.f32 0.0, %v1509
        %v1511 = vpop.f32.mrb[0].mxu0
        %v1512 = vpop.f32.mrb[0].mxu0
        %v1513 = vadd.f32 0.0, %v1512
        %v1514 = vpop.f32.mrb[0].mxu0
        %1515 = vmatprep.mubr.bf16.mxu0 0
        %1516 = vmatmul.mubr.bf16.gmra.mrb[0].mxu0 %v1467
        %v1517 = vpop.f32.mrb[0].mxu0
        %v1518 = vadd.f32 0.0, %v1517
        %v1519 = vpop.f32.mrb[0].mxu0
        %v1520 = vpop.f32.mrb[0].mxu0
        %v1521 = vadd.f32 0.0, %v1520
        %v1522 = vpop.f32.mrb[0].mxu0
        %1523 = vdwg.mxu0
        %v1525 = vsel %vm1401, %v1387, 0
        %v1528 = vsel %vm1401, %v1388, 0
        %v1531 = vsel %vm1401, %v1393, 0
        %v1534 = vsel %vm1401, %v1394, 0
        %1536 = vmatprep.subr.bf16.mxu0 0
        %1537 = vmatpush1.bf16.xpose.msra.mxu0 %v1531
        %1538 = vmatprep.subr.bf16.mxu0 0
        %1539 = vmatpush1.bf16.xpose.msra.mxu0 %v1534
        %1540 = vmatprep.subr.bf16.mxu0 0
        %1541 = vmatpush1.bf16.xpose.msra.mxu0 0
        %1542 = vmatprep.subr.bf16.mxu0 0
        %1543 = vmatpush1.bf16.xpose.msra.mxu0 0
        %1544 = vmatprep.subr.bf16.mxu0 0
        %1545 = vmatpush1.bf16.xpose.msra.mxu0 0
        %1546 = vmatprep.subr.bf16.mxu0 0
        %1547 = vmatpush1.bf16.xpose.msra.mxu0 0
        %1548 = vmatprep.subr.bf16.mxu0 0
        %1549 = vmatpush1.bf16.xpose.msra.mxu0 0
        %1550 = vmatprep.subr.bf16.mxu0 0
        %1551 = vmatpush1.bf16.xpose.msra.mxu0 0
        %1552 = vmatprep.subr.bf16.mxu0 0
        %1553 = vmatpush1.bf16.xpose.msra.mxu0 0
        %1554 = vmatprep.subr.bf16.mxu0 0
        %1555 = vmatpush1.bf16.xpose.msra.mxu0 0
        %1556 = vmatprep.subr.bf16.mxu0 0
        %1557 = vmatpush1.bf16.xpose.msra.mxu0 0
        %1558 = vmatprep.subr.bf16.mxu0 0
        %1559 = vmatpush1.bf16.xpose.msra.mxu0 0
        %1560 = vmatprep.subr.bf16.mxu0 0
        %1561 = vmatpush1.bf16.xpose.msra.mxu0 0
        %1562 = vmatprep.subr.bf16.mxu0 0
        %1563 = vmatpush1.bf16.xpose.msra.mxu0 0
        %1564 = vmatprep.subr.bf16.mxu0 0
        %1565 = vmatpush1.bf16.xpose.msra.mxu0 0
        %1566 = vmatprep.subr.bf16.mxu0 0
        %1567 = vmatpush1.bf16.xpose.msra.mxu0 0
        %1568 = vmatprep.mubr.bf16.mxu0 0
        %1569 = vmatmul.mubr.bf16.gmra.mrb[0].mxu0 %v1525
        %v1570 = vpop.f32.mrb[0].mxu0
        %v1571 = vadd.f32 0.0, %v1570
        %v1572 = vpop.f32.mrb[0].mxu0
        %v1573 = vpop.f32.mrb[0].mxu0
        %v1574 = vadd.f32 0.0, %v1573
        %v1575 = vpop.f32.mrb[0].mxu0
        %1576 = vmatprep.mubr.bf16.mxu0 0
        %1577 = vmatmul.mubr.bf16.gmra.mrb[0].mxu0 %v1528
        %v1578 = vpop.f32.mrb[0].mxu0
        %v1579 = vadd.f32 0.0, %v1578
        %v1580 = vpop.f32.mrb[0].mxu0
        %v1581 = vpop.f32.mrb[0].mxu0
        %v1582 = vadd.f32 0.0, %v1581
        %v1583 = vpop.f32.mrb[0].mxu0
        %1584 = vdwg.mxu0
        %v1585 = vmul.f32 %v1449, 0.17677669
        %v1586 = vmul.f32 %v1452, 0.17677669
        %v1587 = vmul.f32 %v1457, 0.17677669
        %v1588 = vmul.f32 %v1460, 0.17677669
        %v1589 = vmul.f32 %v1510, 0.17677669
        %v1590 = vmul.f32 %v1513, 0.17677669
        %v1591 = vmul.f32 %v1518, 0.17677669
        %v1592 = vmul.f32 %v1521, 0.17677669
        %v1593 = vmul.f32 %v1571, 0.17677669
        %v1594 = vmul.f32 %v1574, 0.17677669
        %v1595 = vmul.f32 %v1579, 0.17677669
        %v1596 = vmul.f32 %v1582, 0.17677669
        %v1598 = vlaneseq
        %v1599 = vshrl.u32 %v1598, 7
        %v1600 = vsub.s32 0, %v1599
        %v1601 = vrot.slane %v838, %v1600
        %v1603 = vadd.f32 %v1585, %v1601
        %v1604 = vadd.f32 %v1586, %v1601
        %v1605 = vadd.f32 %v1587, %v1601
        %v1606 = vadd.f32 %v1588, %v1601
        %v1607 = vadd.f32 %v1589, %v1601
        %v1608 = vadd.f32 %v1590, %v1601
        %v1609 = vadd.f32 %v1591, %v1601
        %v1610 = vadd.f32 %v1592, %v1601
        %v1611 = vadd.f32 %v1593, %v1601
        %v1612 = vadd.f32 %v1594, %v1601
        %v1613 = vadd.f32 %v1595, %v1601
        %v1614 = vadd.f32 %v1596, %v1601
        %v1615 = vsel %vm1401, %v1603, -inf
        %1616 = vmax.xlane.f32.xlu0 %v1615
        %v1617 = vpop.xlane.xlu0 %1616
        %v1618 = vsel %vm1401, %v1604, -inf
        %1619 = vmax.xlane.f32.xlu0 %v1618
        %v1620 = vpop.xlane.xlu0 %1619
        %v1621 = vsel %vm1401, %v1605, -inf
        %1622 = vmax.xlane.f32.xlu0 %v1621
        %v1623 = vpop.xlane.xlu0 %1622
        %v1624 = vsel %vm1401, %v1606, -inf
        %1625 = vmax.xlane.f32.xlu0 %v1624
        %v1626 = vpop.xlane.xlu0 %1625
        %v1627 = vsel %vm1401, %v1607, -inf
        %1628 = vmax.xlane.f32.xlu0 %v1627
        %v1629 = vpop.xlane.xlu0 %1628
        %v1630 = vsel %vm1401, %v1608, -inf
        %1631 = vmax.xlane.f32.xlu0 %v1630
        %v1632 = vpop.xlane.xlu0 %1631
        %v1633 = vsel %vm1401, %v1609, -inf
        %1634 = vmax.xlane.f32.xlu0 %v1633
        %v1635 = vpop.xlane.xlu0 %1634
        %v1636 = vsel %vm1401, %v1610, -inf
        %1637 = vmax.xlane.f32.xlu0 %v1636
        %v1638 = vpop.xlane.xlu0 %1637
        %v1639 = vsel %vm1401, %v1611, -inf
        %1640 = vmax.xlane.f32.xlu0 %v1639
        %v1641 = vpop.xlane.xlu0 %1640
        %v1642 = vsel %vm1401, %v1612, -inf
        %1643 = vmax.xlane.f32.xlu0 %v1642
        %v1644 = vpop.xlane.xlu0 %1643
        %v1645 = vsel %vm1401, %v1613, -inf
        %1646 = vmax.xlane.f32.xlu0 %v1645
        %v1647 = vpop.xlane.xlu0 %1646
        %v1648 = vsel %vm1401, %v1614, -inf
        %1649 = vmax.xlane.f32.xlu0 %v1648
        %v1650 = vpop.xlane.xlu0 %1649
        %v1651 = vsub.f32 %v1603, %v1617
        %v1652 = vsub.f32 %v1604, %v1620
        %v1653 = vsub.f32 %v1605, %v1623
        %v1654 = vsub.f32 %v1606, %v1626
        %v1655 = vsub.f32 %v1607, %v1629
        %v1656 = vsub.f32 %v1608, %v1632
        %v1657 = vsub.f32 %v1609, %v1635
        %v1658 = vsub.f32 %v1610, %v1638
        %v1659 = vsub.f32 %v1611, %v1641
        %v1660 = vsub.f32 %v1612, %v1644
        %v1661 = vsub.f32 %v1613, %v1647
        %v1662 = vsub.f32 %v1614, %v1650
        %v1663 = vmul.f32 %v1651, 1.442695
        %v1664 = vpow.pop %v1663
        %v1665 = vmul.f32 %v1652, 1.442695
        %v1666 = vpow.pop %v1665
        %v1667 = vmul.f32 %v1653, 1.442695
        %v1668 = vpow.pop %v1667
        %v1669 = vmul.f32 %v1654, 1.442695
        %v1670 = vpow.pop %v1669
        %v1671 = vmul.f32 %v1655, 1.442695
        %v1672 = vpow.pop %v1671
        %v1673 = vmul.f32 %v1656, 1.442695
        %v1674 = vpow.pop %v1673
        %v1675 = vmul.f32 %v1657, 1.442695
        %v1676 = vpow.pop %v1675
        %v1677 = vmul.f32 %v1658, 1.442695
        %v1678 = vpow.pop %v1677
        %v1679 = vmul.f32 %v1659, 1.442695
        %v1680 = vpow.pop %v1679
        %v1681 = vmul.f32 %v1660, 1.442695
        %v1682 = vpow.pop %v1681
        %v1683 = vmul.f32 %v1661, 1.442695
        %v1684 = vpow.pop %v1683
        %v1685 = vmul.f32 %v1662, 1.442695
        %v1686 = vpow.pop %v1685
        %v1687 = vsel %vm1401, %v1664, 0.0
        %1688 = vadd.xlane.f32.xlu0 %v1687
        %v1689 = vpop.xlane.xlu0 %1688
        %v1690 = vsel %vm1401, %v1666, 0.0
        %1691 = vadd.xlane.f32.xlu0 %v1690
        %v1692 = vpop.xlane.xlu0 %1691
        %v1693 = vsel %vm1401, %v1668, 0.0
        %1694 = vadd.xlane.f32.xlu0 %v1693
        %v1695 = vpop.xlane.xlu0 %1694
        %v1696 = vsel %vm1401, %v1670, 0.0
        %1697 = vadd.xlane.f32.xlu0 %v1696
        %v1698 = vpop.xlane.xlu0 %1697
        %v1699 = vsel %vm1401, %v1672, 0.0
        %1700 = vadd.xlane.f32.xlu0 %v1699
        %v1701 = vpop.xlane.xlu0 %1700
        %v1702 = vsel %vm1401, %v1674, 0.0
        %1703 = vadd.xlane.f32.xlu0 %v1702
        %v1704 = vpop.xlane.xlu0 %1703
        %v1705 = vsel %vm1401, %v1676, 0.0
        %1706 = vadd.xlane.f32.xlu0 %v1705
        %v1707 = vpop.xlane.xlu0 %1706
        %v1708 = vsel %vm1401, %v1678, 0.0
        %1709 = vadd.xlane.f32.xlu0 %v1708
        %v1710 = vpop.xlane.xlu0 %1709
        %v1711 = vsel %vm1401, %v1680, 0.0
        %1712 = vadd.xlane.f32.xlu0 %v1711
        %v1713 = vpop.xlane.xlu0 %1712
        %v1714 = vsel %vm1401, %v1682, 0.0
        %1715 = vadd.xlane.f32.xlu0 %v1714
        %v1716 = vpop.xlane.xlu0 %1715
        %v1717 = vsel %vm1401, %v1684, 0.0
        %1718 = vadd.xlane.f32.xlu0 %v1717
        %v1719 = vpop.xlane.xlu0 %1718
        %v1720 = vsel %vm1401, %v1686, 0.0
        %1721 = vadd.xlane.f32.xlu0 %v1720
        %v1722 = vpop.xlane.xlu0 %1721
        %v1723 = vrcp.pop %v1689
        %v1724 = vmul.f32 %v1664, %v1723
        %v1725 = vrcp.pop %v1692
        %v1726 = vmul.f32 %v1666, %v1725
        %v1727 = vrcp.pop %v1695
        %v1728 = vmul.f32 %v1668, %v1727
        %v1729 = vrcp.pop %v1698
        %v1730 = vmul.f32 %v1670, %v1729
        %v1731 = vrcp.pop %v1701
        %v1732 = vmul.f32 %v1672, %v1731
        %v1733 = vrcp.pop %v1704
        %v1734 = vmul.f32 %v1674, %v1733
        %v1735 = vrcp.pop %v1707
        %v1736 = vmul.f32 %v1676, %v1735
        %v1737 = vrcp.pop %v1710
        %v1738 = vmul.f32 %v1678, %v1737
        %v1739 = vrcp.pop %v1713
        %v1740 = vmul.f32 %v1680, %v1739
        %v1741 = vrcp.pop %v1716
        %v1742 = vmul.f32 %v1682, %v1741
        %v1743 = vrcp.pop %v1719
        %v1744 = vmul.f32 %v1684, %v1743
        %v1745 = vrcp.pop %v1722
        %v1746 = vmul.f32 %v1686, %v1745
        %v1747 = vpack.c.bf16 %v1726, %v1724
        %v1748 = vpack.c.bf16 %v1730, %v1728
        %v1749 = vpack.c.bf16 %v1734, %v1732
        %v1750 = vpack.c.bf16 %v1738, %v1736
        %v1751 = vpack.c.bf16 %v1742, %v1740
        %v1752 = vpack.c.bf16 %v1746, %v1744
        %v1754 = vsel %vm1401, %v1747, 0
        %v1757 = vsel %vm1401, %v1748, 0
        %1759 = vmatprep.subr.bf16.mxu0 0
        %1760 = vmatpush1.bf16.msra.mxu0 %v1395
        %1761 = vmatprep.subr.bf16.mxu0 0
        %1762 = vmatpush1.bf16.msra.mxu0 %v1396
        %1763 = vmatprep.subr.bf16.mxu0 0
        %1764 = vmatpush1.bf16.msra.mxu0 0
        %1765 = vmatprep.subr.bf16.mxu0 0
        %1766 = vmatpush1.bf16.msra.mxu0 0
        %1767 = vmatprep.subr.bf16.mxu0 0
        %1768 = vmatpush1.bf16.msra.mxu0 0
        %1769 = vmatprep.subr.bf16.mxu0 0
        %1770 = vmatpush1.bf16.msra.mxu0 0
        %1771 = vmatprep.subr.bf16.mxu0 0
        %1772 = vmatpush1.bf16.msra.mxu0 0
        %1773 = vmatprep.subr.bf16.mxu0 0
        %1774 = vmatpush1.bf16.msra.mxu0 0
        %1775 = vmatprep.subr.bf16.mxu0 0
        %1776 = vmatpush1.bf16.msra.mxu0 0
        %1777 = vmatprep.subr.bf16.mxu0 0
        %1778 = vmatpush1.bf16.msra.mxu0 0
        %1779 = vmatprep.subr.bf16.mxu0 0
        %1780 = vmatpush1.bf16.msra.mxu0 0
        %1781 = vmatprep.subr.bf16.mxu0 0
        %1782 = vmatpush1.bf16.msra.mxu0 0
        %1783 = vmatprep.subr.bf16.mxu0 0
        %1784 = vmatpush1.bf16.msra.mxu0 0
        %1785 = vmatprep.subr.bf16.mxu0 0
        %1786 = vmatpush1.bf16.msra.mxu0 0
        %1787 = vmatprep.subr.bf16.mxu0 0
        %1788 = vmatpush1.bf16.msra.mxu0 0
        %1789 = vmatprep.subr.bf16.mxu0 0
        %1790 = vmatpush1.bf16.msra.mxu0 0
        %1791 = vmatprep.mubr.bf16.mxu0 0
        %1792 = vmatmul.mubr.bf16.gmra.mrb[0].mxu0 %v1754
        %v1793 = vpop.f32.mrb[0].mxu0
        %v1794 = vadd.f32 0.0, %v1793
        %v1795 = vpop.f32.mrb[0].mxu0
        %v1796 = vpop.f32.mrb[0].mxu0
        %v1797 = vadd.f32 0.0, %v1796
        %v1798 = vpop.f32.mrb[0].mxu0
        %1799 = vmatprep.mubr.bf16.mxu0 0
        %1800 = vmatmul.mubr.bf16.gmra.mrb[0].mxu0 %v1757
        %v1801 = vpop.f32.mrb[0].mxu0
        %v1802 = vadd.f32 0.0, %v1801
        %v1803 = vpop.f32.mrb[0].mxu0
        %v1804 = vpop.f32.mrb[0].mxu0
        %v1805 = vadd.f32 0.0, %v1804
        %v1806 = vpop.f32.mrb[0].mxu0
        %1807 = vdwg.mxu0
        %v1809 = vsel %vm1401, %v1749, 0
        %v1812 = vsel %vm1401, %v1750, 0
        %1814 = vmatprep.subr.bf16.mxu0 0
        %1815 = vmatpush1.bf16.msra.mxu0 %v1397
        %1816 = vmatprep.subr.bf16.mxu0 0
        %1817 = vmatpush1.bf16.msra.mxu0 %v1398
        %1818 = vmatprep.subr.bf16.mxu0 0
        %1819 = vmatpush1.bf16.msra.mxu0 0
        %1820 = vmatprep.subr.bf16.mxu0 0
        %1821 = vmatpush1.bf16.msra.mxu0 0
        %1822 = vmatprep.subr.bf16.mxu0 0
        %1823 = vmatpush1.bf16.msra.mxu0 0
        %1824 = vmatprep.subr.bf16.mxu0 0
        %1825 = vmatpush1.bf16.msra.mxu0 0
        %1826 = vmatprep.subr.bf16.mxu0 0
        %1827 = vmatpush1.bf16.msra.mxu0 0
        %1828 = vmatprep.subr.bf16.mxu0 0
        %1829 = vmatpush1.bf16.msra.mxu0 0
        %1830 = vmatprep.subr.bf16.mxu0 0
        %1831 = vmatpush1.bf16.msra.mxu0 0
        %1832 = vmatprep.subr.bf16.mxu0 0
        %1833 = vmatpush1.bf16.msra.mxu0 0
        %1834 = vmatprep.subr.bf16.mxu0 0
        %1835 = vmatpush1.bf16.msra.mxu0 0
        %1836 = vmatprep.subr.bf16.mxu0 0
        %1837 = vmatpush1.bf16.msra.mxu0 0
        %1838 = vmatprep.subr.bf16.mxu0 0
        %1839 = vmatpush1.bf16.msra.mxu0 0
        %1840 = vmatprep.subr.bf16.mxu0 0
        %1841 = vmatpush1.bf16.msra.mxu0 0
        %1842 = vmatprep.subr.bf16.mxu0 0
        %1843 = vmatpush1.bf16.msra.mxu0 0
        %1844 = vmatprep.subr.bf16.mxu0 0
        %1845 = vmatpush1.bf16.msra.mxu0 0
        %1846 = vmatprep.mubr.bf16.mxu0 0
        %1847 = vmatmul.mubr.bf16.gmra.mrb[0].mxu0 %v1809
        %v1848 = vpop.f32.mrb[0].mxu0
        %v1849 = vadd.f32 0.0, %v1848
        %v1850 = vpop.f32.mrb[0].mxu0
        %v1851 = vpop.f32.mrb[0].mxu0
        %v1852 = vadd.f32 0.0, %v1851
        %v1853 = vpop.f32.mrb[0].mxu0
        %1854 = vmatprep.mubr.bf16.mxu0 0
        %1855 = vmatmul.mubr.bf16.gmra.mrb[0].mxu0 %v1812
        %v1856 = vpop.f32.mrb[0].mxu0
        %v1857 = vadd.f32 0.0, %v1856
        %v1858 = vpop.f32.mrb[0].mxu0
        %v1859 = vpop.f32.mrb[0].mxu0
        %v1860 = vadd.f32 0.0, %v1859
        %v1861 = vpop.f32.mrb[0].mxu0
        %1862 = vdwg.mxu0
        %v1864 = vsel %vm1401, %v1751, 0
        %v1867 = vsel %vm1401, %v1752, 0
        %1869 = vmatprep.subr.bf16.mxu0 0
        %1870 = vmatpush1.bf16.msra.mxu0 %v1399
        %1871 = vmatprep.subr.bf16.mxu0 0
        %1872 = vmatpush1.bf16.msra.mxu0 %v1400
        %1873 = vmatprep.subr.bf16.mxu0 0
        %1874 = vmatpush1.bf16.msra.mxu0 0
        %1875 = vmatprep.subr.bf16.mxu0 0
        %1876 = vmatpush1.bf16.msra.mxu0 0
        %1877 = vmatprep.subr.bf16.mxu0 0
        %1878 = vmatpush1.bf16.msra.mxu0 0
        %1879 = vmatprep.subr.bf16.mxu0 0
        %1880 = vmatpush1.bf16.msra.mxu0 0
        %1881 = vmatprep.subr.bf16.mxu0 0
        %1882 = vmatpush1.bf16.msra.mxu0 0
        %1883 = vmatprep.subr.bf16.mxu0 0
        %1884 = vmatpush1.bf16.msra.mxu0 0
        %1885 = vmatprep.subr.bf16.mxu0 0
        %1886 = vmatpush1.bf16.msra.mxu0 0
        %1887 = vmatprep.subr.bf16.mxu0 0
        %1888 = vmatpush1.bf16.msra.mxu0 0
        %1889 = vmatprep.subr.bf16.mxu0 0
        %1890 = vmatpush1.bf16.msra.mxu0 0
        %1891 = vmatprep.subr.bf16.mxu0 0
        %1892 = vmatpush1.bf16.msra.mxu0 0
        %1893 = vmatprep.subr.bf16.mxu0 0
        %1894 = vmatpush1.bf16.msra.mxu0 0
        %1895 = vmatprep.subr.bf16.mxu0 0
        %1896 = vmatpush1.bf16.msra.mxu0 0
        %1897 = vmatprep.subr.bf16.mxu0 0
        %1898 = vmatpush1.bf16.msra.mxu0 0
        %1899 = vmatprep.subr.bf16.mxu0 0
        %1900 = vmatpush1.bf16.msra.mxu0 0
        %1901 = vmatprep.mubr.bf16.mxu0 0
        %1902 = vmatmul.mubr.bf16.gmra.mrb[0].mxu0 %v1864
        %v1903 = vpop.f32.mrb[0].mxu0
        %v1904 = vadd.f32 0.0, %v1903
        %v1905 = vpop.f32.mrb[0].mxu0
        %v1906 = vpop.f32.mrb[0].mxu0
        %v1907 = vadd.f32 0.0, %v1906
        %v1908 = vpop.f32.mrb[0].mxu0
        %1909 = vmatprep.mubr.bf16.mxu0 0
        %1910 = vmatmul.mubr.bf16.gmra.mrb[0].mxu0 %v1867
        %v1911 = vpop.f32.mrb[0].mxu0
        %v1912 = vadd.f32 0.0, %v1911
        %v1913 = vpop.f32.mrb[0].mxu0
        %v1914 = vpop.f32.mrb[0].mxu0
        %v1915 = vadd.f32 0.0, %v1914
        %v1916 = vpop.f32.mrb[0].mxu0
        %1917 = vdwg.mxu0
        %v1918 = vpack.c.bf16 %v1797, %v1794
        %v1919 = vpack.c.bf16 %v1805, %v1802
        %v1920 = vpack.c.bf16 %v1852, %v1849
        %v1921 = vpack.c.bf16 %v1860, %v1857
        %v1922 = vpack.c.bf16 %v1907, %v1904
        %v1923 = vpack.c.bf16 %v1915, %v1912
        %1926 = vrot.lane.b32.xlu0 %v1383, 96
        %v1927 = vpop.permute.xlu0 %1926
        %1928 = vrot.lane.b32.xlu0 %v1384, 96
        %v1929 = vpop.permute.xlu0 %1928
        %1932 = vrot.lane.b32.xlu0 %v1389, 96
        %v1933 = vpop.permute.xlu0 %1932
        %1934 = vrot.lane.b32.xlu0 %v1390, 96
        %v1935 = vpop.permute.xlu0 %1934
        %v1937 = vsel %vm1401, %v1927, 0
        %v1940 = vsel %vm1401, %v1929, 0
        %v1943 = vsel %vm1401, %v1933, 0
        %v1946 = vsel %vm1401, %v1935, 0
        %1948 = vmatprep.subr.bf16.mxu0 0
        %1949 = vmatpush1.bf16.xpose.msra.mxu0 %v1943
        %1950 = vmatprep.subr.bf16.mxu0 0
        %1951 = vmatpush1.bf16.xpose.msra.mxu0 %v1946
        %1952 = vmatprep.subr.bf16.mxu0 0
        %1953 = vmatpush1.bf16.xpose.msra.mxu0 0
        %1954 = vmatprep.subr.bf16.mxu0 0
        %1955 = vmatpush1.bf16.xpose.msra.mxu0 0
        %1956 = vmatprep.subr.bf16.mxu0 0
        %1957 = vmatpush1.bf16.xpose.msra.mxu0 0
        %1958 = vmatprep.subr.bf16.mxu0 0
        %1959 = vmatpush1.bf16.xpose.msra.mxu0 0
        %1960 = vmatprep.subr.bf16.mxu0 0
        %1961 = vmatpush1.bf16.xpose.msra.mxu0 0
        %1962 = vmatprep.subr.bf16.mxu0 0
        %1963 = vmatpush1.bf16.xpose.msra.mxu0 0
        %1964 = vmatprep.subr.bf16.mxu0 0
        %1965 = vmatpush1.bf16.xpose.msra.mxu0 0
        %1966 = vmatprep.subr.bf16.mxu0 0
        %1967 = vmatpush1.bf16.xpose.msra.mxu0 0
        %1968 = vmatprep.subr.bf16.mxu0 0
        %1969 = vmatpush1.bf16.xpose.msra.mxu0 0
        %1970 = vmatprep.subr.bf16.mxu0 0
        %1971 = vmatpush1.bf16.xpose.msra.mxu0 0
        %1972 = vmatprep.subr.bf16.mxu0 0
        %1973 = vmatpush1.bf16.xpose.msra.mxu0 0
        %1974 = vmatprep.subr.bf16.mxu0 0
        %1975 = vmatpush1.bf16.xpose.msra.mxu0 0
        %1976 = vmatprep.subr.bf16.mxu0 0
        %1977 = vmatpush1.bf16.xpose.msra.mxu0 0
        %1978 = vmatprep.subr.bf16.mxu0 0
        %1979 = vmatpush1.bf16.xpose.msra.mxu0 0
        %1980 = vmatprep.mubr.bf16.mxu0 0
        %1981 = vmatmul.mubr.bf16.gmra.mrb[0].mxu0 %v1937
        %v1982 = vpop.f32.mrb[0].mxu0
        %v1983 = vadd.f32 0.0, %v1982
        %v1984 = vpop.f32.mrb[0].mxu0
        %v1985 = vpop.f32.mrb[0].mxu0
        %v1986 = vadd.f32 0.0, %v1985
        %v1987 = vpop.f32.mrb[0].mxu0
        %1988 = vmatprep.mubr.bf16.mxu0 0
        %1989 = vmatmul.mubr.bf16.gmra.mrb[0].mxu0 %v1940
        %v1990 = vpop.f32.mrb[0].mxu0
        %v1991 = vadd.f32 0.0, %v1990
        %v1992 = vpop.f32.mrb[0].mxu0
        %v1993 = vpop.f32.mrb[0].mxu0
        %v1994 = vadd.f32 0.0, %v1993
        %v1995 = vpop.f32.mrb[0].mxu0
        %1996 = vdwg.mxu0
        %1999 = vrot.lane.b32.xlu0 %v1385, 96
        %v2000 = vpop.permute.xlu0 %1999
        %2001 = vrot.lane.b32.xlu0 %v1386, 96
        %v2002 = vpop.permute.xlu0 %2001
        %2005 = vrot.lane.b32.xlu0 %v1391, 96
        %v2006 = vpop.permute.xlu0 %2005
        %2007 = vrot.lane.b32.xlu0 %v1392, 96
        %v2008 = vpop.permute.xlu0 %2007
        %v2010 = vsel %vm1401, %v2000, 0
        %v2013 = vsel %vm1401, %v2002, 0
        %v2016 = vsel %vm1401, %v2006, 0
        %v2019 = vsel %vm1401, %v2008, 0
        %2021 = vmatprep.subr.bf16.mxu0 0
        %2022 = vmatpush1.bf16.xpose.msra.mxu0 %v2016
        %2023 = vmatprep.subr.bf16.mxu0 0
        %2024 = vmatpush1.bf16.xpose.msra.mxu0 %v2019
        %2025 = vmatprep.subr.bf16.mxu0 0
        %2026 = vmatpush1.bf16.xpose.msra.mxu0 0
        %2027 = vmatprep.subr.bf16.mxu0 0
        %2028 = vmatpush1.bf16.xpose.msra.mxu0 0
        %2029 = vmatprep.subr.bf16.mxu0 0
        %2030 = vmatpush1.bf16.xpose.msra.mxu0 0
        %2031 = vmatprep.subr.bf16.mxu0 0
        %2032 = vmatpush1.bf16.xpose.msra.mxu0 0
        %2033 = vmatprep.subr.bf16.mxu0 0
        %2034 = vmatpush1.bf16.xpose.msra.mxu0 0
        %2035 = vmatprep.subr.bf16.mxu0 0
        %2036 = vmatpush1.bf16.xpose.msra.mxu0 0
        %2037 = vmatprep.subr.bf16.mxu0 0
        %2038 = vmatpush1.bf16.xpose.msra.mxu0 0
        %2039 = vmatprep.subr.bf16.mxu0 0
        %2040 = vmatpush1.bf16.xpose.msra.mxu0 0
        %2041 = vmatprep.subr.bf16.mxu0 0
        %2042 = vmatpush1.bf16.xpose.msra.mxu0 0
        %2043 = vmatprep.subr.bf16.mxu0 0
        %2044 = vmatpush1.bf16.xpose.msra.mxu0 0
        %2045 = vmatprep.subr.bf16.mxu0 0
        %2046 = vmatpush1.bf16.xpose.msra.mxu0 0
        %2047 = vmatprep.subr.bf16.mxu0 0
        %2048 = vmatpush1.bf16.xpose.msra.mxu0 0
        %2049 = vmatprep.subr.bf16.mxu0 0
        %2050 = vmatpush1.bf16.xpose.msra.mxu0 0
        %2051 = vmatprep.subr.bf16.mxu0 0
        %2052 = vmatpush1.bf16.xpose.msra.mxu0 0
        %2053 = vmatprep.mubr.bf16.mxu0 0
        %2054 = vmatmul.mubr.bf16.gmra.mrb[0].mxu0 %v2010
        %v2055 = vpop.f32.mrb[0].mxu0
        %v2056 = vadd.f32 0.0, %v2055
        %v2057 = vpop.f32.mrb[0].mxu0
        %v2058 = vpop.f32.mrb[0].mxu0
        %v2059 = vadd.f32 0.0, %v2058
        %v2060 = vpop.f32.mrb[0].mxu0
        %2061 = vmatprep.mubr.bf16.mxu0 0
        %2062 = vmatmul.mubr.bf16.gmra.mrb[0].mxu0 %v2013
        %v2063 = vpop.f32.mrb[0].mxu0
        %v2064 = vadd.f32 0.0, %v2063
        %v2065 = vpop.f32.mrb[0].mxu0
        %v2066 = vpop.f32.mrb[0].mxu0
        %v2067 = vadd.f32 0.0, %v2066
        %v2068 = vpop.f32.mrb[0].mxu0
        %2069 = vdwg.mxu0
        %2072 = vrot.lane.b32.xlu0 %v1387, 96
        %v2073 = vpop.permute.xlu0 %2072
        %2074 = vrot.lane.b32.xlu0 %v1388, 96
        %v2075 = vpop.permute.xlu0 %2074
        %2078 = vrot.lane.b32.xlu0 %v1393, 96
        %v2079 = vpop.permute.xlu0 %2078
        %2080 = vrot.lane.b32.xlu0 %v1394, 96
        %v2081 = vpop.permute.xlu0 %2080
        %v2083 = vsel %vm1401, %v2073, 0
        %v2086 = vsel %vm1401, %v2075, 0
        %v2089 = vsel %vm1401, %v2079, 0
        %v2092 = vsel %vm1401, %v2081, 0
        %2094 = vmatprep.subr.bf16.mxu0 0
        %2095 = vmatpush1.bf16.xpose.msra.mxu0 %v2089
        %2096 = vmatprep.subr.bf16.mxu0 0
        %2097 = vmatpush1.bf16.xpose.msra.mxu0 %v2092
        %2098 = vmatprep.subr.bf16.mxu0 0
        %2099 = vmatpush1.bf16.xpose.msra.mxu0 0
        %2100 = vmatprep.subr.bf16.mxu0 0
        %2101 = vmatpush1.bf16.xpose.msra.mxu0 0
        %2102 = vmatprep.subr.bf16.mxu0 0
        %2103 = vmatpush1.bf16.xpose.msra.mxu0 0
        %2104 = vmatprep.subr.bf16.mxu0 0
        %2105 = vmatpush1.bf16.xpose.msra.mxu0 0
        %2106 = vmatprep.subr.bf16.mxu0 0
        %2107 = vmatpush1.bf16.xpose.msra.mxu0 0
        %2108 = vmatprep.subr.bf16.mxu0 0
        %2109 = vmatpush1.bf16.xpose.msra.mxu0 0
        %2110 = vmatprep.subr.bf16.mxu0 0
        %2111 = vmatpush1.bf16.xpose.msra.mxu0 0
        %2112 = vmatprep.subr.bf16.mxu0 0
        %2113 = vmatpush1.bf16.xpose.msra.mxu0 0
        %2114 = vmatprep.subr.bf16.mxu0 0
        %2115 = vmatpush1.bf16.xpose.msra.mxu0 0
        %2116 = vmatprep.subr.bf16.mxu0 0
        %2117 = vmatpush1.bf16.xpose.msra.mxu0 0
        %2118 = vmatprep.subr.bf16.mxu0 0
        %2119 = vmatpush1.bf16.xpose.msra.mxu0 0
        %2120 = vmatprep.subr.bf16.mxu0 0
        %2121 = vmatpush1.bf16.xpose.msra.mxu0 0
        %2122 = vmatprep.subr.bf16.mxu0 0
        %2123 = vmatpush1.bf16.xpose.msra.mxu0 0
        %2124 = vmatprep.subr.bf16.mxu0 0
        %2125 = vmatpush1.bf16.xpose.msra.mxu0 0
        %2126 = vmatprep.mubr.bf16.mxu0 0
        %2127 = vmatmul.mubr.bf16.gmra.mrb[0].mxu0 %v2083
        %v2128 = vpop.f32.mrb[0].mxu0
        %v2129 = vadd.f32 0.0, %v2128
        %v2130 = vpop.f32.mrb[0].mxu0
        %v2131 = vpop.f32.mrb[0].mxu0
        %v2132 = vadd.f32 0.0, %v2131
        %v2133 = vpop.f32.mrb[0].mxu0
        %2134 = vmatprep.mubr.bf16.mxu0 0
        %2135 = vmatmul.mubr.bf16.gmra.mrb[0].mxu0 %v2086
        %v2136 = vpop.f32.mrb[0].mxu0
        %v2137 = vadd.f32 0.0, %v2136
        %v2138 = vpop.f32.mrb[0].mxu0
        %v2139 = vpop.f32.mrb[0].mxu0
        %v2140 = vadd.f32 0.0, %v2139
        %v2141 = vpop.f32.mrb[0].mxu0
        %2142 = vdwg.mxu0
        %v2143 = vmul.f32 %v1983, 0.17677669
        %v2144 = vmul.f32 %v1986, 0.17677669
        %v2145 = vmul.f32 %v1991, 0.17677669
        %v2146 = vmul.f32 %v1994, 0.17677669
        %v2147 = vmul.f32 %v2056, 0.17677669
        %v2148 = vmul.f32 %v2059, 0.17677669
        %v2149 = vmul.f32 %v2064, 0.17677669
        %v2150 = vmul.f32 %v2067, 0.17677669
        %v2151 = vmul.f32 %v2129, 0.17677669
        %v2152 = vmul.f32 %v2132, 0.17677669
        %v2153 = vmul.f32 %v2137, 0.17677669
        %v2154 = vmul.f32 %v2140, 0.17677669
        %v2155 = vadd.f32 %v2143, %v1601
        %v2156 = vadd.f32 %v2144, %v1601
        %v2157 = vadd.f32 %v2145, %v1601
        %v2158 = vadd.f32 %v2146, %v1601
        %v2159 = vadd.f32 %v2147, %v1601
        %v2160 = vadd.f32 %v2148, %v1601
        %v2161 = vadd.f32 %v2149, %v1601
        %v2162 = vadd.f32 %v2150, %v1601
        %v2163 = vadd.f32 %v2151, %v1601
        %v2164 = vadd.f32 %v2152, %v1601
        %v2165 = vadd.f32 %v2153, %v1601
        %v2166 = vadd.f32 %v2154, %v1601
        %v2167 = vsel %vm1401, %v2155, -inf
        %2168 = vmax.xlane.f32.xlu0 %v2167
        %v2169 = vpop.xlane.xlu0 %2168
        %v2170 = vsel %vm1401, %v2156, -inf
        %2171 = vmax.xlane.f32.xlu0 %v2170
        %v2172 = vpop.xlane.xlu0 %2171
        %v2173 = vsel %vm1401, %v2157, -inf
        %2174 = vmax.xlane.f32.xlu0 %v2173
        %v2175 = vpop.xlane.xlu0 %2174
        %v2176 = vsel %vm1401, %v2158, -inf
        %2177 = vmax.xlane.f32.xlu0 %v2176
        %v2178 = vpop.xlane.xlu0 %2177
        %v2179 = vsel %vm1401, %v2159, -inf
        %2180 = vmax.xlane.f32.xlu0 %v2179
        %v2181 = vpop.xlane.xlu0 %2180
        %v2182 = vsel %vm1401, %v2160, -inf
        %2183 = vmax.xlane.f32.xlu0 %v2182
        %v2184 = vpop.xlane.xlu0 %2183
        %v2185 = vsel %vm1401, %v2161, -inf
        %2186 = vmax.xlane.f32.xlu0 %v2185
        %v2187 = vpop.xlane.xlu0 %2186
        %v2188 = vsel %vm1401, %v2162, -inf
        %2189 = vmax.xlane.f32.xlu0 %v2188
        %v2190 = vpop.xlane.xlu0 %2189
        %v2191 = vsel %vm1401, %v2163, -inf
        %2192 = vmax.xlane.f32.xlu0 %v2191
        %v2193 = vpop.xlane.xlu0 %2192
        %v2194 = vsel %vm1401, %v2164, -inf
        %2195 = vmax.xlane.f32.xlu0 %v2194
        %v2196 = vpop.xlane.xlu0 %2195
        %v2197 = vsel %vm1401, %v2165, -inf
        %2198 = vmax.xlane.f32.xlu0 %v2197
        %v2199 = vpop.xlane.xlu0 %2198
        %v2200 = vsel %vm1401, %v2166, -inf
        %2201 = vmax.xlane.f32.xlu0 %v2200
        %v2202 = vpop.xlane.xlu0 %2201
        %v2203 = vsub.f32 %v2155, %v2169
        %v2204 = vsub.f32 %v2156, %v2172
        %v2205 = vsub.f32 %v2157, %v2175
        %v2206 = vsub.f32 %v2158, %v2178
        %v2207 = vsub.f32 %v2159, %v2181
        %v2208 = vsub.f32 %v2160, %v2184
        %v2209 = vsub.f32 %v2161, %v2187
        %v2210 = vsub.f32 %v2162, %v2190
        %v2211 = vsub.f32 %v2163, %v2193
        %v2212 = vsub.f32 %v2164, %v2196
        %v2213 = vsub.f32 %v2165, %v2199
        %v2214 = vsub.f32 %v2166, %v2202
        %v2215 = vmul.f32 %v2203, 1.442695
        %v2216 = vpow.pop %v2215
        %v2217 = vmul.f32 %v2204, 1.442695
        %v2218 = vpow.pop %v2217
        %v2219 = vmul.f32 %v2205, 1.442695
        %v2220 = vpow.pop %v2219
        %v2221 = vmul.f32 %v2206, 1.442695
        %v2222 = vpow.pop %v2221
        %v2223 = vmul.f32 %v2207, 1.442695
        %v2224 = vpow.pop %v2223
        %v2225 = vmul.f32 %v2208, 1.442695
        %v2226 = vpow.pop %v2225
        %v2227 = vmul.f32 %v2209, 1.442695
        %v2228 = vpow.pop %v2227
        %v2229 = vmul.f32 %v2210, 1.442695
        %v2230 = vpow.pop %v2229
        %v2231 = vmul.f32 %v2211, 1.442695
        %v2232 = vpow.pop %v2231
        %v2233 = vmul.f32 %v2212, 1.442695
        %v2234 = vpow.pop %v2233
        %v2235 = vmul.f32 %v2213, 1.442695
        %v2236 = vpow.pop %v2235
        %v2237 = vmul.f32 %v2214, 1.442695
        %v2238 = vpow.pop %v2237
        %v2239 = vsel %vm1401, %v2216, 0.0
        %2240 = vadd.xlane.f32.xlu0 %v2239
        %v2241 = vpop.xlane.xlu0 %2240
        %v2242 = vsel %vm1401, %v2218, 0.0
        %2243 = vadd.xlane.f32.xlu0 %v2242
        %v2244 = vpop.xlane.xlu0 %2243
        %v2245 = vsel %vm1401, %v2220, 0.0
        %2246 = vadd.xlane.f32.xlu0 %v2245
        %v2247 = vpop.xlane.xlu0 %2246
        %v2248 = vsel %vm1401, %v2222, 0.0
        %2249 = vadd.xlane.f32.xlu0 %v2248
        %v2250 = vpop.xlane.xlu0 %2249
        %v2251 = vsel %vm1401, %v2224, 0.0
        %2252 = vadd.xlane.f32.xlu0 %v2251
        %v2253 = vpop.xlane.xlu0 %2252
        %v2254 = vsel %vm1401, %v2226, 0.0
        %2255 = vadd.xlane.f32.xlu0 %v2254
        %v2256 = vpop.xlane.xlu0 %2255
        %v2257 = vsel %vm1401, %v2228, 0.0
        %2258 = vadd.xlane.f32.xlu0 %v2257
        %v2259 = vpop.xlane.xlu0 %2258
        %v2260 = vsel %vm1401, %v2230, 0.0
        %2261 = vadd.xlane.f32.xlu0 %v2260
        %v2262 = vpop.xlane.xlu0 %2261
        %v2263 = vsel %vm1401, %v2232, 0.0
        %2264 = vadd.xlane.f32.xlu0 %v2263
        %v2265 = vpop.xlane.xlu0 %2264
        %v2266 = vsel %vm1401, %v2234, 0.0
        %2267 = vadd.xlane.f32.xlu0 %v2266
        %v2268 = vpop.xlane.xlu0 %2267
        %v2269 = vsel %vm1401, %v2236, 0.0
        %2270 = vadd.xlane.f32.xlu0 %v2269
        %v2271 = vpop.xlane.xlu0 %2270
        %v2272 = vsel %vm1401, %v2238, 0.0
        %2273 = vadd.xlane.f32.xlu0 %v2272
        %v2274 = vpop.xlane.xlu0 %2273
        %v2275 = vrcp.pop %v2241
        %v2276 = vmul.f32 %v2216, %v2275
        %v2277 = vrcp.pop %v2244
        %v2278 = vmul.f32 %v2218, %v2277
        %v2279 = vrcp.pop %v2247
        %v2280 = vmul.f32 %v2220, %v2279
        %v2281 = vrcp.pop %v2250
        %v2282 = vmul.f32 %v2222, %v2281
        %v2283 = vrcp.pop %v2253
        %v2284 = vmul.f32 %v2224, %v2283
        %v2285 = vrcp.pop %v2256
        %v2286 = vmul.f32 %v2226, %v2285
        %v2287 = vrcp.pop %v2259
        %v2288 = vmul.f32 %v2228, %v2287
        %v2289 = vrcp.pop %v2262
        %v2290 = vmul.f32 %v2230, %v2289
        %v2291 = vrcp.pop %v2265
        %v2292 = vmul.f32 %v2232, %v2291
        %v2293 = vrcp.pop %v2268
        %v2294 = vmul.f32 %v2234, %v2293
        %v2295 = vrcp.pop %v2271
        %v2296 = vmul.f32 %v2236, %v2295
        %v2297 = vrcp.pop %v2274
        %v2298 = vmul.f32 %v2238, %v2297
        %v2299 = vpack.c.bf16 %v2278, %v2276
        %v2300 = vpack.c.bf16 %v2282, %v2280
        %v2301 = vpack.c.bf16 %v2286, %v2284
        %v2302 = vpack.c.bf16 %v2290, %v2288
        %v2303 = vpack.c.bf16 %v2294, %v2292
        %v2304 = vpack.c.bf16 %v2298, %v2296
        %2307 = vrot.lane.b32.xlu0 %v1395, 96
        %v2308 = vpop.permute.xlu0 %2307
        %2309 = vrot.lane.b32.xlu0 %v1396, 96
        %v2310 = vpop.permute.xlu0 %2309
        %v2314 = vsel %vm1401, %v2299, 0
        %v2317 = vsel %vm1401, %v2300, 0
        %2319 = vmatprep.subr.bf16.mxu0 0
        %2320 = vmatpush1.bf16.msra.mxu0 %v2308
        %2321 = vmatprep.subr.bf16.mxu0 0
        %2322 = vmatpush1.bf16.msra.mxu0 %v2310
        %2323 = vmatprep.subr.bf16.mxu0 0
        %2324 = vmatpush1.bf16.msra.mxu0 0
        %2325 = vmatprep.subr.bf16.mxu0 0
        %2326 = vmatpush1.bf16.msra.mxu0 0
        %2327 = vmatprep.subr.bf16.mxu0 0
        %2328 = vmatpush1.bf16.msra.mxu0 0
        %2329 = vmatprep.subr.bf16.mxu0 0
        %2330 = vmatpush1.bf16.msra.mxu0 0
        %2331 = vmatprep.subr.bf16.mxu0 0
        %2332 = vmatpush1.bf16.msra.mxu0 0
        %2333 = vmatprep.subr.bf16.mxu0 0
        %2334 = vmatpush1.bf16.msra.mxu0 0
        %2335 = vmatprep.subr.bf16.mxu0 0
        %2336 = vmatpush1.bf16.msra.mxu0 0
        %2337 = vmatprep.subr.bf16.mxu0 0
        %2338 = vmatpush1.bf16.msra.mxu0 0
        %2339 = vmatprep.subr.bf16.mxu0 0
        %2340 = vmatpush1.bf16.msra.mxu0 0
        %2341 = vmatprep.subr.bf16.mxu0 0
        %2342 = vmatpush1.bf16.msra.mxu0 0
        %2343 = vmatprep.subr.bf16.mxu0 0
        %2344 = vmatpush1.bf16.msra.mxu0 0
        %2345 = vmatprep.subr.bf16.mxu0 0
        %2346 = vmatpush1.bf16.msra.mxu0 0
        %2347 = vmatprep.subr.bf16.mxu0 0
        %2348 = vmatpush1.bf16.msra.mxu0 0
        %2349 = vmatprep.subr.bf16.mxu0 0
        %2350 = vmatpush1.bf16.msra.mxu0 0
        %2351 = vmatprep.mubr.bf16.mxu0 0
        %2352 = vmatmul.mubr.bf16.gmra.mrb[0].mxu0 %v2314
        %v2353 = vpop.f32.mrb[0].mxu0
        %v2354 = vadd.f32 0.0, %v2353
        %v2355 = vpop.f32.mrb[0].mxu0
        %v2356 = vpop.f32.mrb[0].mxu0
        %v2357 = vadd.f32 0.0, %v2356
        %v2358 = vpop.f32.mrb[0].mxu0
        %2359 = vmatprep.mubr.bf16.mxu0 0
        %2360 = vmatmul.mubr.bf16.gmra.mrb[0].mxu0 %v2317
        %v2361 = vpop.f32.mrb[0].mxu0
        %v2362 = vadd.f32 0.0, %v2361
        %v2363 = vpop.f32.mrb[0].mxu0
        %v2364 = vpop.f32.mrb[0].mxu0
        %v2365 = vadd.f32 0.0, %v2364
        %v2366 = vpop.f32.mrb[0].mxu0
        %2367 = vdwg.mxu0
        %2370 = vrot.lane.b32.xlu0 %v1397, 96
        %v2371 = vpop.permute.xlu0 %2370
        %2372 = vrot.lane.b32.xlu0 %v1398, 96
        %v2373 = vpop.permute.xlu0 %2372
        %v2377 = vsel %vm1401, %v2301, 0
        %v2380 = vsel %vm1401, %v2302, 0
        %2382 = vmatprep.subr.bf16.mxu0 0
        %2383 = vmatpush1.bf16.msra.mxu0 %v2371
        %2384 = vmatprep.subr.bf16.mxu0 0
        %2385 = vmatpush1.bf16.msra.mxu0 %v2373
        %2386 = vmatprep.subr.bf16.mxu0 0
        %2387 = vmatpush1.bf16.msra.mxu0 0
        %2388 = vmatprep.subr.bf16.mxu0 0
        %2389 = vmatpush1.bf16.msra.mxu0 0
        %2390 = vmatprep.subr.bf16.mxu0 0
        %2391 = vmatpush1.bf16.msra.mxu0 0
        %2392 = vmatprep.subr.bf16.mxu0 0
        %2393 = vmatpush1.bf16.msra.mxu0 0
        %2394 = vmatprep.subr.bf16.mxu0 0
        %2395 = vmatpush1.bf16.msra.mxu0 0
        %2396 = vmatprep.subr.bf16.mxu0 0
        %2397 = vmatpush1.bf16.msra.mxu0 0
        %2398 = vmatprep.subr.bf16.mxu0 0
        %2399 = vmatpush1.bf16.msra.mxu0 0
        %2400 = vmatprep.subr.bf16.mxu0 0
        %2401 = vmatpush1.bf16.msra.mxu0 0
        %2402 = vmatprep.subr.bf16.mxu0 0
        %2403 = vmatpush1.bf16.msra.mxu0 0
        %2404 = vmatprep.subr.bf16.mxu0 0
        %2405 = vmatpush1.bf16.msra.mxu0 0
        %2406 = vmatprep.subr.bf16.mxu0 0
        %2407 = vmatpush1.bf16.msra.mxu0 0
        %2408 = vmatprep.subr.bf16.mxu0 0
        %2409 = vmatpush1.bf16.msra.mxu0 0
        %2410 = vmatprep.subr.bf16.mxu0 0
        %2411 = vmatpush1.bf16.msra.mxu0 0
        %2412 = vmatprep.subr.bf16.mxu0 0
        %2413 = vmatpush1.bf16.msra.mxu0 0
        %2414 = vmatprep.mubr.bf16.mxu0 0
        %2415 = vmatmul.mubr.bf16.gmra.mrb[0].mxu0 %v2377
        %v2416 = vpop.f32.mrb[0].mxu0
        %v2417 = vadd.f32 0.0, %v2416
        %v2418 = vpop.f32.mrb[0].mxu0
        %v2419 = vpop.f32.mrb[0].mxu0
        %v2420 = vadd.f32 0.0, %v2419
        %v2421 = vpop.f32.mrb[0].mxu0
        %2422 = vmatprep.mubr.bf16.mxu0 0
        %2423 = vmatmul.mubr.bf16.gmra.mrb[0].mxu0 %v2380
        %v2424 = vpop.f32.mrb[0].mxu0
        %v2425 = vadd.f32 0.0, %v2424
        %v2426 = vpop.f32.mrb[0].mxu0
        %v2427 = vpop.f32.mrb[0].mxu0
        %v2428 = vadd.f32 0.0, %v2427
        %v2429 = vpop.f32.mrb[0].mxu0
        %2430 = vdwg.mxu0
        %2433 = vrot.lane.b32.xlu0 %v1399, 96
        %v2434 = vpop.permute.xlu0 %2433
        %2435 = vrot.lane.b32.xlu0 %v1400, 96
        %v2436 = vpop.permute.xlu0 %2435
        %v2440 = vsel %vm1401, %v2303, 0
        %v2443 = vsel %vm1401, %v2304, 0
        %2445 = vmatprep.subr.bf16.mxu0 0
        %2446 = vmatpush1.bf16.msra.mxu0 %v2434
        %2447 = vmatprep.subr.bf16.mxu0 0
        %2448 = vmatpush1.bf16.msra.mxu0 %v2436
        %2449 = vmatprep.subr.bf16.mxu0 0
        %2450 = vmatpush1.bf16.msra.mxu0 0
        %2451 = vmatprep.subr.bf16.mxu0 0
        %2452 = vmatpush1.bf16.msra.mxu0 0
        %2453 = vmatprep.subr.bf16.mxu0 0
        %2454 = vmatpush1.bf16.msra.mxu0 0
        %2455 = vmatprep.subr.bf16.mxu0 0
        %2456 = vmatpush1.bf16.msra.mxu0 0
        %2457 = vmatprep.subr.bf16.mxu0 0
        %2458 = vmatpush1.bf16.msra.mxu0 0
        %2459 = vmatprep.subr.bf16.mxu0 0
        %2460 = vmatpush1.bf16.msra.mxu0 0
        %2461 = vmatprep.subr.bf16.mxu0 0
        %2462 = vmatpush1.bf16.msra.mxu0 0
        %2463 = vmatprep.subr.bf16.mxu0 0
        %2464 = vmatpush1.bf16.msra.mxu0 0
        %2465 = vmatprep.subr.bf16.mxu0 0
        %2466 = vmatpush1.bf16.msra.mxu0 0
        %2467 = vmatprep.subr.bf16.mxu0 0
        %2468 = vmatpush1.bf16.msra.mxu0 0
        %2469 = vmatprep.subr.bf16.mxu0 0
        %2470 = vmatpush1.bf16.msra.mxu0 0
        %2471 = vmatprep.subr.bf16.mxu0 0
        %2472 = vmatpush1.bf16.msra.mxu0 0
        %2473 = vmatprep.subr.bf16.mxu0 0
        %2474 = vmatpush1.bf16.msra.mxu0 0
        %2475 = vmatprep.subr.bf16.mxu0 0
        %2476 = vmatpush1.bf16.msra.mxu0 0
        %2477 = vmatprep.mubr.bf16.mxu0 0
        %2478 = vmatmul.mubr.bf16.gmra.mrb[0].mxu0 %v2440
        %v2479 = vpop.f32.mrb[0].mxu0
        %v2480 = vadd.f32 0.0, %v2479
        %v2481 = vpop.f32.mrb[0].mxu0
        %v2482 = vpop.f32.mrb[0].mxu0
        %v2483 = vadd.f32 0.0, %v2482
        %v2484 = vpop.f32.mrb[0].mxu0
        %2485 = vmatprep.mubr.bf16.mxu0 0
        %2486 = vmatmul.mubr.bf16.gmra.mrb[0].mxu0 %v2443
        %v2487 = vpop.f32.mrb[0].mxu0
        %v2488 = vadd.f32 0.0, %v2487
        %v2489 = vpop.f32.mrb[0].mxu0
        %v2490 = vpop.f32.mrb[0].mxu0
        %v2491 = vadd.f32 0.0, %v2490
        %v2492 = vpop.f32.mrb[0].mxu0
        %2493 = vdwg.mxu0
        %v2494 = vpack.c.bf16 %v2357, %v2354
        %v2495 = vpack.c.bf16 %v2365, %v2362
        %v2496 = vpack.c.bf16 %v2420, %v2417
        %v2497 = vpack.c.bf16 %v2428, %v2425
        %v2498 = vpack.c.bf16 %v2483, %v2480
        %v2499 = vpack.c.bf16 %v2491, %v2488
        %v2504 = vunpack.c.l.b16 %v1371
        %v2505 = vunpack.c.l.b16 %v1372
        %v2506 = vunpack.c.l.b16 %v1373
        %v2507 = vunpack.c.l.b16 %v1374
        %v2508 = vpack.c.b16 %v2505, %v2504
        %v2509 = vpack.c.b16 %v2507, %v2506
        %v2513 = vsel %vm1401, %v2494, 0
        %v2516 = vsel %vm1401, %v2495, 0
        %v2519 = vsel %vm1401, %v2496, 0
        %v2522 = vsel %vm1401, %v2497, 0
        %v2525 = vsel %vm1401, %v2498, 0
        %v2528 = vsel %vm1401, %v2499, 0
        %2530 = vmatprep.subr.bf16.mxu0 0
        %2531 = vmatpush1.bf16.msra.mxu0 %v2508
        %2532 = vmatprep.subr.bf16.mxu0 0
        %2533 = vmatpush1.bf16.msra.mxu0 %v2509
        %2534 = vmatprep.subr.bf16.mxu0 0
        %2535 = vmatpush1.bf16.msra.mxu0 0
        %2536 = vmatprep.subr.bf16.mxu0 0
        %2537 = vmatpush1.bf16.msra.mxu0 0
        %2538 = vmatprep.subr.bf16.mxu0 0
        %2539 = vmatpush1.bf16.msra.mxu0 0
        %2540 = vmatprep.subr.bf16.mxu0 0
        %2541 = vmatpush1.bf16.msra.mxu0 0
        %2542 = vmatprep.subr.bf16.mxu0 0
        %2543 = vmatpush1.bf16.msra.mxu0 0
        %2544 = vmatprep.subr.bf16.mxu0 0
        %2545 = vmatpush1.bf16.msra.mxu0 0
        %2546 = vmatprep.subr.bf16.mxu0 0
        %2547 = vmatpush1.bf16.msra.mxu0 0
        %2548 = vmatprep.subr.bf16.mxu0 0
        %2549 = vmatpush1.bf16.msra.mxu0 0
        %2550 = vmatprep.subr.bf16.mxu0 0
        %2551 = vmatpush1.bf16.msra.mxu0 0
        %2552 = vmatprep.subr.bf16.mxu0 0
        %2553 = vmatpush1.bf16.msra.mxu0 0
        %2554 = vmatprep.subr.bf16.mxu0 0
        %2555 = vmatpush1.bf16.msra.mxu0 0
        %2556 = vmatprep.subr.bf16.mxu0 0
        %2557 = vmatpush1.bf16.msra.mxu0 0
        %2558 = vmatprep.subr.bf16.mxu0 0
        %2559 = vmatpush1.bf16.msra.mxu0 0
        %2560 = vmatprep.subr.bf16.mxu0 0
        %2561 = vmatpush1.bf16.msra.mxu0 0
        %2562 = vmatprep.mubr.bf16.mxu0 0
        %2563 = vmatmul.mubr.bf16.gmra.mrb[0].mxu0 %v2513
        %v2564 = vpop.f32.mrb[0].mxu0
        %v2565 = vadd.f32 0.0, %v2564
        %v2566 = vpop.f32.mrb[0].mxu0
        %v2567 = vpop.f32.mrb[0].mxu0
        %v2568 = vadd.f32 0.0, %v2567
        %v2569 = vpop.f32.mrb[0].mxu0
        %2570 = vmatprep.mubr.bf16.mxu0 0
        %2571 = vmatmul.mubr.bf16.gmra.mrb[0].mxu0 %v2516
        %v2572 = vpop.f32.mrb[0].mxu0
        %v2573 = vadd.f32 0.0, %v2572
        %v2574 = vpop.f32.mrb[0].mxu0
        %v2575 = vpop.f32.mrb[0].mxu0
        %v2576 = vadd.f32 0.0, %v2575
        %v2577 = vpop.f32.mrb[0].mxu0
        %2578 = vmatprep.mubr.bf16.mxu0 0
        %2579 = vmatmul.mubr.bf16.gmra.mrb[0].mxu0 %v2519
        %v2580 = vpop.f32.mrb[0].mxu0
        %v2581 = vadd.f32 0.0, %v2580
        %v2582 = vpop.f32.mrb[0].mxu0
        %v2583 = vpop.f32.mrb[0].mxu0
        %v2584 = vadd.f32 0.0, %v2583
        %v2585 = vpop.f32.mrb[0].mxu0
        %2586 = vmatprep.mubr.bf16.mxu0 0
        %2587 = vmatmul.mubr.bf16.gmra.mrb[0].mxu0 %v2522
        %v2588 = vpop.f32.mrb[0].mxu0
        %v2589 = vadd.f32 0.0, %v2588
        %v2590 = vpop.f32.mrb[0].mxu0
        %v2591 = vpop.f32.mrb[0].mxu0
        %v2592 = vadd.f32 0.0, %v2591
        %v2593 = vpop.f32.mrb[0].mxu0
        %2594 = vmatprep.mubr.bf16.mxu0 0
        %2595 = vmatmul.mubr.bf16.gmra.mrb[0].mxu0 %v2525
        %v2596 = vpop.f32.mrb[0].mxu0
        %v2597 = vadd.f32 0.0, %v2596
        %v2598 = vpop.f32.mrb[0].mxu0
        %v2599 = vpop.f32.mrb[0].mxu0
        %v2600 = vadd.f32 0.0, %v2599
        %v2601 = vpop.f32.mrb[0].mxu0
        %2602 = vmatprep.mubr.bf16.mxu0 0
        %2603 = vmatmul.mubr.bf16.gmra.mrb[0].mxu0 %v2528
        %v2604 = vpop.f32.mrb[0].mxu0
        %v2605 = vadd.f32 0.0, %v2604
        %v2606 = vpop.f32.mrb[0].mxu0
        %v2607 = vpop.f32.mrb[0].mxu0
        %v2608 = vadd.f32 0.0, %v2607
        %v2609 = vpop.f32.mrb[0].mxu0
        %2610 = vdwg.mxu0
        %v2615 = vunpack.c.l.b16 %v1367
        %v2616 = vunpack.c.l.b16 %v1368
        %v2617 = vunpack.c.l.b16 %v1369
        %v2618 = vunpack.c.l.b16 %v1370
        %v2619 = vpack.c.b16 %v2616, %v2615
        %v2620 = vpack.c.b16 %v2618, %v2617
        %v2624 = vsel %vm1401, %v1918, 0
        %v2627 = vsel %vm1401, %v1919, 0
        %v2630 = vsel %vm1401, %v1920, 0
        %v2633 = vsel %vm1401, %v1921, 0
        %v2636 = vsel %vm1401, %v1922, 0
        %v2639 = vsel %vm1401, %v1923, 0
        %2641 = vmatprep.subr.bf16.mxu0 0
        %2642 = vmatpush1.bf16.msra.mxu0 %v2619
        %2643 = vmatprep.subr.bf16.mxu0 0
        %2644 = vmatpush1.bf16.msra.mxu0 %v2620
        %2645 = vmatprep.subr.bf16.mxu0 0
        %2646 = vmatpush1.bf16.msra.mxu0 0
        %2647 = vmatprep.subr.bf16.mxu0 0
        %2648 = vmatpush1.bf16.msra.mxu0 0
        %2649 = vmatprep.subr.bf16.mxu0 0
        %2650 = vmatpush1.bf16.msra.mxu0 0
        %2651 = vmatprep.subr.bf16.mxu0 0
        %2652 = vmatpush1.bf16.msra.mxu0 0
        %2653 = vmatprep.subr.bf16.mxu0 0
        %2654 = vmatpush1.bf16.msra.mxu0 0
        %2655 = vmatprep.subr.bf16.mxu0 0
        %2656 = vmatpush1.bf16.msra.mxu0 0
        %2657 = vmatprep.subr.bf16.mxu0 0
        %2658 = vmatpush1.bf16.msra.mxu0 0
        %2659 = vmatprep.subr.bf16.mxu0 0
        %2660 = vmatpush1.bf16.msra.mxu0 0
        %2661 = vmatprep.subr.bf16.mxu0 0
        %2662 = vmatpush1.bf16.msra.mxu0 0
        %2663 = vmatprep.subr.bf16.mxu0 0
        %2664 = vmatpush1.bf16.msra.mxu0 0
        %2665 = vmatprep.subr.bf16.mxu0 0
        %2666 = vmatpush1.bf16.msra.mxu0 0
        %2667 = vmatprep.subr.bf16.mxu0 0
        %2668 = vmatpush1.bf16.msra.mxu0 0
        %2669 = vmatprep.subr.bf16.mxu0 0
        %2670 = vmatpush1.bf16.msra.mxu0 0
        %2671 = vmatprep.subr.bf16.mxu0 0
        %2672 = vmatpush1.bf16.msra.mxu0 0
        %2673 = vmatprep.mubr.bf16.mxu0 0
        %2674 = vmatmul.mubr.bf16.gmra.mrb[0].mxu0 %v2624
        %v2675 = vpop.f32.mrb[0].mxu0
        %v2676 = vadd.f32 %v2565, %v2675
        %v2677 = vpop.f32.mrb[0].mxu0
        %v2678 = vpop.f32.mrb[0].mxu0
        %v2679 = vadd.f32 %v2568, %v2678
        %v2680 = vpop.f32.mrb[0].mxu0
        %2681 = vmatprep.mubr.bf16.mxu0 0
        %2682 = vmatmul.mubr.bf16.gmra.mrb[0].mxu0 %v2627
        %v2683 = vpop.f32.mrb[0].mxu0
        %v2684 = vadd.f32 %v2573, %v2683
        %v2685 = vpop.f32.mrb[0].mxu0
        %v2686 = vpop.f32.mrb[0].mxu0
        %v2687 = vadd.f32 %v2576, %v2686
        %v2688 = vpop.f32.mrb[0].mxu0
        %2689 = vmatprep.mubr.bf16.mxu0 0
        %2690 = vmatmul.mubr.bf16.gmra.mrb[0].mxu0 %v2630
        %v2691 = vpop.f32.mrb[0].mxu0
        %v2692 = vadd.f32 %v2581, %v2691
        %v2693 = vpop.f32.mrb[0].mxu0
        %v2694 = vpop.f32.mrb[0].mxu0
        %v2695 = vadd.f32 %v2584, %v2694
        %v2696 = vpop.f32.mrb[0].mxu0
        %2697 = vmatprep.mubr.bf16.mxu0 0
        %2698 = vmatmul.mubr.bf16.gmra.mrb[0].mxu0 %v2633
        %v2699 = vpop.f32.mrb[0].mxu0
        %v2700 = vadd.f32 %v2589, %v2699
        %v2701 = vpop.f32.mrb[0].mxu0
        %v2702 = vpop.f32.mrb[0].mxu0
        %v2703 = vadd.f32 %v2592, %v2702
        %v2704 = vpop.f32.mrb[0].mxu0
        %2705 = vmatprep.mubr.bf16.mxu0 0
        %2706 = vmatmul.mubr.bf16.gmra.mrb[0].mxu0 %v2636
        %v2707 = vpop.f32.mrb[0].mxu0
        %v2708 = vadd.f32 %v2597, %v2707
        %v2709 = vpop.f32.mrb[0].mxu0
        %v2710 = vpop.f32.mrb[0].mxu0
        %v2711 = vadd.f32 %v2600, %v2710
        %v2712 = vpop.f32.mrb[0].mxu0
        %2713 = vmatprep.mubr.bf16.mxu0 0
        %2714 = vmatmul.mubr.bf16.gmra.mrb[0].mxu0 %v2639
        %v2715 = vpop.f32.mrb[0].mxu0
        %v2716 = vadd.f32 %v2605, %v2715
        %v2717 = vpop.f32.mrb[0].mxu0
        %v2718 = vpop.f32.mrb[0].mxu0
        %v2719 = vadd.f32 %v2608, %v2718
        %v2720 = vpop.f32.mrb[0].mxu0
        %2721 = vdwg.mxu0
        %2722 = vrot.lane.b32.xlu0 %v1383, 64
        %v2723 = vpop.permute.xlu0 %2722
        %2724 = vrot.lane.b32.xlu0 %v1384, 64
        %v2725 = vpop.permute.xlu0 %2724
        %2726 = vrot.lane.b32.xlu0 %v1389, 64
        %v2727 = vpop.permute.xlu0 %2726
        %2728 = vrot.lane.b32.xlu0 %v1390, 64
        %v2729 = vpop.permute.xlu0 %2728
        %v2731 = vsel %vm1401, %v2723, 0
        %v2734 = vsel %vm1401, %v2725, 0
        %v2737 = vsel %vm1401, %v2727, 0
        %v2740 = vsel %vm1401, %v2729, 0
        %2742 = vmatprep.subr.bf16.mxu0 0
        %2743 = vmatpush1.bf16.xpose.msra.mxu0 %v2737
        %2744 = vmatprep.subr.bf16.mxu0 0
        %2745 = vmatpush1.bf16.xpose.msra.mxu0 %v2740
        %2746 = vmatprep.subr.bf16.mxu0 0
        %2747 = vmatpush1.bf16.xpose.msra.mxu0 0
        %2748 = vmatprep.subr.bf16.mxu0 0
        %2749 = vmatpush1.bf16.xpose.msra.mxu0 0
        %2750 = vmatprep.subr.bf16.mxu0 0
        %2751 = vmatpush1.bf16.xpose.msra.mxu0 0
        %2752 = vmatprep.subr.bf16.mxu0 0
        %2753 = vmatpush1.bf16.xpose.msra.mxu0 0
        %2754 = vmatprep.subr.bf16.mxu0 0
        %2755 = vmatpush1.bf16.xpose.msra.mxu0 0
        %2756 = vmatprep.subr.bf16.mxu0 0
        %2757 = vmatpush1.bf16.xpose.msra.mxu0 0
        %2758 = vmatprep.subr.bf16.mxu0 0
        %2759 = vmatpush1.bf16.xpose.msra.mxu0 0
        %2760 = vmatprep.subr.bf16.mxu0 0
        %2761 = vmatpush1.bf16.xpose.msra.mxu0 0
        %2762 = vmatprep.subr.bf16.mxu0 0
        %2763 = vmatpush1.bf16.xpose.msra.mxu0 0
        %2764 = vmatprep.subr.bf16.mxu0 0
        %2765 = vmatpush1.bf16.xpose.msra.mxu0 0
        %2766 = vmatprep.subr.bf16.mxu0 0
        %2767 = vmatpush1.bf16.xpose.msra.mxu0 0
        %2768 = vmatprep.subr.bf16.mxu0 0
        %2769 = vmatpush1.bf16.xpose.msra.mxu0 0
        %2770 = vmatprep.subr.bf16.mxu0 0
        %2771 = vmatpush1.bf16.xpose.msra.mxu0 0
        %2772 = vmatprep.subr.bf16.mxu0 0
        %2773 = vmatpush1.bf16.xpose.msra.mxu0 0
        %2774 = vmatprep.mubr.bf16.mxu0 0
        %2775 = vmatmul.mubr.bf16.gmra.mrb[0].mxu0 %v2731
        %v2776 = vpop.f32.mrb[0].mxu0
        %v2777 = vadd.f32 0.0, %v2776
        %v2778 = vpop.f32.mrb[0].mxu0
        %v2779 = vpop.f32.mrb[0].mxu0
        %v2780 = vadd.f32 0.0, %v2779
        %v2781 = vpop.f32.mrb[0].mxu0
        %2782 = vmatprep.mubr.bf16.mxu0 0
        %2783 = vmatmul.mubr.bf16.gmra.mrb[0].mxu0 %v2734
        %v2784 = vpop.f32.mrb[0].mxu0
        %v2785 = vadd.f32 0.0, %v2784
        %v2786 = vpop.f32.mrb[0].mxu0
        %v2787 = vpop.f32.mrb[0].mxu0
        %v2788 = vadd.f32 0.0, %v2787
        %v2789 = vpop.f32.mrb[0].mxu0
        %2790 = vdwg.mxu0
        %2791 = vrot.lane.b32.xlu0 %v1385, 64
        %v2792 = vpop.permute.xlu0 %2791
        %2793 = vrot.lane.b32.xlu0 %v1386, 64
        %v2794 = vpop.permute.xlu0 %2793
        %2795 = vrot.lane.b32.xlu0 %v1391, 64
        %v2796 = vpop.permute.xlu0 %2795
        %2797 = vrot.lane.b32.xlu0 %v1392, 64
        %v2798 = vpop.permute.xlu0 %2797
        %v2800 = vsel %vm1401, %v2792, 0
        %v2803 = vsel %vm1401, %v2794, 0
        %v2806 = vsel %vm1401, %v2796, 0
        %v2809 = vsel %vm1401, %v2798, 0
        %2811 = vmatprep.subr.bf16.mxu0 0
        %2812 = vmatpush1.bf16.xpose.msra.mxu0 %v2806
        %2813 = vmatprep.subr.bf16.mxu0 0
        %2814 = vmatpush1.bf16.xpose.msra.mxu0 %v2809
        %2815 = vmatprep.subr.bf16.mxu0 0
        %2816 = vmatpush1.bf16.xpose.msra.mxu0 0
        %2817 = vmatprep.subr.bf16.mxu0 0
        %2818 = vmatpush1.bf16.xpose.msra.mxu0 0
        %2819 = vmatprep.subr.bf16.mxu0 0
        %2820 = vmatpush1.bf16.xpose.msra.mxu0 0
        %2821 = vmatprep.subr.bf16.mxu0 0
        %2822 = vmatpush1.bf16.xpose.msra.mxu0 0
        %2823 = vmatprep.subr.bf16.mxu0 0
        %2824 = vmatpush1.bf16.xpose.msra.mxu0 0
        %2825 = vmatprep.subr.bf16.mxu0 0
        %2826 = vmatpush1.bf16.xpose.msra.mxu0 0
        %2827 = vmatprep.subr.bf16.mxu0 0
        %2828 = vmatpush1.bf16.xpose.msra.mxu0 0
        %2829 = vmatprep.subr.bf16.mxu0 0
        %2830 = vmatpush1.bf16.xpose.msra.mxu0 0
        %2831 = vmatprep.subr.bf16.mxu0 0
        %2832 = vmatpush1.bf16.xpose.msra.mxu0 0
        %2833 = vmatprep.subr.bf16.mxu0 0
        %2834 = vmatpush1.bf16.xpose.msra.mxu0 0
        %2835 = vmatprep.subr.bf16.mxu0 0
        %2836 = vmatpush1.bf16.xpose.msra.mxu0 0
        %2837 = vmatprep.subr.bf16.mxu0 0
        %2838 = vmatpush1.bf16.xpose.msra.mxu0 0
        %2839 = vmatprep.subr.bf16.mxu0 0
        %2840 = vmatpush1.bf16.xpose.msra.mxu0 0
        %2841 = vmatprep.subr.bf16.mxu0 0
        %2842 = vmatpush1.bf16.xpose.msra.mxu0 0
        %2843 = vmatprep.mubr.bf16.mxu0 0
        %2844 = vmatmul.mubr.bf16.gmra.mrb[0].mxu0 %v2800
        %v2845 = vpop.f32.mrb[0].mxu0
        %v2846 = vadd.f32 0.0, %v2845
        %v2847 = vpop.f32.mrb[0].mxu0
        %v2848 = vpop.f32.mrb[0].mxu0
        %v2849 = vadd.f32 0.0, %v2848
        %v2850 = vpop.f32.mrb[0].mxu0
        %2851 = vmatprep.mubr.bf16.mxu0 0
        %2852 = vmatmul.mubr.bf16.gmra.mrb[0].mxu0 %v2803
        %v2853 = vpop.f32.mrb[0].mxu0
        %v2854 = vadd.f32 0.0, %v2853
        %v2855 = vpop.f32.mrb[0].mxu0
        %v2856 = vpop.f32.mrb[0].mxu0
        %v2857 = vadd.f32 0.0, %v2856
        %v2858 = vpop.f32.mrb[0].mxu0
        %2859 = vdwg.mxu0
        %2860 = vrot.lane.b32.xlu0 %v1387, 64
        %v2861 = vpop.permute.xlu0 %2860
        %2862 = vrot.lane.b32.xlu0 %v1388, 64
        %v2863 = vpop.permute.xlu0 %2862
        %2864 = vrot.lane.b32.xlu0 %v1393, 64
        %v2865 = vpop.permute.xlu0 %2864
        %2866 = vrot.lane.b32.xlu0 %v1394, 64
        %v2867 = vpop.permute.xlu0 %2866
        %v2869 = vsel %vm1401, %v2861, 0
        %v2872 = vsel %vm1401, %v2863, 0
        %v2875 = vsel %vm1401, %v2865, 0
        %v2878 = vsel %vm1401, %v2867, 0
        %2880 = vmatprep.subr.bf16.mxu0 0
        %2881 = vmatpush1.bf16.xpose.msra.mxu0 %v2875
        %2882 = vmatprep.subr.bf16.mxu0 0
        %2883 = vmatpush1.bf16.xpose.msra.mxu0 %v2878
        %2884 = vmatprep.subr.bf16.mxu0 0
        %2885 = vmatpush1.bf16.xpose.msra.mxu0 0
        %2886 = vmatprep.subr.bf16.mxu0 0
        %2887 = vmatpush1.bf16.xpose.msra.mxu0 0
        %2888 = vmatprep.subr.bf16.mxu0 0
        %2889 = vmatpush1.bf16.xpose.msra.mxu0 0
        %2890 = vmatprep.subr.bf16.mxu0 0
        %2891 = vmatpush1.bf16.xpose.msra.mxu0 0
        %2892 = vmatprep.subr.bf16.mxu0 0
        %2893 = vmatpush1.bf16.xpose.msra.mxu0 0
        %2894 = vmatprep.subr.bf16.mxu0 0
        %2895 = vmatpush1.bf16.xpose.msra.mxu0 0
        %2896 = vmatprep.subr.bf16.mxu0 0
        %2897 = vmatpush1.bf16.xpose.msra.mxu0 0
        %2898 = vmatprep.subr.bf16.mxu0 0
        %2899 = vmatpush1.bf16.xpose.msra.mxu0 0
        %2900 = vmatprep.subr.bf16.mxu0 0
        %2901 = vmatpush1.bf16.xpose.msra.mxu0 0
        %2902 = vmatprep.subr.bf16.mxu0 0
        %2903 = vmatpush1.bf16.xpose.msra.mxu0 0
        %2904 = vmatprep.subr.bf16.mxu0 0
        %2905 = vmatpush1.bf16.xpose.msra.mxu0 0
        %2906 = vmatprep.subr.bf16.mxu0 0
        %2907 = vmatpush1.bf16.xpose.msra.mxu0 0
        %2908 = vmatprep.subr.bf16.mxu0 0
        %2909 = vmatpush1.bf16.xpose.msra.mxu0 0
        %2910 = vmatprep.subr.bf16.mxu0 0
        %2911 = vmatpush1.bf16.xpose.msra.mxu0 0
        %2912 = vmatprep.mubr.bf16.mxu0 0
        %2913 = vmatmul.mubr.bf16.gmra.mrb[0].mxu0 %v2869
        %v2914 = vpop.f32.mrb[0].mxu0
        %v2915 = vadd.f32 0.0, %v2914
        %v2916 = vpop.f32.mrb[0].mxu0
        %v2917 = vpop.f32.mrb[0].mxu0
        %v2918 = vadd.f32 0.0, %v2917
        %v2919 = vpop.f32.mrb[0].mxu0
        %2920 = vmatprep.mubr.bf16.mxu0 0
        %2921 = vmatmul.mubr.bf16.gmra.mrb[0].mxu0 %v2872
        %v2922 = vpop.f32.mrb[0].mxu0
        %v2923 = vadd.f32 0.0, %v2922
        %v2924 = vpop.f32.mrb[0].mxu0
        %v2925 = vpop.f32.mrb[0].mxu0
        %v2926 = vadd.f32 0.0, %v2925
        %v2927 = vpop.f32.mrb[0].mxu0
        %2928 = vdwg.mxu0
        %v2929 = vmul.f32 %v2777, 0.17677669
        %v2930 = vmul.f32 %v2780, 0.17677669
        %v2931 = vmul.f32 %v2785, 0.17677669
        %v2932 = vmul.f32 %v2788, 0.17677669
        %v2933 = vmul.f32 %v2846, 0.17677669
        %v2934 = vmul.f32 %v2849, 0.17677669
        %v2935 = vmul.f32 %v2854, 0.17677669
        %v2936 = vmul.f32 %v2857, 0.17677669
        %v2937 = vmul.f32 %v2915, 0.17677669
        %v2938 = vmul.f32 %v2918, 0.17677669
        %v2939 = vmul.f32 %v2923, 0.17677669
        %v2940 = vmul.f32 %v2926, 0.17677669
        %v2941 = vadd.f32 %v2929, %v1601
        %v2942 = vadd.f32 %v2930, %v1601
        %v2943 = vadd.f32 %v2931, %v1601
        %v2944 = vadd.f32 %v2932, %v1601
        %v2945 = vadd.f32 %v2933, %v1601
        %v2946 = vadd.f32 %v2934, %v1601
        %v2947 = vadd.f32 %v2935, %v1601
        %v2948 = vadd.f32 %v2936, %v1601
        %v2949 = vadd.f32 %v2937, %v1601
        %v2950 = vadd.f32 %v2938, %v1601
        %v2951 = vadd.f32 %v2939, %v1601
        %v2952 = vadd.f32 %v2940, %v1601
        %v2953 = vsel %vm1401, %v2941, -inf
        %2954 = vmax.xlane.f32.xlu0 %v2953
        %v2955 = vpop.xlane.xlu0 %2954
        %v2956 = vsel %vm1401, %v2942, -inf
        %2957 = vmax.xlane.f32.xlu0 %v2956
        %v2958 = vpop.xlane.xlu0 %2957
        %v2959 = vsel %vm1401, %v2943, -inf
        %2960 = vmax.xlane.f32.xlu0 %v2959
        %v2961 = vpop.xlane.xlu0 %2960
        %v2962 = vsel %vm1401, %v2944, -inf
        %2963 = vmax.xlane.f32.xlu0 %v2962
        %v2964 = vpop.xlane.xlu0 %2963
        %v2965 = vsel %vm1401, %v2945, -inf
        %2966 = vmax.xlane.f32.xlu0 %v2965
        %v2967 = vpop.xlane.xlu0 %2966
        %v2968 = vsel %vm1401, %v2946, -inf
        %2969 = vmax.xlane.f32.xlu0 %v2968
        %v2970 = vpop.xlane.xlu0 %2969
        %v2971 = vsel %vm1401, %v2947, -inf
        %2972 = vmax.xlane.f32.xlu0 %v2971
        %v2973 = vpop.xlane.xlu0 %2972
        %v2974 = vsel %vm1401, %v2948, -inf
        %2975 = vmax.xlane.f32.xlu0 %v2974
        %v2976 = vpop.xlane.xlu0 %2975
        %v2977 = vsel %vm1401, %v2949, -inf
        %2978 = vmax.xlane.f32.xlu0 %v2977
        %v2979 = vpop.xlane.xlu0 %2978
        %v2980 = vsel %vm1401, %v2950, -inf
        %2981 = vmax.xlane.f32.xlu0 %v2980
        %v2982 = vpop.xlane.xlu0 %2981
        %v2983 = vsel %vm1401, %v2951, -inf
        %2984 = vmax.xlane.f32.xlu0 %v2983
        %v2985 = vpop.xlane.xlu0 %2984
        %v2986 = vsel %vm1401, %v2952, -inf
        %2987 = vmax.xlane.f32.xlu0 %v2986
        %v2988 = vpop.xlane.xlu0 %2987
        %v2989 = vsub.f32 %v2941, %v2955
        %v2990 = vsub.f32 %v2942, %v2958
        %v2991 = vsub.f32 %v2943, %v2961
        %v2992 = vsub.f32 %v2944, %v2964
        %v2993 = vsub.f32 %v2945, %v2967
        %v2994 = vsub.f32 %v2946, %v2970
        %v2995 = vsub.f32 %v2947, %v2973
        %v2996 = vsub.f32 %v2948, %v2976
        %v2997 = vsub.f32 %v2949, %v2979
        %v2998 = vsub.f32 %v2950, %v2982
        %v2999 = vsub.f32 %v2951, %v2985
        %v3000 = vsub.f32 %v2952, %v2988
        %v3001 = vmul.f32 %v2989, 1.442695
        %v3002 = vpow.pop %v3001
        %v3003 = vmul.f32 %v2990, 1.442695
        %v3004 = vpow.pop %v3003
        %v3005 = vmul.f32 %v2991, 1.442695
        %v3006 = vpow.pop %v3005
        %v3007 = vmul.f32 %v2992, 1.442695
        %v3008 = vpow.pop %v3007
        %v3009 = vmul.f32 %v2993, 1.442695
        %v3010 = vpow.pop %v3009
        %v3011 = vmul.f32 %v2994, 1.442695
        %v3012 = vpow.pop %v3011
        %v3013 = vmul.f32 %v2995, 1.442695
        %v3014 = vpow.pop %v3013
        %v3015 = vmul.f32 %v2996, 1.442695
        %v3016 = vpow.pop %v3015
        %v3017 = vmul.f32 %v2997, 1.442695
        %v3018 = vpow.pop %v3017
        %v3019 = vmul.f32 %v2998, 1.442695
        %v3020 = vpow.pop %v3019
        %v3021 = vmul.f32 %v2999, 1.442695
        %v3022 = vpow.pop %v3021
        %v3023 = vmul.f32 %v3000, 1.442695
        %v3024 = vpow.pop %v3023
        %v3025 = vsel %vm1401, %v3002, 0.0
        %3026 = vadd.xlane.f32.xlu0 %v3025
        %v3027 = vpop.xlane.xlu0 %3026
        %v3028 = vsel %vm1401, %v3004, 0.0
        %3029 = vadd.xlane.f32.xlu0 %v3028
        %v3030 = vpop.xlane.xlu0 %3029
        %v3031 = vsel %vm1401, %v3006, 0.0
        %3032 = vadd.xlane.f32.xlu0 %v3031
        %v3033 = vpop.xlane.xlu0 %3032
        %v3034 = vsel %vm1401, %v3008, 0.0
        %3035 = vadd.xlane.f32.xlu0 %v3034
        %v3036 = vpop.xlane.xlu0 %3035
        %v3037 = vsel %vm1401, %v3010, 0.0
        %3038 = vadd.xlane.f32.xlu0 %v3037
        %v3039 = vpop.xlane.xlu0 %3038
        %v3040 = vsel %vm1401, %v3012, 0.0
        %3041 = vadd.xlane.f32.xlu0 %v3040
        %v3042 = vpop.xlane.xlu0 %3041
        %v3043 = vsel %vm1401, %v3014, 0.0
        %3044 = vadd.xlane.f32.xlu0 %v3043
        %v3045 = vpop.xlane.xlu0 %3044
        %v3046 = vsel %vm1401, %v3016, 0.0
        %3047 = vadd.xlane.f32.xlu0 %v3046
        %v3048 = vpop.xlane.xlu0 %3047
        %v3049 = vsel %vm1401, %v3018, 0.0
        %3050 = vadd.xlane.f32.xlu0 %v3049
        %v3051 = vpop.xlane.xlu0 %3050
        %v3052 = vsel %vm1401, %v3020, 0.0
        %3053 = vadd.xlane.f32.xlu0 %v3052
        %v3054 = vpop.xlane.xlu0 %3053
        %v3055 = vsel %vm1401, %v3022, 0.0
        %3056 = vadd.xlane.f32.xlu0 %v3055
        %v3057 = vpop.xlane.xlu0 %3056
        %v3058 = vsel %vm1401, %v3024, 0.0
        %3059 = vadd.xlane.f32.xlu0 %v3058
        %v3060 = vpop.xlane.xlu0 %3059
        %v3061 = vrcp.pop %v3027
        %v3062 = vmul.f32 %v3002, %v3061
        %v3063 = vrcp.pop %v3030
        %v3064 = vmul.f32 %v3004, %v3063
        %v3065 = vrcp.pop %v3033
        %v3066 = vmul.f32 %v3006, %v3065
        %v3067 = vrcp.pop %v3036
        %v3068 = vmul.f32 %v3008, %v3067
        %v3069 = vrcp.pop %v3039
        %v3070 = vmul.f32 %v3010, %v3069
        %v3071 = vrcp.pop %v3042
        %v3072 = vmul.f32 %v3012, %v3071
        %v3073 = vrcp.pop %v3045
        %v3074 = vmul.f32 %v3014, %v3073
        %v3075 = vrcp.pop %v3048
        %v3076 = vmul.f32 %v3016, %v3075
        %v3077 = vrcp.pop %v3051
        %v3078 = vmul.f32 %v3018, %v3077
        %v3079 = vrcp.pop %v3054
        %v3080 = vmul.f32 %v3020, %v3079
        %v3081 = vrcp.pop %v3057
        %v3082 = vmul.f32 %v3022, %v3081
        %v3083 = vrcp.pop %v3060
        %v3084 = vmul.f32 %v3024, %v3083
        %v3085 = vpack.c.bf16 %v3064, %v3062
        %v3086 = vpack.c.bf16 %v3068, %v3066
        %v3087 = vpack.c.bf16 %v3072, %v3070
        %v3088 = vpack.c.bf16 %v3076, %v3074
        %v3089 = vpack.c.bf16 %v3080, %v3078
        %v3090 = vpack.c.bf16 %v3084, %v3082
        %3091 = vrot.lane.b32.xlu0 %v1395, 64
        %v3092 = vpop.permute.xlu0 %3091
        %3093 = vrot.lane.b32.xlu0 %v1396, 64
        %v3094 = vpop.permute.xlu0 %3093
        %v3098 = vsel %vm1401, %v3085, 0
        %v3101 = vsel %vm1401, %v3086, 0
        %3103 = vmatprep.subr.bf16.mxu0 0
        %3104 = vmatpush1.bf16.msra.mxu0 %v3092
        %3105 = vmatprep.subr.bf16.mxu0 0
        %3106 = vmatpush1.bf16.msra.mxu0 %v3094
        %3107 = vmatprep.subr.bf16.mxu0 0
        %3108 = vmatpush1.bf16.msra.mxu0 0
        %3109 = vmatprep.subr.bf16.mxu0 0
        %3110 = vmatpush1.bf16.msra.mxu0 0
        %3111 = vmatprep.subr.bf16.mxu0 0
        %3112 = vmatpush1.bf16.msra.mxu0 0
        %3113 = vmatprep.subr.bf16.mxu0 0
        %3114 = vmatpush1.bf16.msra.mxu0 0
        %3115 = vmatprep.subr.bf16.mxu0 0
        %3116 = vmatpush1.bf16.msra.mxu0 0
        %3117 = vmatprep.subr.bf16.mxu0 0
        %3118 = vmatpush1.bf16.msra.mxu0 0
        %3119 = vmatprep.subr.bf16.mxu0 0
        %3120 = vmatpush1.bf16.msra.mxu0 0
        %3121 = vmatprep.subr.bf16.mxu0 0
        %3122 = vmatpush1.bf16.msra.mxu0 0
        %3123 = vmatprep.subr.bf16.mxu0 0
        %3124 = vmatpush1.bf16.msra.mxu0 0
        %3125 = vmatprep.subr.bf16.mxu0 0
        %3126 = vmatpush1.bf16.msra.mxu0 0
        %3127 = vmatprep.subr.bf16.mxu0 0
        %3128 = vmatpush1.bf16.msra.mxu0 0
        %3129 = vmatprep.subr.bf16.mxu0 0
        %3130 = vmatpush1.bf16.msra.mxu0 0
        %3131 = vmatprep.subr.bf16.mxu0 0
        %3132 = vmatpush1.bf16.msra.mxu0 0
        %3133 = vmatprep.subr.bf16.mxu0 0
        %3134 = vmatpush1.bf16.msra.mxu0 0
        %3135 = vmatprep.mubr.bf16.mxu0 0
        %3136 = vmatmul.mubr.bf16.gmra.mrb[0].mxu0 %v3098
        %v3137 = vpop.f32.mrb[0].mxu0
        %v3138 = vadd.f32 0.0, %v3137
        %v3139 = vpop.f32.mrb[0].mxu0
        %v3140 = vpop.f32.mrb[0].mxu0
        %v3141 = vadd.f32 0.0, %v3140
        %v3142 = vpop.f32.mrb[0].mxu0
        %3143 = vmatprep.mubr.bf16.mxu0 0
        %3144 = vmatmul.mubr.bf16.gmra.mrb[0].mxu0 %v3101
        %v3145 = vpop.f32.mrb[0].mxu0
        %v3146 = vadd.f32 0.0, %v3145
        %v3147 = vpop.f32.mrb[0].mxu0
        %v3148 = vpop.f32.mrb[0].mxu0
        %v3149 = vadd.f32 0.0, %v3148
        %v3150 = vpop.f32.mrb[0].mxu0
        %3151 = vdwg.mxu0
        %3152 = vrot.lane.b32.xlu0 %v1397, 64
        %v3153 = vpop.permute.xlu0 %3152
        %3154 = vrot.lane.b32.xlu0 %v1398, 64
        %v3155 = vpop.permute.xlu0 %3154
        %v3159 = vsel %vm1401, %v3087, 0
        %v3162 = vsel %vm1401, %v3088, 0
        %3164 = vmatprep.subr.bf16.mxu0 0
        %3165 = vmatpush1.bf16.msra.mxu0 %v3153
        %3166 = vmatprep.subr.bf16.mxu0 0
        %3167 = vmatpush1.bf16.msra.mxu0 %v3155
        %3168 = vmatprep.subr.bf16.mxu0 0
        %3169 = vmatpush1.bf16.msra.mxu0 0
        %3170 = vmatprep.subr.bf16.mxu0 0
        %3171 = vmatpush1.bf16.msra.mxu0 0
        %3172 = vmatprep.subr.bf16.mxu0 0
        %3173 = vmatpush1.bf16.msra.mxu0 0
        %3174 = vmatprep.subr.bf16.mxu0 0
        %3175 = vmatpush1.bf16.msra.mxu0 0
        %3176 = vmatprep.subr.bf16.mxu0 0
        %3177 = vmatpush1.bf16.msra.mxu0 0
        %3178 = vmatprep.subr.bf16.mxu0 0
        %3179 = vmatpush1.bf16.msra.mxu0 0
        %3180 = vmatprep.subr.bf16.mxu0 0
        %3181 = vmatpush1.bf16.msra.mxu0 0
        %3182 = vmatprep.subr.bf16.mxu0 0
        %3183 = vmatpush1.bf16.msra.mxu0 0
        %3184 = vmatprep.subr.bf16.mxu0 0
        %3185 = vmatpush1.bf16.msra.mxu0 0
        %3186 = vmatprep.subr.bf16.mxu0 0
        %3187 = vmatpush1.bf16.msra.mxu0 0
        %3188 = vmatprep.subr.bf16.mxu0 0
        %3189 = vmatpush1.bf16.msra.mxu0 0
        %3190 = vmatprep.subr.bf16.mxu0 0
        %3191 = vmatpush1.bf16.msra.mxu0 0
        %3192 = vmatprep.subr.bf16.mxu0 0
        %3193 = vmatpush1.bf16.msra.mxu0 0
        %3194 = vmatprep.subr.bf16.mxu0 0
        %3195 = vmatpush1.bf16.msra.mxu0 0
        %3196 = vmatprep.mubr.bf16.mxu0 0
        %3197 = vmatmul.mubr.bf16.gmra.mrb[0].mxu0 %v3159
        %v3198 = vpop.f32.mrb[0].mxu0
        %v3199 = vadd.f32 0.0, %v3198
        %v3200 = vpop.f32.mrb[0].mxu0
        %v3201 = vpop.f32.mrb[0].mxu0
        %v3202 = vadd.f32 0.0, %v3201
        %v3203 = vpop.f32.mrb[0].mxu0
        %3204 = vmatprep.mubr.bf16.mxu0 0
        %3205 = vmatmul.mubr.bf16.gmra.mrb[0].mxu0 %v3162
        %v3206 = vpop.f32.mrb[0].mxu0
        %v3207 = vadd.f32 0.0, %v3206
        %v3208 = vpop.f32.mrb[0].mxu0
        %v3209 = vpop.f32.mrb[0].mxu0
        %v3210 = vadd.f32 0.0, %v3209
        %v3211 = vpop.f32.mrb[0].mxu0
        %3212 = vdwg.mxu0
        %3213 = vrot.lane.b32.xlu0 %v1399, 64
        %v3214 = vpop.permute.xlu0 %3213
        %3215 = vrot.lane.b32.xlu0 %v1400, 64
        %v3216 = vpop.permute.xlu0 %3215
        %v3220 = vsel %vm1401, %v3089, 0
        %v3223 = vsel %vm1401, %v3090, 0
        %3225 = vmatprep.subr.bf16.mxu0 0
        %3226 = vmatpush1.bf16.msra.mxu0 %v3214
        %3227 = vmatprep.subr.bf16.mxu0 0
        %3228 = vmatpush1.bf16.msra.mxu0 %v3216
        %3229 = vmatprep.subr.bf16.mxu0 0
        %3230 = vmatpush1.bf16.msra.mxu0 0
        %3231 = vmatprep.subr.bf16.mxu0 0
        %3232 = vmatpush1.bf16.msra.mxu0 0
        %3233 = vmatprep.subr.bf16.mxu0 0
        %3234 = vmatpush1.bf16.msra.mxu0 0
        %3235 = vmatprep.subr.bf16.mxu0 0
        %3236 = vmatpush1.bf16.msra.mxu0 0
        %3237 = vmatprep.subr.bf16.mxu0 0
        %3238 = vmatpush1.bf16.msra.mxu0 0
        %3239 = vmatprep.subr.bf16.mxu0 0
        %3240 = vmatpush1.bf16.msra.mxu0 0
        %3241 = vmatprep.subr.bf16.mxu0 0
        %3242 = vmatpush1.bf16.msra.mxu0 0
        %3243 = vmatprep.subr.bf16.mxu0 0
        %3244 = vmatpush1.bf16.msra.mxu0 0
        %3245 = vmatprep.subr.bf16.mxu0 0
        %3246 = vmatpush1.bf16.msra.mxu0 0
        %3247 = vmatprep.subr.bf16.mxu0 0
        %3248 = vmatpush1.bf16.msra.mxu0 0
        %3249 = vmatprep.subr.bf16.mxu0 0
        %3250 = vmatpush1.bf16.msra.mxu0 0
        %3251 = vmatprep.subr.bf16.mxu0 0
        %3252 = vmatpush1.bf16.msra.mxu0 0
        %3253 = vmatprep.subr.bf16.mxu0 0
        %3254 = vmatpush1.bf16.msra.mxu0 0
        %3255 = vmatprep.subr.bf16.mxu0 0
        %3256 = vmatpush1.bf16.msra.mxu0 0
        %3257 = vmatprep.mubr.bf16.mxu0 0
        %3258 = vmatmul.mubr.bf16.gmra.mrb[0].mxu0 %v3220
        %v3259 = vpop.f32.mrb[0].mxu0
        %v3260 = vadd.f32 0.0, %v3259
        %v3261 = vpop.f32.mrb[0].mxu0
        %v3262 = vpop.f32.mrb[0].mxu0
        %v3263 = vadd.f32 0.0, %v3262
        %v3264 = vpop.f32.mrb[0].mxu0
        %3265 = vmatprep.mubr.bf16.mxu0 0
        %3266 = vmatmul.mubr.bf16.gmra.mrb[0].mxu0 %v3223
        %v3267 = vpop.f32.mrb[0].mxu0
        %v3268 = vadd.f32 0.0, %v3267
        %v3269 = vpop.f32.mrb[0].mxu0
        %v3270 = vpop.f32.mrb[0].mxu0
        %v3271 = vadd.f32 0.0, %v3270
        %v3272 = vpop.f32.mrb[0].mxu0
        %3273 = vdwg.mxu0
        %v3274 = vpack.c.bf16 %v3141, %v3138
        %v3275 = vpack.c.bf16 %v3149, %v3146
        %v3276 = vpack.c.bf16 %v3202, %v3199
        %v3277 = vpack.c.bf16 %v3210, %v3207
        %v3278 = vpack.c.bf16 %v3263, %v3260
        %v3279 = vpack.c.bf16 %v3271, %v3268
        %v3284 = vunpack.c.l.b16 %v1375
        %v3285 = vunpack.c.l.b16 %v1376
        %v3286 = vunpack.c.l.b16 %v1377
        %v3287 = vunpack.c.l.b16 %v1378
        %v3288 = vpack.c.b16 %v3285, %v3284
        %v3289 = vpack.c.b16 %v3287, %v3286
        %v3293 = vsel %vm1401, %v3274, 0
        %v3296 = vsel %vm1401, %v3275, 0
        %v3299 = vsel %vm1401, %v3276, 0
        %v3302 = vsel %vm1401, %v3277, 0
        %v3305 = vsel %vm1401, %v3278, 0
        %v3308 = vsel %vm1401, %v3279, 0
        %3310 = vmatprep.subr.bf16.mxu0 0
        %3311 = vmatpush1.bf16.msra.mxu0 %v3288
        %3312 = vmatprep.subr.bf16.mxu0 0
        %3313 = vmatpush1.bf16.msra.mxu0 %v3289
        %3314 = vmatprep.subr.bf16.mxu0 0
        %3315 = vmatpush1.bf16.msra.mxu0 0
        %3316 = vmatprep.subr.bf16.mxu0 0
        %3317 = vmatpush1.bf16.msra.mxu0 0
        %3318 = vmatprep.subr.bf16.mxu0 0
        %3319 = vmatpush1.bf16.msra.mxu0 0
        %3320 = vmatprep.subr.bf16.mxu0 0
        %3321 = vmatpush1.bf16.msra.mxu0 0
        %3322 = vmatprep.subr.bf16.mxu0 0
        %3323 = vmatpush1.bf16.msra.mxu0 0
        %3324 = vmatprep.subr.bf16.mxu0 0
        %3325 = vmatpush1.bf16.msra.mxu0 0
        %3326 = vmatprep.subr.bf16.mxu0 0
        %3327 = vmatpush1.bf16.msra.mxu0 0
        %3328 = vmatprep.subr.bf16.mxu0 0
        %3329 = vmatpush1.bf16.msra.mxu0 0
        %3330 = vmatprep.subr.bf16.mxu0 0
        %3331 = vmatpush1.bf16.msra.mxu0 0
        %3332 = vmatprep.subr.bf16.mxu0 0
        %3333 = vmatpush1.bf16.msra.mxu0 0
        %3334 = vmatprep.subr.bf16.mxu0 0
        %3335 = vmatpush1.bf16.msra.mxu0 0
        %3336 = vmatprep.subr.bf16.mxu0 0
        %3337 = vmatpush1.bf16.msra.mxu0 0
        %3338 = vmatprep.subr.bf16.mxu0 0
        %3339 = vmatpush1.bf16.msra.mxu0 0
        %3340 = vmatprep.subr.bf16.mxu0 0
        %3341 = vmatpush1.bf16.msra.mxu0 0
        %3342 = vmatprep.mubr.bf16.mxu0 0
        %3343 = vmatmul.mubr.bf16.gmra.mrb[0].mxu0 %v3293
        %v3344 = vpop.f32.mrb[0].mxu0
        %v3345 = vadd.f32 0.0, %v3344
        %v3346 = vpop.f32.mrb[0].mxu0
        %v3347 = vpop.f32.mrb[0].mxu0
        %v3348 = vadd.f32 0.0, %v3347
        %v3349 = vpop.f32.mrb[0].mxu0
        %3350 = vmatprep.mubr.bf16.mxu0 0
        %3351 = vmatmul.mubr.bf16.gmra.mrb[0].mxu0 %v3296
        %v3352 = vpop.f32.mrb[0].mxu0
        %v3353 = vadd.f32 0.0, %v3352
        %v3354 = vpop.f32.mrb[0].mxu0
        %v3355 = vpop.f32.mrb[0].mxu0
        %v3356 = vadd.f32 0.0, %v3355
        %v3357 = vpop.f32.mrb[0].mxu0
        %3358 = vmatprep.mubr.bf16.mxu0 0
        %3359 = vmatmul.mubr.bf16.gmra.mrb[0].mxu0 %v3299
        %v3360 = vpop.f32.mrb[0].mxu0
        %v3361 = vadd.f32 0.0, %v3360
        %v3362 = vpop.f32.mrb[0].mxu0
        %v3363 = vpop.f32.mrb[0].mxu0
        %v3364 = vadd.f32 0.0, %v3363
        %v3365 = vpop.f32.mrb[0].mxu0
        %3366 = vmatprep.mubr.bf16.mxu0 0
        %3367 = vmatmul.mubr.bf16.gmra.mrb[0].mxu0 %v3302
        %v3368 = vpop.f32.mrb[0].mxu0
        %v3369 = vadd.f32 0.0, %v3368
        %v3370 = vpop.f32.mrb[0].mxu0
        %v3371 = vpop.f32.mrb[0].mxu0
        %v3372 = vadd.f32 0.0, %v3371
        %v3373 = vpop.f32.mrb[0].mxu0
        %3374 = vmatprep.mubr.bf16.mxu0 0
        %3375 = vmatmul.mubr.bf16.gmra.mrb[0].mxu0 %v3305
        %v3376 = vpop.f32.mrb[0].mxu0
        %v3377 = vadd.f32 0.0, %v3376
        %v3378 = vpop.f32.mrb[0].mxu0
        %v3379 = vpop.f32.mrb[0].mxu0
        %v3380 = vadd.f32 0.0, %v3379
        %v3381 = vpop.f32.mrb[0].mxu0
        %3382 = vmatprep.mubr.bf16.mxu0 0
        %3383 = vmatmul.mubr.bf16.gmra.mrb[0].mxu0 %v3308
        %v3384 = vpop.f32.mrb[0].mxu0
        %v3385 = vadd.f32 0.0, %v3384
        %v3386 = vpop.f32.mrb[0].mxu0
        %v3387 = vpop.f32.mrb[0].mxu0
        %v3388 = vadd.f32 0.0, %v3387
        %v3389 = vpop.f32.mrb[0].mxu0
        %3390 = vdwg.mxu0
        %v3391 = vadd.f32 %v2676, %v3345
        %v3392 = vadd.f32 %v2679, %v3348
        %v3393 = vadd.f32 %v2684, %v3353
        %v3394 = vadd.f32 %v2687, %v3356
        %v3395 = vadd.f32 %v2692, %v3361
        %v3396 = vadd.f32 %v2695, %v3364
        %v3397 = vadd.f32 %v2700, %v3369
        %v3398 = vadd.f32 %v2703, %v3372
        %v3399 = vadd.f32 %v2708, %v3377
        %v3400 = vadd.f32 %v2711, %v3380
        %v3401 = vadd.f32 %v2716, %v3385
        %v3402 = vadd.f32 %v2719, %v3388
        %3403 = vrot.lane.b32.xlu0 %v1383, 32
        %v3404 = vpop.permute.xlu0 %3403
        %3405 = vrot.lane.b32.xlu0 %v1384, 32
        %v3406 = vpop.permute.xlu0 %3405
        %3407 = vrot.lane.b32.xlu0 %v1389, 32
        %v3408 = vpop.permute.xlu0 %3407
        %3409 = vrot.lane.b32.xlu0 %v1390, 32
        %v3410 = vpop.permute.xlu0 %3409
        %v3412 = vsel %vm1401, %v3404, 0
        %v3415 = vsel %vm1401, %v3406, 0
        %v3418 = vsel %vm1401, %v3408, 0
        %v3421 = vsel %vm1401, %v3410, 0
        %3423 = vmatprep.subr.bf16.mxu0 0
        %3424 = vmatpush1.bf16.xpose.msra.mxu0 %v3418
        %3425 = vmatprep.subr.bf16.mxu0 0
        %3426 = vmatpush1.bf16.xpose.msra.mxu0 %v3421
        %3427 = vmatprep.subr.bf16.mxu0 0
        %3428 = vmatpush1.bf16.xpose.msra.mxu0 0
        %3429 = vmatprep.subr.bf16.mxu0 0
        %3430 = vmatpush1.bf16.xpose.msra.mxu0 0
        %3431 = vmatprep.subr.bf16.mxu0 0
        %3432 = vmatpush1.bf16.xpose.msra.mxu0 0
        %3433 = vmatprep.subr.bf16.mxu0 0
        %3434 = vmatpush1.bf16.xpose.msra.mxu0 0
        %3435 = vmatprep.subr.bf16.mxu0 0
        %3436 = vmatpush1.bf16.xpose.msra.mxu0 0
        %3437 = vmatprep.subr.bf16.mxu0 0
        %3438 = vmatpush1.bf16.xpose.msra.mxu0 0
        %3439 = vmatprep.subr.bf16.mxu0 0
        %3440 = vmatpush1.bf16.xpose.msra.mxu0 0
        %3441 = vmatprep.subr.bf16.mxu0 0
        %3442 = vmatpush1.bf16.xpose.msra.mxu0 0
        %3443 = vmatprep.subr.bf16.mxu0 0
        %3444 = vmatpush1.bf16.xpose.msra.mxu0 0
        %3445 = vmatprep.subr.bf16.mxu0 0
        %3446 = vmatpush1.bf16.xpose.msra.mxu0 0
        %3447 = vmatprep.subr.bf16.mxu0 0
        %3448 = vmatpush1.bf16.xpose.msra.mxu0 0
        %3449 = vmatprep.subr.bf16.mxu0 0
        %3450 = vmatpush1.bf16.xpose.msra.mxu0 0
        %3451 = vmatprep.subr.bf16.mxu0 0
        %3452 = vmatpush1.bf16.xpose.msra.mxu0 0
        %3453 = vmatprep.subr.bf16.mxu0 0
        %3454 = vmatpush1.bf16.xpose.msra.mxu0 0
        %3455 = vmatprep.mubr.bf16.mxu0 0
        %3456 = vmatmul.mubr.bf16.gmra.mrb[0].mxu0 %v3412
        %v3457 = vpop.f32.mrb[0].mxu0
        %v3458 = vadd.f32 0.0, %v3457
        %v3459 = vpop.f32.mrb[0].mxu0
        %v3460 = vpop.f32.mrb[0].mxu0
        %v3461 = vadd.f32 0.0, %v3460
        %v3462 = vpop.f32.mrb[0].mxu0
        %3463 = vmatprep.mubr.bf16.mxu0 0
        %3464 = vmatmul.mubr.bf16.gmra.mrb[0].mxu0 %v3415
        %v3465 = vpop.f32.mrb[0].mxu0
        %v3466 = vadd.f32 0.0, %v3465
        %v3467 = vpop.f32.mrb[0].mxu0
        %v3468 = vpop.f32.mrb[0].mxu0
        %v3469 = vadd.f32 0.0, %v3468
        %v3470 = vpop.f32.mrb[0].mxu0
        %3471 = vdwg.mxu0
        %3472 = vrot.lane.b32.xlu0 %v1385, 32
        %v3473 = vpop.permute.xlu0 %3472
        %3474 = vrot.lane.b32.xlu0 %v1386, 32
        %v3475 = vpop.permute.xlu0 %3474
        %3476 = vrot.lane.b32.xlu0 %v1391, 32
        %v3477 = vpop.permute.xlu0 %3476
        %3478 = vrot.lane.b32.xlu0 %v1392, 32
        %v3479 = vpop.permute.xlu0 %3478
        %v3481 = vsel %vm1401, %v3473, 0
        %v3484 = vsel %vm1401, %v3475, 0
        %v3487 = vsel %vm1401, %v3477, 0
        %v3490 = vsel %vm1401, %v3479, 0
        %3492 = vmatprep.subr.bf16.mxu0 0
        %3493 = vmatpush1.bf16.xpose.msra.mxu0 %v3487
        %3494 = vmatprep.subr.bf16.mxu0 0
        %3495 = vmatpush1.bf16.xpose.msra.mxu0 %v3490
        %3496 = vmatprep.subr.bf16.mxu0 0
        %3497 = vmatpush1.bf16.xpose.msra.mxu0 0
        %3498 = vmatprep.subr.bf16.mxu0 0
        %3499 = vmatpush1.bf16.xpose.msra.mxu0 0
        %3500 = vmatprep.subr.bf16.mxu0 0
        %3501 = vmatpush1.bf16.xpose.msra.mxu0 0
        %3502 = vmatprep.subr.bf16.mxu0 0
        %3503 = vmatpush1.bf16.xpose.msra.mxu0 0
        %3504 = vmatprep.subr.bf16.mxu0 0
        %3505 = vmatpush1.bf16.xpose.msra.mxu0 0
        %3506 = vmatprep.subr.bf16.mxu0 0
        %3507 = vmatpush1.bf16.xpose.msra.mxu0 0
        %3508 = vmatprep.subr.bf16.mxu0 0
        %3509 = vmatpush1.bf16.xpose.msra.mxu0 0
        %3510 = vmatprep.subr.bf16.mxu0 0
        %3511 = vmatpush1.bf16.xpose.msra.mxu0 0
        %3512 = vmatprep.subr.bf16.mxu0 0
        %3513 = vmatpush1.bf16.xpose.msra.mxu0 0
        %3514 = vmatprep.subr.bf16.mxu0 0
        %3515 = vmatpush1.bf16.xpose.msra.mxu0 0
        %3516 = vmatprep.subr.bf16.mxu0 0
        %3517 = vmatpush1.bf16.xpose.msra.mxu0 0
        %3518 = vmatprep.subr.bf16.mxu0 0
        %3519 = vmatpush1.bf16.xpose.msra.mxu0 0
        %3520 = vmatprep.subr.bf16.mxu0 0
        %3521 = vmatpush1.bf16.xpose.msra.mxu0 0
        %3522 = vmatprep.subr.bf16.mxu0 0
        %3523 = vmatpush1.bf16.xpose.msra.mxu0 0
        %3524 = vmatprep.mubr.bf16.mxu0 0
        %3525 = vmatmul.mubr.bf16.gmra.mrb[0].mxu0 %v3481
        %v3526 = vpop.f32.mrb[0].mxu0
        %v3527 = vadd.f32 0.0, %v3526
        %v3528 = vpop.f32.mrb[0].mxu0
        %v3529 = vpop.f32.mrb[0].mxu0
        %v3530 = vadd.f32 0.0, %v3529
        %v3531 = vpop.f32.mrb[0].mxu0
        %3532 = vmatprep.mubr.bf16.mxu0 0
        %3533 = vmatmul.mubr.bf16.gmra.mrb[0].mxu0 %v3484
        %v3534 = vpop.f32.mrb[0].mxu0
        %v3535 = vadd.f32 0.0, %v3534
        %v3536 = vpop.f32.mrb[0].mxu0
        %v3537 = vpop.f32.mrb[0].mxu0
        %v3538 = vadd.f32 0.0, %v3537
        %v3539 = vpop.f32.mrb[0].mxu0
        %3540 = vdwg.mxu0
        %3541 = vrot.lane.b32.xlu0 %v1387, 32
        %v3542 = vpop.permute.xlu0 %3541
        %3543 = vrot.lane.b32.xlu0 %v1388, 32
        %v3544 = vpop.permute.xlu0 %3543
        %3545 = vrot.lane.b32.xlu0 %v1393, 32
        %v3546 = vpop.permute.xlu0 %3545
        %3547 = vrot.lane.b32.xlu0 %v1394, 32
        %v3548 = vpop.permute.xlu0 %3547
        %v3550 = vsel %vm1401, %v3542, 0
        %v3553 = vsel %vm1401, %v3544, 0
        %v3556 = vsel %vm1401, %v3546, 0
        %v3559 = vsel %vm1401, %v3548, 0
        %3561 = vmatprep.subr.bf16.mxu0 0
        %3562 = vmatpush1.bf16.xpose.msra.mxu0 %v3556
        %3563 = vmatprep.subr.bf16.mxu0 0
        %3564 = vmatpush1.bf16.xpose.msra.mxu0 %v3559
        %3565 = vmatprep.subr.bf16.mxu0 0
        %3566 = vmatpush1.bf16.xpose.msra.mxu0 0
        %3567 = vmatprep.subr.bf16.mxu0 0
        %3568 = vmatpush1.bf16.xpose.msra.mxu0 0
        %3569 = vmatprep.subr.bf16.mxu0 0
        %3570 = vmatpush1.bf16.xpose.msra.mxu0 0
        %3571 = vmatprep.subr.bf16.mxu0 0
        %3572 = vmatpush1.bf16.xpose.msra.mxu0 0
        %3573 = vmatprep.subr.bf16.mxu0 0
        %3574 = vmatpush1.bf16.xpose.msra.mxu0 0
        %3575 = vmatprep.subr.bf16.mxu0 0
        %3576 = vmatpush1.bf16.xpose.msra.mxu0 0
        %3577 = vmatprep.subr.bf16.mxu0 0
        %3578 = vmatpush1.bf16.xpose.msra.mxu0 0
        %3579 = vmatprep.subr.bf16.mxu0 0
        %3580 = vmatpush1.bf16.xpose.msra.mxu0 0
        %3581 = vmatprep.subr.bf16.mxu0 0
        %3582 = vmatpush1.bf16.xpose.msra.mxu0 0
        %3583 = vmatprep.subr.bf16.mxu0 0
        %3584 = vmatpush1.bf16.xpose.msra.mxu0 0
        %3585 = vmatprep.subr.bf16.mxu0 0
        %3586 = vmatpush1.bf16.xpose.msra.mxu0 0
        %3587 = vmatprep.subr.bf16.mxu0 0
        %3588 = vmatpush1.bf16.xpose.msra.mxu0 0
        %3589 = vmatprep.subr.bf16.mxu0 0
        %3590 = vmatpush1.bf16.xpose.msra.mxu0 0
        %3591 = vmatprep.subr.bf16.mxu0 0
        %3592 = vmatpush1.bf16.xpose.msra.mxu0 0
        %3593 = vmatprep.mubr.bf16.mxu0 0
        %3594 = vmatmul.mubr.bf16.gmra.mrb[0].mxu0 %v3550
        %v3595 = vpop.f32.mrb[0].mxu0
        %v3596 = vadd.f32 0.0, %v3595
        %v3597 = vpop.f32.mrb[0].mxu0
        %v3598 = vpop.f32.mrb[0].mxu0
        %v3599 = vadd.f32 0.0, %v3598
        %v3600 = vpop.f32.mrb[0].mxu0
        %3601 = vmatprep.mubr.bf16.mxu0 0
        %3602 = vmatmul.mubr.bf16.gmra.mrb[0].mxu0 %v3553
        %v3603 = vpop.f32.mrb[0].mxu0
        %v3604 = vadd.f32 0.0, %v3603
        %v3605 = vpop.f32.mrb[0].mxu0
        %v3606 = vpop.f32.mrb[0].mxu0
        %v3607 = vadd.f32 0.0, %v3606
        %v3608 = vpop.f32.mrb[0].mxu0
        %3609 = vdwg.mxu0
        %v3610 = vmul.f32 %v3458, 0.17677669
        %v3611 = vmul.f32 %v3461, 0.17677669
        %v3612 = vmul.f32 %v3466, 0.17677669
        %v3613 = vmul.f32 %v3469, 0.17677669
        %v3614 = vmul.f32 %v3527, 0.17677669
        %v3615 = vmul.f32 %v3530, 0.17677669
        %v3616 = vmul.f32 %v3535, 0.17677669
        %v3617 = vmul.f32 %v3538, 0.17677669
        %v3618 = vmul.f32 %v3596, 0.17677669
        %v3619 = vmul.f32 %v3599, 0.17677669
        %v3620 = vmul.f32 %v3604, 0.17677669
        %v3621 = vmul.f32 %v3607, 0.17677669
        %v3622 = vadd.f32 %v3610, %v1601
        %v3623 = vadd.f32 %v3611, %v1601
        %v3624 = vadd.f32 %v3612, %v1601
        %v3625 = vadd.f32 %v3613, %v1601
        %v3626 = vadd.f32 %v3614, %v1601
        %v3627 = vadd.f32 %v3615, %v1601
        %v3628 = vadd.f32 %v3616, %v1601
        %v3629 = vadd.f32 %v3617, %v1601
        %v3630 = vadd.f32 %v3618, %v1601
        %v3631 = vadd.f32 %v3619, %v1601
        %v3632 = vadd.f32 %v3620, %v1601
        %v3633 = vadd.f32 %v3621, %v1601
        %v3634 = vsel %vm1401, %v3622, -inf
        %3635 = vmax.xlane.f32.xlu0 %v3634
        %v3636 = vpop.xlane.xlu0 %3635
        %v3637 = vsel %vm1401, %v3623, -inf
        %3638 = vmax.xlane.f32.xlu0 %v3637
        %v3639 = vpop.xlane.xlu0 %3638
        %v3640 = vsel %vm1401, %v3624, -inf
        %3641 = vmax.xlane.f32.xlu0 %v3640
        %v3642 = vpop.xlane.xlu0 %3641
        %v3643 = vsel %vm1401, %v3625, -inf
        %3644 = vmax.xlane.f32.xlu0 %v3643
        %v3645 = vpop.xlane.xlu0 %3644
        %v3646 = vsel %vm1401, %v3626, -inf
        %3647 = vmax.xlane.f32.xlu0 %v3646
        %v3648 = vpop.xlane.xlu0 %3647
        %v3649 = vsel %vm1401, %v3627, -inf
        %3650 = vmax.xlane.f32.xlu0 %v3649
        %v3651 = vpop.xlane.xlu0 %3650
        %v3652 = vsel %vm1401, %v3628, -inf
        %3653 = vmax.xlane.f32.xlu0 %v3652
        %v3654 = vpop.xlane.xlu0 %3653
        %v3655 = vsel %vm1401, %v3629, -inf
        %3656 = vmax.xlane.f32.xlu0 %v3655
        %v3657 = vpop.xlane.xlu0 %3656
        %v3658 = vsel %vm1401, %v3630, -inf
        %3659 = vmax.xlane.f32.xlu0 %v3658
        %v3660 = vpop.xlane.xlu0 %3659
        %v3661 = vsel %vm1401, %v3631, -inf
        %3662 = vmax.xlane.f32.xlu0 %v3661
        %v3663 = vpop.xlane.xlu0 %3662
        %v3664 = vsel %vm1401, %v3632, -inf
        %3665 = vmax.xlane.f32.xlu0 %v3664
        %v3666 = vpop.xlane.xlu0 %3665
        %v3667 = vsel %vm1401, %v3633, -inf
        %3668 = vmax.xlane.f32.xlu0 %v3667
        %v3669 = vpop.xlane.xlu0 %3668
        %v3670 = vsub.f32 %v3622, %v3636
        %v3671 = vsub.f32 %v3623, %v3639
        %v3672 = vsub.f32 %v3624, %v3642
        %v3673 = vsub.f32 %v3625, %v3645
        %v3674 = vsub.f32 %v3626, %v3648
        %v3675 = vsub.f32 %v3627, %v3651
        %v3676 = vsub.f32 %v3628, %v3654
        %v3677 = vsub.f32 %v3629, %v3657
        %v3678 = vsub.f32 %v3630, %v3660
        %v3679 = vsub.f32 %v3631, %v3663
        %v3680 = vsub.f32 %v3632, %v3666
        %v3681 = vsub.f32 %v3633, %v3669
        %v3682 = vmul.f32 %v3670, 1.442695
        %v3683 = vpow.pop %v3682
        %v3684 = vmul.f32 %v3671, 1.442695
        %v3685 = vpow.pop %v3684
        %v3686 = vmul.f32 %v3672, 1.442695
        %v3687 = vpow.pop %v3686
        %v3688 = vmul.f32 %v3673, 1.442695
        %v3689 = vpow.pop %v3688
        %v3690 = vmul.f32 %v3674, 1.442695
        %v3691 = vpow.pop %v3690
        %v3692 = vmul.f32 %v3675, 1.442695
        %v3693 = vpow.pop %v3692
        %v3694 = vmul.f32 %v3676, 1.442695
        %v3695 = vpow.pop %v3694
        %v3696 = vmul.f32 %v3677, 1.442695
        %v3697 = vpow.pop %v3696
        %v3698 = vmul.f32 %v3678, 1.442695
        %v3699 = vpow.pop %v3698
        %v3700 = vmul.f32 %v3679, 1.442695
        %v3701 = vpow.pop %v3700
        %v3702 = vmul.f32 %v3680, 1.442695
        %v3703 = vpow.pop %v3702
        %v3704 = vmul.f32 %v3681, 1.442695
        %v3705 = vpow.pop %v3704
        %v3706 = vsel %vm1401, %v3683, 0.0
        %3707 = vadd.xlane.f32.xlu0 %v3706
        %v3708 = vpop.xlane.xlu0 %3707
        %v3709 = vsel %vm1401, %v3685, 0.0
        %3710 = vadd.xlane.f32.xlu0 %v3709
        %v3711 = vpop.xlane.xlu0 %3710
        %v3712 = vsel %vm1401, %v3687, 0.0
        %3713 = vadd.xlane.f32.xlu0 %v3712
        %v3714 = vpop.xlane.xlu0 %3713
        %v3715 = vsel %vm1401, %v3689, 0.0
        %3716 = vadd.xlane.f32.xlu0 %v3715
        %v3717 = vpop.xlane.xlu0 %3716
        %v3718 = vsel %vm1401, %v3691, 0.0
        %3719 = vadd.xlane.f32.xlu0 %v3718
        %v3720 = vpop.xlane.xlu0 %3719
        %v3721 = vsel %vm1401, %v3693, 0.0
        %3722 = vadd.xlane.f32.xlu0 %v3721
        %v3723 = vpop.xlane.xlu0 %3722
        %v3724 = vsel %vm1401, %v3695, 0.0
        %3725 = vadd.xlane.f32.xlu0 %v3724
        %v3726 = vpop.xlane.xlu0 %3725
        %v3727 = vsel %vm1401, %v3697, 0.0
        %3728 = vadd.xlane.f32.xlu0 %v3727
        %v3729 = vpop.xlane.xlu0 %3728
        %v3730 = vsel %vm1401, %v3699, 0.0
        %3731 = vadd.xlane.f32.xlu0 %v3730
        %v3732 = vpop.xlane.xlu0 %3731
        %v3733 = vsel %vm1401, %v3701, 0.0
        %3734 = vadd.xlane.f32.xlu0 %v3733
        %v3735 = vpop.xlane.xlu0 %3734
        %v3736 = vsel %vm1401, %v3703, 0.0
        %3737 = vadd.xlane.f32.xlu0 %v3736
        %v3738 = vpop.xlane.xlu0 %3737
        %v3739 = vsel %vm1401, %v3705, 0.0
        %3740 = vadd.xlane.f32.xlu0 %v3739
        %v3741 = vpop.xlane.xlu0 %3740
        %v3742 = vrcp.pop %v3708
        %v3743 = vmul.f32 %v3683, %v3742
        %v3744 = vrcp.pop %v3711
        %v3745 = vmul.f32 %v3685, %v3744
        %v3746 = vrcp.pop %v3714
        %v3747 = vmul.f32 %v3687, %v3746
        %v3748 = vrcp.pop %v3717
        %v3749 = vmul.f32 %v3689, %v3748
        %v3750 = vrcp.pop %v3720
        %v3751 = vmul.f32 %v3691, %v3750
        %v3752 = vrcp.pop %v3723
        %v3753 = vmul.f32 %v3693, %v3752
        %v3754 = vrcp.pop %v3726
        %v3755 = vmul.f32 %v3695, %v3754
        %v3756 = vrcp.pop %v3729
        %v3757 = vmul.f32 %v3697, %v3756
        %v3758 = vrcp.pop %v3732
        %v3759 = vmul.f32 %v3699, %v3758
        %v3760 = vrcp.pop %v3735
        %v3761 = vmul.f32 %v3701, %v3760
        %v3762 = vrcp.pop %v3738
        %v3763 = vmul.f32 %v3703, %v3762
        %v3764 = vrcp.pop %v3741
        %v3765 = vmul.f32 %v3705, %v3764
        %v3766 = vpack.c.bf16 %v3745, %v3743
        %v3767 = vpack.c.bf16 %v3749, %v3747
        %v3768 = vpack.c.bf16 %v3753, %v3751
        %v3769 = vpack.c.bf16 %v3757, %v3755
        %v3770 = vpack.c.bf16 %v3761, %v3759
        %v3771 = vpack.c.bf16 %v3765, %v3763
        %3772 = vrot.lane.b32.xlu0 %v1395, 32
        %v3773 = vpop.permute.xlu0 %3772
        %3774 = vrot.lane.b32.xlu0 %v1396, 32
        %v3775 = vpop.permute.xlu0 %3774
        %v3779 = vsel %vm1401, %v3766, 0
        %v3782 = vsel %vm1401, %v3767, 0
        %3784 = vmatprep.subr.bf16.mxu0 0
        %3785 = vmatpush1.bf16.msra.mxu0 %v3773
        %3786 = vmatprep.subr.bf16.mxu0 0
        %3787 = vmatpush1.bf16.msra.mxu0 %v3775
        %3788 = vmatprep.subr.bf16.mxu0 0
        %3789 = vmatpush1.bf16.msra.mxu0 0
        %3790 = vmatprep.subr.bf16.mxu0 0
        %3791 = vmatpush1.bf16.msra.mxu0 0
        %3792 = vmatprep.subr.bf16.mxu0 0
        %3793 = vmatpush1.bf16.msra.mxu0 0
        %3794 = vmatprep.subr.bf16.mxu0 0
        %3795 = vmatpush1.bf16.msra.mxu0 0
        %3796 = vmatprep.subr.bf16.mxu0 0
        %3797 = vmatpush1.bf16.msra.mxu0 0
        %3798 = vmatprep.subr.bf16.mxu0 0
        %3799 = vmatpush1.bf16.msra.mxu0 0
        %3800 = vmatprep.subr.bf16.mxu0 0
        %3801 = vmatpush1.bf16.msra.mxu0 0
        %3802 = vmatprep.subr.bf16.mxu0 0
        %3803 = vmatpush1.bf16.msra.mxu0 0
        %3804 = vmatprep.subr.bf16.mxu0 0
        %3805 = vmatpush1.bf16.msra.mxu0 0
        %3806 = vmatprep.subr.bf16.mxu0 0
        %3807 = vmatpush1.bf16.msra.mxu0 0
        %3808 = vmatprep.subr.bf16.mxu0 0
        %3809 = vmatpush1.bf16.msra.mxu0 0
        %3810 = vmatprep.subr.bf16.mxu0 0
        %3811 = vmatpush1.bf16.msra.mxu0 0
        %3812 = vmatprep.subr.bf16.mxu0 0
        %3813 = vmatpush1.bf16.msra.mxu0 0
        %3814 = vmatprep.subr.bf16.mxu0 0
        %3815 = vmatpush1.bf16.msra.mxu0 0
        %3816 = vmatprep.mubr.bf16.mxu0 0
        %3817 = vmatmul.mubr.bf16.gmra.mrb[0].mxu0 %v3779
        %v3818 = vpop.f32.mrb[0].mxu0
        %v3819 = vadd.f32 0.0, %v3818
        %v3820 = vpop.f32.mrb[0].mxu0
        %v3821 = vpop.f32.mrb[0].mxu0
        %v3822 = vadd.f32 0.0, %v3821
        %v3823 = vpop.f32.mrb[0].mxu0
        %3824 = vmatprep.mubr.bf16.mxu0 0
        %3825 = vmatmul.mubr.bf16.gmra.mrb[0].mxu0 %v3782
        %v3826 = vpop.f32.mrb[0].mxu0
        %v3827 = vadd.f32 0.0, %v3826
        %v3828 = vpop.f32.mrb[0].mxu0
        %v3829 = vpop.f32.mrb[0].mxu0
        %v3830 = vadd.f32 0.0, %v3829
        %v3831 = vpop.f32.mrb[0].mxu0
        %3832 = vdwg.mxu0
        %3833 = vrot.lane.b32.xlu0 %v1397, 32
        %v3834 = vpop.permute.xlu0 %3833
        %3835 = vrot.lane.b32.xlu0 %v1398, 32
        %v3836 = vpop.permute.xlu0 %3835
        %v3840 = vsel %vm1401, %v3768, 0
        %v3843 = vsel %vm1401, %v3769, 0
        %3845 = vmatprep.subr.bf16.mxu0 0
        %3846 = vmatpush1.bf16.msra.mxu0 %v3834
        %3847 = vmatprep.subr.bf16.mxu0 0
        %3848 = vmatpush1.bf16.msra.mxu0 %v3836
        %3849 = vmatprep.subr.bf16.mxu0 0
        %3850 = vmatpush1.bf16.msra.mxu0 0
        %3851 = vmatprep.subr.bf16.mxu0 0
        %3852 = vmatpush1.bf16.msra.mxu0 0
        %3853 = vmatprep.subr.bf16.mxu0 0
        %3854 = vmatpush1.bf16.msra.mxu0 0
        %3855 = vmatprep.subr.bf16.mxu0 0
        %3856 = vmatpush1.bf16.msra.mxu0 0
        %3857 = vmatprep.subr.bf16.mxu0 0
        %3858 = vmatpush1.bf16.msra.mxu0 0
        %3859 = vmatprep.subr.bf16.mxu0 0
        %3860 = vmatpush1.bf16.msra.mxu0 0
        %3861 = vmatprep.subr.bf16.mxu0 0
        %3862 = vmatpush1.bf16.msra.mxu0 0
        %3863 = vmatprep.subr.bf16.mxu0 0
        %3864 = vmatpush1.bf16.msra.mxu0 0
        %3865 = vmatprep.subr.bf16.mxu0 0
        %3866 = vmatpush1.bf16.msra.mxu0 0
        %3867 = vmatprep.subr.bf16.mxu0 0
        %3868 = vmatpush1.bf16.msra.mxu0 0
        %3869 = vmatprep.subr.bf16.mxu0 0
        %3870 = vmatpush1.bf16.msra.mxu0 0
        %3871 = vmatprep.subr.bf16.mxu0 0
        %3872 = vmatpush1.bf16.msra.mxu0 0
        %3873 = vmatprep.subr.bf16.mxu0 0
        %3874 = vmatpush1.bf16.msra.mxu0 0
        %3875 = vmatprep.subr.bf16.mxu0 0
        %3876 = vmatpush1.bf16.msra.mxu0 0
        %3877 = vmatprep.mubr.bf16.mxu0 0
        %3878 = vmatmul.mubr.bf16.gmra.mrb[0].mxu0 %v3840
        %v3879 = vpop.f32.mrb[0].mxu0
        %v3880 = vadd.f32 0.0, %v3879
        %v3881 = vpop.f32.mrb[0].mxu0
        %v3882 = vpop.f32.mrb[0].mxu0
        %v3883 = vadd.f32 0.0, %v3882
        %v3884 = vpop.f32.mrb[0].mxu0
        %3885 = vmatprep.mubr.bf16.mxu0 0
        %3886 = vmatmul.mubr.bf16.gmra.mrb[0].mxu0 %v3843
        %v3887 = vpop.f32.mrb[0].mxu0
        %v3888 = vadd.f32 0.0, %v3887
        %v3889 = vpop.f32.mrb[0].mxu0
        %v3890 = vpop.f32.mrb[0].mxu0
        %v3891 = vadd.f32 0.0, %v3890
        %v3892 = vpop.f32.mrb[0].mxu0
        %3893 = vdwg.mxu0
        %3894 = vrot.lane.b32.xlu0 %v1399, 32
        %v3895 = vpop.permute.xlu0 %3894
        %3896 = vrot.lane.b32.xlu0 %v1400, 32
        %v3897 = vpop.permute.xlu0 %3896
        %v3901 = vsel %vm1401, %v3770, 0
        %v3904 = vsel %vm1401, %v3771, 0
        %3906 = vmatprep.subr.bf16.mxu0 0
        %3907 = vmatpush1.bf16.msra.mxu0 %v3895
        %3908 = vmatprep.subr.bf16.mxu0 0
        %3909 = vmatpush1.bf16.msra.mxu0 %v3897
        %3910 = vmatprep.subr.bf16.mxu0 0
        %3911 = vmatpush1.bf16.msra.mxu0 0
        %3912 = vmatprep.subr.bf16.mxu0 0
        %3913 = vmatpush1.bf16.msra.mxu0 0
        %3914 = vmatprep.subr.bf16.mxu0 0
        %3915 = vmatpush1.bf16.msra.mxu0 0
        %3916 = vmatprep.subr.bf16.mxu0 0
        %3917 = vmatpush1.bf16.msra.mxu0 0
        %3918 = vmatprep.subr.bf16.mxu0 0
        %3919 = vmatpush1.bf16.msra.mxu0 0
        %3920 = vmatprep.subr.bf16.mxu0 0
        %3921 = vmatpush1.bf16.msra.mxu0 0
        %3922 = vmatprep.subr.bf16.mxu0 0
        %3923 = vmatpush1.bf16.msra.mxu0 0
        %3924 = vmatprep.subr.bf16.mxu0 0
        %3925 = vmatpush1.bf16.msra.mxu0 0
        %3926 = vmatprep.subr.bf16.mxu0 0
        %3927 = vmatpush1.bf16.msra.mxu0 0
        %3928 = vmatprep.subr.bf16.mxu0 0
        %3929 = vmatpush1.bf16.msra.mxu0 0
        %3930 = vmatprep.subr.bf16.mxu0 0
        %3931 = vmatpush1.bf16.msra.mxu0 0
        %3932 = vmatprep.subr.bf16.mxu0 0
        %3933 = vmatpush1.bf16.msra.mxu0 0
        %3934 = vmatprep.subr.bf16.mxu0 0
        %3935 = vmatpush1.bf16.msra.mxu0 0
        %3936 = vmatprep.subr.bf16.mxu0 0
        %3937 = vmatpush1.bf16.msra.mxu0 0
        %3938 = vmatprep.mubr.bf16.mxu0 0
        %3939 = vmatmul.mubr.bf16.gmra.mrb[0].mxu0 %v3901
        %v3940 = vpop.f32.mrb[0].mxu0
        %v3941 = vadd.f32 0.0, %v3940
        %v3942 = vpop.f32.mrb[0].mxu0
        %v3943 = vpop.f32.mrb[0].mxu0
        %v3944 = vadd.f32 0.0, %v3943
        %v3945 = vpop.f32.mrb[0].mxu0
        %3946 = vmatprep.mubr.bf16.mxu0 0
        %3947 = vmatmul.mubr.bf16.gmra.mrb[0].mxu0 %v3904
        %v3948 = vpop.f32.mrb[0].mxu0
        %v3949 = vadd.f32 0.0, %v3948
        %v3950 = vpop.f32.mrb[0].mxu0
        %v3951 = vpop.f32.mrb[0].mxu0
        %v3952 = vadd.f32 0.0, %v3951
        %v3953 = vpop.f32.mrb[0].mxu0
        %3954 = vdwg.mxu0
        %v3955 = vpack.c.bf16 %v3822, %v3819
        %v3956 = vpack.c.bf16 %v3830, %v3827
        %v3957 = vpack.c.bf16 %v3883, %v3880
        %v3958 = vpack.c.bf16 %v3891, %v3888
        %v3959 = vpack.c.bf16 %v3944, %v3941
        %v3960 = vpack.c.bf16 %v3952, %v3949
        %v3965 = vunpack.c.l.b16 %v1379
        %v3966 = vunpack.c.l.b16 %v1380
        %v3967 = vunpack.c.l.b16 %v1381
        %v3968 = vunpack.c.l.b16 %v1382
        %v3969 = vpack.c.b16 %v3966, %v3965
        %v3970 = vpack.c.b16 %v3968, %v3967
        %v3974 = vsel %vm1401, %v3955, 0
        %v3977 = vsel %vm1401, %v3956, 0
        %v3980 = vsel %vm1401, %v3957, 0
        %v3983 = vsel %vm1401, %v3958, 0
        %v3986 = vsel %vm1401, %v3959, 0
        %v3989 = vsel %vm1401, %v3960, 0
        %3991 = vmatprep.subr.bf16.mxu0 0
        %3992 = vmatpush1.bf16.msra.mxu0 %v3969
        %3993 = vmatprep.subr.bf16.mxu0 0
        %3994 = vmatpush1.bf16.msra.mxu0 %v3970
        %3995 = vmatprep.subr.bf16.mxu0 0
        %3996 = vmatpush1.bf16.msra.mxu0 0
        %3997 = vmatprep.subr.bf16.mxu0 0
        %3998 = vmatpush1.bf16.msra.mxu0 0
        %3999 = vmatprep.subr.bf16.mxu0 0
        %4000 = vmatpush1.bf16.msra.mxu0 0
        %4001 = vmatprep.subr.bf16.mxu0 0
        %4002 = vmatpush1.bf16.msra.mxu0 0
        %4003 = vmatprep.subr.bf16.mxu0 0
        %4004 = vmatpush1.bf16.msra.mxu0 0
        %4005 = vmatprep.subr.bf16.mxu0 0
        %4006 = vmatpush1.bf16.msra.mxu0 0
        %4007 = vmatprep.subr.bf16.mxu0 0
        %4008 = vmatpush1.bf16.msra.mxu0 0
        %4009 = vmatprep.subr.bf16.mxu0 0
        %4010 = vmatpush1.bf16.msra.mxu0 0
        %4011 = vmatprep.subr.bf16.mxu0 0
        %4012 = vmatpush1.bf16.msra.mxu0 0
        %4013 = vmatprep.subr.bf16.mxu0 0
        %4014 = vmatpush1.bf16.msra.mxu0 0
        %4015 = vmatprep.subr.bf16.mxu0 0
        %4016 = vmatpush1.bf16.msra.mxu0 0
        %4017 = vmatprep.subr.bf16.mxu0 0
        %4018 = vmatpush1.bf16.msra.mxu0 0
        %4019 = vmatprep.subr.bf16.mxu0 0
        %4020 = vmatpush1.bf16.msra.mxu0 0
        %4021 = vmatprep.subr.bf16.mxu0 0
        %4022 = vmatpush1.bf16.msra.mxu0 0
        %4023 = vmatprep.mubr.bf16.mxu0 0
        %4024 = vmatmul.mubr.bf16.gmra.mrb[0].mxu0 %v3974
        %v4025 = vpop.f32.mrb[0].mxu0
        %v4026 = vadd.f32 0.0, %v4025
        %v4027 = vpop.f32.mrb[0].mxu0
        %v4028 = vpop.f32.mrb[0].mxu0
        %v4029 = vadd.f32 0.0, %v4028
        %v4030 = vpop.f32.mrb[0].mxu0
        %4031 = vmatprep.mubr.bf16.mxu0 0
        %4032 = vmatmul.mubr.bf16.gmra.mrb[0].mxu0 %v3977
        %v4033 = vpop.f32.mrb[0].mxu0
        %v4034 = vadd.f32 0.0, %v4033
        %v4035 = vpop.f32.mrb[0].mxu0
        %v4036 = vpop.f32.mrb[0].mxu0
        %v4037 = vadd.f32 0.0, %v4036
        %v4038 = vpop.f32.mrb[0].mxu0
        %4039 = vmatprep.mubr.bf16.mxu0 0
        %4040 = vmatmul.mubr.bf16.gmra.mrb[0].mxu0 %v3980
        %v4041 = vpop.f32.mrb[0].mxu0
        %v4042 = vadd.f32 0.0, %v4041
        %v4043 = vpop.f32.mrb[0].mxu0
        %v4044 = vpop.f32.mrb[0].mxu0
        %v4045 = vadd.f32 0.0, %v4044
        %v4046 = vpop.f32.mrb[0].mxu0
        %4047 = vmatprep.mubr.bf16.mxu0 0
        %4048 = vmatmul.mubr.bf16.gmra.mrb[0].mxu0 %v3983
        %v4049 = vpop.f32.mrb[0].mxu0
        %v4050 = vadd.f32 0.0, %v4049
        %v4051 = vpop.f32.mrb[0].mxu0
        %v4052 = vpop.f32.mrb[0].mxu0
        %v4053 = vadd.f32 0.0, %v4052
        %v4054 = vpop.f32.mrb[0].mxu0
        %4055 = vmatprep.mubr.bf16.mxu0 0
        %4056 = vmatmul.mubr.bf16.gmra.mrb[0].mxu0 %v3986
        %v4057 = vpop.f32.mrb[0].mxu0
        %v4058 = vadd.f32 0.0, %v4057
        %v4059 = vpop.f32.mrb[0].mxu0
        %v4060 = vpop.f32.mrb[0].mxu0
        %v4061 = vadd.f32 0.0, %v4060
        %v4062 = vpop.f32.mrb[0].mxu0
        %4063 = vmatprep.mubr.bf16.mxu0 0
        %4064 = vmatmul.mubr.bf16.gmra.mrb[0].mxu0 %v3989
        %v4065 = vpop.f32.mrb[0].mxu0
        %v4066 = vadd.f32 0.0, %v4065
        %v4067 = vpop.f32.mrb[0].mxu0
        %v4068 = vpop.f32.mrb[0].mxu0
        %v4069 = vadd.f32 0.0, %v4068
        %v4070 = vpop.f32.mrb[0].mxu0
        %4071 = vdwg.mxu0
        %v4072 = vadd.f32 %v3391, %v4026
        %v4073 = vadd.f32 %v3392, %v4029
        %v4074 = vadd.f32 %v3393, %v4034
        %v4075 = vadd.f32 %v3394, %v4037
        %v4076 = vadd.f32 %v3395, %v4042
        %v4077 = vadd.f32 %v3396, %v4045
        %v4078 = vadd.f32 %v3397, %v4050
        %v4079 = vadd.f32 %v3398, %v4053
        %v4080 = vadd.f32 %v3399, %v4058
        %v4081 = vadd.f32 %v3400, %v4061
        %v4082 = vadd.f32 %v3401, %v4066
        %v4083 = vadd.f32 %v3402, %v4069
        %v4084 = vadd.f32 %v826, %v4072
        %v4085 = vadd.f32 %v827, %v4073
        %v4086 = vadd.f32 %v828, %v4074
        %v4087 = vadd.f32 %v829, %v4075
        %v4088 = vadd.f32 %v830, %v4076
        %v4089 = vadd.f32 %v831, %v4077
        %v4090 = vadd.f32 %v832, %v4078
        %v4091 = vadd.f32 %v833, %v4079
        %v4092 = vadd.f32 %v834, %v4080
        %v4093 = vadd.f32 %v835, %v4081
        %v4094 = vadd.f32 %v836, %v4082
        %v4095 = vadd.f32 %v837, %v4083
        %v4096 = vld [vmem:[%s11] sm:$0x1]
        %v4098 = vlaneseq
        %v4099 = vshrl.u32 %v4098, 7
        %v4100 = vsub.s32 0, %v4099
        %v4101 = vrot.slane %v4096, %v4100
        %v4103 = vadd.f32 %v4084, %v4101
        %v4104 = vadd.f32 %v4085, %v4101
        %v4105 = vadd.f32 %v4086, %v4101
        %v4106 = vadd.f32 %v4087, %v4101
        %v4107 = vadd.f32 %v4088, %v4101
        %v4108 = vadd.f32 %v4089, %v4101
        %v4109 = vadd.f32 %v4090, %v4101
        %v4110 = vadd.f32 %v4091, %v4101
        %v4111 = vadd.f32 %v4092, %v4101
        %v4112 = vadd.f32 %v4093, %v4101
        %v4113 = vadd.f32 %v4094, %v4101
        %v4114 = vadd.f32 %v4095, %v4101
        %v4115 = vld [vmem:[%s12] sm:$0x1]
        %v4116 = vld [vmem:[%s13] sm:$0x1]
        %4117 = vadd.xlane.f32.xlu0 %v4103
        %v4118 = vpop.xlane.xlu0 %4117
        %4119 = vadd.xlane.f32.xlu0 %v4104
        %v4120 = vpop.xlane.xlu0 %4119
        %4121 = vadd.xlane.f32.xlu0 %v4105
        %v4122 = vpop.xlane.xlu0 %4121
        %4123 = vadd.xlane.f32.xlu0 %v4106
        %v4124 = vpop.xlane.xlu0 %4123
        %4125 = vadd.xlane.f32.xlu0 %v4107
        %v4126 = vpop.xlane.xlu0 %4125
        %4127 = vadd.xlane.f32.xlu0 %v4108
        %v4128 = vpop.xlane.xlu0 %4127
        %4129 = vadd.xlane.f32.xlu0 %v4109
        %v4130 = vpop.xlane.xlu0 %4129
        %4131 = vadd.xlane.f32.xlu0 %v4110
        %v4132 = vpop.xlane.xlu0 %4131
        %4133 = vadd.xlane.f32.xlu0 %v4111
        %v4134 = vpop.xlane.xlu0 %4133
        %4135 = vadd.xlane.f32.xlu0 %v4112
        %v4136 = vpop.xlane.xlu0 %4135
        %4137 = vadd.xlane.f32.xlu0 %v4113
        %v4138 = vpop.xlane.xlu0 %4137
        %4139 = vadd.xlane.f32.xlu0 %v4114
        %v4140 = vpop.xlane.xlu0 %4139
        %v4141 = vmul.f32 %v4118, %v865
        %v4142 = vmul.f32 %v4120, %v865
        %v4143 = vmul.f32 %v4122, %v865
        %v4144 = vmul.f32 %v4124, %v865
        %v4145 = vmul.f32 %v4126, %v865
        %v4146 = vmul.f32 %v4128, %v865
        %v4147 = vmul.f32 %v4130, %v865
        %v4148 = vmul.f32 %v4132, %v865
        %v4149 = vmul.f32 %v4134, %v865
        %v4150 = vmul.f32 %v4136, %v865
        %v4151 = vmul.f32 %v4138, %v865
        %v4152 = vmul.f32 %v4140, %v865
        %v4153 = vsub.f32 %v4103, %v4141
        %v4154 = vsub.f32 %v4104, %v4142
        %v4155 = vsub.f32 %v4105, %v4143
        %v4156 = vsub.f32 %v4106, %v4144
        %v4157 = vsub.f32 %v4107, %v4145
        %v4158 = vsub.f32 %v4108, %v4146
        %v4159 = vsub.f32 %v4109, %v4147
        %v4160 = vsub.f32 %v4110, %v4148
        %v4161 = vsub.f32 %v4111, %v4149
        %v4162 = vsub.f32 %v4112, %v4150
        %v4163 = vsub.f32 %v4113, %v4151
        %v4164 = vsub.f32 %v4114, %v4152
        %v4165 = vmul.f32 %v4153, %v4153
        %v4166 = vmul.f32 %v4154, %v4154
        %v4167 = vmul.f32 %v4155, %v4155
        %v4168 = vmul.f32 %v4156, %v4156
        %v4169 = vmul.f32 %v4157, %v4157
        %v4170 = vmul.f32 %v4158, %v4158
        %v4171 = vmul.f32 %v4159, %v4159
        %v4172 = vmul.f32 %v4160, %v4160
        %v4173 = vmul.f32 %v4161, %v4161
        %v4174 = vmul.f32 %v4162, %v4162
        %v4175 = vmul.f32 %v4163, %v4163
        %v4176 = vmul.f32 %v4164, %v4164
        %4177 = vadd.xlane.f32.xlu0 %v4165
        %v4178 = vpop.xlane.xlu0 %4177
        %4179 = vadd.xlane.f32.xlu0 %v4166
        %v4180 = vpop.xlane.xlu0 %4179
        %4181 = vadd.xlane.f32.xlu0 %v4167
        %v4182 = vpop.xlane.xlu0 %4181
        %4183 = vadd.xlane.f32.xlu0 %v4168
        %v4184 = vpop.xlane.xlu0 %4183
        %4185 = vadd.xlane.f32.xlu0 %v4169
        %v4186 = vpop.xlane.xlu0 %4185
        %4187 = vadd.xlane.f32.xlu0 %v4170
        %v4188 = vpop.xlane.xlu0 %4187
        %4189 = vadd.xlane.f32.xlu0 %v4171
        %v4190 = vpop.xlane.xlu0 %4189
        %4191 = vadd.xlane.f32.xlu0 %v4172
        %v4192 = vpop.xlane.xlu0 %4191
        %4193 = vadd.xlane.f32.xlu0 %v4173
        %v4194 = vpop.xlane.xlu0 %4193
        %4195 = vadd.xlane.f32.xlu0 %v4174
        %v4196 = vpop.xlane.xlu0 %4195
        %4197 = vadd.xlane.f32.xlu0 %v4175
        %v4198 = vpop.xlane.xlu0 %4197
        %4199 = vadd.xlane.f32.xlu0 %v4176
        %v4200 = vpop.xlane.xlu0 %4199
        %v4201 = vmul.f32 %v4178, %v865
        %v4202 = vmul.f32 %v4180, %v865
        %v4203 = vmul.f32 %v4182, %v865
        %v4204 = vmul.f32 %v4184, %v865
        %v4205 = vmul.f32 %v4186, %v865
        %v4206 = vmul.f32 %v4188, %v865
        %v4207 = vmul.f32 %v4190, %v865
        %v4208 = vmul.f32 %v4192, %v865
        %v4209 = vmul.f32 %v4194, %v865
        %v4210 = vmul.f32 %v4196, %v865
        %v4211 = vmul.f32 %v4198, %v865
        %v4212 = vmul.f32 %v4200, %v865
        %v4213 = vadd.f32 %v4201, 1e-06
        %v4214 = vadd.f32 %v4202, 1e-06
        %v4215 = vadd.f32 %v4203, 1e-06
        %v4216 = vadd.f32 %v4204, 1e-06
        %v4217 = vadd.f32 %v4205, 1e-06
        %v4218 = vadd.f32 %v4206, 1e-06
        %v4219 = vadd.f32 %v4207, 1e-06
        %v4220 = vadd.f32 %v4208, 1e-06
        %v4221 = vadd.f32 %v4209, 1e-06
        %v4222 = vadd.f32 %v4210, 1e-06
        %v4223 = vadd.f32 %v4211, 1e-06
        %v4224 = vadd.f32 %v4212, 1e-06
        %v4225 = vrsqrt.pop %v4213
        %v4226 = vrsqrt.pop %v4214
        %v4227 = vrsqrt.pop %v4215
        %v4228 = vrsqrt.pop %v4216
        %v4229 = vrsqrt.pop %v4217
        %v4230 = vrsqrt.pop %v4218
        %v4231 = vrsqrt.pop %v4219
        %v4232 = vrsqrt.pop %v4220
        %v4233 = vrsqrt.pop %v4221
        %v4234 = vrsqrt.pop %v4222
        %v4235 = vrsqrt.pop %v4223
        %v4236 = vrsqrt.pop %v4224
        %v4237 = vmul.f32 %v4153, %v4225
        %v4238 = vmul.f32 %v4154, %v4226
        %v4239 = vmul.f32 %v4155, %v4227
        %v4240 = vmul.f32 %v4156, %v4228
        %v4241 = vmul.f32 %v4157, %v4229
        %v4242 = vmul.f32 %v4158, %v4230
        %v4243 = vmul.f32 %v4159, %v4231
        %v4244 = vmul.f32 %v4160, %v4232
        %v4245 = vmul.f32 %v4161, %v4233
        %v4246 = vmul.f32 %v4162, %v4234
        %v4247 = vmul.f32 %v4163, %v4235
        %v4248 = vmul.f32 %v4164, %v4236
        %v4250 = vlaneseq
        %v4251 = vshrl.u32 %v4250, 7
        %v4252 = vsub.s32 0, %v4251
        %v4253 = vrot.slane %v4115, %v4252
        %v4255 = vmul.f32 %v4237, %v4253
        %v4256 = vmul.f32 %v4238, %v4253
        %v4257 = vmul.f32 %v4239, %v4253
        %v4258 = vmul.f32 %v4240, %v4253
        %v4259 = vmul.f32 %v4241, %v4253
        %v4260 = vmul.f32 %v4242, %v4253
        %v4261 = vmul.f32 %v4243, %v4253
        %v4262 = vmul.f32 %v4244, %v4253
        %v4263 = vmul.f32 %v4245, %v4253
        %v4264 = vmul.f32 %v4246, %v4253
        %v4265 = vmul.f32 %v4247, %v4253
        %v4266 = vmul.f32 %v4248, %v4253
        %v4268 = vlaneseq
        %v4269 = vshrl.u32 %v4268, 7
        %v4270 = vsub.s32 0, %v4269
        %v4271 = vrot.slane %v4116, %v4270
        %v4273 = vadd.f32 %v4255, %v4271
        %v4274 = vadd.f32 %v4256, %v4271
        %v4275 = vadd.f32 %v4257, %v4271
        %v4276 = vadd.f32 %v4258, %v4271
        %v4277 = vadd.f32 %v4259, %v4271
        %v4278 = vadd.f32 %v4260, %v4271
        %v4279 = vadd.f32 %v4261, %v4271
        %v4280 = vadd.f32 %v4262, %v4271
        %v4281 = vadd.f32 %v4263, %v4271
        %v4282 = vadd.f32 %v4264, %v4271
        %v4283 = vadd.f32 %v4265, %v4271
        %v4284 = vadd.f32 %v4266, %v4271
        %v4285 = vpack.c.bf16 %v4274, %v4273
        %v4286 = vpack.c.bf16 %v4276, %v4275
        %v4287 = vpack.c.bf16 %v4278, %v4277
        %v4288 = vpack.c.bf16 %v4280, %v4279
        %v4289 = vpack.c.bf16 %v4282, %v4281
        %v4290 = vpack.c.bf16 %v4284, %v4283
        %v4291 = vld [vmem:[%s14] sm:$0xff]
        %v4292 = vld [vmem:[%s14 + $0x8] sm:$0xff]
        %v4293 = vld [vmem:[%s14 + $0x10] sm:$0xff]
        %v4294 = vld [vmem:[%s14 + $0x18] sm:$0xff]
        %v4295 = vld [vmem:[%s14 + $0x20] sm:$0xff]
        %v4296 = vld [vmem:[%s14 + $0x28] sm:$0xff]
        %v4297 = vld [vmem:[%s14 + $0x30] sm:$0xff]
        %v4298 = vld [vmem:[%s14 + $0x38] sm:$0xff]
        %v4299 = vld [vmem:[%s14 + $0x40] sm:$0xff]
        %v4300 = vld [vmem:[%s14 + $0x48] sm:$0xff]
        %v4301 = vld [vmem:[%s14 + $0x50] sm:$0xff]
        %v4302 = vld [vmem:[%s14 + $0x58] sm:$0xff]
        %v4303 = vld [vmem:[%s14 + $0x60] sm:$0xff]
        %v4304 = vld [vmem:[%s14 + $0x68] sm:$0xff]
        %v4305 = vld [vmem:[%s14 + $0x70] sm:$0xff]
        %v4306 = vld [vmem:[%s14 + $0x78] sm:$0xff]
        %v4307 = vld [vmem:[%s15] sm:$0x3]
        %v4309 = vlaneseq
        %v4310 = vshrl.u32 %v4309, 7
        %v4311 = vsub.s32 0, %v4310
        %v4312 = vrot.slane %v4307, %v4311
        %v4313 = vlaneseq
        %v4314 = vshrl.u32 %v4313, 7
        %v4315 = vsub.s32 1, %v4314
        %v4316 = vrot.slane %v4307, %v4315
        %v4335 = vunpack.c.l.b16 %v4291
        %v4336 = vunpack.c.h.b16 %v4291
        %v4337 = vunpack.c.l.b16 %v4292
        %v4338 = vunpack.c.h.b16 %v4292
        %v4339 = vunpack.c.l.b16 %v4293
        %v4340 = vunpack.c.h.b16 %v4293
        %v4341 = vunpack.c.l.b16 %v4294
        %v4342 = vunpack.c.h.b16 %v4294
        %v4343 = vunpack.c.l.b16 %v4295
        %v4344 = vunpack.c.h.b16 %v4295
        %v4345 = vunpack.c.l.b16 %v4296
        %v4346 = vunpack.c.h.b16 %v4296
        %v4347 = vunpack.c.l.b16 %v4297
        %v4348 = vunpack.c.h.b16 %v4297
        %v4349 = vunpack.c.l.b16 %v4298
        %v4350 = vunpack.c.h.b16 %v4298
        %v4351 = vunpack.c.l.b16 %v4299
        %v4352 = vunpack.c.h.b16 %v4299
        %v4353 = vunpack.c.l.b16 %v4300
        %v4354 = vunpack.c.h.b16 %v4300
        %v4355 = vunpack.c.l.b16 %v4301
        %v4356 = vunpack.c.h.b16 %v4301
        %v4357 = vunpack.c.l.b16 %v4302
        %v4358 = vunpack.c.h.b16 %v4302
        %v4359 = vunpack.c.l.b16 %v4303
        %v4360 = vunpack.c.h.b16 %v4303
        %v4361 = vunpack.c.l.b16 %v4304
        %v4362 = vunpack.c.h.b16 %v4304
        %v4363 = vunpack.c.l.b16 %v4305
        %v4364 = vunpack.c.h.b16 %v4305
        %v4365 = vunpack.c.l.b16 %v4306
        %v4366 = vunpack.c.h.b16 %v4306
        %v4367 = vpack.c.b16 %v4337, %v4335
        %v4368 = vpack.c.b16 %v4338, %v4336
        %v4369 = vpack.c.b16 %v4341, %v4339
        %v4370 = vpack.c.b16 %v4342, %v4340
        %v4371 = vpack.c.b16 %v4345, %v4343
        %v4372 = vpack.c.b16 %v4346, %v4344
        %v4373 = vpack.c.b16 %v4349, %v4347
        %v4374 = vpack.c.b16 %v4350, %v4348
        %v4375 = vpack.c.b16 %v4353, %v4351
        %v4376 = vpack.c.b16 %v4354, %v4352
        %v4377 = vpack.c.b16 %v4357, %v4355
        %v4378 = vpack.c.b16 %v4358, %v4356
        %v4379 = vpack.c.b16 %v4361, %v4359
        %v4380 = vpack.c.b16 %v4362, %v4360
        %v4381 = vpack.c.b16 %v4365, %v4363
        %v4382 = vpack.c.b16 %v4366, %v4364
        %4399 = vmatprep.subr.bf16.mxu0 %v4368
        %4400 = vmatpush1.bf16.msra.mxu0 %v4367
        %4401 = vmatprep.subr.bf16.mxu0 %v4370
        %4402 = vmatpush1.bf16.msra.mxu0 %v4369
        %4403 = vmatprep.subr.bf16.mxu0 %v4372
        %4404 = vmatpush1.bf16.msra.mxu0 %v4371
        %4405 = vmatprep.subr.bf16.mxu0 %v4374
        %4406 = vmatpush1.bf16.msra.mxu0 %v4373
        %4407 = vmatprep.subr.bf16.mxu0 %v4376
        %4408 = vmatpush1.bf16.msra.mxu0 %v4375
        %4409 = vmatprep.subr.bf16.mxu0 %v4378
        %4410 = vmatpush1.bf16.msra.mxu0 %v4377
        %4411 = vmatprep.subr.bf16.mxu0 %v4380
        %4412 = vmatpush1.bf16.msra.mxu0 %v4379
        %4413 = vmatprep.subr.bf16.mxu0 %v4382
        %4414 = vmatpush1.bf16.msra.mxu0 %v4381
        %4415 = vmatprep.subr.bf16.mxu0 0
        %4416 = vmatpush1.bf16.msra.mxu0 0
        %4417 = vmatprep.subr.bf16.mxu0 0
        %4418 = vmatpush1.bf16.msra.mxu0 0
        %4419 = vmatprep.subr.bf16.mxu0 0
        %4420 = vmatpush1.bf16.msra.mxu0 0
        %4421 = vmatprep.subr.bf16.mxu0 0
        %4422 = vmatpush1.bf16.msra.mxu0 0
        %4423 = vmatprep.subr.bf16.mxu0 0
        %4424 = vmatpush1.bf16.msra.mxu0 0
        %4425 = vmatprep.subr.bf16.mxu0 0
        %4426 = vmatpush1.bf16.msra.mxu0 0
        %4427 = vmatprep.subr.bf16.mxu0 0
        %4428 = vmatpush1.bf16.msra.mxu0 0
        %4429 = vmatprep.subr.bf16.mxu0 0
        %4430 = vmatpush1.bf16.msra.mxu0 0
        %4431 = vmatprep.mubr.bf16.mxu0 0
        %4432 = vmatmul.mubr.bf16.gmra.mrb[0].mxu0 %v4285
        %v4433 = vpop.f32.mrb[0].mxu0
        %v4434 = vadd.f32 %v4312, %v4433
        %v4435 = vpop.f32.mrb[0].mxu0
        %v4436 = vadd.f32 %v4316, %v4435
        %v4437 = vpop.f32.mrb[0].mxu0
        %v4438 = vadd.f32 %v4312, %v4437
        %v4439 = vpop.f32.mrb[0].mxu0
        %v4440 = vadd.f32 %v4316, %v4439
        %4441 = vmatprep.mubr.bf16.mxu0 0
        %4442 = vmatmul.mubr.bf16.gmra.mrb[0].mxu0 %v4286
        %v4443 = vpop.f32.mrb[0].mxu0
        %v4444 = vadd.f32 %v4312, %v4443
        %v4445 = vpop.f32.mrb[0].mxu0
        %v4446 = vadd.f32 %v4316, %v4445
        %v4447 = vpop.f32.mrb[0].mxu0
        %v4448 = vadd.f32 %v4312, %v4447
        %v4449 = vpop.f32.mrb[0].mxu0
        %v4450 = vadd.f32 %v4316, %v4449
        %4451 = vmatprep.mubr.bf16.mxu0 0
        %4452 = vmatmul.mubr.bf16.gmra.mrb[0].mxu0 %v4287
        %v4453 = vpop.f32.mrb[0].mxu0
        %v4454 = vadd.f32 %v4312, %v4453
        %v4455 = vpop.f32.mrb[0].mxu0
        %v4456 = vadd.f32 %v4316, %v4455
        %v4457 = vpop.f32.mrb[0].mxu0
        %v4458 = vadd.f32 %v4312, %v4457
        %v4459 = vpop.f32.mrb[0].mxu0
        %v4460 = vadd.f32 %v4316, %v4459
        %4461 = vmatprep.mubr.bf16.mxu0 0
        %4462 = vmatmul.mubr.bf16.gmra.mrb[0].mxu0 %v4288
        %v4463 = vpop.f32.mrb[0].mxu0
        %v4464 = vadd.f32 %v4312, %v4463
        %v4465 = vpop.f32.mrb[0].mxu0
        %v4466 = vadd.f32 %v4316, %v4465
        %v4467 = vpop.f32.mrb[0].mxu0
        %v4468 = vadd.f32 %v4312, %v4467
        %v4469 = vpop.f32.mrb[0].mxu0
        %v4470 = vadd.f32 %v4316, %v4469
        %4471 = vmatprep.mubr.bf16.mxu0 0
        %4472 = vmatmul.mubr.bf16.gmra.mrb[0].mxu0 %v4289
        %v4473 = vpop.f32.mrb[0].mxu0
        %v4474 = vadd.f32 %v4312, %v4473
        %v4475 = vpop.f32.mrb[0].mxu0
        %v4476 = vadd.f32 %v4316, %v4475
        %v4477 = vpop.f32.mrb[0].mxu0
        %v4478 = vadd.f32 %v4312, %v4477
        %v4479 = vpop.f32.mrb[0].mxu0
        %v4480 = vadd.f32 %v4316, %v4479
        %4481 = vmatprep.mubr.bf16.mxu0 0
        %4482 = vmatmul.mubr.bf16.gmra.mrb[0].mxu0 %v4290
        %v4483 = vpop.f32.mrb[0].mxu0
        %v4484 = vadd.f32 %v4312, %v4483
        %v4485 = vpop.f32.mrb[0].mxu0
        %v4486 = vadd.f32 %v4316, %v4485
        %v4487 = vpop.f32.mrb[0].mxu0
        %v4488 = vadd.f32 %v4312, %v4487
        %v4489 = vpop.f32.mrb[0].mxu0
        %v4490 = vadd.f32 %v4316, %v4489
        %4491 = vdwg.mxu0
        %v4492 = vmul.f32 %v4434, %v4434
        %v4493 = vmul.f32 %v4436, %v4436
        %v4494 = vmul.f32 %v4438, %v4438
        %v4495 = vmul.f32 %v4440, %v4440
        %v4496 = vmul.f32 %v4444, %v4444
        %v4497 = vmul.f32 %v4446, %v4446
        %v4498 = vmul.f32 %v4448, %v4448
        %v4499 = vmul.f32 %v4450, %v4450
        %v4500 = vmul.f32 %v4454, %v4454
        %v4501 = vmul.f32 %v4456, %v4456
        %v4502 = vmul.f32 %v4458, %v4458
        %v4503 = vmul.f32 %v4460, %v4460
        %v4504 = vmul.f32 %v4464, %v4464
        %v4505 = vmul.f32 %v4466, %v4466
        %v4506 = vmul.f32 %v4468, %v4468
        %v4507 = vmul.f32 %v4470, %v4470
        %v4508 = vmul.f32 %v4474, %v4474
        %v4509 = vmul.f32 %v4476, %v4476
        %v4510 = vmul.f32 %v4478, %v4478
        %v4511 = vmul.f32 %v4480, %v4480
        %v4512 = vmul.f32 %v4484, %v4484
        %v4513 = vmul.f32 %v4486, %v4486
        %v4514 = vmul.f32 %v4488, %v4488
        %v4515 = vmul.f32 %v4490, %v4490
        %v4516 = vmul.f32 %v4434, %v4492
        %v4517 = vmul.f32 %v4436, %v4493
        %v4518 = vmul.f32 %v4438, %v4494
        %v4519 = vmul.f32 %v4440, %v4495
        %v4520 = vmul.f32 %v4444, %v4496
        %v4521 = vmul.f32 %v4446, %v4497
        %v4522 = vmul.f32 %v4448, %v4498
        %v4523 = vmul.f32 %v4450, %v4499
        %v4524 = vmul.f32 %v4454, %v4500
        %v4525 = vmul.f32 %v4456, %v4501
        %v4526 = vmul.f32 %v4458, %v4502
        %v4527 = vmul.f32 %v4460, %v4503
        %v4528 = vmul.f32 %v4464, %v4504
        %v4529 = vmul.f32 %v4466, %v4505
        %v4530 = vmul.f32 %v4468, %v4506
        %v4531 = vmul.f32 %v4470, %v4507
        %v4532 = vmul.f32 %v4474, %v4508
        %v4533 = vmul.f32 %v4476, %v4509
        %v4534 = vmul.f32 %v4478, %v4510
        %v4535 = vmul.f32 %v4480, %v4511
        %v4536 = vmul.f32 %v4484, %v4512
        %v4537 = vmul.f32 %v4486, %v4513
        %v4538 = vmul.f32 %v4488, %v4514
        %v4539 = vmul.f32 %v4490, %v4515
        %v4540 = vmul.f32 %v4516, 0.044715
        %v4541 = vmul.f32 %v4517, 0.044715
        %v4542 = vmul.f32 %v4518, 0.044715
        %v4543 = vmul.f32 %v4519, 0.044715
        %v4544 = vmul.f32 %v4520, 0.044715
        %v4545 = vmul.f32 %v4521, 0.044715
        %v4546 = vmul.f32 %v4522, 0.044715
        %v4547 = vmul.f32 %v4523, 0.044715
        %v4548 = vmul.f32 %v4524, 0.044715
        %v4549 = vmul.f32 %v4525, 0.044715
        %v4550 = vmul.f32 %v4526, 0.044715
        %v4551 = vmul.f32 %v4527, 0.044715
        %v4552 = vmul.f32 %v4528, 0.044715
        %v4553 = vmul.f32 %v4529, 0.044715
        %v4554 = vmul.f32 %v4530, 0.044715
        %v4555 = vmul.f32 %v4531, 0.044715
        %v4556 = vmul.f32 %v4532, 0.044715
        %v4557 = vmul.f32 %v4533, 0.044715
        %v4558 = vmul.f32 %v4534, 0.044715
        %v4559 = vmul.f32 %v4535, 0.044715
        %v4560 = vmul.f32 %v4536, 0.044715
        %v4561 = vmul.f32 %v4537, 0.044715
        %v4562 = vmul.f32 %v4538, 0.044715
        %v4563 = vmul.f32 %v4539, 0.044715
        %v4564 = vadd.f32 %v4434, %v4540
        %v4565 = vadd.f32 %v4436, %v4541
        %v4566 = vadd.f32 %v4438, %v4542
        %v4567 = vadd.f32 %v4440, %v4543
        %v4568 = vadd.f32 %v4444, %v4544
        %v4569 = vadd.f32 %v4446, %v4545
        %v4570 = vadd.f32 %v4448, %v4546
        %v4571 = vadd.f32 %v4450, %v4547
        %v4572 = vadd.f32 %v4454, %v4548
        %v4573 = vadd.f32 %v4456, %v4549
        %v4574 = vadd.f32 %v4458, %v4550
        %v4575 = vadd.f32 %v4460, %v4551
        %v4576 = vadd.f32 %v4464, %v4552
        %v4577 = vadd.f32 %v4466, %v4553
        %v4578 = vadd.f32 %v4468, %v4554
        %v4579 = vadd.f32 %v4470, %v4555
        %v4580 = vadd.f32 %v4474, %v4556
        %v4581 = vadd.f32 %v4476, %v4557
        %v4582 = vadd.f32 %v4478, %v4558
        %v4583 = vadd.f32 %v4480, %v4559
        %v4584 = vadd.f32 %v4484, %v4560
        %v4585 = vadd.f32 %v4486, %v4561
        %v4586 = vadd.f32 %v4488, %v4562
        %v4587 = vadd.f32 %v4490, %v4563
        %v4588 = vmul.f32 %v4564, 0.7978846
        %v4589 = vmul.f32 %v4565, 0.7978846
        %v4590 = vmul.f32 %v4566, 0.7978846
        %v4591 = vmul.f32 %v4567, 0.7978846
        %v4592 = vmul.f32 %v4568, 0.7978846
        %v4593 = vmul.f32 %v4569, 0.7978846
        %v4594 = vmul.f32 %v4570, 0.7978846
        %v4595 = vmul.f32 %v4571, 0.7978846
        %v4596 = vmul.f32 %v4572, 0.7978846
        %v4597 = vmul.f32 %v4573, 0.7978846
        %v4598 = vmul.f32 %v4574, 0.7978846
        %v4599 = vmul.f32 %v4575, 0.7978846
        %v4600 = vmul.f32 %v4576, 0.7978846
        %v4601 = vmul.f32 %v4577, 0.7978846
        %v4602 = vmul.f32 %v4578, 0.7978846
        %v4603 = vmul.f32 %v4579, 0.7978846
        %v4604 = vmul.f32 %v4580, 0.7978846
        %v4605 = vmul.f32 %v4581, 0.7978846
        %v4606 = vmul.f32 %v4582, 0.7978846
        %v4607 = vmul.f32 %v4583, 0.7978846
        %v4608 = vmul.f32 %v4584, 0.7978846
        %v4609 = vmul.f32 %v4585, 0.7978846
        %v4610 = vmul.f32 %v4586, 0.7978846
        %v4611 = vmul.f32 %v4587, 0.7978846
        %v4612 = vtanh.pop %v4588
        %v4613 = vtanh.pop %v4589
        %v4614 = vtanh.pop %v4590
        %v4615 = vtanh.pop %v4591
        %v4616 = vtanh.pop %v4592
        %v4617 = vtanh.pop %v4593
        %v4618 = vtanh.pop %v4594
        %v4619 = vtanh.pop %v4595
        %v4620 = vtanh.pop %v4596
        %v4621 = vtanh.pop %v4597
        %v4622 = vtanh.pop %v4598
        %v4623 = vtanh.pop %v4599
        %v4624 = vtanh.pop %v4600
        %v4625 = vtanh.pop %v4601
        %v4626 = vtanh.pop %v4602
        %v4627 = vtanh.pop %v4603
        %v4628 = vtanh.pop %v4604
        %v4629 = vtanh.pop %v4605
        %v4630 = vtanh.pop %v4606
        %v4631 = vtanh.pop %v4607
        %v4632 = vtanh.pop %v4608
        %v4633 = vtanh.pop %v4609
        %v4634 = vtanh.pop %v4610
        %v4635 = vtanh.pop %v4611
        %v4636 = vadd.f32 %v4612, 1.0
        %v4637 = vadd.f32 %v4613, 1.0
        %v4638 = vadd.f32 %v4614, 1.0
        %v4639 = vadd.f32 %v4615, 1.0
        %v4640 = vadd.f32 %v4616, 1.0
        %v4641 = vadd.f32 %v4617, 1.0
        %v4642 = vadd.f32 %v4618, 1.0
        %v4643 = vadd.f32 %v4619, 1.0
        %v4644 = vadd.f32 %v4620, 1.0
        %v4645 = vadd.f32 %v4621, 1.0
        %v4646 = vadd.f32 %v4622, 1.0
        %v4647 = vadd.f32 %v4623, 1.0
        %v4648 = vadd.f32 %v4624, 1.0
        %v4649 = vadd.f32 %v4625, 1.0
        %v4650 = vadd.f32 %v4626, 1.0
        %v4651 = vadd.f32 %v4627, 1.0
        %v4652 = vadd.f32 %v4628, 1.0
        %v4653 = vadd.f32 %v4629, 1.0
        %v4654 = vadd.f32 %v4630, 1.0
        %v4655 = vadd.f32 %v4631, 1.0
        %v4656 = vadd.f32 %v4632, 1.0
        %v4657 = vadd.f32 %v4633, 1.0
        %v4658 = vadd.f32 %v4634, 1.0
        %v4659 = vadd.f32 %v4635, 1.0
        %v4660 = vmul.f32 %v4636, 0.5
        %v4661 = vmul.f32 %v4637, 0.5
        %v4662 = vmul.f32 %v4638, 0.5
        %v4663 = vmul.f32 %v4639, 0.5
        %v4664 = vmul.f32 %v4640, 0.5
        %v4665 = vmul.f32 %v4641, 0.5
        %v4666 = vmul.f32 %v4642, 0.5
        %v4667 = vmul.f32 %v4643, 0.5
        %v4668 = vmul.f32 %v4644, 0.5
        %v4669 = vmul.f32 %v4645, 0.5
        %v4670 = vmul.f32 %v4646, 0.5
        %v4671 = vmul.f32 %v4647, 0.5
        %v4672 = vmul.f32 %v4648, 0.5
        %v4673 = vmul.f32 %v4649, 0.5
        %v4674 = vmul.f32 %v4650, 0.5
        %v4675 = vmul.f32 %v4651, 0.5
        %v4676 = vmul.f32 %v4652, 0.5
        %v4677 = vmul.f32 %v4653, 0.5
        %v4678 = vmul.f32 %v4654, 0.5
        %v4679 = vmul.f32 %v4655, 0.5
        %v4680 = vmul.f32 %v4656, 0.5
        %v4681 = vmul.f32 %v4657, 0.5
        %v4682 = vmul.f32 %v4658, 0.5
        %v4683 = vmul.f32 %v4659, 0.5
        %v4684 = vmul.f32 %v4434, %v4660
        %v4685 = vmul.f32 %v4436, %v4661
        %v4686 = vmul.f32 %v4438, %v4662
        %v4687 = vmul.f32 %v4440, %v4663
        %v4688 = vmul.f32 %v4444, %v4664
        %v4689 = vmul.f32 %v4446, %v4665
        %v4690 = vmul.f32 %v4448, %v4666
        %v4691 = vmul.f32 %v4450, %v4667
        %v4692 = vmul.f32 %v4454, %v4668
        %v4693 = vmul.f32 %v4456, %v4669
        %v4694 = vmul.f32 %v4458, %v4670
        %v4695 = vmul.f32 %v4460, %v4671
        %v4696 = vmul.f32 %v4464, %v4672
        %v4697 = vmul.f32 %v4466, %v4673
        %v4698 = vmul.f32 %v4468, %v4674
        %v4699 = vmul.f32 %v4470, %v4675
        %v4700 = vmul.f32 %v4474, %v4676
        %v4701 = vmul.f32 %v4476, %v4677
        %v4702 = vmul.f32 %v4478, %v4678
        %v4703 = vmul.f32 %v4480, %v4679
        %v4704 = vmul.f32 %v4484, %v4680
        %v4705 = vmul.f32 %v4486, %v4681
        %v4706 = vmul.f32 %v4488, %v4682
        %v4707 = vmul.f32 %v4490, %v4683
        %v4708 = vpack.c.bf16 %v4686, %v4684
        %v4709 = vpack.c.bf16 %v4687, %v4685
        %v4710 = vpack.c.bf16 %v4690, %v4688
        %v4711 = vpack.c.bf16 %v4691, %v4689
        %v4712 = vpack.c.bf16 %v4694, %v4692
        %v4713 = vpack.c.bf16 %v4695, %v4693
        %v4714 = vpack.c.bf16 %v4698, %v4696
        %v4715 = vpack.c.bf16 %v4699, %v4697
        %v4716 = vpack.c.bf16 %v4702, %v4700
        %v4717 = vpack.c.bf16 %v4703, %v4701
        %v4718 = vpack.c.bf16 %v4706, %v4704
        %v4719 = vpack.c.bf16 %v4707, %v4705
        %v4720 = vld [vmem:[%s16] sm:$0xf]
        %v4721 = vld [vmem:[%s16 + $0x4] sm:$0xf]
        %v4722 = vld [vmem:[%s16 + $0x8] sm:$0xf]
        %v4723 = vld [vmem:[%s16 + $0xc] sm:$0xf]
        %v4724 = vld [vmem:[%s16 + $0x10] sm:$0xf]
        %v4725 = vld [vmem:[%s16 + $0x14] sm:$0xf]
        %v4726 = vld [vmem:[%s16 + $0x18] sm:$0xf]
        %v4727 = vld [vmem:[%s16 + $0x1c] sm:$0xf]
        %v4728 = vld [vmem:[%s16 + $0x20] sm:$0xf]
        %v4729 = vld [vmem:[%s16 + $0x24] sm:$0xf]
        %v4730 = vld [vmem:[%s16 + $0x28] sm:$0xf]
        %v4731 = vld [vmem:[%s16 + $0x2c] sm:$0xf]
        %v4732 = vld [vmem:[%s16 + $0x30] sm:$0xf]
        %v4733 = vld [vmem:[%s16 + $0x34] sm:$0xf]
        %v4734 = vld [vmem:[%s16 + $0x38] sm:$0xf]
        %v4735 = vld [vmem:[%s16 + $0x3c] sm:$0xf]
        %v4736 = vld [vmem:[%s16 + $0x40] sm:$0xf]
        %v4737 = vld [vmem:[%s16 + $0x44] sm:$0xf]
        %v4738 = vld [vmem:[%s16 + $0x48] sm:$0xf]
        %v4739 = vld [vmem:[%s16 + $0x4c] sm:$0xf]
        %v4740 = vld [vmem:[%s16 + $0x50] sm:$0xf]
        %v4741 = vld [vmem:[%s16 + $0x54] sm:$0xf]
        %v4742 = vld [vmem:[%s16 + $0x58] sm:$0xf]
        %v4743 = vld [vmem:[%s16 + $0x5c] sm:$0xf]
        %v4744 = vld [vmem:[%s16 + $0x60] sm:$0xf]
        %v4745 = vld [vmem:[%s16 + $0x64] sm:$0xf]
        %v4746 = vld [vmem:[%s16 + $0x68] sm:$0xf]
        %v4747 = vld [vmem:[%s16 + $0x6c] sm:$0xf]
        %v4748 = vld [vmem:[%s16 + $0x70] sm:$0xf]
        %v4749 = vld [vmem:[%s16 + $0x74] sm:$0xf]
        %v4750 = vld [vmem:[%s16 + $0x78] sm:$0xf]
        %v4751 = vld [vmem:[%s16 + $0x7c] sm:$0xf]
        %v4784 = vunpack.c.l.b16 %v4720
        %v4785 = vunpack.c.l.b16 %v4721
        %v4786 = vunpack.c.l.b16 %v4722
        %v4787 = vunpack.c.l.b16 %v4723
        %v4788 = vunpack.c.l.b16 %v4724
        %v4789 = vunpack.c.l.b16 %v4725
        %v4790 = vunpack.c.l.b16 %v4726
        %v4791 = vunpack.c.l.b16 %v4727
        %v4792 = vunpack.c.l.b16 %v4728
        %v4793 = vunpack.c.l.b16 %v4729
        %v4794 = vunpack.c.l.b16 %v4730
        %v4795 = vunpack.c.l.b16 %v4731
        %v4796 = vunpack.c.l.b16 %v4732
        %v4797 = vunpack.c.l.b16 %v4733
        %v4798 = vunpack.c.l.b16 %v4734
        %v4799 = vunpack.c.l.b16 %v4735
        %v4800 = vunpack.c.l.b16 %v4736
        %v4801 = vunpack.c.l.b16 %v4737
        %v4802 = vunpack.c.l.b16 %v4738
        %v4803 = vunpack.c.l.b16 %v4739
        %v4804 = vunpack.c.l.b16 %v4740
        %v4805 = vunpack.c.l.b16 %v4741
        %v4806 = vunpack.c.l.b16 %v4742
        %v4807 = vunpack.c.l.b16 %v4743
        %v4808 = vunpack.c.l.b16 %v4744
        %v4809 = vunpack.c.l.b16 %v4745
        %v4810 = vunpack.c.l.b16 %v4746
        %v4811 = vunpack.c.l.b16 %v4747
        %v4812 = vunpack.c.l.b16 %v4748
        %v4813 = vunpack.c.l.b16 %v4749
        %v4814 = vunpack.c.l.b16 %v4750
        %v4815 = vunpack.c.l.b16 %v4751
        %v4816 = vpack.c.b16 %v4785, %v4784
        %v4817 = vpack.c.b16 %v4787, %v4786
        %v4818 = vpack.c.b16 %v4789, %v4788
        %v4819 = vpack.c.b16 %v4791, %v4790
        %v4820 = vpack.c.b16 %v4793, %v4792
        %v4821 = vpack.c.b16 %v4795, %v4794
        %v4822 = vpack.c.b16 %v4797, %v4796
        %v4823 = vpack.c.b16 %v4799, %v4798
        %v4824 = vpack.c.b16 %v4801, %v4800
        %v4825 = vpack.c.b16 %v4803, %v4802
        %v4826 = vpack.c.b16 %v4805, %v4804
        %v4827 = vpack.c.b16 %v4807, %v4806
        %v4828 = vpack.c.b16 %v4809, %v4808
        %v4829 = vpack.c.b16 %v4811, %v4810
        %v4830 = vpack.c.b16 %v4813, %v4812
        %v4831 = vpack.c.b16 %v4815, %v4814
        %4848 = vmatprep.subr.bf16.mxu0 0
        %4849 = vmatpush1.bf16.msra.mxu0 %v4816
        %4850 = vmatprep.subr.bf16.mxu0 0
        %4851 = vmatpush1.bf16.msra.mxu0 %v4817
        %4852 = vmatprep.subr.bf16.mxu0 0
        %4853 = vmatpush1.bf16.msra.mxu0 %v4818
        %4854 = vmatprep.subr.bf16.mxu0 0
        %4855 = vmatpush1.bf16.msra.mxu0 %v4819
        %4856 = vmatprep.subr.bf16.mxu0 0
        %4857 = vmatpush1.bf16.msra.mxu0 %v4820
        %4858 = vmatprep.subr.bf16.mxu0 0
        %4859 = vmatpush1.bf16.msra.mxu0 %v4821
        %4860 = vmatprep.subr.bf16.mxu0 0
        %4861 = vmatpush1.bf16.msra.mxu0 %v4822
        %4862 = vmatprep.subr.bf16.mxu0 0
        %4863 = vmatpush1.bf16.msra.mxu0 %v4823
        %4864 = vmatprep.subr.bf16.mxu0 0
        %4865 = vmatpush1.bf16.msra.mxu0 %v4824
        %4866 = vmatprep.subr.bf16.mxu0 0
        %4867 = vmatpush1.bf16.msra.mxu0 %v4825
        %4868 = vmatprep.subr.bf16.mxu0 0
        %4869 = vmatpush1.bf16.msra.mxu0 %v4826
        %4870 = vmatprep.subr.bf16.mxu0 0
        %4871 = vmatpush1.bf16.msra.mxu0 %v4827
        %4872 = vmatprep.subr.bf16.mxu0 0
        %4873 = vmatpush1.bf16.msra.mxu0 %v4828
        %4874 = vmatprep.subr.bf16.mxu0 0
        %4875 = vmatpush1.bf16.msra.mxu0 %v4829
        %4876 = vmatprep.subr.bf16.mxu0 0
        %4877 = vmatpush1.bf16.msra.mxu0 %v4830
        %4878 = vmatprep.subr.bf16.mxu0 0
        %4879 = vmatpush1.bf16.msra.mxu0 %v4831
        %4880 = vmatprep.mubr.bf16.mxu0 %v4709
        %4881 = vmatmul.mubr.bf16.gmra.mrb[0].mxu0 %v4708
        %v4882 = vpop.f32.mrb[0].mxu0
        %v4883 = vadd.f32 0.0, %v4882
        %v4884 = vpop.f32.mrb[0].mxu0
        %v4885 = vpop.f32.mrb[0].mxu0
        %v4886 = vadd.f32 0.0, %v4885
        %v4887 = vpop.f32.mrb[0].mxu0
        %4888 = vmatprep.mubr.bf16.mxu0 %v4711
        %4889 = vmatmul.mubr.bf16.gmra.mrb[0].mxu0 %v4710
        %v4890 = vpop.f32.mrb[0].mxu0
        %v4891 = vadd.f32 0.0, %v4890
        %v4892 = vpop.f32.mrb[0].mxu0
        %v4893 = vpop.f32.mrb[0].mxu0
        %v4894 = vadd.f32 0.0, %v4893
        %v4895 = vpop.f32.mrb[0].mxu0
        %4896 = vmatprep.mubr.bf16.mxu0 %v4713
        %4897 = vmatmul.mubr.bf16.gmra.mrb[0].mxu0 %v4712
        %v4898 = vpop.f32.mrb[0].mxu0
        %v4899 = vadd.f32 0.0, %v4898
        %v4900 = vpop.f32.mrb[0].mxu0
        %v4901 = vpop.f32.mrb[0].mxu0
        %v4902 = vadd.f32 0.0, %v4901
        %v4903 = vpop.f32.mrb[0].mxu0
        %4904 = vmatprep.mubr.bf16.mxu0 %v4715
        %4905 = vmatmul.mubr.bf16.gmra.mrb[0].mxu0 %v4714
        %v4906 = vpop.f32.mrb[0].mxu0
        %v4907 = vadd.f32 0.0, %v4906
        %v4908 = vpop.f32.mrb[0].mxu0
        %v4909 = vpop.f32.mrb[0].mxu0
        %v4910 = vadd.f32 0.0, %v4909
        %v4911 = vpop.f32.mrb[0].mxu0
        %4912 = vmatprep.mubr.bf16.mxu0 %v4717
        %4913 = vmatmul.mubr.bf16.gmra.mrb[0].mxu0 %v4716
        %v4914 = vpop.f32.mrb[0].mxu0
        %v4915 = vadd.f32 0.0, %v4914
        %v4916 = vpop.f32.mrb[0].mxu0
        %v4917 = vpop.f32.mrb[0].mxu0
        %v4918 = vadd.f32 0.0, %v4917
        %v4919 = vpop.f32.mrb[0].mxu0
        %4920 = vmatprep.mubr.bf16.mxu0 %v4719
        %4921 = vmatmul.mubr.bf16.gmra.mrb[0].mxu0 %v4718
        %v4922 = vpop.f32.mrb[0].mxu0
        %v4923 = vadd.f32 0.0, %v4922
        %v4924 = vpop.f32.mrb[0].mxu0
        %v4925 = vpop.f32.mrb[0].mxu0
        %v4926 = vadd.f32 0.0, %v4925
        %v4927 = vpop.f32.mrb[0].mxu0
        %4928 = vdwg.mxu0
        %v4929 = vadd.f32 %v4103, %v4883
        %v4930 = vadd.f32 %v4104, %v4886
        %v4931 = vadd.f32 %v4105, %v4891
        %v4932 = vadd.f32 %v4106, %v4894
        %v4933 = vadd.f32 %v4107, %v4899
        %v4934 = vadd.f32 %v4108, %v4902
        %v4935 = vadd.f32 %v4109, %v4907
        %v4936 = vadd.f32 %v4110, %v4910
        %v4937 = vadd.f32 %v4111, %v4915
        %v4938 = vadd.f32 %v4112, %v4918
        %v4939 = vadd.f32 %v4113, %v4923
        %v4940 = vadd.f32 %v4114, %v4926
        %v4941 = vld [vmem:[%s17] sm:$0x1]
        %v4943 = vlaneseq
        %v4944 = vshrl.u32 %v4943, 7
        %v4945 = vsub.s32 0, %v4944
        %v4946 = vrot.slane %v4941, %v4945
        %v4948 = vadd.f32 %v4929, %v4946
        %v4949 = vadd.f32 %v4930, %v4946
        %v4950 = vadd.f32 %v4931, %v4946
        %v4951 = vadd.f32 %v4932, %v4946
        %v4952 = vadd.f32 %v4933, %v4946
        %v4953 = vadd.f32 %v4934, %v4946
        %v4954 = vadd.f32 %v4935, %v4946
        %v4955 = vadd.f32 %v4936, %v4946
        %v4956 = vadd.f32 %v4937, %v4946
        %v4957 = vadd.f32 %v4938, %v4946
        %v4958 = vadd.f32 %v4939, %v4946
        %v4959 = vadd.f32 %v4940, %v4946
        %s4960 = scalar_lea.vmem %s6, 1
        %v4961 = vld [vmem:[%s4960] sm:$0x1]
        %s4962 = scalar_lea.vmem %s7, 1
        %v4963 = vld [vmem:[%s4962] sm:$0x1]
        %4964 = vadd.xlane.f32.xlu0 %v4948
        %v4965 = vpop.xlane.xlu0 %4964
        %4966 = vadd.xlane.f32.xlu0 %v4949
        %v4967 = vpop.xlane.xlu0 %4966
        %4968 = vadd.xlane.f32.xlu0 %v4950
        %v4969 = vpop.xlane.xlu0 %4968
        %4970 = vadd.xlane.f32.xlu0 %v4951
        %v4971 = vpop.xlane.xlu0 %4970
        %4972 = vadd.xlane.f32.xlu0 %v4952
        %v4973 = vpop.xlane.xlu0 %4972
        %4974 = vadd.xlane.f32.xlu0 %v4953
        %v4975 = vpop.xlane.xlu0 %4974
        %4976 = vadd.xlane.f32.xlu0 %v4954
        %v4977 = vpop.xlane.xlu0 %4976
        %4978 = vadd.xlane.f32.xlu0 %v4955
        %v4979 = vpop.xlane.xlu0 %4978
        %4980 = vadd.xlane.f32.xlu0 %v4956
        %v4981 = vpop.xlane.xlu0 %4980
        %4982 = vadd.xlane.f32.xlu0 %v4957
        %v4983 = vpop.xlane.xlu0 %4982
        %4984 = vadd.xlane.f32.xlu0 %v4958
        %v4985 = vpop.xlane.xlu0 %4984
        %4986 = vadd.xlane.f32.xlu0 %v4959
        %v4987 = vpop.xlane.xlu0 %4986
        %v4988 = vmul.f32 %v4965, %v865
        %v4989 = vmul.f32 %v4967, %v865
        %v4990 = vmul.f32 %v4969, %v865
        %v4991 = vmul.f32 %v4971, %v865
        %v4992 = vmul.f32 %v4973, %v865
        %v4993 = vmul.f32 %v4975, %v865
        %v4994 = vmul.f32 %v4977, %v865
        %v4995 = vmul.f32 %v4979, %v865
        %v4996 = vmul.f32 %v4981, %v865
        %v4997 = vmul.f32 %v4983, %v865
        %v4998 = vmul.f32 %v4985, %v865
        %v4999 = vmul.f32 %v4987, %v865
        %v5000 = vsub.f32 %v4948, %v4988
        %v5001 = vsub.f32 %v4949, %v4989
        %v5002 = vsub.f32 %v4950, %v4990
        %v5003 = vsub.f32 %v4951, %v4991
        %v5004 = vsub.f32 %v4952, %v4992
        %v5005 = vsub.f32 %v4953, %v4993
        %v5006 = vsub.f32 %v4954, %v4994
        %v5007 = vsub.f32 %v4955, %v4995
        %v5008 = vsub.f32 %v4956, %v4996
        %v5009 = vsub.f32 %v4957, %v4997
        %v5010 = vsub.f32 %v4958, %v4998
        %v5011 = vsub.f32 %v4959, %v4999
        %v5012 = vmul.f32 %v5000, %v5000
        %v5013 = vmul.f32 %v5001, %v5001
        %v5014 = vmul.f32 %v5002, %v5002
        %v5015 = vmul.f32 %v5003, %v5003
        %v5016 = vmul.f32 %v5004, %v5004
        %v5017 = vmul.f32 %v5005, %v5005
        %v5018 = vmul.f32 %v5006, %v5006
        %v5019 = vmul.f32 %v5007, %v5007
        %v5020 = vmul.f32 %v5008, %v5008
        %v5021 = vmul.f32 %v5009, %v5009
        %v5022 = vmul.f32 %v5010, %v5010
        %v5023 = vmul.f32 %v5011, %v5011
        %5024 = vadd.xlane.f32.xlu0 %v5012
        %v5025 = vpop.xlane.xlu0 %5024
        %5026 = vadd.xlane.f32.xlu0 %v5013
        %v5027 = vpop.xlane.xlu0 %5026
        %5028 = vadd.xlane.f32.xlu0 %v5014
        %v5029 = vpop.xlane.xlu0 %5028
        %5030 = vadd.xlane.f32.xlu0 %v5015
        %v5031 = vpop.xlane.xlu0 %5030
        %5032 = vadd.xlane.f32.xlu0 %v5016
        %v5033 = vpop.xlane.xlu0 %5032
        %5034 = vadd.xlane.f32.xlu0 %v5017
        %v5035 = vpop.xlane.xlu0 %5034
        %5036 = vadd.xlane.f32.xlu0 %v5018
        %v5037 = vpop.xlane.xlu0 %5036
        %5038 = vadd.xlane.f32.xlu0 %v5019
        %v5039 = vpop.xlane.xlu0 %5038
        %5040 = vadd.xlane.f32.xlu0 %v5020
        %v5041 = vpop.xlane.xlu0 %5040
        %5042 = vadd.xlane.f32.xlu0 %v5021
        %v5043 = vpop.xlane.xlu0 %5042
        %5044 = vadd.xlane.f32.xlu0 %v5022
        %v5045 = vpop.xlane.xlu0 %5044
        %5046 = vadd.xlane.f32.xlu0 %v5023
        %v5047 = vpop.xlane.xlu0 %5046
        %v5048 = vmul.f32 %v5025, %v865
        %v5049 = vmul.f32 %v5027, %v865
        %v5050 = vmul.f32 %v5029, %v865
        %v5051 = vmul.f32 %v5031, %v865
        %v5052 = vmul.f32 %v5033, %v865
        %v5053 = vmul.f32 %v5035, %v865
        %v5054 = vmul.f32 %v5037, %v865
        %v5055 = vmul.f32 %v5039, %v865
        %v5056 = vmul.f32 %v5041, %v865
        %v5057 = vmul.f32 %v5043, %v865
        %v5058 = vmul.f32 %v5045, %v865
        %v5059 = vmul.f32 %v5047, %v865
        %v5060 = vadd.f32 %v5048, 1e-06
        %v5061 = vadd.f32 %v5049, 1e-06
        %v5062 = vadd.f32 %v5050, 1e-06
        %v5063 = vadd.f32 %v5051, 1e-06
        %v5064 = vadd.f32 %v5052, 1e-06
        %v5065 = vadd.f32 %v5053, 1e-06
        %v5066 = vadd.f32 %v5054, 1e-06
        %v5067 = vadd.f32 %v5055, 1e-06
        %v5068 = vadd.f32 %v5056, 1e-06
        %v5069 = vadd.f32 %v5057, 1e-06
        %v5070 = vadd.f32 %v5058, 1e-06
        %v5071 = vadd.f32 %v5059, 1e-06
        %v5072 = vrsqrt.pop %v5060
        %v5073 = vrsqrt.pop %v5061
        %v5074 = vrsqrt.pop %v5062
        %v5075 = vrsqrt.pop %v5063
        %v5076 = vrsqrt.pop %v5064
        %v5077 = vrsqrt.pop %v5065
        %v5078 = vrsqrt.pop %v5066
        %v5079 = vrsqrt.pop %v5067
        %v5080 = vrsqrt.pop %v5068
        %v5081 = vrsqrt.pop %v5069
        %v5082 = vrsqrt.pop %v5070
        %v5083 = vrsqrt.pop %v5071
        %v5084 = vmul.f32 %v5000, %v5072
        %v5085 = vmul.f32 %v5001, %v5073
        %v5086 = vmul.f32 %v5002, %v5074
        %v5087 = vmul.f32 %v5003, %v5075
        %v5088 = vmul.f32 %v5004, %v5076
        %v5089 = vmul.f32 %v5005, %v5077
        %v5090 = vmul.f32 %v5006, %v5078
        %v5091 = vmul.f32 %v5007, %v5079
        %v5092 = vmul.f32 %v5008, %v5080
        %v5093 = vmul.f32 %v5009, %v5081
        %v5094 = vmul.f32 %v5010, %v5082
        %v5095 = vmul.f32 %v5011, %v5083
        %v5097 = vlaneseq
        %v5098 = vshrl.u32 %v5097, 7
        %v5099 = vsub.s32 0, %v5098
        %v5100 = vrot.slane %v4961, %v5099
        %v5102 = vmul.f32 %v5084, %v5100
        %v5103 = vmul.f32 %v5085, %v5100
        %v5104 = vmul.f32 %v5086, %v5100
        %v5105 = vmul.f32 %v5087, %v5100
        %v5106 = vmul.f32 %v5088, %v5100
        %v5107 = vmul.f32 %v5089, %v5100
        %v5108 = vmul.f32 %v5090, %v5100
        %v5109 = vmul.f32 %v5091, %v5100
        %v5110 = vmul.f32 %v5092, %v5100
        %v5111 = vmul.f32 %v5093, %v5100
        %v5112 = vmul.f32 %v5094, %v5100
        %v5113 = vmul.f32 %v5095, %v5100
        %v5115 = vlaneseq
        %v5116 = vshrl.u32 %v5115, 7
        %v5117 = vsub.s32 0, %v5116
        %v5118 = vrot.slane %v4963, %v5117
        %v5120 = vadd.f32 %v5102, %v5118
        %v5121 = vadd.f32 %v5103, %v5118
        %v5122 = vadd.f32 %v5104, %v5118
        %v5123 = vadd.f32 %v5105, %v5118
        %v5124 = vadd.f32 %v5106, %v5118
        %v5125 = vadd.f32 %v5107, %v5118
        %v5126 = vadd.f32 %v5108, %v5118
        %v5127 = vadd.f32 %v5109, %v5118
        %v5128 = vadd.f32 %v5110, %v5118
        %v5129 = vadd.f32 %v5111, %v5118
        %v5130 = vadd.f32 %v5112, %v5118
        %v5131 = vadd.f32 %v5113, %v5118
        %v5132 = vpack.c.bf16 %v5121, %v5120
        %v5133 = vpack.c.bf16 %v5123, %v5122
        %v5134 = vpack.c.bf16 %v5125, %v5124
        %v5135 = vpack.c.bf16 %v5127, %v5126
        %v5136 = vpack.c.bf16 %v5129, %v5128
        %v5137 = vpack.c.bf16 %v5131, %v5130
        %s5138 = scalar_lea.vmem %s8, 192
        %v5139 = vld [vmem:[%s5138] sm:$0xff]
        %v5140 = vld [vmem:[%s5138 + $0x8] sm:$0xf]
        %v5141 = vld [vmem:[%s5138 + $0xc] sm:$0xff]
        %v5142 = vld [vmem:[%s5138 + $0x14] sm:$0xf]
        %v5143 = vld [vmem:[%s5138 + $0x18] sm:$0xff]
        %v5144 = vld [vmem:[%s5138 + $0x20] sm:$0xf]
        %v5145 = vld [vmem:[%s5138 + $0x24] sm:$0xff]
        %v5146 = vld [vmem:[%s5138 + $0x2c] sm:$0xf]
        %v5147 = vld [vmem:[%s5138 + $0x30] sm:$0xff]
        %v5148 = vld [vmem:[%s5138 + $0x38] sm:$0xf]
        %v5149 = vld [vmem:[%s5138 + $0x3c] sm:$0xff]
        %v5150 = vld [vmem:[%s5138 + $0x44] sm:$0xf]
        %v5151 = vld [vmem:[%s5138 + $0x48] sm:$0xff]
        %v5152 = vld [vmem:[%s5138 + $0x50] sm:$0xf]
        %v5153 = vld [vmem:[%s5138 + $0x54] sm:$0xff]
        %v5154 = vld [vmem:[%s5138 + $0x5c] sm:$0xf]
        %v5155 = vld [vmem:[%s5138 + $0x60] sm:$0xff]
        %v5156 = vld [vmem:[%s5138 + $0x68] sm:$0xf]
        %v5157 = vld [vmem:[%s5138 + $0x6c] sm:$0xff]
        %v5158 = vld [vmem:[%s5138 + $0x74] sm:$0xf]
        %v5159 = vld [vmem:[%s5138 + $0x78] sm:$0xff]
        %v5160 = vld [vmem:[%s5138 + $0x80] sm:$0xf]
        %v5161 = vld [vmem:[%s5138 + $0x84] sm:$0xff]
        %v5162 = vld [vmem:[%s5138 + $0x8c] sm:$0xf]
        %v5163 = vld [vmem:[%s5138 + $0x90] sm:$0xff]
        %v5164 = vld [vmem:[%s5138 + $0x98] sm:$0xf]
        %v5165 = vld [vmem:[%s5138 + $0x9c] sm:$0xff]
        %v5166 = vld [vmem:[%s5138 + $0xa4] sm:$0xf]
        %v5167 = vld [vmem:[%s5138 + $0xa8] sm:$0xff]
        %v5168 = vld [vmem:[%s5138 + $0xb0] sm:$0xf]
        %v5169 = vld [vmem:[%s5138 + $0xb4] sm:$0xff]
        %v5170 = vld [vmem:[%s5138 + $0xbc] sm:$0xf]
        %s5171 = scalar_lea.vmem %s9, 3
        %v5172 = vld [vmem:[%s5171] sm:$0x7]
        %v5174 = vlaneseq
        %v5175 = vshrl.u32 %v5174, 7
        %v5176 = vsub.s32 0, %v5175
        %v5177 = vrot.slane %v5172, %v5176
        %v5178 = vlaneseq
        %v5179 = vshrl.u32 %v5178, 7
        %v5180 = vsub.s32 1, %v5179
        %v5181 = vrot.slane %v5172, %v5180
        %v5182 = vlaneseq
        %v5183 = vshrl.u32 %v5182, 7
        %v5184 = vsub.s32 2, %v5183
        %v5185 = vrot.slane %v5172, %v5184
        %v5221 = vunpack.c.l.b16 %v5139
        %v5222 = vunpack.c.h.b16 %v5139
        %v5223 = vunpack.c.l.b16 %v5140
        %v5224 = vunpack.c.l.b16 %v5141
        %v5225 = vunpack.c.h.b16 %v5141
        %v5226 = vunpack.c.l.b16 %v5142
        %v5227 = vunpack.c.l.b16 %v5143
        %v5228 = vunpack.c.h.b16 %v5143
        %v5229 = vunpack.c.l.b16 %v5144
        %v5230 = vunpack.c.l.b16 %v5145
        %v5231 = vunpack.c.h.b16 %v5145
        %v5232 = vunpack.c.l.b16 %v5146
        %v5233 = vunpack.c.l.b16 %v5147
        %v5234 = vunpack.c.h.b16 %v5147
        %v5235 = vunpack.c.l.b16 %v5148
        %v5236 = vunpack.c.l.b16 %v5149
        %v5237 = vunpack.c.h.b16 %v5149
        %v5238 = vunpack.c.l.b16 %v5150
        %v5239 = vunpack.c.l.b16 %v5151
        %v5240 = vunpack.c.h.b16 %v5151
        %v5241 = vunpack.c.l.b16 %v5152
        %v5242 = vunpack.c.l.b16 %v5153
        %v5243 = vunpack.c.h.b16 %v5153
        %v5244 = vunpack.c.l.b16 %v5154
        %v5245 = vunpack.c.l.b16 %v5155
        %v5246 = vunpack.c.h.b16 %v5155
        %v5247 = vunpack.c.l.b16 %v5156
        %v5248 = vunpack.c.l.b16 %v5157
        %v5249 = vunpack.c.h.b16 %v5157
        %v5250 = vunpack.c.l.b16 %v5158
        %v5251 = vunpack.c.l.b16 %v5159
        %v5252 = vunpack.c.h.b16 %v5159
        %v5253 = vunpack.c.l.b16 %v5160
        %v5254 = vunpack.c.l.b16 %v5161
        %v5255 = vunpack.c.h.b16 %v5161
        %v5256 = vunpack.c.l.b16 %v5162
        %v5257 = vunpack.c.l.b16 %v5163
        %v5258 = vunpack.c.h.b16 %v5163
        %v5259 = vunpack.c.l.b16 %v5164
        %v5260 = vunpack.c.l.b16 %v5165
        %v5261 = vunpack.c.h.b16 %v5165
        %v5262 = vunpack.c.l.b16 %v5166
        %v5263 = vunpack.c.l.b16 %v5167
        %v5264 = vunpack.c.h.b16 %v5167
        %v5265 = vunpack.c.l.b16 %v5168
        %v5266 = vunpack.c.l.b16 %v5169
        %v5267 = vunpack.c.h.b16 %v5169
        %v5268 = vunpack.c.l.b16 %v5170
        %v5269 = vpack.c.b16 %v5224, %v5221
        %v5270 = vpack.c.b16 %v5225, %v5222
        %v5271 = vpack.c.b16 %v5226, %v5223
        %v5272 = vpack.c.b16 %v5230, %v5227
        %v5273 = vpack.c.b16 %v5231, %v5228
        %v5274 = vpack.c.b16 %v5232, %v5229
        %v5275 = vpack.c.b16 %v5236, %v5233
        %v5276 = vpack.c.b16 %v5237, %v5234
        %v5277 = vpack.c.b16 %v5238, %v5235
        %v5278 = vpack.c.b16 %v5242, %v5239
        %v5279 = vpack.c.b16 %v5243, %v5240
        %v5280 = vpack.c.b16 %v5244, %v5241
        %v5281 = vpack.c.b16 %v5248, %v5245
        %v5282 = vpack.c.b16 %v5249, %v5246
        %v5283 = vpack.c.b16 %v5250, %v5247
        %v5284 = vpack.c.b16 %v5254, %v5251
        %v5285 = vpack.c.b16 %v5255, %v5252
        %v5286 = vpack.c.b16 %v5256, %v5253
        %v5287 = vpack.c.b16 %v5260, %v5257
        %v5288 = vpack.c.b16 %v5261, %v5258
        %v5289 = vpack.c.b16 %v5262, %v5259
        %v5290 = vpack.c.b16 %v5266, %v5263
        %v5291 = vpack.c.b16 %v5267, %v5264
        %v5292 = vpack.c.b16 %v5268, %v5265
        %5317 = vmatprep.subr.bf16.mxu0 %v5270
        %5318 = vmatpush1.bf16.msra.mxu0 %v5269
        %5319 = vmatprep.subr.bf16.mxu0 %v5273
        %5320 = vmatpush1.bf16.msra.mxu0 %v5272
        %5321 = vmatprep.subr.bf16.mxu0 %v5276
        %5322 = vmatpush1.bf16.msra.mxu0 %v5275
        %5323 = vmatprep.subr.bf16.mxu0 %v5279
        %5324 = vmatpush1.bf16.msra.mxu0 %v5278
        %5325 = vmatprep.subr.bf16.mxu0 %v5282
        %5326 = vmatpush1.bf16.msra.mxu0 %v5281
        %5327 = vmatprep.subr.bf16.mxu0 %v5285
        %5328 = vmatpush1.bf16.msra.mxu0 %v5284
        %5329 = vmatprep.subr.bf16.mxu0 %v5288
        %5330 = vmatpush1.bf16.msra.mxu0 %v5287
        %5331 = vmatprep.subr.bf16.mxu0 %v5291
        %5332 = vmatpush1.bf16.msra.mxu0 %v5290
        %5333 = vmatprep.subr.bf16.mxu0 0
        %5334 = vmatpush1.bf16.msra.mxu0 0
        %5335 = vmatprep.subr.bf16.mxu0 0
        %5336 = vmatpush1.bf16.msra.mxu0 0
        %5337 = vmatprep.subr.bf16.mxu0 0
        %5338 = vmatpush1.bf16.msra.mxu0 0
        %5339 = vmatprep.subr.bf16.mxu0 0
        %5340 = vmatpush1.bf16.msra.mxu0 0
        %5341 = vmatprep.subr.bf16.mxu0 0
        %5342 = vmatpush1.bf16.msra.mxu0 0
        %5343 = vmatprep.subr.bf16.mxu0 0
        %5344 = vmatpush1.bf16.msra.mxu0 0
        %5345 = vmatprep.subr.bf16.mxu0 0
        %5346 = vmatpush1.bf16.msra.mxu0 0
        %5347 = vmatprep.subr.bf16.mxu0 0
        %5348 = vmatpush1.bf16.msra.mxu0 0
        %5349 = vmatprep.mubr.bf16.mxu0 0
        %5350 = vmatmul.mubr.bf16.gmra.mrb[0].mxu0 %v5132
        %v5351 = vpop.f32.mrb[0].mxu0
        %v5352 = vadd.f32 %v5177, %v5351
        %v5353 = vpop.f32.mrb[0].mxu0
        %v5354 = vadd.f32 %v5181, %v5353
        %v5355 = vpop.f32.mrb[0].mxu0
        %v5356 = vadd.f32 %v5177, %v5355
        %v5357 = vpop.f32.mrb[0].mxu0
        %v5358 = vadd.f32 %v5181, %v5357
        %5359 = vmatprep.mubr.bf16.mxu0 0
        %5360 = vmatmul.mubr.bf16.gmra.mrb[0].mxu0 %v5133
        %v5361 = vpop.f32.mrb[0].mxu0
        %v5362 = vadd.f32 %v5177, %v5361
        %v5363 = vpop.f32.mrb[0].mxu0
        %v5364 = vadd.f32 %v5181, %v5363
        %v5365 = vpop.f32.mrb[0].mxu0
        %v5366 = vadd.f32 %v5177, %v5365
        %v5367 = vpop.f32.mrb[0].mxu0
        %v5368 = vadd.f32 %v5181, %v5367
        %5369 = vmatprep.mubr.bf16.mxu0 0
        %5370 = vmatmul.mubr.bf16.gmra.mrb[0].mxu0 %v5134
        %v5371 = vpop.f32.mrb[0].mxu0
        %v5372 = vadd.f32 %v5177, %v5371
        %v5373 = vpop.f32.mrb[0].mxu0
        %v5374 = vadd.f32 %v5181, %v5373
        %v5375 = vpop.f32.mrb[0].mxu0
        %v5376 = vadd.f32 %v5177, %v5375
        %v5377 = vpop.f32.mrb[0].mxu0
        %v5378 = vadd.f32 %v5181, %v5377
        %5379 = vmatprep.mubr.bf16.mxu0 0
        %5380 = vmatmul.mubr.bf16.gmra.mrb[0].mxu0 %v5135
        %v5381 = vpop.f32.mrb[0].mxu0
        %v5382 = vadd.f32 %v5177, %v5381
        %v5383 = vpop.f32.mrb[0].mxu0
        %v5384 = vadd.f32 %v5181, %v5383
        %v5385 = vpop.f32.mrb[0].mxu0
        %v5386 = vadd.f32 %v5177, %v5385
        %v5387 = vpop.f32.mrb[0].mxu0
        %v5388 = vadd.f32 %v5181, %v5387
        %5389 = vmatprep.mubr.bf16.mxu0 0
        %5390 = vmatmul.mubr.bf16.gmra.mrb[0].mxu0 %v5136
        %v5391 = vpop.f32.mrb[0].mxu0
        %v5392 = vadd.f32 %v5177, %v5391
        %v5393 = vpop.f32.mrb[0].mxu0
        %v5394 = vadd.f32 %v5181, %v5393
        %v5395 = vpop.f32.mrb[0].mxu0
        %v5396 = vadd.f32 %v5177, %v5395
        %v5397 = vpop.f32.mrb[0].mxu0
        %v5398 = vadd.f32 %v5181, %v5397
        %5399 = vmatprep.mubr.bf16.mxu0 0
        %5400 = vmatmul.mubr.bf16.gmra.mrb[0].mxu0 %v5137
        %v5401 = vpop.f32.mrb[0].mxu0
        %v5402 = vadd.f32 %v5177, %v5401
        %v5403 = vpop.f32.mrb[0].mxu0
        %v5404 = vadd.f32 %v5181, %v5403
        %v5405 = vpop.f32.mrb[0].mxu0
        %v5406 = vadd.f32 %v5177, %v5405
        %v5407 = vpop.f32.mrb[0].mxu0
        %v5408 = vadd.f32 %v5181, %v5407
        %5409 = vdwg.mxu0
        %5410 = vmatprep.subr.bf16.mxu0 0
        %5411 = vmatpush1.bf16.msra.mxu0 %v5271
        %5412 = vmatprep.subr.bf16.mxu0 0
        %5413 = vmatpush1.bf16.msra.mxu0 %v5274
        %5414 = vmatprep.subr.bf16.mxu0 0
        %5415 = vmatpush1.bf16.msra.mxu0 %v5277
        %5416 = vmatprep.subr.bf16.mxu0 0
        %5417 = vmatpush1.bf16.msra.mxu0 %v5280
        %5418 = vmatprep.subr.bf16.mxu0 0
        %5419 = vmatpush1.bf16.msra.mxu0 %v5283
        %5420 = vmatprep.subr.bf16.mxu0 0
        %5421 = vmatpush1.bf16.msra.mxu0 %v5286
        %5422 = vmatprep.subr.bf16.mxu0 0
        %5423 = vmatpush1.bf16.msra.mxu0 %v5289
        %5424 = vmatprep.subr.bf16.mxu0 0
        %5425 = vmatpush1.bf16.msra.mxu0 %v5292
        %5426 = vmatprep.subr.bf16.mxu0 0
        %5427 = vmatpush1.bf16.msra.mxu0 0
        %5428 = vmatprep.subr.bf16.mxu0 0
        %5429 = vmatpush1.bf16.msra.mxu0 0
        %5430 = vmatprep.subr.bf16.mxu0 0
        %5431 = vmatpush1.bf16.msra.mxu0 0
        %5432 = vmatprep.subr.bf16.mxu0 0
        %5433 = vmatpush1.bf16.msra.mxu0 0
        %5434 = vmatprep.subr.bf16.mxu0 0
        %5435 = vmatpush1.bf16.msra.mxu0 0
        %5436 = vmatprep.subr.bf16.mxu0 0
        %5437 = vmatpush1.bf16.msra.mxu0 0
        %5438 = vmatprep.subr.bf16.mxu0 0
        %5439 = vmatpush1.bf16.msra.mxu0 0
        %5440 = vmatprep.subr.bf16.mxu0 0
        %5441 = vmatpush1.bf16.msra.mxu0 0
        %5442 = vmatprep.mubr.bf16.mxu0 0
        %5443 = vmatmul.mubr.bf16.gmra.mrb[0].mxu0 %v5132
        %v5444 = vpop.f32.mrb[0].mxu0
        %v5445 = vadd.f32 %v5185, %v5444
        %v5446 = vpop.f32.mrb[0].mxu0
        %v5447 = vpop.f32.mrb[0].mxu0
        %v5448 = vadd.f32 %v5185, %v5447
        %v5449 = vpop.f32.mrb[0].mxu0
        %5450 = vmatprep.mubr.bf16.mxu0 0
        %5451 = vmatmul.mubr.bf16.gmra.mrb[0].mxu0 %v5133
        %v5452 = vpop.f32.mrb[0].mxu0
        %v5453 = vadd.f32 %v5185, %v5452
        %v5454 = vpop.f32.mrb[0].mxu0
        %v5455 = vpop.f32.mrb[0].mxu0
        %v5456 = vadd.f32 %v5185, %v5455
        %v5457 = vpop.f32.mrb[0].mxu0
        %5458 = vmatprep.mubr.bf16.mxu0 0
        %5459 = vmatmul.mubr.bf16.gmra.mrb[0].mxu0 %v5134
        %v5460 = vpop.f32.mrb[0].mxu0
        %v5461 = vadd.f32 %v5185, %v5460
        %v5462 = vpop.f32.mrb[0].mxu0
        %v5463 = vpop.f32.mrb[0].mxu0
        %v5464 = vadd.f32 %v5185, %v5463
        %v5465 = vpop.f32.mrb[0].mxu0
        %5466 = vmatprep.mubr.bf16.mxu0 0
        %5467 = vmatmul.mubr.bf16.gmra.mrb[0].mxu0 %v5135
        %v5468 = vpop.f32.mrb[0].mxu0
        %v5469 = vadd.f32 %v5185, %v5468
        %v5470 = vpop.f32.mrb[0].mxu0
        %v5471 = vpop.f32.mrb[0].mxu0
        %v5472 = vadd.f32 %v5185, %v5471
        %v5473 = vpop.f32.mrb[0].mxu0
        %5474 = vmatprep.mubr.bf16.mxu0 0
        %5475 = vmatmul.mubr.bf16.gmra.mrb[0].mxu0 %v5136
        %v5476 = vpop.f32.mrb[0].mxu0
        %v5477 = vadd.f32 %v5185, %v5476
        %v5478 = vpop.f32.mrb[0].mxu0
        %v5479 = vpop.f32.mrb[0].mxu0
        %v5480 = vadd.f32 %v5185, %v5479
        %v5481 = vpop.f32.mrb[0].mxu0
        %5482 = vmatprep.mubr.bf16.mxu0 0
        %5483 = vmatmul.mubr.bf16.gmra.mrb[0].mxu0 %v5137
        %v5484 = vpop.f32.mrb[0].mxu0
        %v5485 = vadd.f32 %v5185, %v5484
        %v5486 = vpop.f32.mrb[0].mxu0
        %v5487 = vpop.f32.mrb[0].mxu0
        %v5488 = vadd.f32 %v5185, %v5487
        %v5489 = vpop.f32.mrb[0].mxu0
        %5490 = vdwg.mxu0
        %s5491 = scalar_lea.vmem %s10, 64
        %v5492 = vld [vmem:[%s5491] sm:$0xf]
        %v5493 = vld [vmem:[%s5491 + $0x4] sm:$0xf]
        %v5494 = vld [vmem:[%s5491 + $0x8] sm:$0xf]
        %v5495 = vld [vmem:[%s5491 + $0xc] sm:$0xf]
        %v5496 = vld [vmem:[%s5491 + $0x10] sm:$0xf]
        %v5497 = vld [vmem:[%s5491 + $0x14] sm:$0xf]
        %v5498 = vld [vmem:[%s5491 + $0x18] sm:$0xf]
        %v5499 = vld [vmem:[%s5491 + $0x1c] sm:$0xf]
        %v5500 = vld [vmem:[%s5491 + $0x20] sm:$0xf]
        %v5501 = vld [vmem:[%s5491 + $0x24] sm:$0xf]
        %v5502 = vld [vmem:[%s5491 + $0x28] sm:$0xf]
        %v5503 = vld [vmem:[%s5491 + $0x2c] sm:$0xf]
        %v5504 = vld [vmem:[%s5491 + $0x30] sm:$0xf]
        %v5505 = vld [vmem:[%s5491 + $0x34] sm:$0xf]
        %v5506 = vld [vmem:[%s5491 + $0x38] sm:$0xf]
        %v5507 = vld [vmem:[%s5491 + $0x3c] sm:$0xf]
        %v5508 = vpack.c.bf16 %v5356, %v5352
        %v5509 = vpack.c.bf16 %v5366, %v5362
        %v5510 = vpack.c.bf16 %v5376, %v5372
        %v5511 = vpack.c.bf16 %v5386, %v5382
        %v5512 = vpack.c.bf16 %v5396, %v5392
        %v5513 = vpack.c.bf16 %v5406, %v5402
        %v5514 = vpack.c.bf16 %v5358, %v5354
        %v5515 = vpack.c.bf16 %v5368, %v5364
        %v5516 = vpack.c.bf16 %v5378, %v5374
        %v5517 = vpack.c.bf16 %v5388, %v5384
        %v5518 = vpack.c.bf16 %v5398, %v5394
        %v5519 = vpack.c.bf16 %v5408, %v5404
        %v5520 = vpack.c.bf16 %v5448, %v5445
        %v5521 = vpack.c.bf16 %v5456, %v5453
        %v5522 = vpack.c.bf16 %v5464, %v5461
        %v5523 = vpack.c.bf16 %v5472, %v5469
        %v5524 = vpack.c.bf16 %v5480, %v5477
        %v5525 = vpack.c.bf16 %v5488, %v5485
        %v5527 = vsel %vm1401, %v5508, 0
        %v5530 = vsel %vm1401, %v5509, 0
        %v5533 = vsel %vm1401, %v5514, 0
        %v5536 = vsel %vm1401, %v5515, 0
        %5538 = vmatprep.subr.bf16.mxu0 0
        %5539 = vmatpush1.bf16.xpose.msra.mxu0 %v5533
        %5540 = vmatprep.subr.bf16.mxu0 0
        %5541 = vmatpush1.bf16.xpose.msra.mxu0 %v5536
        %5542 = vmatprep.subr.bf16.mxu0 0
        %5543 = vmatpush1.bf16.xpose.msra.mxu0 0
        %5544 = vmatprep.subr.bf16.mxu0 0
        %5545 = vmatpush1.bf16.xpose.msra.mxu0 0
        %5546 = vmatprep.subr.bf16.mxu0 0
        %5547 = vmatpush1.bf16.xpose.msra.mxu0 0
        %5548 = vmatprep.subr.bf16.mxu0 0
        %5549 = vmatpush1.bf16.xpose.msra.mxu0 0
        %5550 = vmatprep.subr.bf16.mxu0 0
        %5551 = vmatpush1.bf16.xpose.msra.mxu0 0
        %5552 = vmatprep.subr.bf16.mxu0 0
        %5553 = vmatpush1.bf16.xpose.msra.mxu0 0
        %5554 = vmatprep.subr.bf16.mxu0 0
        %5555 = vmatpush1.bf16.xpose.msra.mxu0 0
        %5556 = vmatprep.subr.bf16.mxu0 0
        %5557 = vmatpush1.bf16.xpose.msra.mxu0 0
        %5558 = vmatprep.subr.bf16.mxu0 0
        %5559 = vmatpush1.bf16.xpose.msra.mxu0 0
        %5560 = vmatprep.subr.bf16.mxu0 0
        %5561 = vmatpush1.bf16.xpose.msra.mxu0 0
        %5562 = vmatprep.subr.bf16.mxu0 0
        %5563 = vmatpush1.bf16.xpose.msra.mxu0 0
        %5564 = vmatprep.subr.bf16.mxu0 0
        %5565 = vmatpush1.bf16.xpose.msra.mxu0 0
        %5566 = vmatprep.subr.bf16.mxu0 0
        %5567 = vmatpush1.bf16.xpose.msra.mxu0 0
        %5568 = vmatprep.subr.bf16.mxu0 0
        %5569 = vmatpush1.bf16.xpose.msra.mxu0 0
        %5570 = vmatprep.mubr.bf16.mxu0 0
        %5571 = vmatmul.mubr.bf16.gmra.mrb[0].mxu0 %v5527
        %v5572 = vpop.f32.mrb[0].mxu0
        %v5573 = vadd.f32 0.0, %v5572
        %v5574 = vpop.f32.mrb[0].mxu0
        %v5575 = vpop.f32.mrb[0].mxu0
        %v5576 = vadd.f32 0.0, %v5575
        %v5577 = vpop.f32.mrb[0].mxu0
        %5578 = vmatprep.mubr.bf16.mxu0 0
        %5579 = vmatmul.mubr.bf16.gmra.mrb[0].mxu0 %v5530
        %v5580 = vpop.f32.mrb[0].mxu0
        %v5581 = vadd.f32 0.0, %v5580
        %v5582 = vpop.f32.mrb[0].mxu0
        %v5583 = vpop.f32.mrb[0].mxu0
        %v5584 = vadd.f32 0.0, %v5583
        %v5585 = vpop.f32.mrb[0].mxu0
        %5586 = vdwg.mxu0
        %v5588 = vsel %vm1401, %v5510, 0
        %v5591 = vsel %vm1401, %v5511, 0
        %v5594 = vsel %vm1401, %v5516, 0
        %v5597 = vsel %vm1401, %v5517, 0
        %5599 = vmatprep.subr.bf16.mxu0 0
        %5600 = vmatpush1.bf16.xpose.msra.mxu0 %v5594
        %5601 = vmatprep.subr.bf16.mxu0 0
        %5602 = vmatpush1.bf16.xpose.msra.mxu0 %v5597
        %5603 = vmatprep.subr.bf16.mxu0 0
        %5604 = vmatpush1.bf16.xpose.msra.mxu0 0
        %5605 = vmatprep.subr.bf16.mxu0 0
        %5606 = vmatpush1.bf16.xpose.msra.mxu0 0
        %5607 = vmatprep.subr.bf16.mxu0 0
        %5608 = vmatpush1.bf16.xpose.msra.mxu0 0
        %5609 = vmatprep.subr.bf16.mxu0 0
        %5610 = vmatpush1.bf16.xpose.msra.mxu0 0
        %5611 = vmatprep.subr.bf16.mxu0 0
        %5612 = vmatpush1.bf16.xpose.msra.mxu0 0
        %5613 = vmatprep.subr.bf16.mxu0 0
        %5614 = vmatpush1.bf16.xpose.msra.mxu0 0
        %5615 = vmatprep.subr.bf16.mxu0 0
        %5616 = vmatpush1.bf16.xpose.msra.mxu0 0
        %5617 = vmatprep.subr.bf16.mxu0 0
        %5618 = vmatpush1.bf16.xpose.msra.mxu0 0
        %5619 = vmatprep.subr.bf16.mxu0 0
        %5620 = vmatpush1.bf16.xpose.msra.mxu0 0
        %5621 = vmatprep.subr.bf16.mxu0 0
        %5622 = vmatpush1.bf16.xpose.msra.mxu0 0
        %5623 = vmatprep.subr.bf16.mxu0 0
        %5624 = vmatpush1.bf16.xpose.msra.mxu0 0
        %5625 = vmatprep.subr.bf16.mxu0 0
        %5626 = vmatpush1.bf16.xpose.msra.mxu0 0
        %5627 = vmatprep.subr.bf16.mxu0 0
        %5628 = vmatpush1.bf16.xpose.msra.mxu0 0
        %5629 = vmatprep.subr.bf16.mxu0 0
        %5630 = vmatpush1.bf16.xpose.msra.mxu0 0
        %5631 = vmatprep.mubr.bf16.mxu0 0
        %5632 = vmatmul.mubr.bf16.gmra.mrb[0].mxu0 %v5588
        %v5633 = vpop.f32.mrb[0].mxu0
        %v5634 = vadd.f32 0.0, %v5633
        %v5635 = vpop.f32.mrb[0].mxu0
        %v5636 = vpop.f32.mrb[0].mxu0
        %v5637 = vadd.f32 0.0, %v5636
        %v5638 = vpop.f32.mrb[0].mxu0
        %5639 = vmatprep.mubr.bf16.mxu0 0
        %5640 = vmatmul.mubr.bf16.gmra.mrb[0].mxu0 %v5591
        %v5641 = vpop.f32.mrb[0].mxu0
        %v5642 = vadd.f32 0.0, %v5641
        %v5643 = vpop.f32.mrb[0].mxu0
        %v5644 = vpop.f32.mrb[0].mxu0
        %v5645 = vadd.f32 0.0, %v5644
        %v5646 = vpop.f32.mrb[0].mxu0
        %5647 = vdwg.mxu0
        %v5649 = vsel %vm1401, %v5512, 0
        %v5652 = vsel %vm1401, %v5513, 0
        %v5655 = vsel %vm1401, %v5518, 0
        %v5658 = vsel %vm1401, %v5519, 0
        %5660 = vmatprep.subr.bf16.mxu0 0
        %5661 = vmatpush1.bf16.xpose.msra.mxu0 %v5655
        %5662 = vmatprep.subr.bf16.mxu0 0
        %5663 = vmatpush1.bf16.xpose.msra.mxu0 %v5658
        %5664 = vmatprep.subr.bf16.mxu0 0
        %5665 = vmatpush1.bf16.xpose.msra.mxu0 0
        %5666 = vmatprep.subr.bf16.mxu0 0
        %5667 = vmatpush1.bf16.xpose.msra.mxu0 0
        %5668 = vmatprep.subr.bf16.mxu0 0
        %5669 = vmatpush1.bf16.xpose.msra.mxu0 0
        %5670 = vmatprep.subr.bf16.mxu0 0
        %5671 = vmatpush1.bf16.xpose.msra.mxu0 0
        %5672 = vmatprep.subr.bf16.mxu0 0
        %5673 = vmatpush1.bf16.xpose.msra.mxu0 0
        %5674 = vmatprep.subr.bf16.mxu0 0
        %5675 = vmatpush1.bf16.xpose.msra.mxu0 0
        %5676 = vmatprep.subr.bf16.mxu0 0
        %5677 = vmatpush1.bf16.xpose.msra.mxu0 0
        %5678 = vmatprep.subr.bf16.mxu0 0
        %5679 = vmatpush1.bf16.xpose.msra.mxu0 0
        %5680 = vmatprep.subr.bf16.mxu0 0
        %5681 = vmatpush1.bf16.xpose.msra.mxu0 0
        %5682 = vmatprep.subr.bf16.mxu0 0
        %5683 = vmatpush1.bf16.xpose.msra.mxu0 0
        %5684 = vmatprep.subr.bf16.mxu0 0
        %5685 = vmatpush1.bf16.xpose.msra.mxu0 0
        %5686 = vmatprep.subr.bf16.mxu0 0
        %5687 = vmatpush1.bf16.xpose.msra.mxu0 0
        %5688 = vmatprep.subr.bf16.mxu0 0
        %5689 = vmatpush1.bf16.xpose.msra.mxu0 0
        %5690 = vmatprep.subr.bf16.mxu0 0
        %5691 = vmatpush1.bf16.xpose.msra.mxu0 0
        %5692 = vmatprep.mubr.bf16.mxu0 0
        %5693 = vmatmul.mubr.bf16.gmra.mrb[0].mxu0 %v5649
        %v5694 = vpop.f32.mrb[0].mxu0
        %v5695 = vadd.f32 0.0, %v5694
        %v5696 = vpop.f32.mrb[0].mxu0
        %v5697 = vpop.f32.mrb[0].mxu0
        %v5698 = vadd.f32 0.0, %v5697
        %v5699 = vpop.f32.mrb[0].mxu0
        %5700 = vmatprep.mubr.bf16.mxu0 0
        %5701 = vmatmul.mubr.bf16.gmra.mrb[0].mxu0 %v5652
        %v5702 = vpop.f32.mrb[0].mxu0
        %v5703 = vadd.f32 0.0, %v5702
        %v5704 = vpop.f32.mrb[0].mxu0
        %v5705 = vpop.f32.mrb[0].mxu0
        %v5706 = vadd.f32 0.0, %v5705
        %v5707 = vpop.f32.mrb[0].mxu0
        %5708 = vdwg.mxu0
        %v5709 = vmul.f32 %v5573, 0.17677669
        %v5710 = vmul.f32 %v5576, 0.17677669
        %v5711 = vmul.f32 %v5581, 0.17677669
        %v5712 = vmul.f32 %v5584, 0.17677669
        %v5713 = vmul.f32 %v5634, 0.17677669
        %v5714 = vmul.f32 %v5637, 0.17677669
        %v5715 = vmul.f32 %v5642, 0.17677669
        %v5716 = vmul.f32 %v5645, 0.17677669
        %v5717 = vmul.f32 %v5695, 0.17677669
        %v5718 = vmul.f32 %v5698, 0.17677669
        %v5719 = vmul.f32 %v5703, 0.17677669
        %v5720 = vmul.f32 %v5706, 0.17677669
        %v5721 = vadd.f32 %v5709, %v1601
        %v5722 = vadd.f32 %v5710, %v1601
        %v5723 = vadd.f32 %v5711, %v1601
        %v5724 = vadd.f32 %v5712, %v1601
        %v5725 = vadd.f32 %v5713, %v1601
        %v5726 = vadd.f32 %v5714, %v1601
        %v5727 = vadd.f32 %v5715, %v1601
        %v5728 = vadd.f32 %v5716, %v1601
        %v5729 = vadd.f32 %v5717, %v1601
        %v5730 = vadd.f32 %v5718, %v1601
        %v5731 = vadd.f32 %v5719, %v1601
        %v5732 = vadd.f32 %v5720, %v1601
        %v5733 = vsel %vm1401, %v5721, -inf
        %5734 = vmax.xlane.f32.xlu0 %v5733
        %v5735 = vpop.xlane.xlu0 %5734
        %v5736 = vsel %vm1401, %v5722, -inf
        %5737 = vmax.xlane.f32.xlu0 %v5736
        %v5738 = vpop.xlane.xlu0 %5737
        %v5739 = vsel %vm1401, %v5723, -inf
        %5740 = vmax.xlane.f32.xlu0 %v5739
        %v5741 = vpop.xlane.xlu0 %5740
        %v5742 = vsel %vm1401, %v5724, -inf
        %5743 = vmax.xlane.f32.xlu0 %v5742
        %v5744 = vpop.xlane.xlu0 %5743
        %v5745 = vsel %vm1401, %v5725, -inf
        %5746 = vmax.xlane.f32.xlu0 %v5745
        %v5747 = vpop.xlane.xlu0 %5746
        %v5748 = vsel %vm1401, %v5726, -inf
        %5749 = vmax.xlane.f32.xlu0 %v5748
        %v5750 = vpop.xlane.xlu0 %5749
        %v5751 = vsel %vm1401, %v5727, -inf
        %5752 = vmax.xlane.f32.xlu0 %v5751
        %v5753 = vpop.xlane.xlu0 %5752
        %v5754 = vsel %vm1401, %v5728, -inf
        %5755 = vmax.xlane.f32.xlu0 %v5754
        %v5756 = vpop.xlane.xlu0 %5755
        %v5757 = vsel %vm1401, %v5729, -inf
        %5758 = vmax.xlane.f32.xlu0 %v5757
        %v5759 = vpop.xlane.xlu0 %5758
        %v5760 = vsel %vm1401, %v5730, -inf
        %5761 = vmax.xlane.f32.xlu0 %v5760
        %v5762 = vpop.xlane.xlu0 %5761
        %v5763 = vsel %vm1401, %v5731, -inf
        %5764 = vmax.xlane.f32.xlu0 %v5763
        %v5765 = vpop.xlane.xlu0 %5764
        %v5766 = vsel %vm1401, %v5732, -inf
        %5767 = vmax.xlane.f32.xlu0 %v5766
        %v5768 = vpop.xlane.xlu0 %5767
        %v5769 = vsub.f32 %v5721, %v5735
        %v5770 = vsub.f32 %v5722, %v5738
        %v5771 = vsub.f32 %v5723, %v5741
        %v5772 = vsub.f32 %v5724, %v5744
        %v5773 = vsub.f32 %v5725, %v5747
        %v5774 = vsub.f32 %v5726, %v5750
        %v5775 = vsub.f32 %v5727, %v5753
        %v5776 = vsub.f32 %v5728, %v5756
        %v5777 = vsub.f32 %v5729, %v5759
        %v5778 = vsub.f32 %v5730, %v5762
        %v5779 = vsub.f32 %v5731, %v5765
        %v5780 = vsub.f32 %v5732, %v5768
        %v5781 = vmul.f32 %v5769, 1.442695
        %v5782 = vpow.pop %v5781
        %v5783 = vmul.f32 %v5770, 1.442695
        %v5784 = vpow.pop %v5783
        %v5785 = vmul.f32 %v5771, 1.442695
        %v5786 = vpow.pop %v5785
        %v5787 = vmul.f32 %v5772, 1.442695
        %v5788 = vpow.pop %v5787
        %v5789 = vmul.f32 %v5773, 1.442695
        %v5790 = vpow.pop %v5789
        %v5791 = vmul.f32 %v5774, 1.442695
        %v5792 = vpow.pop %v5791
        %v5793 = vmul.f32 %v5775, 1.442695
        %v5794 = vpow.pop %v5793
        %v5795 = vmul.f32 %v5776, 1.442695
        %v5796 = vpow.pop %v5795
        %v5797 = vmul.f32 %v5777, 1.442695
        %v5798 = vpow.pop %v5797
        %v5799 = vmul.f32 %v5778, 1.442695
        %v5800 = vpow.pop %v5799
        %v5801 = vmul.f32 %v5779, 1.442695
        %v5802 = vpow.pop %v5801
        %v5803 = vmul.f32 %v5780, 1.442695
        %v5804 = vpow.pop %v5803
        %v5805 = vsel %vm1401, %v5782, 0.0
        %5806 = vadd.xlane.f32.xlu0 %v5805
        %v5807 = vpop.xlane.xlu0 %5806
        %v5808 = vsel %vm1401, %v5784, 0.0
        %5809 = vadd.xlane.f32.xlu0 %v5808
        %v5810 = vpop.xlane.xlu0 %5809
        %v5811 = vsel %vm1401, %v5786, 0.0
        %5812 = vadd.xlane.f32.xlu0 %v5811
        %v5813 = vpop.xlane.xlu0 %5812
        %v5814 = vsel %vm1401, %v5788, 0.0
        %5815 = vadd.xlane.f32.xlu0 %v5814
        %v5816 = vpop.xlane.xlu0 %5815
        %v5817 = vsel %vm1401, %v5790, 0.0
        %5818 = vadd.xlane.f32.xlu0 %v5817
        %v5819 = vpop.xlane.xlu0 %5818
        %v5820 = vsel %vm1401, %v5792, 0.0
        %5821 = vadd.xlane.f32.xlu0 %v5820
        %v5822 = vpop.xlane.xlu0 %5821
        %v5823 = vsel %vm1401, %v5794, 0.0
        %5824 = vadd.xlane.f32.xlu0 %v5823
        %v5825 = vpop.xlane.xlu0 %5824
        %v5826 = vsel %vm1401, %v5796, 0.0
        %5827 = vadd.xlane.f32.xlu0 %v5826
        %v5828 = vpop.xlane.xlu0 %5827
        %v5829 = vsel %vm1401, %v5798, 0.0
        %5830 = vadd.xlane.f32.xlu0 %v5829
        %v5831 = vpop.xlane.xlu0 %5830
        %v5832 = vsel %vm1401, %v5800, 0.0
        %5833 = vadd.xlane.f32.xlu0 %v5832
        %v5834 = vpop.xlane.xlu0 %5833
        %v5835 = vsel %vm1401, %v5802, 0.0
        %5836 = vadd.xlane.f32.xlu0 %v5835
        %v5837 = vpop.xlane.xlu0 %5836
        %v5838 = vsel %vm1401, %v5804, 0.0
        %5839 = vadd.xlane.f32.xlu0 %v5838
        %v5840 = vpop.xlane.xlu0 %5839
        %v5841 = vrcp.pop %v5807
        %v5842 = vmul.f32 %v5782, %v5841
        %v5843 = vrcp.pop %v5810
        %v5844 = vmul.f32 %v5784, %v5843
        %v5845 = vrcp.pop %v5813
        %v5846 = vmul.f32 %v5786, %v5845
        %v5847 = vrcp.pop %v5816
        %v5848 = vmul.f32 %v5788, %v5847
        %v5849 = vrcp.pop %v5819
        %v5850 = vmul.f32 %v5790, %v5849
        %v5851 = vrcp.pop %v5822
        %v5852 = vmul.f32 %v5792, %v5851
        %v5853 = vrcp.pop %v5825
        %v5854 = vmul.f32 %v5794, %v5853
        %v5855 = vrcp.pop %v5828
        %v5856 = vmul.f32 %v5796, %v5855
        %v5857 = vrcp.pop %v5831
        %v5858 = vmul.f32 %v5798, %v5857
        %v5859 = vrcp.pop %v5834
        %v5860 = vmul.f32 %v5800, %v5859
        %v5861 = vrcp.pop %v5837
        %v5862 = vmul.f32 %v5802, %v5861
        %v5863 = vrcp.pop %v5840
        %v5864 = vmul.f32 %v5804, %v5863
        %v5865 = vpack.c.bf16 %v5844, %v5842
        %v5866 = vpack.c.bf16 %v5848, %v5846
        %v5867 = vpack.c.bf16 %v5852, %v5850
        %v5868 = vpack.c.bf16 %v5856, %v5854
        %v5869 = vpack.c.bf16 %v5860, %v5858
        %v5870 = vpack.c.bf16 %v5864, %v5862
        %v5872 = vsel %vm1401, %v5865, 0
        %v5875 = vsel %vm1401, %v5866, 0
        %5877 = vmatprep.subr.bf16.mxu0 0
        %5878 = vmatpush1.bf16.msra.mxu0 %v5520
        %5879 = vmatprep.subr.bf16.mxu0 0
        %5880 = vmatpush1.bf16.msra.mxu0 %v5521
        %5881 = vmatprep.subr.bf16.mxu0 0
        %5882 = vmatpush1.bf16.msra.mxu0 0
        %5883 = vmatprep.subr.bf16.mxu0 0
        %5884 = vmatpush1.bf16.msra.mxu0 0
        %5885 = vmatprep.subr.bf16.mxu0 0
        %5886 = vmatpush1.bf16.msra.mxu0 0
        %5887 = vmatprep.subr.bf16.mxu0 0
        %5888 = vmatpush1.bf16.msra.mxu0 0
        %5889 = vmatprep.subr.bf16.mxu0 0
        %5890 = vmatpush1.bf16.msra.mxu0 0
        %5891 = vmatprep.subr.bf16.mxu0 0
        %5892 = vmatpush1.bf16.msra.mxu0 0
        %5893 = vmatprep.subr.bf16.mxu0 0
        %5894 = vmatpush1.bf16.msra.mxu0 0
        %5895 = vmatprep.subr.bf16.mxu0 0
        %5896 = vmatpush1.bf16.msra.mxu0 0
        %5897 = vmatprep.subr.bf16.mxu0 0
        %5898 = vmatpush1.bf16.msra.mxu0 0
        %5899 = vmatprep.subr.bf16.mxu0 0
        %5900 = vmatpush1.bf16.msra.mxu0 0
        %5901 = vmatprep.subr.bf16.mxu0 0
        %5902 = vmatpush1.bf16.msra.mxu0 0
        %5903 = vmatprep.subr.bf16.mxu0 0
        %5904 = vmatpush1.bf16.msra.mxu0 0
        %5905 = vmatprep.subr.bf16.mxu0 0
        %5906 = vmatpush1.bf16.msra.mxu0 0
        %5907 = vmatprep.subr.bf16.mxu0 0
        %5908 = vmatpush1.bf16.msra.mxu0 0
        %5909 = vmatprep.mubr.bf16.mxu0 0
        %5910 = vmatmul.mubr.bf16.gmra.mrb[0].mxu0 %v5872
        %v5911 = vpop.f32.mrb[0].mxu0
        %v5912 = vadd.f32 0.0, %v5911
        %v5913 = vpop.f32.mrb[0].mxu0
        %v5914 = vpop.f32.mrb[0].mxu0
        %v5915 = vadd.f32 0.0, %v5914
        %v5916 = vpop.f32.mrb[0].mxu0
        %5917 = vmatprep.mubr.bf16.mxu0 0
        %5918 = vmatmul.mubr.bf16.gmra.mrb[0].mxu0 %v5875
        %v5919 = vpop.f32.mrb[0].mxu0
        %v5920 = vadd.f32 0.0, %v5919
        %v5921 = vpop.f32.mrb[0].mxu0
        %v5922 = vpop.f32.mrb[0].mxu0
        %v5923 = vadd.f32 0.0, %v5922
        %v5924 = vpop.f32.mrb[0].mxu0
        %5925 = vdwg.mxu0
        %v5927 = vsel %vm1401, %v5867, 0
        %v5930 = vsel %vm1401, %v5868, 0
        %5932 = vmatprep.subr.bf16.mxu0 0
        %5933 = vmatpush1.bf16.msra.mxu0 %v5522
        %5934 = vmatprep.subr.bf16.mxu0 0
        %5935 = vmatpush1.bf16.msra.mxu0 %v5523
        %5936 = vmatprep.subr.bf16.mxu0 0
        %5937 = vmatpush1.bf16.msra.mxu0 0
        %5938 = vmatprep.subr.bf16.mxu0 0
        %5939 = vmatpush1.bf16.msra.mxu0 0
        %5940 = vmatprep.subr.bf16.mxu0 0
        %5941 = vmatpush1.bf16.msra.mxu0 0
        %5942 = vmatprep.subr.bf16.mxu0 0
        %5943 = vmatpush1.bf16.msra.mxu0 0
        %5944 = vmatprep.subr.bf16.mxu0 0
        %5945 = vmatpush1.bf16.msra.mxu0 0
        %5946 = vmatprep.subr.bf16.mxu0 0
        %5947 = vmatpush1.bf16.msra.mxu0 0
        %5948 = vmatprep.subr.bf16.mxu0 0
        %5949 = vmatpush1.bf16.msra.mxu0 0
        %5950 = vmatprep.subr.bf16.mxu0 0
        %5951 = vmatpush1.bf16.msra.mxu0 0
        %5952 = vmatprep.subr.bf16.mxu0 0
        %5953 = vmatpush1.bf16.msra.mxu0 0
        %5954 = vmatprep.subr.bf16.mxu0 0
        %5955 = vmatpush1.bf16.msra.mxu0 0
        %5956 = vmatprep.subr.bf16.mxu0 0
        %5957 = vmatpush1.bf16.msra.mxu0 0
        %5958 = vmatprep.subr.bf16.mxu0 0
        %5959 = vmatpush1.bf16.msra.mxu0 0
        %5960 = vmatprep.subr.bf16.mxu0 0
        %5961 = vmatpush1.bf16.msra.mxu0 0
        %5962 = vmatprep.subr.bf16.mxu0 0
        %5963 = vmatpush1.bf16.msra.mxu0 0
        %5964 = vmatprep.mubr.bf16.mxu0 0
        %5965 = vmatmul.mubr.bf16.gmra.mrb[0].mxu0 %v5927
        %v5966 = vpop.f32.mrb[0].mxu0
        %v5967 = vadd.f32 0.0, %v5966
        %v5968 = vpop.f32.mrb[0].mxu0
        %v5969 = vpop.f32.mrb[0].mxu0
        %v5970 = vadd.f32 0.0, %v5969
        %v5971 = vpop.f32.mrb[0].mxu0
        %5972 = vmatprep.mubr.bf16.mxu0 0
        %5973 = vmatmul.mubr.bf16.gmra.mrb[0].mxu0 %v5930
        %v5974 = vpop.f32.mrb[0].mxu0
        %v5975 = vadd.f32 0.0, %v5974
        %v5976 = vpop.f32.mrb[0].mxu0
        %v5977 = vpop.f32.mrb[0].mxu0
        %v5978 = vadd.f32 0.0, %v5977
        %v5979 = vpop.f32.mrb[0].mxu0
        %5980 = vdwg.mxu0
        %v5982 = vsel %vm1401, %v5869, 0
        %v5985 = vsel %vm1401, %v5870, 0
        %5987 = vmatprep.subr.bf16.mxu0 0
        %5988 = vmatpush1.bf16.msra.mxu0 %v5524
        %5989 = vmatprep.subr.bf16.mxu0 0
        %5990 = vmatpush1.bf16.msra.mxu0 %v5525
        %5991 = vmatprep.subr.bf16.mxu0 0
        %5992 = vmatpush1.bf16.msra.mxu0 0
        %5993 = vmatprep.subr.bf16.mxu0 0
        %5994 = vmatpush1.bf16.msra.mxu0 0
        %5995 = vmatprep.subr.bf16.mxu0 0
        %5996 = vmatpush1.bf16.msra.mxu0 0
        %5997 = vmatprep.subr.bf16.mxu0 0
        %5998 = vmatpush1.bf16.msra.mxu0 0
        %5999 = vmatprep.subr.bf16.mxu0 0
        %6000 = vmatpush1.bf16.msra.mxu0 0
        %6001 = vmatprep.subr.bf16.mxu0 0
        %6002 = vmatpush1.bf16.msra.mxu0 0
        %6003 = vmatprep.subr.bf16.mxu0 0
        %6004 = vmatpush1.bf16.msra.mxu0 0
        %6005 = vmatprep.subr.bf16.mxu0 0
        %6006 = vmatpush1.bf16.msra.mxu0 0
        %6007 = vmatprep.subr.bf16.mxu0 0
        %6008 = vmatpush1.bf16.msra.mxu0 0
        %6009 = vmatprep.subr.bf16.mxu0 0
        %6010 = vmatpush1.bf16.msra.mxu0 0
        %6011 = vmatprep.subr.bf16.mxu0 0
        %6012 = vmatpush1.bf16.msra.mxu0 0
        %6013 = vmatprep.subr.bf16.mxu0 0
        %6014 = vmatpush1.bf16.msra.mxu0 0
        %6015 = vmatprep.subr.bf16.mxu0 0
        %6016 = vmatpush1.bf16.msra.mxu0 0
        %6017 = vmatprep.subr.bf16.mxu0 0
        %6018 = vmatpush1.bf16.msra.mxu0 0
        %6019 = vmatprep.mubr.bf16.mxu0 0
        %6020 = vmatmul.mubr.bf16.gmra.mrb[0].mxu0 %v5982
        %v6021 = vpop.f32.mrb[0].mxu0
        %v6022 = vadd.f32 0.0, %v6021
        %v6023 = vpop.f32.mrb[0].mxu0
        %v6024 = vpop.f32.mrb[0].mxu0
        %v6025 = vadd.f32 0.0, %v6024
        %v6026 = vpop.f32.mrb[0].mxu0
        %6027 = vmatprep.mubr.bf16.mxu0 0
        %6028 = vmatmul.mubr.bf16.gmra.mrb[0].mxu0 %v5985
        %v6029 = vpop.f32.mrb[0].mxu0
        %v6030 = vadd.f32 0.0, %v6029
        %v6031 = vpop.f32.mrb[0].mxu0
        %v6032 = vpop.f32.mrb[0].mxu0
        %v6033 = vadd.f32 0.0, %v6032
        %v6034 = vpop.f32.mrb[0].mxu0
        %6035 = vdwg.mxu0
        %v6036 = vpack.c.bf16 %v5915, %v5912
        %v6037 = vpack.c.bf16 %v5923, %v5920
        %v6038 = vpack.c.bf16 %v5970, %v5967
        %v6039 = vpack.c.bf16 %v5978, %v5975
        %v6040 = vpack.c.bf16 %v6025, %v6022
        %v6041 = vpack.c.bf16 %v6033, %v6030
        %6044 = vrot.lane.b32.xlu0 %v5508, 96
        %v6045 = vpop.permute.xlu0 %6044
        %6046 = vrot.lane.b32.xlu0 %v5509, 96
        %v6047 = vpop.permute.xlu0 %6046
        %6050 = vrot.lane.b32.xlu0 %v5514, 96
        %v6051 = vpop.permute.xlu0 %6050
        %6052 = vrot.lane.b32.xlu0 %v5515, 96
        %v6053 = vpop.permute.xlu0 %6052
        %v6055 = vsel %vm1401, %v6045, 0
        %v6058 = vsel %vm1401, %v6047, 0
        %v6061 = vsel %vm1401, %v6051, 0
        %v6064 = vsel %vm1401, %v6053, 0
        %6066 = vmatprep.subr.bf16.mxu0 0
        %6067 = vmatpush1.bf16.xpose.msra.mxu0 %v6061
        %6068 = vmatprep.subr.bf16.mxu0 0
        %6069 = vmatpush1.bf16.xpose.msra.mxu0 %v6064
        %6070 = vmatprep.subr.bf16.mxu0 0
        %6071 = vmatpush1.bf16.xpose.msra.mxu0 0
        %6072 = vmatprep.subr.bf16.mxu0 0
        %6073 = vmatpush1.bf16.xpose.msra.mxu0 0
        %6074 = vmatprep.subr.bf16.mxu0 0
        %6075 = vmatpush1.bf16.xpose.msra.mxu0 0
        %6076 = vmatprep.subr.bf16.mxu0 0
        %6077 = vmatpush1.bf16.xpose.msra.mxu0 0
        %6078 = vmatprep.subr.bf16.mxu0 0
        %6079 = vmatpush1.bf16.xpose.msra.mxu0 0
        %6080 = vmatprep.subr.bf16.mxu0 0
        %6081 = vmatpush1.bf16.xpose.msra.mxu0 0
        %6082 = vmatprep.subr.bf16.mxu0 0
        %6083 = vmatpush1.bf16.xpose.msra.mxu0 0
        %6084 = vmatprep.subr.bf16.mxu0 0
        %6085 = vmatpush1.bf16.xpose.msra.mxu0 0
        %6086 = vmatprep.subr.bf16.mxu0 0
        %6087 = vmatpush1.bf16.xpose.msra.mxu0 0
        %6088 = vmatprep.subr.bf16.mxu0 0
        %6089 = vmatpush1.bf16.xpose.msra.mxu0 0
        %6090 = vmatprep.subr.bf16.mxu0 0
        %6091 = vmatpush1.bf16.xpose.msra.mxu0 0
        %6092 = vmatprep.subr.bf16.mxu0 0
        %6093 = vmatpush1.bf16.xpose.msra.mxu0 0
        %6094 = vmatprep.subr.bf16.mxu0 0
        %6095 = vmatpush1.bf16.xpose.msra.mxu0 0
        %6096 = vmatprep.subr.bf16.mxu0 0
        %6097 = vmatpush1.bf16.xpose.msra.mxu0 0
        %6098 = vmatprep.mubr.bf16.mxu0 0
        %6099 = vmatmul.mubr.bf16.gmra.mrb[0].mxu0 %v6055
        %v6100 = vpop.f32.mrb[0].mxu0
        %v6101 = vadd.f32 0.0, %v6100
        %v6102 = vpop.f32.mrb[0].mxu0
        %v6103 = vpop.f32.mrb[0].mxu0
        %v6104 = vadd.f32 0.0, %v6103
        %v6105 = vpop.f32.mrb[0].mxu0
        %6106 = vmatprep.mubr.bf16.mxu0 0
        %6107 = vmatmul.mubr.bf16.gmra.mrb[0].mxu0 %v6058
        %v6108 = vpop.f32.mrb[0].mxu0
        %v6109 = vadd.f32 0.0, %v6108
        %v6110 = vpop.f32.mrb[0].mxu0
        %v6111 = vpop.f32.mrb[0].mxu0
        %v6112 = vadd.f32 0.0, %v6111
        %v6113 = vpop.f32.mrb[0].mxu0
        %6114 = vdwg.mxu0
        %6117 = vrot.lane.b32.xlu0 %v5510, 96
        %v6118 = vpop.permute.xlu0 %6117
        %6119 = vrot.lane.b32.xlu0 %v5511, 96
        %v6120 = vpop.permute.xlu0 %6119
        %6123 = vrot.lane.b32.xlu0 %v5516, 96
        %v6124 = vpop.permute.xlu0 %6123
        %6125 = vrot.lane.b32.xlu0 %v5517, 96
        %v6126 = vpop.permute.xlu0 %6125
        %v6128 = vsel %vm1401, %v6118, 0
        %v6131 = vsel %vm1401, %v6120, 0
        %v6134 = vsel %vm1401, %v6124, 0
        %v6137 = vsel %vm1401, %v6126, 0
        %6139 = vmatprep.subr.bf16.mxu0 0
        %6140 = vmatpush1.bf16.xpose.msra.mxu0 %v6134
        %6141 = vmatprep.subr.bf16.mxu0 0
        %6142 = vmatpush1.bf16.xpose.msra.mxu0 %v6137
        %6143 = vmatprep.subr.bf16.mxu0 0
        %6144 = vmatpush1.bf16.xpose.msra.mxu0 0
        %6145 = vmatprep.subr.bf16.mxu0 0
        %6146 = vmatpush1.bf16.xpose.msra.mxu0 0
        %6147 = vmatprep.subr.bf16.mxu0 0
        %6148 = vmatpush1.bf16.xpose.msra.mxu0 0
        %6149 = vmatprep.subr.bf16.mxu0 0
        %6150 = vmatpush1.bf16.xpose.msra.mxu0 0
        %6151 = vmatprep.subr.bf16.mxu0 0
        %6152 = vmatpush1.bf16.xpose.msra.mxu0 0
        %6153 = vmatprep.subr.bf16.mxu0 0
        %6154 = vmatpush1.bf16.xpose.msra.mxu0 0
        %6155 = vmatprep.subr.bf16.mxu0 0
        %6156 = vmatpush1.bf16.xpose.msra.mxu0 0
        %6157 = vmatprep.subr.bf16.mxu0 0
        %6158 = vmatpush1.bf16.xpose.msra.mxu0 0
        %6159 = vmatprep.subr.bf16.mxu0 0
        %6160 = vmatpush1.bf16.xpose.msra.mxu0 0
        %6161 = vmatprep.subr.bf16.mxu0 0
        %6162 = vmatpush1.bf16.xpose.msra.mxu0 0
        %6163 = vmatprep.subr.bf16.mxu0 0
        %6164 = vmatpush1.bf16.xpose.msra.mxu0 0
        %6165 = vmatprep.subr.bf16.mxu0 0
        %6166 = vmatpush1.bf16.xpose.msra.mxu0 0
        %6167 = vmatprep.subr.bf16.mxu0 0
        %6168 = vmatpush1.bf16.xpose.msra.mxu0 0
        %6169 = vmatprep.subr.bf16.mxu0 0
        %6170 = vmatpush1.bf16.xpose.msra.mxu0 0
        %6171 = vmatprep.mubr.bf16.mxu0 0
        %6172 = vmatmul.mubr.bf16.gmra.mrb[0].mxu0 %v6128
        %v6173 = vpop.f32.mrb[0].mxu0
        %v6174 = vadd.f32 0.0, %v6173
        %v6175 = vpop.f32.mrb[0].mxu0
        %v6176 = vpop.f32.mrb[0].mxu0
        %v6177 = vadd.f32 0.0, %v6176
        %v6178 = vpop.f32.mrb[0].mxu0
        %6179 = vmatprep.mubr.bf16.mxu0 0
        %6180 = vmatmul.mubr.bf16.gmra.mrb[0].mxu0 %v6131
        %v6181 = vpop.f32.mrb[0].mxu0
        %v6182 = vadd.f32 0.0, %v6181
        %v6183 = vpop.f32.mrb[0].mxu0
        %v6184 = vpop.f32.mrb[0].mxu0
        %v6185 = vadd.f32 0.0, %v6184
        %v6186 = vpop.f32.mrb[0].mxu0
        %6187 = vdwg.mxu0
        %6190 = vrot.lane.b32.xlu0 %v5512, 96
        %v6191 = vpop.permute.xlu0 %6190
        %6192 = vrot.lane.b32.xlu0 %v5513, 96
        %v6193 = vpop.permute.xlu0 %6192
        %6196 = vrot.lane.b32.xlu0 %v5518, 96
        %v6197 = vpop.permute.xlu0 %6196
        %6198 = vrot.lane.b32.xlu0 %v5519, 96
        %v6199 = vpop.permute.xlu0 %6198
        %v6201 = vsel %vm1401, %v6191, 0
        %v6204 = vsel %vm1401, %v6193, 0
        %v6207 = vsel %vm1401, %v6197, 0
        %v6210 = vsel %vm1401, %v6199, 0
        %6212 = vmatprep.subr.bf16.mxu0 0
        %6213 = vmatpush1.bf16.xpose.msra.mxu0 %v6207
        %6214 = vmatprep.subr.bf16.mxu0 0
        %6215 = vmatpush1.bf16.xpose.msra.mxu0 %v6210
        %6216 = vmatprep.subr.bf16.mxu0 0
        %6217 = vmatpush1.bf16.xpose.msra.mxu0 0
        %6218 = vmatprep.subr.bf16.mxu0 0
        %6219 = vmatpush1.bf16.xpose.msra.mxu0 0
        %6220 = vmatprep.subr.bf16.mxu0 0
        %6221 = vmatpush1.bf16.xpose.msra.mxu0 0
        %6222 = vmatprep.subr.bf16.mxu0 0
        %6223 = vmatpush1.bf16.xpose.msra.mxu0 0
        %6224 = vmatprep.subr.bf16.mxu0 0
        %6225 = vmatpush1.bf16.xpose.msra.mxu0 0
        %6226 = vmatprep.subr.bf16.mxu0 0
        %6227 = vmatpush1.bf16.xpose.msra.mxu0 0
        %6228 = vmatprep.subr.bf16.mxu0 0
        %6229 = vmatpush1.bf16.xpose.msra.mxu0 0
        %6230 = vmatprep.subr.bf16.mxu0 0
        %6231 = vmatpush1.bf16.xpose.msra.mxu0 0
        %6232 = vmatprep.subr.bf16.mxu0 0
        %6233 = vmatpush1.bf16.xpose.msra.mxu0 0
        %6234 = vmatprep.subr.bf16.mxu0 0
        %6235 = vmatpush1.bf16.xpose.msra.mxu0 0
        %6236 = vmatprep.subr.bf16.mxu0 0
        %6237 = vmatpush1.bf16.xpose.msra.mxu0 0
        %6238 = vmatprep.subr.bf16.mxu0 0
        %6239 = vmatpush1.bf16.xpose.msra.mxu0 0
        %6240 = vmatprep.subr.bf16.mxu0 0
        %6241 = vmatpush1.bf16.xpose.msra.mxu0 0
        %6242 = vmatprep.subr.bf16.mxu0 0
        %6243 = vmatpush1.bf16.xpose.msra.mxu0 0
        %6244 = vmatprep.mubr.bf16.mxu0 0
        %6245 = vmatmul.mubr.bf16.gmra.mrb[0].mxu0 %v6201
        %v6246 = vpop.f32.mrb[0].mxu0
        %v6247 = vadd.f32 0.0, %v6246
        %v6248 = vpop.f32.mrb[0].mxu0
        %v6249 = vpop.f32.mrb[0].mxu0
        %v6250 = vadd.f32 0.0, %v6249
        %v6251 = vpop.f32.mrb[0].mxu0
        %6252 = vmatprep.mubr.bf16.mxu0 0
        %6253 = vmatmul.mubr.bf16.gmra.mrb[0].mxu0 %v6204
        %v6254 = vpop.f32.mrb[0].mxu0
        %v6255 = vadd.f32 0.0, %v6254
        %v6256 = vpop.f32.mrb[0].mxu0
        %v6257 = vpop.f32.mrb[0].mxu0
        %v6258 = vadd.f32 0.0, %v6257
        %v6259 = vpop.f32.mrb[0].mxu0
        %6260 = vdwg.mxu0
        %v6261 = vmul.f32 %v6101, 0.17677669
        %v6262 = vmul.f32 %v6104, 0.17677669
        %v6263 = vmul.f32 %v6109, 0.17677669
        %v6264 = vmul.f32 %v6112, 0.17677669
        %v6265 = vmul.f32 %v6174, 0.17677669
        %v6266 = vmul.f32 %v6177, 0.17677669
        %v6267 = vmul.f32 %v6182, 0.17677669
        %v6268 = vmul.f32 %v6185, 0.17677669
        %v6269 = vmul.f32 %v6247, 0.17677669
        %v6270 = vmul.f32 %v6250, 0.17677669
        %v6271 = vmul.f32 %v6255, 0.17677669
        %v6272 = vmul.f32 %v6258, 0.17677669
        %v6273 = vadd.f32 %v6261, %v1601
        %v6274 = vadd.f32 %v6262, %v1601
        %v6275 = vadd.f32 %v6263, %v1601
        %v6276 = vadd.f32 %v6264, %v1601
        %v6277 = vadd.f32 %v6265, %v1601
        %v6278 = vadd.f32 %v6266, %v1601
        %v6279 = vadd.f32 %v6267, %v1601
        %v6280 = vadd.f32 %v6268, %v1601
        %v6281 = vadd.f32 %v6269, %v1601
        %v6282 = vadd.f32 %v6270, %v1601
        %v6283 = vadd.f32 %v6271, %v1601
        %v6284 = vadd.f32 %v6272, %v1601
        %v6285 = vsel %vm1401, %v6273, -inf
        %6286 = vmax.xlane.f32.xlu0 %v6285
        %v6287 = vpop.xlane.xlu0 %6286
        %v6288 = vsel %vm1401, %v6274, -inf
        %6289 = vmax.xlane.f32.xlu0 %v6288
        %v6290 = vpop.xlane.xlu0 %6289
        %v6291 = vsel %vm1401, %v6275, -inf
        %6292 = vmax.xlane.f32.xlu0 %v6291
        %v6293 = vpop.xlane.xlu0 %6292
        %v6294 = vsel %vm1401, %v6276, -inf
        %6295 = vmax.xlane.f32.xlu0 %v6294
        %v6296 = vpop.xlane.xlu0 %6295
        %v6297 = vsel %vm1401, %v6277, -inf
        %6298 = vmax.xlane.f32.xlu0 %v6297
        %v6299 = vpop.xlane.xlu0 %6298
        %v6300 = vsel %vm1401, %v6278, -inf
        %6301 = vmax.xlane.f32.xlu0 %v6300
        %v6302 = vpop.xlane.xlu0 %6301
        %v6303 = vsel %vm1401, %v6279, -inf
        %6304 = vmax.xlane.f32.xlu0 %v6303
        %v6305 = vpop.xlane.xlu0 %6304
        %v6306 = vsel %vm1401, %v6280, -inf
        %6307 = vmax.xlane.f32.xlu0 %v6306
        %v6308 = vpop.xlane.xlu0 %6307
        %v6309 = vsel %vm1401, %v6281, -inf
        %6310 = vmax.xlane.f32.xlu0 %v6309
        %v6311 = vpop.xlane.xlu0 %6310
        %v6312 = vsel %vm1401, %v6282, -inf
        %6313 = vmax.xlane.f32.xlu0 %v6312
        %v6314 = vpop.xlane.xlu0 %6313
        %v6315 = vsel %vm1401, %v6283, -inf
        %6316 = vmax.xlane.f32.xlu0 %v6315
        %v6317 = vpop.xlane.xlu0 %6316
        %v6318 = vsel %vm1401, %v6284, -inf
        %6319 = vmax.xlane.f32.xlu0 %v6318
        %v6320 = vpop.xlane.xlu0 %6319
        %v6321 = vsub.f32 %v6273, %v6287
        %v6322 = vsub.f32 %v6274, %v6290
        %v6323 = vsub.f32 %v6275, %v6293
        %v6324 = vsub.f32 %v6276, %v6296
        %v6325 = vsub.f32 %v6277, %v6299
        %v6326 = vsub.f32 %v6278, %v6302
        %v6327 = vsub.f32 %v6279, %v6305
        %v6328 = vsub.f32 %v6280, %v6308
        %v6329 = vsub.f32 %v6281, %v6311
        %v6330 = vsub.f32 %v6282, %v6314
        %v6331 = vsub.f32 %v6283, %v6317
        %v6332 = vsub.f32 %v6284, %v6320
        %v6333 = vmul.f32 %v6321, 1.442695
        %v6334 = vpow.pop %v6333
        %v6335 = vmul.f32 %v6322, 1.442695
        %v6336 = vpow.pop %v6335
        %v6337 = vmul.f32 %v6323, 1.442695
        %v6338 = vpow.pop %v6337
        %v6339 = vmul.f32 %v6324, 1.442695
        %v6340 = vpow.pop %v6339
        %v6341 = vmul.f32 %v6325, 1.442695
        %v6342 = vpow.pop %v6341
        %v6343 = vmul.f32 %v6326, 1.442695
        %v6344 = vpow.pop %v6343
        %v6345 = vmul.f32 %v6327, 1.442695
        %v6346 = vpow.pop %v6345
        %v6347 = vmul.f32 %v6328, 1.442695
        %v6348 = vpow.pop %v6347
        %v6349 = vmul.f32 %v6329, 1.442695
        %v6350 = vpow.pop %v6349
        %v6351 = vmul.f32 %v6330, 1.442695
        %v6352 = vpow.pop %v6351
        %v6353 = vmul.f32 %v6331, 1.442695
        %v6354 = vpow.pop %v6353
        %v6355 = vmul.f32 %v6332, 1.442695
        %v6356 = vpow.pop %v6355
        %v6357 = vsel %vm1401, %v6334, 0.0
        %6358 = vadd.xlane.f32.xlu0 %v6357
        %v6359 = vpop.xlane.xlu0 %6358
        %v6360 = vsel %vm1401, %v6336, 0.0
        %6361 = vadd.xlane.f32.xlu0 %v6360
        %v6362 = vpop.xlane.xlu0 %6361
        %v6363 = vsel %vm1401, %v6338, 0.0
        %6364 = vadd.xlane.f32.xlu0 %v6363
        %v6365 = vpop.xlane.xlu0 %6364
        %v6366 = vsel %vm1401, %v6340, 0.0
        %6367 = vadd.xlane.f32.xlu0 %v6366
        %v6368 = vpop.xlane.xlu0 %6367
        %v6369 = vsel %vm1401, %v6342, 0.0
        %6370 = vadd.xlane.f32.xlu0 %v6369
        %v6371 = vpop.xlane.xlu0 %6370
        %v6372 = vsel %vm1401, %v6344, 0.0
        %6373 = vadd.xlane.f32.xlu0 %v6372
        %v6374 = vpop.xlane.xlu0 %6373
        %v6375 = vsel %vm1401, %v6346, 0.0
        %6376 = vadd.xlane.f32.xlu0 %v6375
        %v6377 = vpop.xlane.xlu0 %6376
        %v6378 = vsel %vm1401, %v6348, 0.0
        %6379 = vadd.xlane.f32.xlu0 %v6378
        %v6380 = vpop.xlane.xlu0 %6379
        %v6381 = vsel %vm1401, %v6350, 0.0
        %6382 = vadd.xlane.f32.xlu0 %v6381
        %v6383 = vpop.xlane.xlu0 %6382
        %v6384 = vsel %vm1401, %v6352, 0.0
        %6385 = vadd.xlane.f32.xlu0 %v6384
        %v6386 = vpop.xlane.xlu0 %6385
        %v6387 = vsel %vm1401, %v6354, 0.0
        %6388 = vadd.xlane.f32.xlu0 %v6387
        %v6389 = vpop.xlane.xlu0 %6388
        %v6390 = vsel %vm1401, %v6356, 0.0
        %6391 = vadd.xlane.f32.xlu0 %v6390
        %v6392 = vpop.xlane.xlu0 %6391
        %v6393 = vrcp.pop %v6359
        %v6394 = vmul.f32 %v6334, %v6393
        %v6395 = vrcp.pop %v6362
        %v6396 = vmul.f32 %v6336, %v6395
        %v6397 = vrcp.pop %v6365
        %v6398 = vmul.f32 %v6338, %v6397
        %v6399 = vrcp.pop %v6368
        %v6400 = vmul.f32 %v6340, %v6399
        %v6401 = vrcp.pop %v6371
        %v6402 = vmul.f32 %v6342, %v6401
        %v6403 = vrcp.pop %v6374
        %v6404 = vmul.f32 %v6344, %v6403
        %v6405 = vrcp.pop %v6377
        %v6406 = vmul.f32 %v6346, %v6405
        %v6407 = vrcp.pop %v6380
        %v6408 = vmul.f32 %v6348, %v6407
        %v6409 = vrcp.pop %v6383
        %v6410 = vmul.f32 %v6350, %v6409
        %v6411 = vrcp.pop %v6386
        %v6412 = vmul.f32 %v6352, %v6411
        %v6413 = vrcp.pop %v6389
        %v6414 = vmul.f32 %v6354, %v6413
        %v6415 = vrcp.pop %v6392
        %v6416 = vmul.f32 %v6356, %v6415
        %v6417 = vpack.c.bf16 %v6396, %v6394
        %v6418 = vpack.c.bf16 %v6400, %v6398
        %v6419 = vpack.c.bf16 %v6404, %v6402
        %v6420 = vpack.c.bf16 %v6408, %v6406
        %v6421 = vpack.c.bf16 %v6412, %v6410
        %v6422 = vpack.c.bf16 %v6416, %v6414
        %6425 = vrot.lane.b32.xlu0 %v5520, 96
        %v6426 = vpop.permute.xlu0 %6425
        %6427 = vrot.lane.b32.xlu0 %v5521, 96
        %v6428 = vpop.permute.xlu0 %6427
        %v6432 = vsel %vm1401, %v6417, 0
        %v6435 = vsel %vm1401, %v6418, 0
        %6437 = vmatprep.subr.bf16.mxu0 0
        %6438 = vmatpush1.bf16.msra.mxu0 %v6426
        %6439 = vmatprep.subr.bf16.mxu0 0
        %6440 = vmatpush1.bf16.msra.mxu0 %v6428
        %6441 = vmatprep.subr.bf16.mxu0 0
        %6442 = vmatpush1.bf16.msra.mxu0 0
        %6443 = vmatprep.subr.bf16.mxu0 0
        %6444 = vmatpush1.bf16.msra.mxu0 0
        %6445 = vmatprep.subr.bf16.mxu0 0
        %6446 = vmatpush1.bf16.msra.mxu0 0
        %6447 = vmatprep.subr.bf16.mxu0 0
        %6448 = vmatpush1.bf16.msra.mxu0 0
        %6449 = vmatprep.subr.bf16.mxu0 0
        %6450 = vmatpush1.bf16.msra.mxu0 0
        %6451 = vmatprep.subr.bf16.mxu0 0
        %6452 = vmatpush1.bf16.msra.mxu0 0
        %6453 = vmatprep.subr.bf16.mxu0 0
        %6454 = vmatpush1.bf16.msra.mxu0 0
        %6455 = vmatprep.subr.bf16.mxu0 0
        %6456 = vmatpush1.bf16.msra.mxu0 0
        %6457 = vmatprep.subr.bf16.mxu0 0
        %6458 = vmatpush1.bf16.msra.mxu0 0
        %6459 = vmatprep.subr.bf16.mxu0 0
        %6460 = vmatpush1.bf16.msra.mxu0 0
        %6461 = vmatprep.subr.bf16.mxu0 0
        %6462 = vmatpush1.bf16.msra.mxu0 0
        %6463 = vmatprep.subr.bf16.mxu0 0
        %6464 = vmatpush1.bf16.msra.mxu0 0
        %6465 = vmatprep.subr.bf16.mxu0 0
        %6466 = vmatpush1.bf16.msra.mxu0 0
        %6467 = vmatprep.subr.bf16.mxu0 0
        %6468 = vmatpush1.bf16.msra.mxu0 0
        %6469 = vmatprep.mubr.bf16.mxu0 0
        %6470 = vmatmul.mubr.bf16.gmra.mrb[0].mxu0 %v6432
        %v6471 = vpop.f32.mrb[0].mxu0
        %v6472 = vadd.f32 0.0, %v6471
        %v6473 = vpop.f32.mrb[0].mxu0
        %v6474 = vpop.f32.mrb[0].mxu0
        %v6475 = vadd.f32 0.0, %v6474
        %v6476 = vpop.f32.mrb[0].mxu0
        %6477 = vmatprep.mubr.bf16.mxu0 0
        %6478 = vmatmul.mubr.bf16.gmra.mrb[0].mxu0 %v6435
        %v6479 = vpop.f32.mrb[0].mxu0
        %v6480 = vadd.f32 0.0, %v6479
        %v6481 = vpop.f32.mrb[0].mxu0
        %v6482 = vpop.f32.mrb[0].mxu0
        %v6483 = vadd.f32 0.0, %v6482
        %v6484 = vpop.f32.mrb[0].mxu0
        %6485 = vdwg.mxu0
        %6488 = vrot.lane.b32.xlu0 %v5522, 96
        %v6489 = vpop.permute.xlu0 %6488
        %6490 = vrot.lane.b32.xlu0 %v5523, 96
        %v6491 = vpop.permute.xlu0 %6490
        %v6495 = vsel %vm1401, %v6419, 0
        %v6498 = vsel %vm1401, %v6420, 0
        %6500 = vmatprep.subr.bf16.mxu0 0
        %6501 = vmatpush1.bf16.msra.mxu0 %v6489
        %6502 = vmatprep.subr.bf16.mxu0 0
        %6503 = vmatpush1.bf16.msra.mxu0 %v6491
        %6504 = vmatprep.subr.bf16.mxu0 0
        %6505 = vmatpush1.bf16.msra.mxu0 0
        %6506 = vmatprep.subr.bf16.mxu0 0
        %6507 = vmatpush1.bf16.msra.mxu0 0
        %6508 = vmatprep.subr.bf16.mxu0 0
        %6509 = vmatpush1.bf16.msra.mxu0 0
        %6510 = vmatprep.subr.bf16.mxu0 0
        %6511 = vmatpush1.bf16.msra.mxu0 0
        %6512 = vmatprep.subr.bf16.mxu0 0
        %6513 = vmatpush1.bf16.msra.mxu0 0
        %6514 = vmatprep.subr.bf16.mxu0 0
        %6515 = vmatpush1.bf16.msra.mxu0 0
        %6516 = vmatprep.subr.bf16.mxu0 0
        %6517 = vmatpush1.bf16.msra.mxu0 0
        %6518 = vmatprep.subr.bf16.mxu0 0
        %6519 = vmatpush1.bf16.msra.mxu0 0
        %6520 = vmatprep.subr.bf16.mxu0 0
        %6521 = vmatpush1.bf16.msra.mxu0 0
        %6522 = vmatprep.subr.bf16.mxu0 0
        %6523 = vmatpush1.bf16.msra.mxu0 0
        %6524 = vmatprep.subr.bf16.mxu0 0
        %6525 = vmatpush1.bf16.msra.mxu0 0
        %6526 = vmatprep.subr.bf16.mxu0 0
        %6527 = vmatpush1.bf16.msra.mxu0 0
        %6528 = vmatprep.subr.bf16.mxu0 0
        %6529 = vmatpush1.bf16.msra.mxu0 0
        %6530 = vmatprep.subr.bf16.mxu0 0
        %6531 = vmatpush1.bf16.msra.mxu0 0
        %6532 = vmatprep.mubr.bf16.mxu0 0
        %6533 = vmatmul.mubr.bf16.gmra.mrb[0].mxu0 %v6495
        %v6534 = vpop.f32.mrb[0].mxu0
        %v6535 = vadd.f32 0.0, %v6534
        %v6536 = vpop.f32.mrb[0].mxu0
        %v6537 = vpop.f32.mrb[0].mxu0
        %v6538 = vadd.f32 0.0, %v6537
        %v6539 = vpop.f32.mrb[0].mxu0
        %6540 = vmatprep.mubr.bf16.mxu0 0
        %6541 = vmatmul.mubr.bf16.gmra.mrb[0].mxu0 %v6498
        %v6542 = vpop.f32.mrb[0].mxu0
        %v6543 = vadd.f32 0.0, %v6542
        %v6544 = vpop.f32.mrb[0].mxu0
        %v6545 = vpop.f32.mrb[0].mxu0
        %v6546 = vadd.f32 0.0, %v6545
        %v6547 = vpop.f32.mrb[0].mxu0
        %6548 = vdwg.mxu0
        %6551 = vrot.lane.b32.xlu0 %v5524, 96
        %v6552 = vpop.permute.xlu0 %6551
        %6553 = vrot.lane.b32.xlu0 %v5525, 96
        %v6554 = vpop.permute.xlu0 %6553
        %v6558 = vsel %vm1401, %v6421, 0
        %v6561 = vsel %vm1401, %v6422, 0
        %6563 = vmatprep.subr.bf16.mxu0 0
        %6564 = vmatpush1.bf16.msra.mxu0 %v6552
        %6565 = vmatprep.subr.bf16.mxu0 0
        %6566 = vmatpush1.bf16.msra.mxu0 %v6554
        %6567 = vmatprep.subr.bf16.mxu0 0
        %6568 = vmatpush1.bf16.msra.mxu0 0
        %6569 = vmatprep.subr.bf16.mxu0 0
        %6570 = vmatpush1.bf16.msra.mxu0 0
        %6571 = vmatprep.subr.bf16.mxu0 0
        %6572 = vmatpush1.bf16.msra.mxu0 0
        %6573 = vmatprep.subr.bf16.mxu0 0
        %6574 = vmatpush1.bf16.msra.mxu0 0
        %6575 = vmatprep.subr.bf16.mxu0 0
        %6576 = vmatpush1.bf16.msra.mxu0 0
        %6577 = vmatprep.subr.bf16.mxu0 0
        %6578 = vmatpush1.bf16.msra.mxu0 0
        %6579 = vmatprep.subr.bf16.mxu0 0
        %6580 = vmatpush1.bf16.msra.mxu0 0
        %6581 = vmatprep.subr.bf16.mxu0 0
        %6582 = vmatpush1.bf16.msra.mxu0 0
        %6583 = vmatprep.subr.bf16.mxu0 0
        %6584 = vmatpush1.bf16.msra.mxu0 0
        %6585 = vmatprep.subr.bf16.mxu0 0
        %6586 = vmatpush1.bf16.msra.mxu0 0
        %6587 = vmatprep.subr.bf16.mxu0 0
        %6588 = vmatpush1.bf16.msra.mxu0 0
        %6589 = vmatprep.subr.bf16.mxu0 0
        %6590 = vmatpush1.bf16.msra.mxu0 0
        %6591 = vmatprep.subr.bf16.mxu0 0
        %6592 = vmatpush1.bf16.msra.mxu0 0
        %6593 = vmatprep.subr.bf16.mxu0 0
        %6594 = vmatpush1.bf16.msra.mxu0 0
        %6595 = vmatprep.mubr.bf16.mxu0 0
        %6596 = vmatmul.mubr.bf16.gmra.mrb[0].mxu0 %v6558
        %v6597 = vpop.f32.mrb[0].mxu0
        %v6598 = vadd.f32 0.0, %v6597
        %v6599 = vpop.f32.mrb[0].mxu0
        %v6600 = vpop.f32.mrb[0].mxu0
        %v6601 = vadd.f32 0.0, %v6600
        %v6602 = vpop.f32.mrb[0].mxu0
        %6603 = vmatprep.mubr.bf16.mxu0 0
        %6604 = vmatmul.mubr.bf16.gmra.mrb[0].mxu0 %v6561
        %v6605 = vpop.f32.mrb[0].mxu0
        %v6606 = vadd.f32 0.0, %v6605
        %v6607 = vpop.f32.mrb[0].mxu0
        %v6608 = vpop.f32.mrb[0].mxu0
        %v6609 = vadd.f32 0.0, %v6608
        %v6610 = vpop.f32.mrb[0].mxu0
        %6611 = vdwg.mxu0
        %v6612 = vpack.c.bf16 %v6475, %v6472
        %v6613 = vpack.c.bf16 %v6483, %v6480
        %v6614 = vpack.c.bf16 %v6538, %v6535
        %v6615 = vpack.c.bf16 %v6546, %v6543
        %v6616 = vpack.c.bf16 %v6601, %v6598
        %v6617 = vpack.c.bf16 %v6609, %v6606
        %v6622 = vunpack.c.l.b16 %v5496
        %v6623 = vunpack.c.l.b16 %v5497
        %v6624 = vunpack.c.l.b16 %v5498
        %v6625 = vunpack.c.l.b16 %v5499
        %v6626 = vpack.c.b16 %v6623, %v6622
        %v6627 = vpack.c.b16 %v6625, %v6624
        %v6631 = vsel %vm1401, %v6612, 0
        %v6634 = vsel %vm1401, %v6613, 0
        %v6637 = vsel %vm1401, %v6614, 0
        %v6640 = vsel %vm1401, %v6615, 0
        %v6643 = vsel %vm1401, %v6616, 0
        %v6646 = vsel %vm1401, %v6617, 0
        %6648 = vmatprep.subr.bf16.mxu0 0
        %6649 = vmatpush1.bf16.msra.mxu0 %v6626
        %6650 = vmatprep.subr.bf16.mxu0 0
        %6651 = vmatpush1.bf16.msra.mxu0 %v6627
        %6652 = vmatprep.subr.bf16.mxu0 0
        %6653 = vmatpush1.bf16.msra.mxu0 0
        %6654 = vmatprep.subr.bf16.mxu0 0
        %6655 = vmatpush1.bf16.msra.mxu0 0
        %6656 = vmatprep.subr.bf16.mxu0 0
        %6657 = vmatpush1.bf16.msra.mxu0 0
        %6658 = vmatprep.subr.bf16.mxu0 0
        %6659 = vmatpush1.bf16.msra.mxu0 0
        %6660 = vmatprep.subr.bf16.mxu0 0
        %6661 = vmatpush1.bf16.msra.mxu0 0
        %6662 = vmatprep.subr.bf16.mxu0 0
        %6663 = vmatpush1.bf16.msra.mxu0 0
        %6664 = vmatprep.subr.bf16.mxu0 0
        %6665 = vmatpush1.bf16.msra.mxu0 0
        %6666 = vmatprep.subr.bf16.mxu0 0
        %6667 = vmatpush1.bf16.msra.mxu0 0
        %6668 = vmatprep.subr.bf16.mxu0 0
        %6669 = vmatpush1.bf16.msra.mxu0 0
        %6670 = vmatprep.subr.bf16.mxu0 0
        %6671 = vmatpush1.bf16.msra.mxu0 0
        %6672 = vmatprep.subr.bf16.mxu0 0
        %6673 = vmatpush1.bf16.msra.mxu0 0
        %6674 = vmatprep.subr.bf16.mxu0 0
        %6675 = vmatpush1.bf16.msra.mxu0 0
        %6676 = vmatprep.subr.bf16.mxu0 0
        %6677 = vmatpush1.bf16.msra.mxu0 0
        %6678 = vmatprep.subr.bf16.mxu0 0
        %6679 = vmatpush1.bf16.msra.mxu0 0
        %6680 = vmatprep.mubr.bf16.mxu0 0
        %6681 = vmatmul.mubr.bf16.gmra.mrb[0].mxu0 %v6631
        %v6682 = vpop.f32.mrb[0].mxu0
        %v6683 = vadd.f32 0.0, %v6682
        %v6684 = vpop.f32.mrb[0].mxu0
        %v6685 = vpop.f32.mrb[0].mxu0
        %v6686 = vadd.f32 0.0, %v6685
        %v6687 = vpop.f32.mrb[0].mxu0
        %6688 = vmatprep.mubr.bf16.mxu0 0
        %6689 = vmatmul.mubr.bf16.gmra.mrb[0].mxu0 %v6634
        %v6690 = vpop.f32.mrb[0].mxu0
        %v6691 = vadd.f32 0.0, %v6690
        %v6692 = vpop.f32.mrb[0].mxu0
        %v6693 = vpop.f32.mrb[0].mxu0
        %v6694 = vadd.f32 0.0, %v6693
        %v6695 = vpop.f32.mrb[0].mxu0
        %6696 = vmatprep.mubr.bf16.mxu0 0
        %6697 = vmatmul.mubr.bf16.gmra.mrb[0].mxu0 %v6637
        %v6698 = vpop.f32.mrb[0].mxu0
        %v6699 = vadd.f32 0.0, %v6698
        %v6700 = vpop.f32.mrb[0].mxu0
        %v6701 = vpop.f32.mrb[0].mxu0
        %v6702 = vadd.f32 0.0, %v6701
        %v6703 = vpop.f32.mrb[0].mxu0
        %6704 = vmatprep.mubr.bf16.mxu0 0
        %6705 = vmatmul.mubr.bf16.gmra.mrb[0].mxu0 %v6640
        %v6706 = vpop.f32.mrb[0].mxu0
        %v6707 = vadd.f32 0.0, %v6706
        %v6708 = vpop.f32.mrb[0].mxu0
        %v6709 = vpop.f32.mrb[0].mxu0
        %v6710 = vadd.f32 0.0, %v6709
        %v6711 = vpop.f32.mrb[0].mxu0
        %6712 = vmatprep.mubr.bf16.mxu0 0
        %6713 = vmatmul.mubr.bf16.gmra.mrb[0].mxu0 %v6643
        %v6714 = vpop.f32.mrb[0].mxu0
        %v6715 = vadd.f32 0.0, %v6714
        %v6716 = vpop.f32.mrb[0].mxu0
        %v6717 = vpop.f32.mrb[0].mxu0
        %v6718 = vadd.f32 0.0, %v6717
        %v6719 = vpop.f32.mrb[0].mxu0
        %6720 = vmatprep.mubr.bf16.mxu0 0
        %6721 = vmatmul.mubr.bf16.gmra.mrb[0].mxu0 %v6646
        %v6722 = vpop.f32.mrb[0].mxu0
        %v6723 = vadd.f32 0.0, %v6722
        %v6724 = vpop.f32.mrb[0].mxu0
        %v6725 = vpop.f32.mrb[0].mxu0
        %v6726 = vadd.f32 0.0, %v6725
        %v6727 = vpop.f32.mrb[0].mxu0
        %6728 = vdwg.mxu0
        %v6733 = vunpack.c.l.b16 %v5492
        %v6734 = vunpack.c.l.b16 %v5493
        %v6735 = vunpack.c.l.b16 %v5494
        %v6736 = vunpack.c.l.b16 %v5495
        %v6737 = vpack.c.b16 %v6734, %v6733
        %v6738 = vpack.c.b16 %v6736, %v6735
        %v6742 = vsel %vm1401, %v6036, 0
        %v6745 = vsel %vm1401, %v6037, 0
        %v6748 = vsel %vm1401, %v6038, 0
        %v6751 = vsel %vm1401, %v6039, 0
        %v6754 = vsel %vm1401, %v6040, 0
        %v6757 = vsel %vm1401, %v6041, 0
        %6759 = vmatprep.subr.bf16.mxu0 0
        %6760 = vmatpush1.bf16.msra.mxu0 %v6737
        %6761 = vmatprep.subr.bf16.mxu0 0
        %6762 = vmatpush1.bf16.msra.mxu0 %v6738
        %6763 = vmatprep.subr.bf16.mxu0 0
        %6764 = vmatpush1.bf16.msra.mxu0 0
        %6765 = vmatprep.subr.bf16.mxu0 0
        %6766 = vmatpush1.bf16.msra.mxu0 0
        %6767 = vmatprep.subr.bf16.mxu0 0
        %6768 = vmatpush1.bf16.msra.mxu0 0
        %6769 = vmatprep.subr.bf16.mxu0 0
        %6770 = vmatpush1.bf16.msra.mxu0 0
        %6771 = vmatprep.subr.bf16.mxu0 0
        %6772 = vmatpush1.bf16.msra.mxu0 0
        %6773 = vmatprep.subr.bf16.mxu0 0
        %6774 = vmatpush1.bf16.msra.mxu0 0
        %6775 = vmatprep.subr.bf16.mxu0 0
        %6776 = vmatpush1.bf16.msra.mxu0 0
        %6777 = vmatprep.subr.bf16.mxu0 0
        %6778 = vmatpush1.bf16.msra.mxu0 0
        %6779 = vmatprep.subr.bf16.mxu0 0
        %6780 = vmatpush1.bf16.msra.mxu0 0
        %6781 = vmatprep.subr.bf16.mxu0 0
        %6782 = vmatpush1.bf16.msra.mxu0 0
        %6783 = vmatprep.subr.bf16.mxu0 0
        %6784 = vmatpush1.bf16.msra.mxu0 0
        %6785 = vmatprep.subr.bf16.mxu0 0
        %6786 = vmatpush1.bf16.msra.mxu0 0
        %6787 = vmatprep.subr.bf16.mxu0 0
        %6788 = vmatpush1.bf16.msra.mxu0 0
        %6789 = vmatprep.subr.bf16.mxu0 0
        %6790 = vmatpush1.bf16.msra.mxu0 0
        %6791 = vmatprep.mubr.bf16.mxu0 0
        %6792 = vmatmul.mubr.bf16.gmra.mrb[0].mxu0 %v6742
        %v6793 = vpop.f32.mrb[0].mxu0
        %v6794 = vadd.f32 %v6683, %v6793
        %v6795 = vpop.f32.mrb[0].mxu0
        %v6796 = vpop.f32.mrb[0].mxu0
        %v6797 = vadd.f32 %v6686, %v6796
        %v6798 = vpop.f32.mrb[0].mxu0
        %6799 = vmatprep.mubr.bf16.mxu0 0
        %6800 = vmatmul.mubr.bf16.gmra.mrb[0].mxu0 %v6745
        %v6801 = vpop.f32.mrb[0].mxu0
        %v6802 = vadd.f32 %v6691, %v6801
        %v6803 = vpop.f32.mrb[0].mxu0
        %v6804 = vpop.f32.mrb[0].mxu0
        %v6805 = vadd.f32 %v6694, %v6804
        %v6806 = vpop.f32.mrb[0].mxu0
        %6807 = vmatprep.mubr.bf16.mxu0 0
        %6808 = vmatmul.mubr.bf16.gmra.mrb[0].mxu0 %v6748
        %v6809 = vpop.f32.mrb[0].mxu0
        %v6810 = vadd.f32 %v6699, %v6809
        %v6811 = vpop.f32.mrb[0].mxu0
        %v6812 = vpop.f32.mrb[0].mxu0
        %v6813 = vadd.f32 %v6702, %v6812
        %v6814 = vpop.f32.mrb[0].mxu0
        %6815 = vmatprep.mubr.bf16.mxu0 0
        %6816 = vmatmul.mubr.bf16.gmra.mrb[0].mxu0 %v6751
        %v6817 = vpop.f32.mrb[0].mxu0
        %v6818 = vadd.f32 %v6707, %v6817
        %v6819 = vpop.f32.mrb[0].mxu0
        %v6820 = vpop.f32.mrb[0].mxu0
        %v6821 = vadd.f32 %v6710, %v6820
        %v6822 = vpop.f32.mrb[0].mxu0
        %6823 = vmatprep.mubr.bf16.mxu0 0
        %6824 = vmatmul.mubr.bf16.gmra.mrb[0].mxu0 %v6754
        %v6825 = vpop.f32.mrb[0].mxu0
        %v6826 = vadd.f32 %v6715, %v6825
        %v6827 = vpop.f32.mrb[0].mxu0
        %v6828 = vpop.f32.mrb[0].mxu0
        %v6829 = vadd.f32 %v6718, %v6828
        %v6830 = vpop.f32.mrb[0].mxu0
        %6831 = vmatprep.mubr.bf16.mxu0 0
        %6832 = vmatmul.mubr.bf16.gmra.mrb[0].mxu0 %v6757
        %v6833 = vpop.f32.mrb[0].mxu0
        %v6834 = vadd.f32 %v6723, %v6833
        %v6835 = vpop.f32.mrb[0].mxu0
        %v6836 = vpop.f32.mrb[0].mxu0
        %v6837 = vadd.f32 %v6726, %v6836
        %v6838 = vpop.f32.mrb[0].mxu0
        %6839 = vdwg.mxu0
        %6840 = vrot.lane.b32.xlu0 %v5508, 64
        %v6841 = vpop.permute.xlu0 %6840
        %6842 = vrot.lane.b32.xlu0 %v5509, 64
        %v6843 = vpop.permute.xlu0 %6842
        %6844 = vrot.lane.b32.xlu0 %v5514, 64
        %v6845 = vpop.permute.xlu0 %6844
        %6846 = vrot.lane.b32.xlu0 %v5515, 64
        %v6847 = vpop.permute.xlu0 %6846
        %v6849 = vsel %vm1401, %v6841, 0
        %v6852 = vsel %vm1401, %v6843, 0
        %v6855 = vsel %vm1401, %v6845, 0
        %v6858 = vsel %vm1401, %v6847, 0
        %6860 = vmatprep.subr.bf16.mxu0 0
        %6861 = vmatpush1.bf16.xpose.msra.mxu0 %v6855
        %6862 = vmatprep.subr.bf16.mxu0 0
        %6863 = vmatpush1.bf16.xpose.msra.mxu0 %v6858
        %6864 = vmatprep.subr.bf16.mxu0 0
        %6865 = vmatpush1.bf16.xpose.msra.mxu0 0
        %6866 = vmatprep.subr.bf16.mxu0 0
        %6867 = vmatpush1.bf16.xpose.msra.mxu0 0
        %6868 = vmatprep.subr.bf16.mxu0 0
        %6869 = vmatpush1.bf16.xpose.msra.mxu0 0
        %6870 = vmatprep.subr.bf16.mxu0 0
        %6871 = vmatpush1.bf16.xpose.msra.mxu0 0
        %6872 = vmatprep.subr.bf16.mxu0 0
        %6873 = vmatpush1.bf16.xpose.msra.mxu0 0
        %6874 = vmatprep.subr.bf16.mxu0 0
        %6875 = vmatpush1.bf16.xpose.msra.mxu0 0
        %6876 = vmatprep.subr.bf16.mxu0 0
        %6877 = vmatpush1.bf16.xpose.msra.mxu0 0
        %6878 = vmatprep.subr.bf16.mxu0 0
        %6879 = vmatpush1.bf16.xpose.msra.mxu0 0
        %6880 = vmatprep.subr.bf16.mxu0 0
        %6881 = vmatpush1.bf16.xpose.msra.mxu0 0
        %6882 = vmatprep.subr.bf16.mxu0 0
        %6883 = vmatpush1.bf16.xpose.msra.mxu0 0
        %6884 = vmatprep.subr.bf16.mxu0 0
        %6885 = vmatpush1.bf16.xpose.msra.mxu0 0
        %6886 = vmatprep.subr.bf16.mxu0 0
        %6887 = vmatpush1.bf16.xpose.msra.mxu0 0
        %6888 = vmatprep.subr.bf16.mxu0 0
        %6889 = vmatpush1.bf16.xpose.msra.mxu0 0
        %6890 = vmatprep.subr.bf16.mxu0 0
        %6891 = vmatpush1.bf16.xpose.msra.mxu0 0
        %6892 = vmatprep.mubr.bf16.mxu0 0
        %6893 = vmatmul.mubr.bf16.gmra.mrb[0].mxu0 %v6849
        %v6894 = vpop.f32.mrb[0].mxu0
        %v6895 = vadd.f32 0.0, %v6894
        %v6896 = vpop.f32.mrb[0].mxu0
        %v6897 = vpop.f32.mrb[0].mxu0
        %v6898 = vadd.f32 0.0, %v6897
        %v6899 = vpop.f32.mrb[0].mxu0
        %6900 = vmatprep.mubr.bf16.mxu0 0
        %6901 = vmatmul.mubr.bf16.gmra.mrb[0].mxu0 %v6852
        %v6902 = vpop.f32.mrb[0].mxu0
        %v6903 = vadd.f32 0.0, %v6902
        %v6904 = vpop.f32.mrb[0].mxu0
        %v6905 = vpop.f32.mrb[0].mxu0
        %v6906 = vadd.f32 0.0, %v6905
        %v6907 = vpop.f32.mrb[0].mxu0
        %6908 = vdwg.mxu0
        %6909 = vrot.lane.b32.xlu0 %v5510, 64
        %v6910 = vpop.permute.xlu0 %6909
        %6911 = vrot.lane.b32.xlu0 %v5511, 64
        %v6912 = vpop.permute.xlu0 %6911
        %6913 = vrot.lane.b32.xlu0 %v5516, 64
        %v6914 = vpop.permute.xlu0 %6913
        %6915 = vrot.lane.b32.xlu0 %v5517, 64
        %v6916 = vpop.permute.xlu0 %6915
        %v6918 = vsel %vm1401, %v6910, 0
        %v6921 = vsel %vm1401, %v6912, 0
        %v6924 = vsel %vm1401, %v6914, 0
        %v6927 = vsel %vm1401, %v6916, 0
        %6929 = vmatprep.subr.bf16.mxu0 0
        %6930 = vmatpush1.bf16.xpose.msra.mxu0 %v6924
        %6931 = vmatprep.subr.bf16.mxu0 0
        %6932 = vmatpush1.bf16.xpose.msra.mxu0 %v6927
        %6933 = vmatprep.subr.bf16.mxu0 0
        %6934 = vmatpush1.bf16.xpose.msra.mxu0 0
        %6935 = vmatprep.subr.bf16.mxu0 0
        %6936 = vmatpush1.bf16.xpose.msra.mxu0 0
        %6937 = vmatprep.subr.bf16.mxu0 0
        %6938 = vmatpush1.bf16.xpose.msra.mxu0 0
        %6939 = vmatprep.subr.bf16.mxu0 0
        %6940 = vmatpush1.bf16.xpose.msra.mxu0 0
        %6941 = vmatprep.subr.bf16.mxu0 0
        %6942 = vmatpush1.bf16.xpose.msra.mxu0 0
        %6943 = vmatprep.subr.bf16.mxu0 0
        %6944 = vmatpush1.bf16.xpose.msra.mxu0 0
        %6945 = vmatprep.subr.bf16.mxu0 0
        %6946 = vmatpush1.bf16.xpose.msra.mxu0 0
        %6947 = vmatprep.subr.bf16.mxu0 0
        %6948 = vmatpush1.bf16.xpose.msra.mxu0 0
        %6949 = vmatprep.subr.bf16.mxu0 0
        %6950 = vmatpush1.bf16.xpose.msra.mxu0 0
        %6951 = vmatprep.subr.bf16.mxu0 0
        %6952 = vmatpush1.bf16.xpose.msra.mxu0 0
        %6953 = vmatprep.subr.bf16.mxu0 0
        %6954 = vmatpush1.bf16.xpose.msra.mxu0 0
        %6955 = vmatprep.subr.bf16.mxu0 0
        %6956 = vmatpush1.bf16.xpose.msra.mxu0 0
        %6957 = vmatprep.subr.bf16.mxu0 0
        %6958 = vmatpush1.bf16.xpose.msra.mxu0 0
        %6959 = vmatprep.subr.bf16.mxu0 0
        %6960 = vmatpush1.bf16.xpose.msra.mxu0 0
        %6961 = vmatprep.mubr.bf16.mxu0 0
        %6962 = vmatmul.mubr.bf16.gmra.mrb[0].mxu0 %v6918
        %v6963 = vpop.f32.mrb[0].mxu0
        %v6964 = vadd.f32 0.0, %v6963
        %v6965 = vpop.f32.mrb[0].mxu0
        %v6966 = vpop.f32.mrb[0].mxu0
        %v6967 = vadd.f32 0.0, %v6966
        %v6968 = vpop.f32.mrb[0].mxu0
        %6969 = vmatprep.mubr.bf16.mxu0 0
        %6970 = vmatmul.mubr.bf16.gmra.mrb[0].mxu0 %v6921
        %v6971 = vpop.f32.mrb[0].mxu0
        %v6972 = vadd.f32 0.0, %v6971
        %v6973 = vpop.f32.mrb[0].mxu0
        %v6974 = vpop.f32.mrb[0].mxu0
        %v6975 = vadd.f32 0.0, %v6974
        %v6976 = vpop.f32.mrb[0].mxu0
        %6977 = vdwg.mxu0
        %6978 = vrot.lane.b32.xlu0 %v5512, 64
        %v6979 = vpop.permute.xlu0 %6978
        %6980 = vrot.lane.b32.xlu0 %v5513, 64
        %v6981 = vpop.permute.xlu0 %6980
        %6982 = vrot.lane.b32.xlu0 %v5518, 64
        %v6983 = vpop.permute.xlu0 %6982
        %6984 = vrot.lane.b32.xlu0 %v5519, 64
        %v6985 = vpop.permute.xlu0 %6984
        %v6987 = vsel %vm1401, %v6979, 0
        %v6990 = vsel %vm1401, %v6981, 0
        %v6993 = vsel %vm1401, %v6983, 0
        %v6996 = vsel %vm1401, %v6985, 0
        %6998 = vmatprep.subr.bf16.mxu0 0
        %6999 = vmatpush1.bf16.xpose.msra.mxu0 %v6993
        %7000 = vmatprep.subr.bf16.mxu0 0
        %7001 = vmatpush1.bf16.xpose.msra.mxu0 %v6996
        %7002 = vmatprep.subr.bf16.mxu0 0
        %7003 = vmatpush1.bf16.xpose.msra.mxu0 0
        %7004 = vmatprep.subr.bf16.mxu0 0
        %7005 = vmatpush1.bf16.xpose.msra.mxu0 0
        %7006 = vmatprep.subr.bf16.mxu0 0
        %7007 = vmatpush1.bf16.xpose.msra.mxu0 0
        %7008 = vmatprep.subr.bf16.mxu0 0
        %7009 = vmatpush1.bf16.xpose.msra.mxu0 0
        %7010 = vmatprep.subr.bf16.mxu0 0
        %7011 = vmatpush1.bf16.xpose.msra.mxu0 0
        %7012 = vmatprep.subr.bf16.mxu0 0
        %7013 = vmatpush1.bf16.xpose.msra.mxu0 0
        %7014 = vmatprep.subr.bf16.mxu0 0
        %7015 = vmatpush1.bf16.xpose.msra.mxu0 0
        %7016 = vmatprep.subr.bf16.mxu0 0
        %7017 = vmatpush1.bf16.xpose.msra.mxu0 0
        %7018 = vmatprep.subr.bf16.mxu0 0
        %7019 = vmatpush1.bf16.xpose.msra.mxu0 0
        %7020 = vmatprep.subr.bf16.mxu0 0
        %7021 = vmatpush1.bf16.xpose.msra.mxu0 0
        %7022 = vmatprep.subr.bf16.mxu0 0
        %7023 = vmatpush1.bf16.xpose.msra.mxu0 0
        %7024 = vmatprep.subr.bf16.mxu0 0
        %7025 = vmatpush1.bf16.xpose.msra.mxu0 0
        %7026 = vmatprep.subr.bf16.mxu0 0
        %7027 = vmatpush1.bf16.xpose.msra.mxu0 0
        %7028 = vmatprep.subr.bf16.mxu0 0
        %7029 = vmatpush1.bf16.xpose.msra.mxu0 0
        %7030 = vmatprep.mubr.bf16.mxu0 0
        %7031 = vmatmul.mubr.bf16.gmra.mrb[0].mxu0 %v6987
        %v7032 = vpop.f32.mrb[0].mxu0
        %v7033 = vadd.f32 0.0, %v7032
        %v7034 = vpop.f32.mrb[0].mxu0
        %v7035 = vpop.f32.mrb[0].mxu0
        %v7036 = vadd.f32 0.0, %v7035
        %v7037 = vpop.f32.mrb[0].mxu0
        %7038 = vmatprep.mubr.bf16.mxu0 0
        %7039 = vmatmul.mubr.bf16.gmra.mrb[0].mxu0 %v6990
        %v7040 = vpop.f32.mrb[0].mxu0
        %v7041 = vadd.f32 0.0, %v7040
        %v7042 = vpop.f32.mrb[0].mxu0
        %v7043 = vpop.f32.mrb[0].mxu0
        %v7044 = vadd.f32 0.0, %v7043
        %v7045 = vpop.f32.mrb[0].mxu0
        %7046 = vdwg.mxu0
        %v7047 = vmul.f32 %v6895, 0.17677669
        %v7048 = vmul.f32 %v6898, 0.17677669
        %v7049 = vmul.f32 %v6903, 0.17677669
        %v7050 = vmul.f32 %v6906, 0.17677669
        %v7051 = vmul.f32 %v6964, 0.17677669
        %v7052 = vmul.f32 %v6967, 0.17677669
        %v7053 = vmul.f32 %v6972, 0.17677669
        %v7054 = vmul.f32 %v6975, 0.17677669
        %v7055 = vmul.f32 %v7033, 0.17677669
        %v7056 = vmul.f32 %v7036, 0.17677669
        %v7057 = vmul.f32 %v7041, 0.17677669
        %v7058 = vmul.f32 %v7044, 0.17677669
        %v7059 = vadd.f32 %v7047, %v1601
        %v7060 = vadd.f32 %v7048, %v1601
        %v7061 = vadd.f32 %v7049, %v1601
        %v7062 = vadd.f32 %v7050, %v1601
        %v7063 = vadd.f32 %v7051, %v1601
        %v7064 = vadd.f32 %v7052, %v1601
        %v7065 = vadd.f32 %v7053, %v1601
        %v7066 = vadd.f32 %v7054, %v1601
        %v7067 = vadd.f32 %v7055, %v1601
        %v7068 = vadd.f32 %v7056, %v1601
        %v7069 = vadd.f32 %v7057, %v1601
        %v7070 = vadd.f32 %v7058, %v1601
        %v7071 = vsel %vm1401, %v7059, -inf
        %7072 = vmax.xlane.f32.xlu0 %v7071
        %v7073 = vpop.xlane.xlu0 %7072
        %v7074 = vsel %vm1401, %v7060, -inf
        %7075 = vmax.xlane.f32.xlu0 %v7074
        %v7076 = vpop.xlane.xlu0 %7075
        %v7077 = vsel %vm1401, %v7061, -inf
        %7078 = vmax.xlane.f32.xlu0 %v7077
        %v7079 = vpop.xlane.xlu0 %7078
        %v7080 = vsel %vm1401, %v7062, -inf
        %7081 = vmax.xlane.f32.xlu0 %v7080
        %v7082 = vpop.xlane.xlu0 %7081
        %v7083 = vsel %vm1401, %v7063, -inf
        %7084 = vmax.xlane.f32.xlu0 %v7083
        %v7085 = vpop.xlane.xlu0 %7084
        %v7086 = vsel %vm1401, %v7064, -inf
        %7087 = vmax.xlane.f32.xlu0 %v7086
        %v7088 = vpop.xlane.xlu0 %7087
        %v7089 = vsel %vm1401, %v7065, -inf
        %7090 = vmax.xlane.f32.xlu0 %v7089
        %v7091 = vpop.xlane.xlu0 %7090
        %v7092 = vsel %vm1401, %v7066, -inf
        %7093 = vmax.xlane.f32.xlu0 %v7092
        %v7094 = vpop.xlane.xlu0 %7093
        %v7095 = vsel %vm1401, %v7067, -inf
        %7096 = vmax.xlane.f32.xlu0 %v7095
        %v7097 = vpop.xlane.xlu0 %7096
        %v7098 = vsel %vm1401, %v7068, -inf
        %7099 = vmax.xlane.f32.xlu0 %v7098
        %v7100 = vpop.xlane.xlu0 %7099
        %v7101 = vsel %vm1401, %v7069, -inf
        %7102 = vmax.xlane.f32.xlu0 %v7101
        %v7103 = vpop.xlane.xlu0 %7102
        %v7104 = vsel %vm1401, %v7070, -inf
        %7105 = vmax.xlane.f32.xlu0 %v7104
        %v7106 = vpop.xlane.xlu0 %7105
        %v7107 = vsub.f32 %v7059, %v7073
        %v7108 = vsub.f32 %v7060, %v7076
        %v7109 = vsub.f32 %v7061, %v7079
        %v7110 = vsub.f32 %v7062, %v7082
        %v7111 = vsub.f32 %v7063, %v7085
        %v7112 = vsub.f32 %v7064, %v7088
        %v7113 = vsub.f32 %v7065, %v7091
        %v7114 = vsub.f32 %v7066, %v7094
        %v7115 = vsub.f32 %v7067, %v7097
        %v7116 = vsub.f32 %v7068, %v7100
        %v7117 = vsub.f32 %v7069, %v7103
        %v7118 = vsub.f32 %v7070, %v7106
        %v7119 = vmul.f32 %v7107, 1.442695
        %v7120 = vpow.pop %v7119
        %v7121 = vmul.f32 %v7108, 1.442695
        %v7122 = vpow.pop %v7121
        %v7123 = vmul.f32 %v7109, 1.442695
        %v7124 = vpow.pop %v7123
        %v7125 = vmul.f32 %v7110, 1.442695
        %v7126 = vpow.pop %v7125
        %v7127 = vmul.f32 %v7111, 1.442695
        %v7128 = vpow.pop %v7127
        %v7129 = vmul.f32 %v7112, 1.442695
        %v7130 = vpow.pop %v7129
        %v7131 = vmul.f32 %v7113, 1.442695
        %v7132 = vpow.pop %v7131
        %v7133 = vmul.f32 %v7114, 1.442695
        %v7134 = vpow.pop %v7133
        %v7135 = vmul.f32 %v7115, 1.442695
        %v7136 = vpow.pop %v7135
        %v7137 = vmul.f32 %v7116, 1.442695
        %v7138 = vpow.pop %v7137
        %v7139 = vmul.f32 %v7117, 1.442695
        %v7140 = vpow.pop %v7139
        %v7141 = vmul.f32 %v7118, 1.442695
        %v7142 = vpow.pop %v7141
        %v7143 = vsel %vm1401, %v7120, 0.0
        %7144 = vadd.xlane.f32.xlu0 %v7143
        %v7145 = vpop.xlane.xlu0 %7144
        %v7146 = vsel %vm1401, %v7122, 0.0
        %7147 = vadd.xlane.f32.xlu0 %v7146
        %v7148 = vpop.xlane.xlu0 %7147
        %v7149 = vsel %vm1401, %v7124, 0.0
        %7150 = vadd.xlane.f32.xlu0 %v7149
        %v7151 = vpop.xlane.xlu0 %7150
        %v7152 = vsel %vm1401, %v7126, 0.0
        %7153 = vadd.xlane.f32.xlu0 %v7152
        %v7154 = vpop.xlane.xlu0 %7153
        %v7155 = vsel %vm1401, %v7128, 0.0
        %7156 = vadd.xlane.f32.xlu0 %v7155
        %v7157 = vpop.xlane.xlu0 %7156
        %v7158 = vsel %vm1401, %v7130, 0.0
        %7159 = vadd.xlane.f32.xlu0 %v7158
        %v7160 = vpop.xlane.xlu0 %7159
        %v7161 = vsel %vm1401, %v7132, 0.0
        %7162 = vadd.xlane.f32.xlu0 %v7161
        %v7163 = vpop.xlane.xlu0 %7162
        %v7164 = vsel %vm1401, %v7134, 0.0
        %7165 = vadd.xlane.f32.xlu0 %v7164
        %v7166 = vpop.xlane.xlu0 %7165
        %v7167 = vsel %vm1401, %v7136, 0.0
        %7168 = vadd.xlane.f32.xlu0 %v7167
        %v7169 = vpop.xlane.xlu0 %7168
        %v7170 = vsel %vm1401, %v7138, 0.0
        %7171 = vadd.xlane.f32.xlu0 %v7170
        %v7172 = vpop.xlane.xlu0 %7171
        %v7173 = vsel %vm1401, %v7140, 0.0
        %7174 = vadd.xlane.f32.xlu0 %v7173
        %v7175 = vpop.xlane.xlu0 %7174
        %v7176 = vsel %vm1401, %v7142, 0.0
        %7177 = vadd.xlane.f32.xlu0 %v7176
        %v7178 = vpop.xlane.xlu0 %7177
        %v7179 = vrcp.pop %v7145
        %v7180 = vmul.f32 %v7120, %v7179
        %v7181 = vrcp.pop %v7148
        %v7182 = vmul.f32 %v7122, %v7181
        %v7183 = vrcp.pop %v7151
        %v7184 = vmul.f32 %v7124, %v7183
        %v7185 = vrcp.pop %v7154
        %v7186 = vmul.f32 %v7126, %v7185
        %v7187 = vrcp.pop %v7157
        %v7188 = vmul.f32 %v7128, %v7187
        %v7189 = vrcp.pop %v7160
        %v7190 = vmul.f32 %v7130, %v7189
        %v7191 = vrcp.pop %v7163
        %v7192 = vmul.f32 %v7132, %v7191
        %v7193 = vrcp.pop %v7166
        %v7194 = vmul.f32 %v7134, %v7193
        %v7195 = vrcp.pop %v7169
        %v7196 = vmul.f32 %v7136, %v7195
        %v7197 = vrcp.pop %v7172
        %v7198 = vmul.f32 %v7138, %v7197
        %v7199 = vrcp.pop %v7175
        %v7200 = vmul.f32 %v7140, %v7199
        %v7201 = vrcp.pop %v7178
        %v7202 = vmul.f32 %v7142, %v7201
        %v7203 = vpack.c.bf16 %v7182, %v7180
        %v7204 = vpack.c.bf16 %v7186, %v7184
        %v7205 = vpack.c.bf16 %v7190, %v7188
        %v7206 = vpack.c.bf16 %v7194, %v7192
        %v7207 = vpack.c.bf16 %v7198, %v7196
        %v7208 = vpack.c.bf16 %v7202, %v7200
        %7209 = vrot.lane.b32.xlu0 %v5520, 64
        %v7210 = vpop.permute.xlu0 %7209
        %7211 = vrot.lane.b32.xlu0 %v5521, 64
        %v7212 = vpop.permute.xlu0 %7211
        %v7216 = vsel %vm1401, %v7203, 0
        %v7219 = vsel %vm1401, %v7204, 0
        %7221 = vmatprep.subr.bf16.mxu0 0
        %7222 = vmatpush1.bf16.msra.mxu0 %v7210
        %7223 = vmatprep.subr.bf16.mxu0 0
        %7224 = vmatpush1.bf16.msra.mxu0 %v7212
        %7225 = vmatprep.subr.bf16.mxu0 0
        %7226 = vmatpush1.bf16.msra.mxu0 0
        %7227 = vmatprep.subr.bf16.mxu0 0
        %7228 = vmatpush1.bf16.msra.mxu0 0
        %7229 = vmatprep.subr.bf16.mxu0 0
        %7230 = vmatpush1.bf16.msra.mxu0 0
        %7231 = vmatprep.subr.bf16.mxu0 0
        %7232 = vmatpush1.bf16.msra.mxu0 0
        %7233 = vmatprep.subr.bf16.mxu0 0
        %7234 = vmatpush1.bf16.msra.mxu0 0
        %7235 = vmatprep.subr.bf16.mxu0 0
        %7236 = vmatpush1.bf16.msra.mxu0 0
        %7237 = vmatprep.subr.bf16.mxu0 0
        %7238 = vmatpush1.bf16.msra.mxu0 0
        %7239 = vmatprep.subr.bf16.mxu0 0
        %7240 = vmatpush1.bf16.msra.mxu0 0
        %7241 = vmatprep.subr.bf16.mxu0 0
        %7242 = vmatpush1.bf16.msra.mxu0 0
        %7243 = vmatprep.subr.bf16.mxu0 0
        %7244 = vmatpush1.bf16.msra.mxu0 0
        %7245 = vmatprep.subr.bf16.mxu0 0
        %7246 = vmatpush1.bf16.msra.mxu0 0
        %7247 = vmatprep.subr.bf16.mxu0 0
        %7248 = vmatpush1.bf16.msra.mxu0 0
        %7249 = vmatprep.subr.bf16.mxu0 0
        %7250 = vmatpush1.bf16.msra.mxu0 0
        %7251 = vmatprep.subr.bf16.mxu0 0
        %7252 = vmatpush1.bf16.msra.mxu0 0
        %7253 = vmatprep.mubr.bf16.mxu0 0
        %7254 = vmatmul.mubr.bf16.gmra.mrb[0].mxu0 %v7216
        %v7255 = vpop.f32.mrb[0].mxu0
        %v7256 = vadd.f32 0.0, %v7255
        %v7257 = vpop.f32.mrb[0].mxu0
        %v7258 = vpop.f32.mrb[0].mxu0
        %v7259 = vadd.f32 0.0, %v7258
        %v7260 = vpop.f32.mrb[0].mxu0
        %7261 = vmatprep.mubr.bf16.mxu0 0
        %7262 = vmatmul.mubr.bf16.gmra.mrb[0].mxu0 %v7219
        %v7263 = vpop.f32.mrb[0].mxu0
        %v7264 = vadd.f32 0.0, %v7263
        %v7265 = vpop.f32.mrb[0].mxu0
        %v7266 = vpop.f32.mrb[0].mxu0
        %v7267 = vadd.f32 0.0, %v7266
        %v7268 = vpop.f32.mrb[0].mxu0
        %7269 = vdwg.mxu0
        %7270 = vrot.lane.b32.xlu0 %v5522, 64
        %v7271 = vpop.permute.xlu0 %7270
        %7272 = vrot.lane.b32.xlu0 %v5523, 64
        %v7273 = vpop.permute.xlu0 %7272
        %v7277 = vsel %vm1401, %v7205, 0
        %v7280 = vsel %vm1401, %v7206, 0
        %7282 = vmatprep.subr.bf16.mxu0 0
        %7283 = vmatpush1.bf16.msra.mxu0 %v7271
        %7284 = vmatprep.subr.bf16.mxu0 0
        %7285 = vmatpush1.bf16.msra.mxu0 %v7273
        %7286 = vmatprep.subr.bf16.mxu0 0
        %7287 = vmatpush1.bf16.msra.mxu0 0
        %7288 = vmatprep.subr.bf16.mxu0 0
        %7289 = vmatpush1.bf16.msra.mxu0 0
        %7290 = vmatprep.subr.bf16.mxu0 0
        %7291 = vmatpush1.bf16.msra.mxu0 0
        %7292 = vmatprep.subr.bf16.mxu0 0
        %7293 = vmatpush1.bf16.msra.mxu0 0
        %7294 = vmatprep.subr.bf16.mxu0 0
        %7295 = vmatpush1.bf16.msra.mxu0 0
        %7296 = vmatprep.subr.bf16.mxu0 0
        %7297 = vmatpush1.bf16.msra.mxu0 0
        %7298 = vmatprep.subr.bf16.mxu0 0
        %7299 = vmatpush1.bf16.msra.mxu0 0
        %7300 = vmatprep.subr.bf16.mxu0 0
        %7301 = vmatpush1.bf16.msra.mxu0 0
        %7302 = vmatprep.subr.bf16.mxu0 0
        %7303 = vmatpush1.bf16.msra.mxu0 0
        %7304 = vmatprep.subr.bf16.mxu0 0
        %7305 = vmatpush1.bf16.msra.mxu0 0
        %7306 = vmatprep.subr.bf16.mxu0 0
        %7307 = vmatpush1.bf16.msra.mxu0 0
        %7308 = vmatprep.subr.bf16.mxu0 0
        %7309 = vmatpush1.bf16.msra.mxu0 0
        %7310 = vmatprep.subr.bf16.mxu0 0
        %7311 = vmatpush1.bf16.msra.mxu0 0
        %7312 = vmatprep.subr.bf16.mxu0 0
        %7313 = vmatpush1.bf16.msra.mxu0 0
        %7314 = vmatprep.mubr.bf16.mxu0 0
        %7315 = vmatmul.mubr.bf16.gmra.mrb[0].mxu0 %v7277
        %v7316 = vpop.f32.mrb[0].mxu0
        %v7317 = vadd.f32 0.0, %v7316
        %v7318 = vpop.f32.mrb[0].mxu0
        %v7319 = vpop.f32.mrb[0].mxu0
        %v7320 = vadd.f32 0.0, %v7319
        %v7321 = vpop.f32.mrb[0].mxu0
        %7322 = vmatprep.mubr.bf16.mxu0 0
        %7323 = vmatmul.mubr.bf16.gmra.mrb[0].mxu0 %v7280
        %v7324 = vpop.f32.mrb[0].mxu0
        %v7325 = vadd.f32 0.0, %v7324
        %v7326 = vpop.f32.mrb[0].mxu0
        %v7327 = vpop.f32.mrb[0].mxu0
        %v7328 = vadd.f32 0.0, %v7327
        %v7329 = vpop.f32.mrb[0].mxu0
        %7330 = vdwg.mxu0
        %7331 = vrot.lane.b32.xlu0 %v5524, 64
        %v7332 = vpop.permute.xlu0 %7331
        %7333 = vrot.lane.b32.xlu0 %v5525, 64
        %v7334 = vpop.permute.xlu0 %7333
        %v7338 = vsel %vm1401, %v7207, 0
        %v7341 = vsel %vm1401, %v7208, 0
        %7343 = vmatprep.subr.bf16.mxu0 0
        %7344 = vmatpush1.bf16.msra.mxu0 %v7332
        %7345 = vmatprep.subr.bf16.mxu0 0
        %7346 = vmatpush1.bf16.msra.mxu0 %v7334
        %7347 = vmatprep.subr.bf16.mxu0 0
        %7348 = vmatpush1.bf16.msra.mxu0 0
        %7349 = vmatprep.subr.bf16.mxu0 0
        %7350 = vmatpush1.bf16.msra.mxu0 0
        %7351 = vmatprep.subr.bf16.mxu0 0
        %7352 = vmatpush1.bf16.msra.mxu0 0
        %7353 = vmatprep.subr.bf16.mxu0 0
        %7354 = vmatpush1.bf16.msra.mxu0 0
        %7355 = vmatprep.subr.bf16.mxu0 0
        %7356 = vmatpush1.bf16.msra.mxu0 0
        %7357 = vmatprep.subr.bf16.mxu0 0
        %7358 = vmatpush1.bf16.msra.mxu0 0
        %7359 = vmatprep.subr.bf16.mxu0 0
        %7360 = vmatpush1.bf16.msra.mxu0 0
        %7361 = vmatprep.subr.bf16.mxu0 0
        %7362 = vmatpush1.bf16.msra.mxu0 0
        %7363 = vmatprep.subr.bf16.mxu0 0
        %7364 = vmatpush1.bf16.msra.mxu0 0
        %7365 = vmatprep.subr.bf16.mxu0 0
        %7366 = vmatpush1.bf16.msra.mxu0 0
        %7367 = vmatprep.subr.bf16.mxu0 0
        %7368 = vmatpush1.bf16.msra.mxu0 0
        %7369 = vmatprep.subr.bf16.mxu0 0
        %7370 = vmatpush1.bf16.msra.mxu0 0
        %7371 = vmatprep.subr.bf16.mxu0 0
        %7372 = vmatpush1.bf16.msra.mxu0 0
        %7373 = vmatprep.subr.bf16.mxu0 0
        %7374 = vmatpush1.bf16.msra.mxu0 0
        %7375 = vmatprep.mubr.bf16.mxu0 0
        %7376 = vmatmul.mubr.bf16.gmra.mrb[0].mxu0 %v7338
        %v7377 = vpop.f32.mrb[0].mxu0
        %v7378 = vadd.f32 0.0, %v7377
        %v7379 = vpop.f32.mrb[0].mxu0
        %v7380 = vpop.f32.mrb[0].mxu0
        %v7381 = vadd.f32 0.0, %v7380
        %v7382 = vpop.f32.mrb[0].mxu0
        %7383 = vmatprep.mubr.bf16.mxu0 0
        %7384 = vmatmul.mubr.bf16.gmra.mrb[0].mxu0 %v7341
        %v7385 = vpop.f32.mrb[0].mxu0
        %v7386 = vadd.f32 0.0, %v7385
        %v7387 = vpop.f32.mrb[0].mxu0
        %v7388 = vpop.f32.mrb[0].mxu0
        %v7389 = vadd.f32 0.0, %v7388
        %v7390 = vpop.f32.mrb[0].mxu0
        %7391 = vdwg.mxu0
        %v7392 = vpack.c.bf16 %v7259, %v7256
        %v7393 = vpack.c.bf16 %v7267, %v7264
        %v7394 = vpack.c.bf16 %v7320, %v7317
        %v7395 = vpack.c.bf16 %v7328, %v7325
        %v7396 = vpack.c.bf16 %v7381, %v7378
        %v7397 = vpack.c.bf16 %v7389, %v7386
        %v7402 = vunpack.c.l.b16 %v5500
        %v7403 = vunpack.c.l.b16 %v5501
        %v7404 = vunpack.c.l.b16 %v5502
        %v7405 = vunpack.c.l.b16 %v5503
        %v7406 = vpack.c.b16 %v7403, %v7402
        %v7407 = vpack.c.b16 %v7405, %v7404
        %v7411 = vsel %vm1401, %v7392, 0
        %v7414 = vsel %vm1401, %v7393, 0
        %v7417 = vsel %vm1401, %v7394, 0
        %v7420 = vsel %vm1401, %v7395, 0
        %v7423 = vsel %vm1401, %v7396, 0
        %v7426 = vsel %vm1401, %v7397, 0
        %7428 = vmatprep.subr.bf16.mxu0 0
        %7429 = vmatpush1.bf16.msra.mxu0 %v7406
        %7430 = vmatprep.subr.bf16.mxu0 0
        %7431 = vmatpush1.bf16.msra.mxu0 %v7407
        %7432 = vmatprep.subr.bf16.mxu0 0
        %7433 = vmatpush1.bf16.msra.mxu0 0
        %7434 = vmatprep.subr.bf16.mxu0 0
        %7435 = vmatpush1.bf16.msra.mxu0 0
        %7436 = vmatprep.subr.bf16.mxu0 0
        %7437 = vmatpush1.bf16.msra.mxu0 0
        %7438 = vmatprep.subr.bf16.mxu0 0
        %7439 = vmatpush1.bf16.msra.mxu0 0
        %7440 = vmatprep.subr.bf16.mxu0 0
        %7441 = vmatpush1.bf16.msra.mxu0 0
        %7442 = vmatprep.subr.bf16.mxu0 0
        %7443 = vmatpush1.bf16.msra.mxu0 0
        %7444 = vmatprep.subr.bf16.mxu0 0
        %7445 = vmatpush1.bf16.msra.mxu0 0
        %7446 = vmatprep.subr.bf16.mxu0 0
        %7447 = vmatpush1.bf16.msra.mxu0 0
        %7448 = vmatprep.subr.bf16.mxu0 0
        %7449 = vmatpush1.bf16.msra.mxu0 0
        %7450 = vmatprep.subr.bf16.mxu0 0
        %7451 = vmatpush1.bf16.msra.mxu0 0
        %7452 = vmatprep.subr.bf16.mxu0 0
        %7453 = vmatpush1.bf16.msra.mxu0 0
        %7454 = vmatprep.subr.bf16.mxu0 0
        %7455 = vmatpush1.bf16.msra.mxu0 0
        %7456 = vmatprep.subr.bf16.mxu0 0
        %7457 = vmatpush1.bf16.msra.mxu0 0
        %7458 = vmatprep.subr.bf16.mxu0 0
        %7459 = vmatpush1.bf16.msra.mxu0 0
        %7460 = vmatprep.mubr.bf16.mxu0 0
        %7461 = vmatmul.mubr.bf16.gmra.mrb[0].mxu0 %v7411
        %v7462 = vpop.f32.mrb[0].mxu0
        %v7463 = vadd.f32 0.0, %v7462
        %v7464 = vpop.f32.mrb[0].mxu0
        %v7465 = vpop.f32.mrb[0].mxu0
        %v7466 = vadd.f32 0.0, %v7465
        %v7467 = vpop.f32.mrb[0].mxu0
        %7468 = vmatprep.mubr.bf16.mxu0 0
        %7469 = vmatmul.mubr.bf16.gmra.mrb[0].mxu0 %v7414
        %v7470 = vpop.f32.mrb[0].mxu0
        %v7471 = vadd.f32 0.0, %v7470
        %v7472 = vpop.f32.mrb[0].mxu0
        %v7473 = vpop.f32.mrb[0].mxu0
        %v7474 = vadd.f32 0.0, %v7473
        %v7475 = vpop.f32.mrb[0].mxu0
        %7476 = vmatprep.mubr.bf16.mxu0 0
        %7477 = vmatmul.mubr.bf16.gmra.mrb[0].mxu0 %v7417
        %v7478 = vpop.f32.mrb[0].mxu0
        %v7479 = vadd.f32 0.0, %v7478
        %v7480 = vpop.f32.mrb[0].mxu0
        %v7481 = vpop.f32.mrb[0].mxu0
        %v7482 = vadd.f32 0.0, %v7481
        %v7483 = vpop.f32.mrb[0].mxu0
        %7484 = vmatprep.mubr.bf16.mxu0 0
        %7485 = vmatmul.mubr.bf16.gmra.mrb[0].mxu0 %v7420
        %v7486 = vpop.f32.mrb[0].mxu0
        %v7487 = vadd.f32 0.0, %v7486
        %v7488 = vpop.f32.mrb[0].mxu0
        %v7489 = vpop.f32.mrb[0].mxu0
        %v7490 = vadd.f32 0.0, %v7489
        %v7491 = vpop.f32.mrb[0].mxu0
        %7492 = vmatprep.mubr.bf16.mxu0 0
        %7493 = vmatmul.mubr.bf16.gmra.mrb[0].mxu0 %v7423
        %v7494 = vpop.f32.mrb[0].mxu0
        %v7495 = vadd.f32 0.0, %v7494
        %v7496 = vpop.f32.mrb[0].mxu0
        %v7497 = vpop.f32.mrb[0].mxu0
        %v7498 = vadd.f32 0.0, %v7497
        %v7499 = vpop.f32.mrb[0].mxu0
        %7500 = vmatprep.mubr.bf16.mxu0 0
        %7501 = vmatmul.mubr.bf16.gmra.mrb[0].mxu0 %v7426
        %v7502 = vpop.f32.mrb[0].mxu0
        %v7503 = vadd.f32 0.0, %v7502
        %v7504 = vpop.f32.mrb[0].mxu0
        %v7505 = vpop.f32.mrb[0].mxu0
        %v7506 = vadd.f32 0.0, %v7505
        %v7507 = vpop.f32.mrb[0].mxu0
        %7508 = vdwg.mxu0
        %v7509 = vadd.f32 %v6794, %v7463
        %v7510 = vadd.f32 %v6797, %v7466
        %v7511 = vadd.f32 %v6802, %v7471
        %v7512 = vadd.f32 %v6805, %v7474
        %v7513 = vadd.f32 %v6810, %v7479
        %v7514 = vadd.f32 %v6813, %v7482
        %v7515 = vadd.f32 %v6818, %v7487
        %v7516 = vadd.f32 %v6821, %v7490
        %v7517 = vadd.f32 %v6826, %v7495
        %v7518 = vadd.f32 %v6829, %v7498
        %v7519 = vadd.f32 %v6834, %v7503
        %v7520 = vadd.f32 %v6837, %v7506
        %7521 = vrot.lane.b32.xlu0 %v5508, 32
        %v7522 = vpop.permute.xlu0 %7521
        %7523 = vrot.lane.b32.xlu0 %v5509, 32
        %v7524 = vpop.permute.xlu0 %7523
        %7525 = vrot.lane.b32.xlu0 %v5514, 32
        %v7526 = vpop.permute.xlu0 %7525
        %7527 = vrot.lane.b32.xlu0 %v5515, 32
        %v7528 = vpop.permute.xlu0 %7527
        %v7530 = vsel %vm1401, %v7522, 0
        %v7533 = vsel %vm1401, %v7524, 0
        %v7536 = vsel %vm1401, %v7526, 0
        %v7539 = vsel %vm1401, %v7528, 0
        %7541 = vmatprep.subr.bf16.mxu0 0
        %7542 = vmatpush1.bf16.xpose.msra.mxu0 %v7536
        %7543 = vmatprep.subr.bf16.mxu0 0
        %7544 = vmatpush1.bf16.xpose.msra.mxu0 %v7539
        %7545 = vmatprep.subr.bf16.mxu0 0
        %7546 = vmatpush1.bf16.xpose.msra.mxu0 0
        %7547 = vmatprep.subr.bf16.mxu0 0
        %7548 = vmatpush1.bf16.xpose.msra.mxu0 0
        %7549 = vmatprep.subr.bf16.mxu0 0
        %7550 = vmatpush1.bf16.xpose.msra.mxu0 0
        %7551 = vmatprep.subr.bf16.mxu0 0
        %7552 = vmatpush1.bf16.xpose.msra.mxu0 0
        %7553 = vmatprep.subr.bf16.mxu0 0
        %7554 = vmatpush1.bf16.xpose.msra.mxu0 0
        %7555 = vmatprep.subr.bf16.mxu0 0
        %7556 = vmatpush1.bf16.xpose.msra.mxu0 0
        %7557 = vmatprep.subr.bf16.mxu0 0
        %7558 = vmatpush1.bf16.xpose.msra.mxu0 0
        %7559 = vmatprep.subr.bf16.mxu0 0
        %7560 = vmatpush1.bf16.xpose.msra.mxu0 0
        %7561 = vmatprep.subr.bf16.mxu0 0
        %7562 = vmatpush1.bf16.xpose.msra.mxu0 0
        %7563 = vmatprep.subr.bf16.mxu0 0
        %7564 = vmatpush1.bf16.xpose.msra.mxu0 0
        %7565 = vmatprep.subr.bf16.mxu0 0
        %7566 = vmatpush1.bf16.xpose.msra.mxu0 0
        %7567 = vmatprep.subr.bf16.mxu0 0
        %7568 = vmatpush1.bf16.xpose.msra.mxu0 0
        %7569 = vmatprep.subr.bf16.mxu0 0
        %7570 = vmatpush1.bf16.xpose.msra.mxu0 0
        %7571 = vmatprep.subr.bf16.mxu0 0
        %7572 = vmatpush1.bf16.xpose.msra.mxu0 0
        %7573 = vmatprep.mubr.bf16.mxu0 0
        %7574 = vmatmul.mubr.bf16.gmra.mrb[0].mxu0 %v7530
        %v7575 = vpop.f32.mrb[0].mxu0
        %v7576 = vadd.f32 0.0, %v7575
        %v7577 = vpop.f32.mrb[0].mxu0
        %v7578 = vpop.f32.mrb[0].mxu0
        %v7579 = vadd.f32 0.0, %v7578
        %v7580 = vpop.f32.mrb[0].mxu0
        %7581 = vmatprep.mubr.bf16.mxu0 0
        %7582 = vmatmul.mubr.bf16.gmra.mrb[0].mxu0 %v7533
        %v7583 = vpop.f32.mrb[0].mxu0
        %v7584 = vadd.f32 0.0, %v7583
        %v7585 = vpop.f32.mrb[0].mxu0
        %v7586 = vpop.f32.mrb[0].mxu0
        %v7587 = vadd.f32 0.0, %v7586
        %v7588 = vpop.f32.mrb[0].mxu0
        %7589 = vdwg.mxu0
        %7590 = vrot.lane.b32.xlu0 %v5510, 32
        %v7591 = vpop.permute.xlu0 %7590
        %7592 = vrot.lane.b32.xlu0 %v5511, 32
        %v7593 = vpop.permute.xlu0 %7592
        %7594 = vrot.lane.b32.xlu0 %v5516, 32
        %v7595 = vpop.permute.xlu0 %7594
        %7596 = vrot.lane.b32.xlu0 %v5517, 32
        %v7597 = vpop.permute.xlu0 %7596
        %v7599 = vsel %vm1401, %v7591, 0
        %v7602 = vsel %vm1401, %v7593, 0
        %v7605 = vsel %vm1401, %v7595, 0
        %v7608 = vsel %vm1401, %v7597, 0
        %7610 = vmatprep.subr.bf16.mxu0 0
        %7611 = vmatpush1.bf16.xpose.msra.mxu0 %v7605
        %7612 = vmatprep.subr.bf16.mxu0 0
        %7613 = vmatpush1.bf16.xpose.msra.mxu0 %v7608
        %7614 = vmatprep.subr.bf16.mxu0 0
        %7615 = vmatpush1.bf16.xpose.msra.mxu0 0
        %7616 = vmatprep.subr.bf16.mxu0 0
        %7617 = vmatpush1.bf16.xpose.msra.mxu0 0
        %7618 = vmatprep.subr.bf16.mxu0 0
        %7619 = vmatpush1.bf16.xpose.msra.mxu0 0
        %7620 = vmatprep.subr.bf16.mxu0 0
        %7621 = vmatpush1.bf16.xpose.msra.mxu0 0
        %7622 = vmatprep.subr.bf16.mxu0 0
        %7623 = vmatpush1.bf16.xpose.msra.mxu0 0
        %7624 = vmatprep.subr.bf16.mxu0 0
        %7625 = vmatpush1.bf16.xpose.msra.mxu0 0
        %7626 = vmatprep.subr.bf16.mxu0 0
        %7627 = vmatpush1.bf16.xpose.msra.mxu0 0
        %7628 = vmatprep.subr.bf16.mxu0 0
        %7629 = vmatpush1.bf16.xpose.msra.mxu0 0
        %7630 = vmatprep.subr.bf16.mxu0 0
        %7631 = vmatpush1.bf16.xpose.msra.mxu0 0
        %7632 = vmatprep.subr.bf16.mxu0 0
        %7633 = vmatpush1.bf16.xpose.msra.mxu0 0
        %7634 = vmatprep.subr.bf16.mxu0 0
        %7635 = vmatpush1.bf16.xpose.msra.mxu0 0
        %7636 = vmatprep.subr.bf16.mxu0 0
        %7637 = vmatpush1.bf16.xpose.msra.mxu0 0
        %7638 = vmatprep.subr.bf16.mxu0 0
        %7639 = vmatpush1.bf16.xpose.msra.mxu0 0
        %7640 = vmatprep.subr.bf16.mxu0 0
        %7641 = vmatpush1.bf16.xpose.msra.mxu0 0
        %7642 = vmatprep.mubr.bf16.mxu0 0
        %7643 = vmatmul.mubr.bf16.gmra.mrb[0].mxu0 %v7599
        %v7644 = vpop.f32.mrb[0].mxu0
        %v7645 = vadd.f32 0.0, %v7644
        %v7646 = vpop.f32.mrb[0].mxu0
        %v7647 = vpop.f32.mrb[0].mxu0
        %v7648 = vadd.f32 0.0, %v7647
        %v7649 = vpop.f32.mrb[0].mxu0
        %7650 = vmatprep.mubr.bf16.mxu0 0
        %7651 = vmatmul.mubr.bf16.gmra.mrb[0].mxu0 %v7602
        %v7652 = vpop.f32.mrb[0].mxu0
        %v7653 = vadd.f32 0.0, %v7652
        %v7654 = vpop.f32.mrb[0].mxu0
        %v7655 = vpop.f32.mrb[0].mxu0
        %v7656 = vadd.f32 0.0, %v7655
        %v7657 = vpop.f32.mrb[0].mxu0
        %7658 = vdwg.mxu0
        %7659 = vrot.lane.b32.xlu0 %v5512, 32
        %v7660 = vpop.permute.xlu0 %7659
        %7661 = vrot.lane.b32.xlu0 %v5513, 32
        %v7662 = vpop.permute.xlu0 %7661
        %7663 = vrot.lane.b32.xlu0 %v5518, 32
        %v7664 = vpop.permute.xlu0 %7663
        %7665 = vrot.lane.b32.xlu0 %v5519, 32
        %v7666 = vpop.permute.xlu0 %7665
        %v7668 = vsel %vm1401, %v7660, 0
        %v7671 = vsel %vm1401, %v7662, 0
        %v7674 = vsel %vm1401, %v7664, 0
        %v7677 = vsel %vm1401, %v7666, 0
        %7679 = vmatprep.subr.bf16.mxu0 0
        %7680 = vmatpush1.bf16.xpose.msra.mxu0 %v7674
        %7681 = vmatprep.subr.bf16.mxu0 0
        %7682 = vmatpush1.bf16.xpose.msra.mxu0 %v7677
        %7683 = vmatprep.subr.bf16.mxu0 0
        %7684 = vmatpush1.bf16.xpose.msra.mxu0 0
        %7685 = vmatprep.subr.bf16.mxu0 0
        %7686 = vmatpush1.bf16.xpose.msra.mxu0 0
        %7687 = vmatprep.subr.bf16.mxu0 0
        %7688 = vmatpush1.bf16.xpose.msra.mxu0 0
        %7689 = vmatprep.subr.bf16.mxu0 0
        %7690 = vmatpush1.bf16.xpose.msra.mxu0 0
        %7691 = vmatprep.subr.bf16.mxu0 0
        %7692 = vmatpush1.bf16.xpose.msra.mxu0 0
        %7693 = vmatprep.subr.bf16.mxu0 0
        %7694 = vmatpush1.bf16.xpose.msra.mxu0 0
        %7695 = vmatprep.subr.bf16.mxu0 0
        %7696 = vmatpush1.bf16.xpose.msra.mxu0 0
        %7697 = vmatprep.subr.bf16.mxu0 0
        %7698 = vmatpush1.bf16.xpose.msra.mxu0 0
        %7699 = vmatprep.subr.bf16.mxu0 0
        %7700 = vmatpush1.bf16.xpose.msra.mxu0 0
        %7701 = vmatprep.subr.bf16.mxu0 0
        %7702 = vmatpush1.bf16.xpose.msra.mxu0 0
        %7703 = vmatprep.subr.bf16.mxu0 0
        %7704 = vmatpush1.bf16.xpose.msra.mxu0 0
        %7705 = vmatprep.subr.bf16.mxu0 0
        %7706 = vmatpush1.bf16.xpose.msra.mxu0 0
        %7707 = vmatprep.subr.bf16.mxu0 0
        %7708 = vmatpush1.bf16.xpose.msra.mxu0 0
        %7709 = vmatprep.subr.bf16.mxu0 0
        %7710 = vmatpush1.bf16.xpose.msra.mxu0 0
        %7711 = vmatprep.mubr.bf16.mxu0 0
        %7712 = vmatmul.mubr.bf16.gmra.mrb[0].mxu0 %v7668
        %v7713 = vpop.f32.mrb[0].mxu0
        %v7714 = vadd.f32 0.0, %v7713
        %v7715 = vpop.f32.mrb[0].mxu0
        %v7716 = vpop.f32.mrb[0].mxu0
        %v7717 = vadd.f32 0.0, %v7716
        %v7718 = vpop.f32.mrb[0].mxu0
        %7719 = vmatprep.mubr.bf16.mxu0 0
        %7720 = vmatmul.mubr.bf16.gmra.mrb[0].mxu0 %v7671
        %v7721 = vpop.f32.mrb[0].mxu0
        %v7722 = vadd.f32 0.0, %v7721
        %v7723 = vpop.f32.mrb[0].mxu0
        %v7724 = vpop.f32.mrb[0].mxu0
        %v7725 = vadd.f32 0.0, %v7724
        %v7726 = vpop.f32.mrb[0].mxu0
        %7727 = vdwg.mxu0
        %v7728 = vmul.f32 %v7576, 0.17677669
        %v7729 = vmul.f32 %v7579, 0.17677669
        %v7730 = vmul.f32 %v7584, 0.17677669
        %v7731 = vmul.f32 %v7587, 0.17677669
        %v7732 = vmul.f32 %v7645, 0.17677669
        %v7733 = vmul.f32 %v7648, 0.17677669
        %v7734 = vmul.f32 %v7653, 0.17677669
        %v7735 = vmul.f32 %v7656, 0.17677669
        %v7736 = vmul.f32 %v7714, 0.17677669
        %v7737 = vmul.f32 %v7717, 0.17677669
        %v7738 = vmul.f32 %v7722, 0.17677669
        %v7739 = vmul.f32 %v7725, 0.17677669
        %v7740 = vadd.f32 %v7728, %v1601
        %v7741 = vadd.f32 %v7729, %v1601
        %v7742 = vadd.f32 %v7730, %v1601
        %v7743 = vadd.f32 %v7731, %v1601
        %v7744 = vadd.f32 %v7732, %v1601
        %v7745 = vadd.f32 %v7733, %v1601
        %v7746 = vadd.f32 %v7734, %v1601
        %v7747 = vadd.f32 %v7735, %v1601
        %v7748 = vadd.f32 %v7736, %v1601
        %v7749 = vadd.f32 %v7737, %v1601
        %v7750 = vadd.f32 %v7738, %v1601
        %v7751 = vadd.f32 %v7739, %v1601
        %v7752 = vsel %vm1401, %v7740, -inf
        %7753 = vmax.xlane.f32.xlu0 %v7752
        %v7754 = vpop.xlane.xlu0 %7753
        %v7755 = vsel %vm1401, %v7741, -inf
        %7756 = vmax.xlane.f32.xlu0 %v7755
        %v7757 = vpop.xlane.xlu0 %7756
        %v7758 = vsel %vm1401, %v7742, -inf
        %7759 = vmax.xlane.f32.xlu0 %v7758
        %v7760 = vpop.xlane.xlu0 %7759
        %v7761 = vsel %vm1401, %v7743, -inf
        %7762 = vmax.xlane.f32.xlu0 %v7761
        %v7763 = vpop.xlane.xlu0 %7762
        %v7764 = vsel %vm1401, %v7744, -inf
        %7765 = vmax.xlane.f32.xlu0 %v7764
        %v7766 = vpop.xlane.xlu0 %7765
        %v7767 = vsel %vm1401, %v7745, -inf
        %7768 = vmax.xlane.f32.xlu0 %v7767
        %v7769 = vpop.xlane.xlu0 %7768
        %v7770 = vsel %vm1401, %v7746, -inf
        %7771 = vmax.xlane.f32.xlu0 %v7770
        %v7772 = vpop.xlane.xlu0 %7771
        %v7773 = vsel %vm1401, %v7747, -inf
        %7774 = vmax.xlane.f32.xlu0 %v7773
        %v7775 = vpop.xlane.xlu0 %7774
        %v7776 = vsel %vm1401, %v7748, -inf
        %7777 = vmax.xlane.f32.xlu0 %v7776
        %v7778 = vpop.xlane.xlu0 %7777
        %v7779 = vsel %vm1401, %v7749, -inf
        %7780 = vmax.xlane.f32.xlu0 %v7779
        %v7781 = vpop.xlane.xlu0 %7780
        %v7782 = vsel %vm1401, %v7750, -inf
        %7783 = vmax.xlane.f32.xlu0 %v7782
        %v7784 = vpop.xlane.xlu0 %7783
        %v7785 = vsel %vm1401, %v7751, -inf
        %7786 = vmax.xlane.f32.xlu0 %v7785
        %v7787 = vpop.xlane.xlu0 %7786
        %v7788 = vsub.f32 %v7740, %v7754
        %v7789 = vsub.f32 %v7741, %v7757
        %v7790 = vsub.f32 %v7742, %v7760
        %v7791 = vsub.f32 %v7743, %v7763
        %v7792 = vsub.f32 %v7744, %v7766
        %v7793 = vsub.f32 %v7745, %v7769
        %v7794 = vsub.f32 %v7746, %v7772
        %v7795 = vsub.f32 %v7747, %v7775
        %v7796 = vsub.f32 %v7748, %v7778
        %v7797 = vsub.f32 %v7749, %v7781
        %v7798 = vsub.f32 %v7750, %v7784
        %v7799 = vsub.f32 %v7751, %v7787
        %v7800 = vmul.f32 %v7788, 1.442695
        %v7801 = vpow.pop %v7800
        %v7802 = vmul.f32 %v7789, 1.442695
        %v7803 = vpow.pop %v7802
        %v7804 = vmul.f32 %v7790, 1.442695
        %v7805 = vpow.pop %v7804
        %v7806 = vmul.f32 %v7791, 1.442695
        %v7807 = vpow.pop %v7806
        %v7808 = vmul.f32 %v7792, 1.442695
        %v7809 = vpow.pop %v7808
        %v7810 = vmul.f32 %v7793, 1.442695
        %v7811 = vpow.pop %v7810
        %v7812 = vmul.f32 %v7794, 1.442695
        %v7813 = vpow.pop %v7812
        %v7814 = vmul.f32 %v7795, 1.442695
        %v7815 = vpow.pop %v7814
        %v7816 = vmul.f32 %v7796, 1.442695
        %v7817 = vpow.pop %v7816
        %v7818 = vmul.f32 %v7797, 1.442695
        %v7819 = vpow.pop %v7818
        %v7820 = vmul.f32 %v7798, 1.442695
        %v7821 = vpow.pop %v7820
        %v7822 = vmul.f32 %v7799, 1.442695
        %v7823 = vpow.pop %v7822
        %v7824 = vsel %vm1401, %v7801, 0.0
        %7825 = vadd.xlane.f32.xlu0 %v7824
        %v7826 = vpop.xlane.xlu0 %7825
        %v7827 = vsel %vm1401, %v7803, 0.0
        %7828 = vadd.xlane.f32.xlu0 %v7827
        %v7829 = vpop.xlane.xlu0 %7828
        %v7830 = vsel %vm1401, %v7805, 0.0
        %7831 = vadd.xlane.f32.xlu0 %v7830
        %v7832 = vpop.xlane.xlu0 %7831
        %v7833 = vsel %vm1401, %v7807, 0.0
        %7834 = vadd.xlane.f32.xlu0 %v7833
        %v7835 = vpop.xlane.xlu0 %7834
        %v7836 = vsel %vm1401, %v7809, 0.0
        %7837 = vadd.xlane.f32.xlu0 %v7836
        %v7838 = vpop.xlane.xlu0 %7837
        %v7839 = vsel %vm1401, %v7811, 0.0
        %7840 = vadd.xlane.f32.xlu0 %v7839
        %v7841 = vpop.xlane.xlu0 %7840
        %v7842 = vsel %vm1401, %v7813, 0.0
        %7843 = vadd.xlane.f32.xlu0 %v7842
        %v7844 = vpop.xlane.xlu0 %7843
        %v7845 = vsel %vm1401, %v7815, 0.0
        %7846 = vadd.xlane.f32.xlu0 %v7845
        %v7847 = vpop.xlane.xlu0 %7846
        %v7848 = vsel %vm1401, %v7817, 0.0
        %7849 = vadd.xlane.f32.xlu0 %v7848
        %v7850 = vpop.xlane.xlu0 %7849
        %v7851 = vsel %vm1401, %v7819, 0.0
        %7852 = vadd.xlane.f32.xlu0 %v7851
        %v7853 = vpop.xlane.xlu0 %7852
        %v7854 = vsel %vm1401, %v7821, 0.0
        %7855 = vadd.xlane.f32.xlu0 %v7854
        %v7856 = vpop.xlane.xlu0 %7855
        %v7857 = vsel %vm1401, %v7823, 0.0
        %7858 = vadd.xlane.f32.xlu0 %v7857
        %v7859 = vpop.xlane.xlu0 %7858
        %v7860 = vrcp.pop %v7826
        %v7861 = vmul.f32 %v7801, %v7860
        %v7862 = vrcp.pop %v7829
        %v7863 = vmul.f32 %v7803, %v7862
        %v7864 = vrcp.pop %v7832
        %v7865 = vmul.f32 %v7805, %v7864
        %v7866 = vrcp.pop %v7835
        %v7867 = vmul.f32 %v7807, %v7866
        %v7868 = vrcp.pop %v7838
        %v7869 = vmul.f32 %v7809, %v7868
        %v7870 = vrcp.pop %v7841
        %v7871 = vmul.f32 %v7811, %v7870
        %v7872 = vrcp.pop %v7844
        %v7873 = vmul.f32 %v7813, %v7872
        %v7874 = vrcp.pop %v7847
        %v7875 = vmul.f32 %v7815, %v7874
        %v7876 = vrcp.pop %v7850
        %v7877 = vmul.f32 %v7817, %v7876
        %v7878 = vrcp.pop %v7853
        %v7879 = vmul.f32 %v7819, %v7878
        %v7880 = vrcp.pop %v7856
        %v7881 = vmul.f32 %v7821, %v7880
        %v7882 = vrcp.pop %v7859
        %v7883 = vmul.f32 %v7823, %v7882
        %v7884 = vpack.c.bf16 %v7863, %v7861
        %v7885 = vpack.c.bf16 %v7867, %v7865
        %v7886 = vpack.c.bf16 %v7871, %v7869
        %v7887 = vpack.c.bf16 %v7875, %v7873
        %v7888 = vpack.c.bf16 %v7879, %v7877
        %v7889 = vpack.c.bf16 %v7883, %v7881
        %7890 = vrot.lane.b32.xlu0 %v5520, 32
        %v7891 = vpop.permute.xlu0 %7890
        %7892 = vrot.lane.b32.xlu0 %v5521, 32
        %v7893 = vpop.permute.xlu0 %7892
        %v7897 = vsel %vm1401, %v7884, 0
        %v7900 = vsel %vm1401, %v7885, 0
        %7902 = vmatprep.subr.bf16.mxu0 0
        %7903 = vmatpush1.bf16.msra.mxu0 %v7891
        %7904 = vmatprep.subr.bf16.mxu0 0
        %7905 = vmatpush1.bf16.msra.mxu0 %v7893
        %7906 = vmatprep.subr.bf16.mxu0 0
        %7907 = vmatpush1.bf16.msra.mxu0 0
        %7908 = vmatprep.subr.bf16.mxu0 0
        %7909 = vmatpush1.bf16.msra.mxu0 0
        %7910 = vmatprep.subr.bf16.mxu0 0
        %7911 = vmatpush1.bf16.msra.mxu0 0
        %7912 = vmatprep.subr.bf16.mxu0 0
        %7913 = vmatpush1.bf16.msra.mxu0 0
        %7914 = vmatprep.subr.bf16.mxu0 0
        %7915 = vmatpush1.bf16.msra.mxu0 0
        %7916 = vmatprep.subr.bf16.mxu0 0
        %7917 = vmatpush1.bf16.msra.mxu0 0
        %7918 = vmatprep.subr.bf16.mxu0 0
        %7919 = vmatpush1.bf16.msra.mxu0 0
        %7920 = vmatprep.subr.bf16.mxu0 0
        %7921 = vmatpush1.bf16.msra.mxu0 0
        %7922 = vmatprep.subr.bf16.mxu0 0
        %7923 = vmatpush1.bf16.msra.mxu0 0
        %7924 = vmatprep.subr.bf16.mxu0 0
        %7925 = vmatpush1.bf16.msra.mxu0 0
        %7926 = vmatprep.subr.bf16.mxu0 0
        %7927 = vmatpush1.bf16.msra.mxu0 0
        %7928 = vmatprep.subr.bf16.mxu0 0
        %7929 = vmatpush1.bf16.msra.mxu0 0
        %7930 = vmatprep.subr.bf16.mxu0 0
        %7931 = vmatpush1.bf16.msra.mxu0 0
        %7932 = vmatprep.subr.bf16.mxu0 0
        %7933 = vmatpush1.bf16.msra.mxu0 0
        %7934 = vmatprep.mubr.bf16.mxu0 0
        %7935 = vmatmul.mubr.bf16.gmra.mrb[0].mxu0 %v7897
        %v7936 = vpop.f32.mrb[0].mxu0
        %v7937 = vadd.f32 0.0, %v7936
        %v7938 = vpop.f32.mrb[0].mxu0
        %v7939 = vpop.f32.mrb[0].mxu0
        %v7940 = vadd.f32 0.0, %v7939
        %v7941 = vpop.f32.mrb[0].mxu0
        %7942 = vmatprep.mubr.bf16.mxu0 0
        %7943 = vmatmul.mubr.bf16.gmra.mrb[0].mxu0 %v7900
        %v7944 = vpop.f32.mrb[0].mxu0
        %v7945 = vadd.f32 0.0, %v7944
        %v7946 = vpop.f32.mrb[0].mxu0
        %v7947 = vpop.f32.mrb[0].mxu0
        %v7948 = vadd.f32 0.0, %v7947
        %v7949 = vpop.f32.mrb[0].mxu0
        %7950 = vdwg.mxu0
        %7951 = vrot.lane.b32.xlu0 %v5522, 32
        %v7952 = vpop.permute.xlu0 %7951
        %7953 = vrot.lane.b32.xlu0 %v5523, 32
        %v7954 = vpop.permute.xlu0 %7953
        %v7958 = vsel %vm1401, %v7886, 0
        %v7961 = vsel %vm1401, %v7887, 0
        %7963 = vmatprep.subr.bf16.mxu0 0
        %7964 = vmatpush1.bf16.msra.mxu0 %v7952
        %7965 = vmatprep.subr.bf16.mxu0 0
        %7966 = vmatpush1.bf16.msra.mxu0 %v7954
        %7967 = vmatprep.subr.bf16.mxu0 0
        %7968 = vmatpush1.bf16.msra.mxu0 0
        %7969 = vmatprep.subr.bf16.mxu0 0
        %7970 = vmatpush1.bf16.msra.mxu0 0
        %7971 = vmatprep.subr.bf16.mxu0 0
        %7972 = vmatpush1.bf16.msra.mxu0 0
        %7973 = vmatprep.subr.bf16.mxu0 0
        %7974 = vmatpush1.bf16.msra.mxu0 0
        %7975 = vmatprep.subr.bf16.mxu0 0
        %7976 = vmatpush1.bf16.msra.mxu0 0
        %7977 = vmatprep.subr.bf16.mxu0 0
        %7978 = vmatpush1.bf16.msra.mxu0 0
        %7979 = vmatprep.subr.bf16.mxu0 0
        %7980 = vmatpush1.bf16.msra.mxu0 0
        %7981 = vmatprep.subr.bf16.mxu0 0
        %7982 = vmatpush1.bf16.msra.mxu0 0
        %7983 = vmatprep.subr.bf16.mxu0 0
        %7984 = vmatpush1.bf16.msra.mxu0 0
        %7985 = vmatprep.subr.bf16.mxu0 0
        %7986 = vmatpush1.bf16.msra.mxu0 0
        %7987 = vmatprep.subr.bf16.mxu0 0
        %7988 = vmatpush1.bf16.msra.mxu0 0
        %7989 = vmatprep.subr.bf16.mxu0 0
        %7990 = vmatpush1.bf16.msra.mxu0 0
        %7991 = vmatprep.subr.bf16.mxu0 0
        %7992 = vmatpush1.bf16.msra.mxu0 0
        %7993 = vmatprep.subr.bf16.mxu0 0
        %7994 = vmatpush1.bf16.msra.mxu0 0
        %7995 = vmatprep.mubr.bf16.mxu0 0
        %7996 = vmatmul.mubr.bf16.gmra.mrb[0].mxu0 %v7958
        %v7997 = vpop.f32.mrb[0].mxu0
        %v7998 = vadd.f32 0.0, %v7997
        %v7999 = vpop.f32.mrb[0].mxu0
        %v8000 = vpop.f32.mrb[0].mxu0
        %v8001 = vadd.f32 0.0, %v8000
        %v8002 = vpop.f32.mrb[0].mxu0
        %8003 = vmatprep.mubr.bf16.mxu0 0
        %8004 = vmatmul.mubr.bf16.gmra.mrb[0].mxu0 %v7961
        %v8005 = vpop.f32.mrb[0].mxu0
        %v8006 = vadd.f32 0.0, %v8005
        %v8007 = vpop.f32.mrb[0].mxu0
        %v8008 = vpop.f32.mrb[0].mxu0
        %v8009 = vadd.f32 0.0, %v8008
        %v8010 = vpop.f32.mrb[0].mxu0
        %8011 = vdwg.mxu0
        %8012 = vrot.lane.b32.xlu0 %v5524, 32
        %v8013 = vpop.permute.xlu0 %8012
        %8014 = vrot.lane.b32.xlu0 %v5525, 32
        %v8015 = vpop.permute.xlu0 %8014
        %v8019 = vsel %vm1401, %v7888, 0
        %v8022 = vsel %vm1401, %v7889, 0
        %8024 = vmatprep.subr.bf16.mxu0 0
        %8025 = vmatpush1.bf16.msra.mxu0 %v8013
        %8026 = vmatprep.subr.bf16.mxu0 0
        %8027 = vmatpush1.bf16.msra.mxu0 %v8015
        %8028 = vmatprep.subr.bf16.mxu0 0
        %8029 = vmatpush1.bf16.msra.mxu0 0
        %8030 = vmatprep.subr.bf16.mxu0 0
        %8031 = vmatpush1.bf16.msra.mxu0 0
        %8032 = vmatprep.subr.bf16.mxu0 0
        %8033 = vmatpush1.bf16.msra.mxu0 0
        %8034 = vmatprep.subr.bf16.mxu0 0
        %8035 = vmatpush1.bf16.msra.mxu0 0
        %8036 = vmatprep.subr.bf16.mxu0 0
        %8037 = vmatpush1.bf16.msra.mxu0 0
        %8038 = vmatprep.subr.bf16.mxu0 0
        %8039 = vmatpush1.bf16.msra.mxu0 0
        %8040 = vmatprep.subr.bf16.mxu0 0
        %8041 = vmatpush1.bf16.msra.mxu0 0
        %8042 = vmatprep.subr.bf16.mxu0 0
        %8043 = vmatpush1.bf16.msra.mxu0 0
        %8044 = vmatprep.subr.bf16.mxu0 0
        %8045 = vmatpush1.bf16.msra.mxu0 0
        %8046 = vmatprep.subr.bf16.mxu0 0
        %8047 = vmatpush1.bf16.msra.mxu0 0
        %8048 = vmatprep.subr.bf16.mxu0 0
        %8049 = vmatpush1.bf16.msra.mxu0 0
        %8050 = vmatprep.subr.bf16.mxu0 0
        %8051 = vmatpush1.bf16.msra.mxu0 0
        %8052 = vmatprep.subr.bf16.mxu0 0
        %8053 = vmatpush1.bf16.msra.mxu0 0
        %8054 = vmatprep.subr.bf16.mxu0 0
        %8055 = vmatpush1.bf16.msra.mxu0 0
        %8056 = vmatprep.mubr.bf16.mxu0 0
        %8057 = vmatmul.mubr.bf16.gmra.mrb[0].mxu0 %v8019
        %v8058 = vpop.f32.mrb[0].mxu0
        %v8059 = vadd.f32 0.0, %v8058
        %v8060 = vpop.f32.mrb[0].mxu0
        %v8061 = vpop.f32.mrb[0].mxu0
        %v8062 = vadd.f32 0.0, %v8061
        %v8063 = vpop.f32.mrb[0].mxu0
        %8064 = vmatprep.mubr.bf16.mxu0 0
        %8065 = vmatmul.mubr.bf16.gmra.mrb[0].mxu0 %v8022
        %v8066 = vpop.f32.mrb[0].mxu0
        %v8067 = vadd.f32 0.0, %v8066
        %v8068 = vpop.f32.mrb[0].mxu0
        %v8069 = vpop.f32.mrb[0].mxu0
        %v8070 = vadd.f32 0.0, %v8069
        %v8071 = vpop.f32.mrb[0].mxu0
        %8072 = vdwg.mxu0
        %v8073 = vpack.c.bf16 %v7940, %v7937
        %v8074 = vpack.c.bf16 %v7948, %v7945
        %v8075 = vpack.c.bf16 %v8001, %v7998
        %v8076 = vpack.c.bf16 %v8009, %v8006
        %v8077 = vpack.c.bf16 %v8062, %v8059
        %v8078 = vpack.c.bf16 %v8070, %v8067
        %v8083 = vunpack.c.l.b16 %v5504
        %v8084 = vunpack.c.l.b16 %v5505
        %v8085 = vunpack.c.l.b16 %v5506
        %v8086 = vunpack.c.l.b16 %v5507
        %v8087 = vpack.c.b16 %v8084, %v8083
        %v8088 = vpack.c.b16 %v8086, %v8085
        %v8092 = vsel %vm1401, %v8073, 0
        %v8095 = vsel %vm1401, %v8074, 0
        %v8098 = vsel %vm1401, %v8075, 0
        %v8101 = vsel %vm1401, %v8076, 0
        %v8104 = vsel %vm1401, %v8077, 0
        %v8107 = vsel %vm1401, %v8078, 0
        %8109 = vmatprep.subr.bf16.mxu0 0
        %8110 = vmatpush1.bf16.msra.mxu0 %v8087
        %8111 = vmatprep.subr.bf16.mxu0 0
        %8112 = vmatpush1.bf16.msra.mxu0 %v8088
        %8113 = vmatprep.subr.bf16.mxu0 0
        %8114 = vmatpush1.bf16.msra.mxu0 0
        %8115 = vmatprep.subr.bf16.mxu0 0
        %8116 = vmatpush1.bf16.msra.mxu0 0
        %8117 = vmatprep.subr.bf16.mxu0 0
        %8118 = vmatpush1.bf16.msra.mxu0 0
        %8119 = vmatprep.subr.bf16.mxu0 0
        %8120 = vmatpush1.bf16.msra.mxu0 0
        %8121 = vmatprep.subr.bf16.mxu0 0
        %8122 = vmatpush1.bf16.msra.mxu0 0
        %8123 = vmatprep.subr.bf16.mxu0 0
        %8124 = vmatpush1.bf16.msra.mxu0 0
        %8125 = vmatprep.subr.bf16.mxu0 0
        %8126 = vmatpush1.bf16.msra.mxu0 0
        %8127 = vmatprep.subr.bf16.mxu0 0
        %8128 = vmatpush1.bf16.msra.mxu0 0
        %8129 = vmatprep.subr.bf16.mxu0 0
        %8130 = vmatpush1.bf16.msra.mxu0 0
        %8131 = vmatprep.subr.bf16.mxu0 0
        %8132 = vmatpush1.bf16.msra.mxu0 0
        %8133 = vmatprep.subr.bf16.mxu0 0
        %8134 = vmatpush1.bf16.msra.mxu0 0
        %8135 = vmatprep.subr.bf16.mxu0 0
        %8136 = vmatpush1.bf16.msra.mxu0 0
        %8137 = vmatprep.subr.bf16.mxu0 0
        %8138 = vmatpush1.bf16.msra.mxu0 0
        %8139 = vmatprep.subr.bf16.mxu0 0
        %8140 = vmatpush1.bf16.msra.mxu0 0
        %8141 = vmatprep.mubr.bf16.mxu0 0
        %8142 = vmatmul.mubr.bf16.gmra.mrb[0].mxu0 %v8092
        %v8143 = vpop.f32.mrb[0].mxu0
        %v8144 = vadd.f32 0.0, %v8143
        %v8145 = vpop.f32.mrb[0].mxu0
        %v8146 = vpop.f32.mrb[0].mxu0
        %v8147 = vadd.f32 0.0, %v8146
        %v8148 = vpop.f32.mrb[0].mxu0
        %8149 = vmatprep.mubr.bf16.mxu0 0
        %8150 = vmatmul.mubr.bf16.gmra.mrb[0].mxu0 %v8095
        %v8151 = vpop.f32.mrb[0].mxu0
        %v8152 = vadd.f32 0.0, %v8151
        %v8153 = vpop.f32.mrb[0].mxu0
        %v8154 = vpop.f32.mrb[0].mxu0
        %v8155 = vadd.f32 0.0, %v8154
        %v8156 = vpop.f32.mrb[0].mxu0
        %8157 = vmatprep.mubr.bf16.mxu0 0
        %8158 = vmatmul.mubr.bf16.gmra.mrb[0].mxu0 %v8098
        %v8159 = vpop.f32.mrb[0].mxu0
        %v8160 = vadd.f32 0.0, %v8159
        %v8161 = vpop.f32.mrb[0].mxu0
        %v8162 = vpop.f32.mrb[0].mxu0
        %v8163 = vadd.f32 0.0, %v8162
        %v8164 = vpop.f32.mrb[0].mxu0
        %8165 = vmatprep.mubr.bf16.mxu0 0
        %8166 = vmatmul.mubr.bf16.gmra.mrb[0].mxu0 %v8101
        %v8167 = vpop.f32.mrb[0].mxu0
        %v8168 = vadd.f32 0.0, %v8167
        %v8169 = vpop.f32.mrb[0].mxu0
        %v8170 = vpop.f32.mrb[0].mxu0
        %v8171 = vadd.f32 0.0, %v8170
        %v8172 = vpop.f32.mrb[0].mxu0
        %8173 = vmatprep.mubr.bf16.mxu0 0
        %8174 = vmatmul.mubr.bf16.gmra.mrb[0].mxu0 %v8104
        %v8175 = vpop.f32.mrb[0].mxu0
        %v8176 = vadd.f32 0.0, %v8175
        %v8177 = vpop.f32.mrb[0].mxu0
        %v8178 = vpop.f32.mrb[0].mxu0
        %v8179 = vadd.f32 0.0, %v8178
        %v8180 = vpop.f32.mrb[0].mxu0
        %8181 = vmatprep.mubr.bf16.mxu0 0
        %8182 = vmatmul.mubr.bf16.gmra.mrb[0].mxu0 %v8107
        %v8183 = vpop.f32.mrb[0].mxu0
        %v8184 = vadd.f32 0.0, %v8183
        %v8185 = vpop.f32.mrb[0].mxu0
        %v8186 = vpop.f32.mrb[0].mxu0
        %v8187 = vadd.f32 0.0, %v8186
        %v8188 = vpop.f32.mrb[0].mxu0
        %8189 = vdwg.mxu0
        %v8190 = vadd.f32 %v7509, %v8144
        %v8191 = vadd.f32 %v7510, %v8147
        %v8192 = vadd.f32 %v7511, %v8152
        %v8193 = vadd.f32 %v7512, %v8155
        %v8194 = vadd.f32 %v7513, %v8160
        %v8195 = vadd.f32 %v7514, %v8163
        %v8196 = vadd.f32 %v7515, %v8168
        %v8197 = vadd.f32 %v7516, %v8171
        %v8198 = vadd.f32 %v7517, %v8176
        %v8199 = vadd.f32 %v7518, %v8179
        %v8200 = vadd.f32 %v7519, %v8184
        %v8201 = vadd.f32 %v7520, %v8187
        %v8202 = vadd.f32 %v4948, %v8190
        %v8203 = vadd.f32 %v4949, %v8191
        %v8204 = vadd.f32 %v4950, %v8192
        %v8205 = vadd.f32 %v4951, %v8193
        %v8206 = vadd.f32 %v4952, %v8194
        %v8207 = vadd.f32 %v4953, %v8195
        %v8208 = vadd.f32 %v4954, %v8196
        %v8209 = vadd.f32 %v4955, %v8197
        %v8210 = vadd.f32 %v4956, %v8198
        %v8211 = vadd.f32 %v4957, %v8199
        %v8212 = vadd.f32 %v4958, %v8200
        %v8213 = vadd.f32 %v4959, %v8201
        %s8214 = scalar_lea.vmem %s11, 1
        %v8215 = vld [vmem:[%s8214] sm:$0x1]
        %v8217 = vlaneseq
        %v8218 = vshrl.u32 %v8217, 7
        %v8219 = vsub.s32 0, %v8218
        %v8220 = vrot.slane %v8215, %v8219
        %v8222 = vadd.f32 %v8202, %v8220
        %v8223 = vadd.f32 %v8203, %v8220
        %v8224 = vadd.f32 %v8204, %v8220
        %v8225 = vadd.f32 %v8205, %v8220
        %v8226 = vadd.f32 %v8206, %v8220
        %v8227 = vadd.f32 %v8207, %v8220
        %v8228 = vadd.f32 %v8208, %v8220
        %v8229 = vadd.f32 %v8209, %v8220
        %v8230 = vadd.f32 %v8210, %v8220
        %v8231 = vadd.f32 %v8211, %v8220
        %v8232 = vadd.f32 %v8212, %v8220
        %v8233 = vadd.f32 %v8213, %v8220
        %s8234 = scalar_lea.vmem %s12, 1
        %v8235 = vld [vmem:[%s8234] sm:$0x1]
        %s8236 = scalar_lea.vmem %s13, 1
        %v8237 = vld [vmem:[%s8236] sm:$0x1]
        %8238 = vadd.xlane.f32.xlu0 %v8222
        %v8239 = vpop.xlane.xlu0 %8238
        %8240 = vadd.xlane.f32.xlu0 %v8223
        %v8241 = vpop.xlane.xlu0 %8240
        %8242 = vadd.xlane.f32.xlu0 %v8224
        %v8243 = vpop.xlane.xlu0 %8242
        %8244 = vadd.xlane.f32.xlu0 %v8225
        %v8245 = vpop.xlane.xlu0 %8244
        %8246 = vadd.xlane.f32.xlu0 %v8226
        %v8247 = vpop.xlane.xlu0 %8246
        %8248 = vadd.xlane.f32.xlu0 %v8227
        %v8249 = vpop.xlane.xlu0 %8248
        %8250 = vadd.xlane.f32.xlu0 %v8228
        %v8251 = vpop.xlane.xlu0 %8250
        %8252 = vadd.xlane.f32.xlu0 %v8229
        %v8253 = vpop.xlane.xlu0 %8252
        %8254 = vadd.xlane.f32.xlu0 %v8230
        %v8255 = vpop.xlane.xlu0 %8254
        %8256 = vadd.xlane.f32.xlu0 %v8231
        %v8257 = vpop.xlane.xlu0 %8256
        %8258 = vadd.xlane.f32.xlu0 %v8232
        %v8259 = vpop.xlane.xlu0 %8258
        %8260 = vadd.xlane.f32.xlu0 %v8233
        %v8261 = vpop.xlane.xlu0 %8260
        %v8262 = vmul.f32 %v8239, %v865
        %v8263 = vmul.f32 %v8241, %v865
        %v8264 = vmul.f32 %v8243, %v865
        %v8265 = vmul.f32 %v8245, %v865
        %v8266 = vmul.f32 %v8247, %v865
        %v8267 = vmul.f32 %v8249, %v865
        %v8268 = vmul.f32 %v8251, %v865
        %v8269 = vmul.f32 %v8253, %v865
        %v8270 = vmul.f32 %v8255, %v865
        %v8271 = vmul.f32 %v8257, %v865
        %v8272 = vmul.f32 %v8259, %v865
        %v8273 = vmul.f32 %v8261, %v865
        %v8274 = vsub.f32 %v8222, %v8262
        %v8275 = vsub.f32 %v8223, %v8263
        %v8276 = vsub.f32 %v8224, %v8264
        %v8277 = vsub.f32 %v8225, %v8265
        %v8278 = vsub.f32 %v8226, %v8266
        %v8279 = vsub.f32 %v8227, %v8267
        %v8280 = vsub.f32 %v8228, %v8268
        %v8281 = vsub.f32 %v8229, %v8269
        %v8282 = vsub.f32 %v8230, %v8270
        %v8283 = vsub.f32 %v8231, %v8271
        %v8284 = vsub.f32 %v8232, %v8272
        %v8285 = vsub.f32 %v8233, %v8273
        %v8286 = vmul.f32 %v8274, %v8274
        %v8287 = vmul.f32 %v8275, %v8275
        %v8288 = vmul.f32 %v8276, %v8276
        %v8289 = vmul.f32 %v8277, %v8277
        %v8290 = vmul.f32 %v8278, %v8278
        %v8291 = vmul.f32 %v8279, %v8279
        %v8292 = vmul.f32 %v8280, %v8280
        %v8293 = vmul.f32 %v8281, %v8281
        %v8294 = vmul.f32 %v8282, %v8282
        %v8295 = vmul.f32 %v8283, %v8283
        %v8296 = vmul.f32 %v8284, %v8284
        %v8297 = vmul.f32 %v8285, %v8285
        %8298 = vadd.xlane.f32.xlu0 %v8286
        %v8299 = vpop.xlane.xlu0 %8298
        %8300 = vadd.xlane.f32.xlu0 %v8287
        %v8301 = vpop.xlane.xlu0 %8300
        %8302 = vadd.xlane.f32.xlu0 %v8288
        %v8303 = vpop.xlane.xlu0 %8302
        %8304 = vadd.xlane.f32.xlu0 %v8289
        %v8305 = vpop.xlane.xlu0 %8304
        %8306 = vadd.xlane.f32.xlu0 %v8290
        %v8307 = vpop.xlane.xlu0 %8306
        %8308 = vadd.xlane.f32.xlu0 %v8291
        %v8309 = vpop.xlane.xlu0 %8308
        %8310 = vadd.xlane.f32.xlu0 %v8292
        %v8311 = vpop.xlane.xlu0 %8310
        %8312 = vadd.xlane.f32.xlu0 %v8293
        %v8313 = vpop.xlane.xlu0 %8312
        %8314 = vadd.xlane.f32.xlu0 %v8294
        %v8315 = vpop.xlane.xlu0 %8314
        %8316 = vadd.xlane.f32.xlu0 %v8295
        %v8317 = vpop.xlane.xlu0 %8316
        %8318 = vadd.xlane.f32.xlu0 %v8296
        %v8319 = vpop.xlane.xlu0 %8318
        %8320 = vadd.xlane.f32.xlu0 %v8297
        %v8321 = vpop.xlane.xlu0 %8320
        %v8322 = vmul.f32 %v8299, %v865
        %v8323 = vmul.f32 %v8301, %v865
        %v8324 = vmul.f32 %v8303, %v865
        %v8325 = vmul.f32 %v8305, %v865
        %v8326 = vmul.f32 %v8307, %v865
        %v8327 = vmul.f32 %v8309, %v865
        %v8328 = vmul.f32 %v8311, %v865
        %v8329 = vmul.f32 %v8313, %v865
        %v8330 = vmul.f32 %v8315, %v865
        %v8331 = vmul.f32 %v8317, %v865
        %v8332 = vmul.f32 %v8319, %v865
        %v8333 = vmul.f32 %v8321, %v865
        %v8334 = vadd.f32 %v8322, 1e-06
        %v8335 = vadd.f32 %v8323, 1e-06
        %v8336 = vadd.f32 %v8324, 1e-06
        %v8337 = vadd.f32 %v8325, 1e-06
        %v8338 = vadd.f32 %v8326, 1e-06
        %v8339 = vadd.f32 %v8327, 1e-06
        %v8340 = vadd.f32 %v8328, 1e-06
        %v8341 = vadd.f32 %v8329, 1e-06
        %v8342 = vadd.f32 %v8330, 1e-06
        %v8343 = vadd.f32 %v8331, 1e-06
        %v8344 = vadd.f32 %v8332, 1e-06
        %v8345 = vadd.f32 %v8333, 1e-06
        %v8346 = vrsqrt.pop %v8334
        %v8347 = vrsqrt.pop %v8335
        %v8348 = vrsqrt.pop %v8336
        %v8349 = vrsqrt.pop %v8337
        %v8350 = vrsqrt.pop %v8338
        %v8351 = vrsqrt.pop %v8339
        %v8352 = vrsqrt.pop %v8340
        %v8353 = vrsqrt.pop %v8341
        %v8354 = vrsqrt.pop %v8342
        %v8355 = vrsqrt.pop %v8343
        %v8356 = vrsqrt.pop %v8344
        %v8357 = vrsqrt.pop %v8345
        %v8358 = vmul.f32 %v8274, %v8346
        %v8359 = vmul.f32 %v8275, %v8347
        %v8360 = vmul.f32 %v8276, %v8348
        %v8361 = vmul.f32 %v8277, %v8349
        %v8362 = vmul.f32 %v8278, %v8350
        %v8363 = vmul.f32 %v8279, %v8351
        %v8364 = vmul.f32 %v8280, %v8352
        %v8365 = vmul.f32 %v8281, %v8353
        %v8366 = vmul.f32 %v8282, %v8354
        %v8367 = vmul.f32 %v8283, %v8355
        %v8368 = vmul.f32 %v8284, %v8356
        %v8369 = vmul.f32 %v8285, %v8357
        %v8371 = vlaneseq
        %v8372 = vshrl.u32 %v8371, 7
        %v8373 = vsub.s32 0, %v8372
        %v8374 = vrot.slane %v8235, %v8373
        %v8376 = vmul.f32 %v8358, %v8374
        %v8377 = vmul.f32 %v8359, %v8374
        %v8378 = vmul.f32 %v8360, %v8374
        %v8379 = vmul.f32 %v8361, %v8374
        %v8380 = vmul.f32 %v8362, %v8374
        %v8381 = vmul.f32 %v8363, %v8374
        %v8382 = vmul.f32 %v8364, %v8374
        %v8383 = vmul.f32 %v8365, %v8374
        %v8384 = vmul.f32 %v8366, %v8374
        %v8385 = vmul.f32 %v8367, %v8374
        %v8386 = vmul.f32 %v8368, %v8374
        %v8387 = vmul.f32 %v8369, %v8374
        %v8389 = vlaneseq
        %v8390 = vshrl.u32 %v8389, 7
        %v8391 = vsub.s32 0, %v8390
        %v8392 = vrot.slane %v8237, %v8391
        %v8394 = vadd.f32 %v8376, %v8392
        %v8395 = vadd.f32 %v8377, %v8392
        %v8396 = vadd.f32 %v8378, %v8392
        %v8397 = vadd.f32 %v8379, %v8392
        %v8398 = vadd.f32 %v8380, %v8392
        %v8399 = vadd.f32 %v8381, %v8392
        %v8400 = vadd.f32 %v8382, %v8392
        %v8401 = vadd.f32 %v8383, %v8392
        %v8402 = vadd.f32 %v8384, %v8392
        %v8403 = vadd.f32 %v8385, %v8392
        %v8404 = vadd.f32 %v8386, %v8392
        %v8405 = vadd.f32 %v8387, %v8392
        %v8406 = vpack.c.bf16 %v8395, %v8394
        %v8407 = vpack.c.bf16 %v8397, %v8396
        %v8408 = vpack.c.bf16 %v8399, %v8398
        %v8409 = vpack.c.bf16 %v8401, %v8400
        %v8410 = vpack.c.bf16 %v8403, %v8402
        %v8411 = vpack.c.bf16 %v8405, %v8404
        %s8412 = scalar_lea.vmem %s14, 128
        %v8413 = vld [vmem:[%s8412] sm:$0xff]
        %v8414 = vld [vmem:[%s8412 + $0x8] sm:$0xff]
        %v8415 = vld [vmem:[%s8412 + $0x10] sm:$0xff]
        %v8416 = vld [vmem:[%s8412 + $0x18] sm:$0xff]
        %v8417 = vld [vmem:[%s8412 + $0x20] sm:$0xff]
        %v8418 = vld [vmem:[%s8412 + $0x28] sm:$0xff]
        %v8419 = vld [vmem:[%s8412 + $0x30] sm:$0xff]
        %v8420 = vld [vmem:[%s8412 + $0x38] sm:$0xff]
        %v8421 = vld [vmem:[%s8412 + $0x40] sm:$0xff]
        %v8422 = vld [vmem:[%s8412 + $0x48] sm:$0xff]
        %v8423 = vld [vmem:[%s8412 + $0x50] sm:$0xff]
        %v8424 = vld [vmem:[%s8412 + $0x58] sm:$0xff]
        %v8425 = vld [vmem:[%s8412 + $0x60] sm:$0xff]
        %v8426 = vld [vmem:[%s8412 + $0x68] sm:$0xff]
        %v8427 = vld [vmem:[%s8412 + $0x70] sm:$0xff]
        %v8428 = vld [vmem:[%s8412 + $0x78] sm:$0xff]
        %s8429 = scalar_lea.vmem %s15, 2
        %v8430 = vld [vmem:[%s8429] sm:$0x3]
        %v8432 = vlaneseq
        %v8433 = vshrl.u32 %v8432, 7
        %v8434 = vsub.s32 0, %v8433
        %v8435 = vrot.slane %v8430, %v8434
        %v8436 = vlaneseq
        %v8437 = vshrl.u32 %v8436, 7
        %v8438 = vsub.s32 1, %v8437
        %v8439 = vrot.slane %v8430, %v8438
        %v8458 = vunpack.c.l.b16 %v8413
        %v8459 = vunpack.c.h.b16 %v8413
        %v8460 = vunpack.c.l.b16 %v8414
        %v8461 = vunpack.c.h.b16 %v8414
        %v8462 = vunpack.c.l.b16 %v8415
        %v8463 = vunpack.c.h.b16 %v8415
        %v8464 = vunpack.c.l.b16 %v8416
        %v8465 = vunpack.c.h.b16 %v8416
        %v8466 = vunpack.c.l.b16 %v8417
        %v8467 = vunpack.c.h.b16 %v8417
        %v8468 = vunpack.c.l.b16 %v8418
        %v8469 = vunpack.c.h.b16 %v8418
        %v8470 = vunpack.c.l.b16 %v8419
        %v8471 = vunpack.c.h.b16 %v8419
        %v8472 = vunpack.c.l.b16 %v8420
        %v8473 = vunpack.c.h.b16 %v8420
        %v8474 = vunpack.c.l.b16 %v8421
        %v8475 = vunpack.c.h.b16 %v8421
        %v8476 = vunpack.c.l.b16 %v8422
        %v8477 = vunpack.c.h.b16 %v8422
        %v8478 = vunpack.c.l.b16 %v8423
        %v8479 = vunpack.c.h.b16 %v8423
        %v8480 = vunpack.c.l.b16 %v8424
        %v8481 = vunpack.c.h.b16 %v8424
        %v8482 = vunpack.c.l.b16 %v8425
        %v8483 = vunpack.c.h.b16 %v8425
        %v8484 = vunpack.c.l.b16 %v8426
        %v8485 = vunpack.c.h.b16 %v8426
        %v8486 = vunpack.c.l.b16 %v8427
        %v8487 = vunpack.c.h.b16 %v8427
        %v8488 = vunpack.c.l.b16 %v8428
        %v8489 = vunpack.c.h.b16 %v8428
        %v8490 = vpack.c.b16 %v8460, %v8458
        %v8491 = vpack.c.b16 %v8461, %v8459
        %v8492 = vpack.c.b16 %v8464, %v8462
        %v8493 = vpack.c.b16 %v8465, %v8463
        %v8494 = vpack.c.b16 %v8468, %v8466
        %v8495 = vpack.c.b16 %v8469, %v8467
        %v8496 = vpack.c.b16 %v8472, %v8470
        %v8497 = vpack.c.b16 %v8473, %v8471
        %v8498 = vpack.c.b16 %v8476, %v8474
        %v8499 = vpack.c.b16 %v8477, %v8475
        %v8500 = vpack.c.b16 %v8480, %v8478
        %v8501 = vpack.c.b16 %v8481, %v8479
        %v8502 = vpack.c.b16 %v8484, %v8482
        %v8503 = vpack.c.b16 %v8485, %v8483
        %v8504 = vpack.c.b16 %v8488, %v8486
        %v8505 = vpack.c.b16 %v8489, %v8487
        %8522 = vmatprep.subr.bf16.mxu0 %v8491
        %8523 = vmatpush1.bf16.msra.mxu0 %v8490
        %8524 = vmatprep.subr.bf16.mxu0 %v8493
        %8525 = vmatpush1.bf16.msra.mxu0 %v8492
        %8526 = vmatprep.subr.bf16.mxu0 %v8495
        %8527 = vmatpush1.bf16.msra.mxu0 %v8494
        %8528 = vmatprep.subr.bf16.mxu0 %v8497
        %8529 = vmatpush1.bf16.msra.mxu0 %v8496
        %8530 = vmatprep.subr.bf16.mxu0 %v8499
        %8531 = vmatpush1.bf16.msra.mxu0 %v8498
        %8532 = vmatprep.subr.bf16.mxu0 %v8501
        %8533 = vmatpush1.bf16.msra.mxu0 %v8500
        %8534 = vmatprep.subr.bf16.mxu0 %v8503
        %8535 = vmatpush1.bf16.msra.mxu0 %v8502
        %8536 = vmatprep.subr.bf16.mxu0 %v8505
        %8537 = vmatpush1.bf16.msra.mxu0 %v8504
        %8538 = vmatprep.subr.bf16.mxu0 0
        %8539 = vmatpush1.bf16.msra.mxu0 0
        %8540 = vmatprep.subr.bf16.mxu0 0
        %8541 = vmatpush1.bf16.msra.mxu0 0
        %8542 = vmatprep.subr.bf16.mxu0 0
        %8543 = vmatpush1.bf16.msra.mxu0 0
        %8544 = vmatprep.subr.bf16.mxu0 0
        %8545 = vmatpush1.bf16.msra.mxu0 0
        %8546 = vmatprep.subr.bf16.mxu0 0
        %8547 = vmatpush1.bf16.msra.mxu0 0
        %8548 = vmatprep.subr.bf16.mxu0 0
        %8549 = vmatpush1.bf16.msra.mxu0 0
        %8550 = vmatprep.subr.bf16.mxu0 0
        %8551 = vmatpush1.bf16.msra.mxu0 0
        %8552 = vmatprep.subr.bf16.mxu0 0
        %8553 = vmatpush1.bf16.msra.mxu0 0
        %8554 = vmatprep.mubr.bf16.mxu0 0
        %8555 = vmatmul.mubr.bf16.gmra.mrb[0].mxu0 %v8406
        %v8556 = vpop.f32.mrb[0].mxu0
        %v8557 = vadd.f32 %v8435, %v8556
        %v8558 = vpop.f32.mrb[0].mxu0
        %v8559 = vadd.f32 %v8439, %v8558
        %v8560 = vpop.f32.mrb[0].mxu0
        %v8561 = vadd.f32 %v8435, %v8560
        %v8562 = vpop.f32.mrb[0].mxu0
        %v8563 = vadd.f32 %v8439, %v8562
        %8564 = vmatprep.mubr.bf16.mxu0 0
        %8565 = vmatmul.mubr.bf16.gmra.mrb[0].mxu0 %v8407
        %v8566 = vpop.f32.mrb[0].mxu0
        %v8567 = vadd.f32 %v8435, %v8566
        %v8568 = vpop.f32.mrb[0].mxu0
        %v8569 = vadd.f32 %v8439, %v8568
        %v8570 = vpop.f32.mrb[0].mxu0
        %v8571 = vadd.f32 %v8435, %v8570
        %v8572 = vpop.f32.mrb[0].mxu0
        %v8573 = vadd.f32 %v8439, %v8572
        %8574 = vmatprep.mubr.bf16.mxu0 0
        %8575 = vmatmul.mubr.bf16.gmra.mrb[0].mxu0 %v8408
        %v8576 = vpop.f32.mrb[0].mxu0
        %v8577 = vadd.f32 %v8435, %v8576
        %v8578 = vpop.f32.mrb[0].mxu0
        %v8579 = vadd.f32 %v8439, %v8578
        %v8580 = vpop.f32.mrb[0].mxu0
        %v8581 = vadd.f32 %v8435, %v8580
        %v8582 = vpop.f32.mrb[0].mxu0
        %v8583 = vadd.f32 %v8439, %v8582
        %8584 = vmatprep.mubr.bf16.mxu0 0
        %8585 = vmatmul.mubr.bf16.gmra.mrb[0].mxu0 %v8409
        %v8586 = vpop.f32.mrb[0].mxu0
        %v8587 = vadd.f32 %v8435, %v8586
        %v8588 = vpop.f32.mrb[0].mxu0
        %v8589 = vadd.f32 %v8439, %v8588
        %v8590 = vpop.f32.mrb[0].mxu0
        %v8591 = vadd.f32 %v8435, %v8590
        %v8592 = vpop.f32.mrb[0].mxu0
        %v8593 = vadd.f32 %v8439, %v8592
        %8594 = vmatprep.mubr.bf16.mxu0 0
        %8595 = vmatmul.mubr.bf16.gmra.mrb[0].mxu0 %v8410
        %v8596 = vpop.f32.mrb[0].mxu0
        %v8597 = vadd.f32 %v8435, %v8596
        %v8598 = vpop.f32.mrb[0].mxu0
        %v8599 = vadd.f32 %v8439, %v8598
        %v8600 = vpop.f32.mrb[0].mxu0
        %v8601 = vadd.f32 %v8435, %v8600
        %v8602 = vpop.f32.mrb[0].mxu0
        %v8603 = vadd.f32 %v8439, %v8602
        %8604 = vmatprep.mubr.bf16.mxu0 0
        %8605 = vmatmul.mubr.bf16.gmra.mrb[0].mxu0 %v8411
        %v8606 = vpop.f32.mrb[0].mxu0
        %v8607 = vadd.f32 %v8435, %v8606
        %v8608 = vpop.f32.mrb[0].mxu0
        %v8609 = vadd.f32 %v8439, %v8608
        %v8610 = vpop.f32.mrb[0].mxu0
        %v8611 = vadd.f32 %v8435, %v8610
        %v8612 = vpop.f32.mrb[0].mxu0
        %v8613 = vadd.f32 %v8439, %v8612
        %8614 = vdwg.mxu0
        %v8615 = vmul.f32 %v8557, %v8557
        %v8616 = vmul.f32 %v8559, %v8559
        %v8617 = vmul.f32 %v8561, %v8561
        %v8618 = vmul.f32 %v8563, %v8563
        %v8619 = vmul.f32 %v8567, %v8567
        %v8620 = vmul.f32 %v8569, %v8569
        %v8621 = vmul.f32 %v8571, %v8571
        %v8622 = vmul.f32 %v8573, %v8573
        %v8623 = vmul.f32 %v8577, %v8577
        %v8624 = vmul.f32 %v8579, %v8579
        %v8625 = vmul.f32 %v8581, %v8581
        %v8626 = vmul.f32 %v8583, %v8583
        %v8627 = vmul.f32 %v8587, %v8587
        %v8628 = vmul.f32 %v8589, %v8589
        %v8629 = vmul.f32 %v8591, %v8591
        %v8630 = vmul.f32 %v8593, %v8593
        %v8631 = vmul.f32 %v8597, %v8597
        %v8632 = vmul.f32 %v8599, %v8599
        %v8633 = vmul.f32 %v8601, %v8601
        %v8634 = vmul.f32 %v8603, %v8603
        %v8635 = vmul.f32 %v8607, %v8607
        %v8636 = vmul.f32 %v8609, %v8609
        %v8637 = vmul.f32 %v8611, %v8611
        %v8638 = vmul.f32 %v8613, %v8613
        %v8639 = vmul.f32 %v8557, %v8615
        %v8640 = vmul.f32 %v8559, %v8616
        %v8641 = vmul.f32 %v8561, %v8617
        %v8642 = vmul.f32 %v8563, %v8618
        %v8643 = vmul.f32 %v8567, %v8619
        %v8644 = vmul.f32 %v8569, %v8620
        %v8645 = vmul.f32 %v8571, %v8621
        %v8646 = vmul.f32 %v8573, %v8622
        %v8647 = vmul.f32 %v8577, %v8623
        %v8648 = vmul.f32 %v8579, %v8624
        %v8649 = vmul.f32 %v8581, %v8625
        %v8650 = vmul.f32 %v8583, %v8626
        %v8651 = vmul.f32 %v8587, %v8627
        %v8652 = vmul.f32 %v8589, %v8628
        %v8653 = vmul.f32 %v8591, %v8629
        %v8654 = vmul.f32 %v8593, %v8630
        %v8655 = vmul.f32 %v8597, %v8631
        %v8656 = vmul.f32 %v8599, %v8632
        %v8657 = vmul.f32 %v8601, %v8633
        %v8658 = vmul.f32 %v8603, %v8634
        %v8659 = vmul.f32 %v8607, %v8635
        %v8660 = vmul.f32 %v8609, %v8636
        %v8661 = vmul.f32 %v8611, %v8637
        %v8662 = vmul.f32 %v8613, %v8638
        %v8663 = vmul.f32 %v8639, 0.044715
        %v8664 = vmul.f32 %v8640, 0.044715
        %v8665 = vmul.f32 %v8641, 0.044715
        %v8666 = vmul.f32 %v8642, 0.044715
        %v8667 = vmul.f32 %v8643, 0.044715
        %v8668 = vmul.f32 %v8644, 0.044715
        %v8669 = vmul.f32 %v8645, 0.044715
        %v8670 = vmul.f32 %v8646, 0.044715
        %v8671 = vmul.f32 %v8647, 0.044715
        %v8672 = vmul.f32 %v8648, 0.044715
        %v8673 = vmul.f32 %v8649, 0.044715
        %v8674 = vmul.f32 %v8650, 0.044715
        %v8675 = vmul.f32 %v8651, 0.044715
        %v8676 = vmul.f32 %v8652, 0.044715
        %v8677 = vmul.f32 %v8653, 0.044715
        %v8678 = vmul.f32 %v8654, 0.044715
        %v8679 = vmul.f32 %v8655, 0.044715
        %v8680 = vmul.f32 %v8656, 0.044715
        %v8681 = vmul.f32 %v8657, 0.044715
        %v8682 = vmul.f32 %v8658, 0.044715
        %v8683 = vmul.f32 %v8659, 0.044715
        %v8684 = vmul.f32 %v8660, 0.044715
        %v8685 = vmul.f32 %v8661, 0.044715
        %v8686 = vmul.f32 %v8662, 0.044715
        %v8687 = vadd.f32 %v8557, %v8663
        %v8688 = vadd.f32 %v8559, %v8664
        %v8689 = vadd.f32 %v8561, %v8665
        %v8690 = vadd.f32 %v8563, %v8666
        %v8691 = vadd.f32 %v8567, %v8667
        %v8692 = vadd.f32 %v8569, %v8668
        %v8693 = vadd.f32 %v8571, %v8669
        %v8694 = vadd.f32 %v8573, %v8670
        %v8695 = vadd.f32 %v8577, %v8671
        %v8696 = vadd.f32 %v8579, %v8672
        %v8697 = vadd.f32 %v8581, %v8673
        %v8698 = vadd.f32 %v8583, %v8674
        %v8699 = vadd.f32 %v8587, %v8675
        %v8700 = vadd.f32 %v8589, %v8676
        %v8701 = vadd.f32 %v8591, %v8677
        %v8702 = vadd.f32 %v8593, %v8678
        %v8703 = vadd.f32 %v8597, %v8679
        %v8704 = vadd.f32 %v8599, %v8680
        %v8705 = vadd.f32 %v8601, %v8681
        %v8706 = vadd.f32 %v8603, %v8682
        %v8707 = vadd.f32 %v8607, %v8683
        %v8708 = vadd.f32 %v8609, %v8684
        %v8709 = vadd.f32 %v8611, %v8685
        %v8710 = vadd.f32 %v8613, %v8686
        %v8711 = vmul.f32 %v8687, 0.7978846
        %v8712 = vmul.f32 %v8688, 0.7978846
        %v8713 = vmul.f32 %v8689, 0.7978846
        %v8714 = vmul.f32 %v8690, 0.7978846
        %v8715 = vmul.f32 %v8691, 0.7978846
        %v8716 = vmul.f32 %v8692, 0.7978846
        %v8717 = vmul.f32 %v8693, 0.7978846
        %v8718 = vmul.f32 %v8694, 0.7978846
        %v8719 = vmul.f32 %v8695, 0.7978846
        %v8720 = vmul.f32 %v8696, 0.7978846
        %v8721 = vmul.f32 %v8697, 0.7978846
        %v8722 = vmul.f32 %v8698, 0.7978846
        %v8723 = vmul.f32 %v8699, 0.7978846
        %v8724 = vmul.f32 %v8700, 0.7978846
        %v8725 = vmul.f32 %v8701, 0.7978846
        %v8726 = vmul.f32 %v8702, 0.7978846
        %v8727 = vmul.f32 %v8703, 0.7978846
        %v8728 = vmul.f32 %v8704, 0.7978846
        %v8729 = vmul.f32 %v8705, 0.7978846
        %v8730 = vmul.f32 %v8706, 0.7978846
        %v8731 = vmul.f32 %v8707, 0.7978846
        %v8732 = vmul.f32 %v8708, 0.7978846
        %v8733 = vmul.f32 %v8709, 0.7978846
        %v8734 = vmul.f32 %v8710, 0.7978846
        %v8735 = vtanh.pop %v8711
        %v8736 = vtanh.pop %v8712
        %v8737 = vtanh.pop %v8713
        %v8738 = vtanh.pop %v8714
        %v8739 = vtanh.pop %v8715
        %v8740 = vtanh.pop %v8716
        %v8741 = vtanh.pop %v8717
        %v8742 = vtanh.pop %v8718
        %v8743 = vtanh.pop %v8719
        %v8744 = vtanh.pop %v8720
        %v8745 = vtanh.pop %v8721
        %v8746 = vtanh.pop %v8722
        %v8747 = vtanh.pop %v8723
        %v8748 = vtanh.pop %v8724
        %v8749 = vtanh.pop %v8725
        %v8750 = vtanh.pop %v8726
        %v8751 = vtanh.pop %v8727
        %v8752 = vtanh.pop %v8728
        %v8753 = vtanh.pop %v8729
        %v8754 = vtanh.pop %v8730
        %v8755 = vtanh.pop %v8731
        %v8756 = vtanh.pop %v8732
        %v8757 = vtanh.pop %v8733
        %v8758 = vtanh.pop %v8734
        %v8759 = vadd.f32 %v8735, 1.0
        %v8760 = vadd.f32 %v8736, 1.0
        %v8761 = vadd.f32 %v8737, 1.0
        %v8762 = vadd.f32 %v8738, 1.0
        %v8763 = vadd.f32 %v8739, 1.0
        %v8764 = vadd.f32 %v8740, 1.0
        %v8765 = vadd.f32 %v8741, 1.0
        %v8766 = vadd.f32 %v8742, 1.0
        %v8767 = vadd.f32 %v8743, 1.0
        %v8768 = vadd.f32 %v8744, 1.0
        %v8769 = vadd.f32 %v8745, 1.0
        %v8770 = vadd.f32 %v8746, 1.0
        %v8771 = vadd.f32 %v8747, 1.0
        %v8772 = vadd.f32 %v8748, 1.0
        %v8773 = vadd.f32 %v8749, 1.0
        %v8774 = vadd.f32 %v8750, 1.0
        %v8775 = vadd.f32 %v8751, 1.0
        %v8776 = vadd.f32 %v8752, 1.0
        %v8777 = vadd.f32 %v8753, 1.0
        %v8778 = vadd.f32 %v8754, 1.0
        %v8779 = vadd.f32 %v8755, 1.0
        %v8780 = vadd.f32 %v8756, 1.0
        %v8781 = vadd.f32 %v8757, 1.0
        %v8782 = vadd.f32 %v8758, 1.0
        %v8783 = vmul.f32 %v8759, 0.5
        %v8784 = vmul.f32 %v8760, 0.5
        %v8785 = vmul.f32 %v8761, 0.5
        %v8786 = vmul.f32 %v8762, 0.5
        %v8787 = vmul.f32 %v8763, 0.5
        %v8788 = vmul.f32 %v8764, 0.5
        %v8789 = vmul.f32 %v8765, 0.5
        %v8790 = vmul.f32 %v8766, 0.5
        %v8791 = vmul.f32 %v8767, 0.5
        %v8792 = vmul.f32 %v8768, 0.5
        %v8793 = vmul.f32 %v8769, 0.5
        %v8794 = vmul.f32 %v8770, 0.5
        %v8795 = vmul.f32 %v8771, 0.5
        %v8796 = vmul.f32 %v8772, 0.5
        %v8797 = vmul.f32 %v8773, 0.5
        %v8798 = vmul.f32 %v8774, 0.5
        %v8799 = vmul.f32 %v8775, 0.5
        %v8800 = vmul.f32 %v8776, 0.5
        %v8801 = vmul.f32 %v8777, 0.5
        %v8802 = vmul.f32 %v8778, 0.5
        %v8803 = vmul.f32 %v8779, 0.5
        %v8804 = vmul.f32 %v8780, 0.5
        %v8805 = vmul.f32 %v8781, 0.5
        %v8806 = vmul.f32 %v8782, 0.5
        %v8807 = vmul.f32 %v8557, %v8783
        %v8808 = vmul.f32 %v8559, %v8784
        %v8809 = vmul.f32 %v8561, %v8785
        %v8810 = vmul.f32 %v8563, %v8786
        %v8811 = vmul.f32 %v8567, %v8787
        %v8812 = vmul.f32 %v8569, %v8788
        %v8813 = vmul.f32 %v8571, %v8789
        %v8814 = vmul.f32 %v8573, %v8790
        %v8815 = vmul.f32 %v8577, %v8791
        %v8816 = vmul.f32 %v8579, %v8792
        %v8817 = vmul.f32 %v8581, %v8793
        %v8818 = vmul.f32 %v8583, %v8794
        %v8819 = vmul.f32 %v8587, %v8795
        %v8820 = vmul.f32 %v8589, %v8796
        %v8821 = vmul.f32 %v8591, %v8797
        %v8822 = vmul.f32 %v8593, %v8798
        %v8823 = vmul.f32 %v8597, %v8799
        %v8824 = vmul.f32 %v8599, %v8800
        %v8825 = vmul.f32 %v8601, %v8801
        %v8826 = vmul.f32 %v8603, %v8802
        %v8827 = vmul.f32 %v8607, %v8803
        %v8828 = vmul.f32 %v8609, %v8804
        %v8829 = vmul.f32 %v8611, %v8805
        %v8830 = vmul.f32 %v8613, %v8806
        %v8831 = vpack.c.bf16 %v8809, %v8807
        %v8832 = vpack.c.bf16 %v8810, %v8808
        %v8833 = vpack.c.bf16 %v8813, %v8811
        %v8834 = vpack.c.bf16 %v8814, %v8812
        %v8835 = vpack.c.bf16 %v8817, %v8815
        %v8836 = vpack.c.bf16 %v8818, %v8816
        %v8837 = vpack.c.bf16 %v8821, %v8819
        %v8838 = vpack.c.bf16 %v8822, %v8820
        %v8839 = vpack.c.bf16 %v8825, %v8823
        %v8840 = vpack.c.bf16 %v8826, %v8824
        %v8841 = vpack.c.bf16 %v8829, %v8827
        %v8842 = vpack.c.bf16 %v8830, %v8828
        %s8843 = scalar_lea.vmem %s16, 128
        %v8844 = vld [vmem:[%s8843] sm:$0xf]
        %v8845 = vld [vmem:[%s8843 + $0x4] sm:$0xf]
        %v8846 = vld [vmem:[%s8843 + $0x8] sm:$0xf]
        %v8847 = vld [vmem:[%s8843 + $0xc] sm:$0xf]
        %v8848 = vld [vmem:[%s8843 + $0x10] sm:$0xf]
        %v8849 = vld [vmem:[%s8843 + $0x14] sm:$0xf]
        %v8850 = vld [vmem:[%s8843 + $0x18] sm:$0xf]
        %v8851 = vld [vmem:[%s8843 + $0x1c] sm:$0xf]
        %v8852 = vld [vmem:[%s8843 + $0x20] sm:$0xf]
        %v8853 = vld [vmem:[%s8843 + $0x24] sm:$0xf]
        %v8854 = vld [vmem:[%s8843 + $0x28] sm:$0xf]
        %v8855 = vld [vmem:[%s8843 + $0x2c] sm:$0xf]
        %v8856 = vld [vmem:[%s8843 + $0x30] sm:$0xf]
        %v8857 = vld [vmem:[%s8843 + $0x34] sm:$0xf]
        %v8858 = vld [vmem:[%s8843 + $0x38] sm:$0xf]
        %v8859 = vld [vmem:[%s8843 + $0x3c] sm:$0xf]
        %v8860 = vld [vmem:[%s8843 + $0x40] sm:$0xf]
        %v8861 = vld [vmem:[%s8843 + $0x44] sm:$0xf]
        %v8862 = vld [vmem:[%s8843 + $0x48] sm:$0xf]
        %v8863 = vld [vmem:[%s8843 + $0x4c] sm:$0xf]
        %v8864 = vld [vmem:[%s8843 + $0x50] sm:$0xf]
        %v8865 = vld [vmem:[%s8843 + $0x54] sm:$0xf]
        %v8866 = vld [vmem:[%s8843 + $0x58] sm:$0xf]
        %v8867 = vld [vmem:[%s8843 + $0x5c] sm:$0xf]
        %v8868 = vld [vmem:[%s8843 + $0x60] sm:$0xf]
        %v8869 = vld [vmem:[%s8843 + $0x64] sm:$0xf]
        %v8870 = vld [vmem:[%s8843 + $0x68] sm:$0xf]
        %v8871 = vld [vmem:[%s8843 + $0x6c] sm:$0xf]
        %v8872 = vld [vmem:[%s8843 + $0x70] sm:$0xf]
        %v8873 = vld [vmem:[%s8843 + $0x74] sm:$0xf]
        %v8874 = vld [vmem:[%s8843 + $0x78] sm:$0xf]
        %v8875 = vld [vmem:[%s8843 + $0x7c] sm:$0xf]
        %v8908 = vunpack.c.l.b16 %v8844
        %v8909 = vunpack.c.l.b16 %v8845
        %v8910 = vunpack.c.l.b16 %v8846
        %v8911 = vunpack.c.l.b16 %v8847
        %v8912 = vunpack.c.l.b16 %v8848
        %v8913 = vunpack.c.l.b16 %v8849
        %v8914 = vunpack.c.l.b16 %v8850
        %v8915 = vunpack.c.l.b16 %v8851
        %v8916 = vunpack.c.l.b16 %v8852
        %v8917 = vunpack.c.l.b16 %v8853
        %v8918 = vunpack.c.l.b16 %v8854
        %v8919 = vunpack.c.l.b16 %v8855
        %v8920 = vunpack.c.l.b16 %v8856
        %v8921 = vunpack.c.l.b16 %v8857
        %v8922 = vunpack.c.l.b16 %v8858
        %v8923 = vunpack.c.l.b16 %v8859
        %v8924 = vunpack.c.l.b16 %v8860
        %v8925 = vunpack.c.l.b16 %v8861
        %v8926 = vunpack.c.l.b16 %v8862
        %v8927 = vunpack.c.l.b16 %v8863
        %v8928 = vunpack.c.l.b16 %v8864
        %v8929 = vunpack.c.l.b16 %v8865
        %v8930 = vunpack.c.l.b16 %v8866
        %v8931 = vunpack.c.l.b16 %v8867
        %v8932 = vunpack.c.l.b16 %v8868
        %v8933 = vunpack.c.l.b16 %v8869
        %v8934 = vunpack.c.l.b16 %v8870
        %v8935 = vunpack.c.l.b16 %v8871
        %v8936 = vunpack.c.l.b16 %v8872
        %v8937 = vunpack.c.l.b16 %v8873
        %v8938 = vunpack.c.l.b16 %v8874
        %v8939 = vunpack.c.l.b16 %v8875
        %v8940 = vpack.c.b16 %v8909, %v8908
        %v8941 = vpack.c.b16 %v8911, %v8910
        %v8942 = vpack.c.b16 %v8913, %v8912
        %v8943 = vpack.c.b16 %v8915, %v8914
        %v8944 = vpack.c.b16 %v8917, %v8916
        %v8945 = vpack.c.b16 %v8919, %v8918
        %v8946 = vpack.c.b16 %v8921, %v8920
        %v8947 = vpack.c.b16 %v8923, %v8922
        %v8948 = vpack.c.b16 %v8925, %v8924
        %v8949 = vpack.c.b16 %v8927, %v8926
        %v8950 = vpack.c.b16 %v8929, %v8928
        %v8951 = vpack.c.b16 %v8931, %v8930
        %v8952 = vpack.c.b16 %v8933, %v8932
        %v8953 = vpack.c.b16 %v8935, %v8934
        %v8954 = vpack.c.b16 %v8937, %v8936
        %v8955 = vpack.c.b16 %v8939, %v8938
        %8972 = vmatprep.subr.bf16.mxu0 0
        %8973 = vmatpush1.bf16.msra.mxu0 %v8940
        %8974 = vmatprep.subr.bf16.mxu0 0
        %8975 = vmatpush1.bf16.msra.mxu0 %v8941
        %8976 = vmatprep.subr.bf16.mxu0 0
        %8977 = vmatpush1.bf16.msra.mxu0 %v8942
        %8978 = vmatprep.subr.bf16.mxu0 0
        %8979 = vmatpush1.bf16.msra.mxu0 %v8943
        %8980 = vmatprep.subr.bf16.mxu0 0
        %8981 = vmatpush1.bf16.msra.mxu0 %v8944
        %8982 = vmatprep.subr.bf16.mxu0 0
        %8983 = vmatpush1.bf16.msra.mxu0 %v8945
        %8984 = vmatprep.subr.bf16.mxu0 0
        %8985 = vmatpush1.bf16.msra.mxu0 %v8946
        %8986 = vmatprep.subr.bf16.mxu0 0
        %8987 = vmatpush1.bf16.msra.mxu0 %v8947
        %8988 = vmatprep.subr.bf16.mxu0 0
        %8989 = vmatpush1.bf16.msra.mxu0 %v8948
        %8990 = vmatprep.subr.bf16.mxu0 0
        %8991 = vmatpush1.bf16.msra.mxu0 %v8949
        %8992 = vmatprep.subr.bf16.mxu0 0
        %8993 = vmatpush1.bf16.msra.mxu0 %v8950
        %8994 = vmatprep.subr.bf16.mxu0 0
        %8995 = vmatpush1.bf16.msra.mxu0 %v8951
        %8996 = vmatprep.subr.bf16.mxu0 0
        %8997 = vmatpush1.bf16.msra.mxu0 %v8952
        %8998 = vmatprep.subr.bf16.mxu0 0
        %8999 = vmatpush1.bf16.msra.mxu0 %v8953
        %9000 = vmatprep.subr.bf16.mxu0 0
        %9001 = vmatpush1.bf16.msra.mxu0 %v8954
        %9002 = vmatprep.subr.bf16.mxu0 0
        %9003 = vmatpush1.bf16.msra.mxu0 %v8955
        %9004 = vmatprep.mubr.bf16.mxu0 %v8832
        %9005 = vmatmul.mubr.bf16.gmra.mrb[0].mxu0 %v8831
        %v9006 = vpop.f32.mrb[0].mxu0
        %v9007 = vadd.f32 0.0, %v9006
        %v9008 = vpop.f32.mrb[0].mxu0
        %v9009 = vpop.f32.mrb[0].mxu0
        %v9010 = vpop.f32.mrb[0].mxu0
        %9011 = vmatprep.mubr.bf16.mxu0 %v8834
        %9012 = vmatmul.mubr.bf16.gmra.mrb[0].mxu0 %v8833
        %v9013 = vpop.f32.mrb[0].mxu0
        %v9014 = vpop.f32.mrb[0].mxu0
        %v9015 = vpop.f32.mrb[0].mxu0
        %v9016 = vpop.f32.mrb[0].mxu0
        %9017 = vmatprep.mubr.bf16.mxu0 %v8836
        %9018 = vmatmul.mubr.bf16.gmra.mrb[0].mxu0 %v8835
        %v9019 = vpop.f32.mrb[0].mxu0
        %v9020 = vadd.f32 0.0, %v9019
        %v9021 = vpop.f32.mrb[0].mxu0
        %v9022 = vpop.f32.mrb[0].mxu0
        %v9023 = vpop.f32.mrb[0].mxu0
        %9024 = vmatprep.mubr.bf16.mxu0 %v8838
        %9025 = vmatmul.mubr.bf16.gmra.mrb[0].mxu0 %v8837
        %v9026 = vpop.f32.mrb[0].mxu0
        %v9027 = vpop.f32.mrb[0].mxu0
        %v9028 = vpop.f32.mrb[0].mxu0
        %v9029 = vpop.f32.mrb[0].mxu0
        %9030 = vmatprep.mubr.bf16.mxu0 %v8840
        %9031 = vmatmul.mubr.bf16.gmra.mrb[0].mxu0 %v8839
        %v9032 = vpop.f32.mrb[0].mxu0
        %v9033 = vadd.f32 0.0, %v9032
        %v9034 = vpop.f32.mrb[0].mxu0
        %v9035 = vpop.f32.mrb[0].mxu0
        %v9036 = vpop.f32.mrb[0].mxu0
        %9037 = vmatprep.mubr.bf16.mxu0 %v8842
        %9038 = vmatmul.mubr.bf16.gmra.mrb[0].mxu0 %v8841
        %v9039 = vpop.f32.mrb[0].mxu0
        %v9040 = vpop.f32.mrb[0].mxu0
        %v9041 = vpop.f32.mrb[0].mxu0
        %v9042 = vpop.f32.mrb[0].mxu0
        %9043 = vdwg.mxu0
        %v9044 = vadd.f32 %v8222, %v9007
        %v9045 = vadd.f32 %v8226, %v9020
        %v9046 = vadd.f32 %v8230, %v9033
        %s9047 = scalar_lea.vmem %s17, 1
        %v9048 = vld [vmem:[%s9047] sm:$0x1]
        %v9050 = vlaneseq
        %v9051 = vshrl.u32 %v9050, 7
        %v9052 = vsub.s32 0, %v9051
        %v9053 = vrot.slane %v9048, %v9052
        %v9055 = vadd.f32 %v9044, %v9053
        %v9056 = vadd.f32 %v9045, %v9053
        %v9057 = vadd.f32 %v9046, %v9053
        %v9059 = vrot.slane %v9056, 7
        %v9062 = vrot.slane %v9057, 6
        %vm9064 = vcmask 1040384
        %v9065 = vsel %vm9064, %v9055, %v9059
        %vm9066 = vcmask 1041408
        %v9067 = vsel %vm9066, %v9065, %v9062
        %v9068 = vld [vmem:[%s18] sm:$0x1]
        %v9069 = vld [vmem:[%s19] sm:$0x1]
        %vm9070 = vcmask 1042432
        %v9071 = vsel %vm9070, %v9067, 0.0
        %9072 = vadd.xlane.f32.xlu0 %v9071
        %v9073 = vpop.xlane.xlu0 %9072
        %v9074 = vmul.f32 %v9073, %v865
        %v9075 = vsub.f32 %v9067, %v9074
        %v9076 = vmul.f32 %v9075, %v9075
        %v9077 = vsel %vm9070, %v9076, 0.0
        %9078 = vadd.xlane.f32.xlu0 %v9077
        %v9079 = vpop.xlane.xlu0 %9078
        %v9080 = vmul.f32 %v9079, %v865
        %v9081 = vadd.f32 %v9080, 1e-06
        %v9082 = vrsqrt.pop %v9081
        %v9083 = vmul.f32 %v9075, %v9082
        %v9085 = vlaneseq
        %v9086 = vshrl.u32 %v9085, 7
        %v9087 = vsub.s32 0, %v9086
        %v9088 = vrot.slane %v9068, %v9087
        %v9090 = vmul.f32 %v9083, %v9088
        %v9092 = vlaneseq
        %v9093 = vshrl.u32 %v9092, 7
        %v9094 = vsub.s32 0, %v9093
        %v9095 = vrot.slane %v9069, %v9094
        %v9097 = vadd.f32 %v9090, %v9095
        %v9098 = vsel %vm9070, %v9097, 0.0
        %v9099 = vrot.slane %v9098, 4
        %v9100 = vadd.f32 %v9098, %v9099
        %v9101 = vrot.slane %v9100, 2
        %v9102 = vadd.f32 %v9100, %v9101
        %v9103 = vrot.slane %v9102, 1
        %v9104 = vadd.f32 %v9102, %v9103
        %v9105 = vrcp.pop 3.0
        %v9106 = vmul.f32 %v9104, %v9105
        %v9107 = vpack.c.bf16 %v9106, %v9106
        %v9108 = vld [vmem:[%s20] sm:$0xf]
        %v9109 = vld [vmem:[%s20 + $0x4] sm:$0xf]
        %v9110 = vld [vmem:[%s20 + $0x8] sm:$0xf]
        %v9111 = vld [vmem:[%s20 + $0xc] sm:$0xf]
        %v9112 = vld [vmem:[%s20 + $0x10] sm:$0xf]
        %v9113 = vld [vmem:[%s20 + $0x14] sm:$0xf]
        %v9114 = vld [vmem:[%s20 + $0x18] sm:$0xf]
        %v9115 = vld [vmem:[%s20 + $0x1c] sm:$0xf]
        %v9116 = vld [vmem:[%s20 + $0x20] sm:$0xf]
        %v9117 = vld [vmem:[%s20 + $0x24] sm:$0xf]
        %v9118 = vld [vmem:[%s20 + $0x28] sm:$0xf]
        %v9119 = vld [vmem:[%s20 + $0x2c] sm:$0xf]
        %v9120 = vld [vmem:[%s20 + $0x30] sm:$0xf]
        %v9121 = vld [vmem:[%s20 + $0x34] sm:$0xf]
        %v9122 = vld [vmem:[%s20 + $0x38] sm:$0xf]
        %v9123 = vld [vmem:[%s20 + $0x3c] sm:$0xf]
        %v9124 = vld [vmem:[%s21] sm:$0x1]
        %v9141 = vunpack.c.l.b16 %v9108
        %v9142 = vunpack.c.l.b16 %v9109
        %v9143 = vunpack.c.l.b16 %v9110
        %v9144 = vunpack.c.l.b16 %v9111
        %v9145 = vunpack.c.l.b16 %v9112
        %v9146 = vunpack.c.l.b16 %v9113
        %v9147 = vunpack.c.l.b16 %v9114
        %v9148 = vunpack.c.l.b16 %v9115
        %v9149 = vunpack.c.l.b16 %v9116
        %v9150 = vunpack.c.l.b16 %v9117
        %v9151 = vunpack.c.l.b16 %v9118
        %v9152 = vunpack.c.l.b16 %v9119
        %v9153 = vunpack.c.l.b16 %v9120
        %v9154 = vunpack.c.l.b16 %v9121
        %v9155 = vunpack.c.l.b16 %v9122
        %v9156 = vunpack.c.l.b16 %v9123
        %v9157 = vpack.c.b16 %v9142, %v9141
        %v9158 = vpack.c.b16 %v9144, %v9143
        %v9159 = vpack.c.b16 %v9146, %v9145
        %v9160 = vpack.c.b16 %v9148, %v9147
        %v9161 = vpack.c.b16 %v9150, %v9149
        %v9162 = vpack.c.b16 %v9152, %v9151
        %v9163 = vpack.c.b16 %v9154, %v9153
        %v9164 = vpack.c.b16 %v9156, %v9155
        %9173 = vmatprep.subr.bf16.mxu0 0
        %9174 = vmatpush1.bf16.msra.mxu0 %v9157
        %9175 = vmatprep.subr.bf16.mxu0 0
        %9176 = vmatpush1.bf16.msra.mxu0 %v9158
        %9177 = vmatprep.subr.bf16.mxu0 0
        %9178 = vmatpush1.bf16.msra.mxu0 %v9159
        %9179 = vmatprep.subr.bf16.mxu0 0
        %9180 = vmatpush1.bf16.msra.mxu0 %v9160
        %9181 = vmatprep.subr.bf16.mxu0 0
        %9182 = vmatpush1.bf16.msra.mxu0 %v9161
        %9183 = vmatprep.subr.bf16.mxu0 0
        %9184 = vmatpush1.bf16.msra.mxu0 %v9162
        %9185 = vmatprep.subr.bf16.mxu0 0
        %9186 = vmatpush1.bf16.msra.mxu0 %v9163
        %9187 = vmatprep.subr.bf16.mxu0 0
        %9188 = vmatpush1.bf16.msra.mxu0 %v9164
        %9189 = vmatprep.subr.bf16.mxu0 0
        %9190 = vmatpush1.bf16.msra.mxu0 0
        %9191 = vmatprep.subr.bf16.mxu0 0
        %9192 = vmatpush1.bf16.msra.mxu0 0
        %9193 = vmatprep.subr.bf16.mxu0 0
        %9194 = vmatpush1.bf16.msra.mxu0 0
        %9195 = vmatprep.subr.bf16.mxu0 0
        %9196 = vmatpush1.bf16.msra.mxu0 0
        %9197 = vmatprep.subr.bf16.mxu0 0
        %9198 = vmatpush1.bf16.msra.mxu0 0
        %9199 = vmatprep.subr.bf16.mxu0 0
        %9200 = vmatpush1.bf16.msra.mxu0 0
        %9201 = vmatprep.subr.bf16.mxu0 0
        %9202 = vmatpush1.bf16.msra.mxu0 0
        %9203 = vmatprep.subr.bf16.mxu0 0
        %9204 = vmatpush1.bf16.msra.mxu0 0
        %9205 = vmatprep.mubr.bf16.mxu0 0
        %9206 = vmatmul.mubr.bf16.gmra.mrb[0].mxu0 %v9107
        %v9207 = vpop.f32.mrb[0].mxu0
        %v9208 = vadd.f32 %v9124, %v9207
        %v9209 = vpop.f32.mrb[0].mxu0
        %v9210 = vpop.f32.mrb[0].mxu0
        %v9211 = vpop.f32.mrb[0].mxu0
        %9212 = vdwg.mxu0
        %9213 = vst [vmem:[%s675] sm:$0x1] %v9208
        %s9214 = sand.u32 %s511, 1
        %s9215 = scalar_lea.sflag [#allocation4], %s9214
        %s9216 = sand.u32 %s511, 1
        %s9217 = scalar_lea.vmem [#allocation3], %s9216
        // Predicated region
        $region109: #{_lambda_.1} parent=107 // pred_check
          %p9218 = pneg %p521
        $region110: #{_lambda_.1} parent=107 // pred_check_branch
          %9220 = sbr.rel (%p9218) target = $region112
        $region111: #{_lambda_.1} parent=107 // pred_region
          %s9222 = ssub.s32 16, 16
          %9223 = vsyncadd %s9215, %s9222
          %s9224 = smul.addr %s36, 16
          %s9225 = scalar_lea.hbm %s22, %s9224
          %s9227 = sshll.u32 %s9217, 4
          %s9228 = int_to_ptr.vmem [resolvable:$true] %s9227
          %9230 = dma.vmem_to_hbm [thread:$0]  %s9228, 16, %s9225, %s9215
        $region112: #{_lambda_.1} parent=107 // pred_fallthru
          _
      $region108: #{_lambda_.1} parent=5 // pred_fallthru
        _
      %p9231 = scmp.le.s32.totalorder 2, %s31
      // Predicated region
      $region113: #{_lambda_.1} parent=5 // pred_check
        %p9232 = pneg %p9231
      $region114: #{_lambda_.1} parent=5 // pred_check_branch
        %9234 = sbr.rel (%p9232) target = $region116
      $region115: #{_lambda_.1} parent=5 // pred_region
        %s9235 = ssub.s32 %s31, 2
        // Predicated region
        $region117: #{_lambda_.1} parent=115 // pred_check
          %p9236 = pneg %p527
        $region118: #{_lambda_.1} parent=115 // pred_check_branch
          %9238 = sbr.rel (%p9236) target = $region120
        $region119: #{_lambda_.1} parent=115 // pred_region
          %s9239 = sand.u32 %s512, 1
          %s9240 = scalar_lea.sflag [#allocation4], %s9239
          %s9241 = sand.u32 %s512, 1
          %s9242 = scalar_lea.vmem [#allocation3], %s9241
          %9243 = dma.done %s9240, 16
        $region120: #{_lambda_.1} parent=115 // pred_fallthru
          _
      $region116: #{_lambda_.1} parent=5 // pred_fallthru
        _
    $region6: #{_lambda_.1} parent=1 // loop_footer
      %s35 = sadd.s32 1, %s31
    $region7: #{_lambda_.1} parent=1 // loop_footer_branch
      %30 = sbr.rel target = $region3
    $region8: #{_lambda_.1} parent=1 // loop_exit
      _
    %9244 = vsyncpa [#allocation4], 1
    %s9245 = scalar_lea.sflag [#allocation4], 1
    %9246 = vsyncpa %s9245, 1

</llo_original>
